<compile_context>
chip_gen: v7x
topology: tpu7x:2x2x1
jax: 0.10.0
libtpu: 0.0.40
codegen_flags: <defaults>
</compile_context>

<pallas_src>
import functools

import jax
import jax.numpy as jnp
import numpy as np
from jax.experimental import pallas as pl
from jax.experimental.pallas import tpu as pltpu

NEG_SLOPE = 0.01  # nn.LeakyReLU() default


# ----------------------------------------------------------------------------
# Fused Pallas kernel (one batch element per grid step)
# ----------------------------------------------------------------------------
def _imdb_kernel(x_ref, mask_ref, w3_ref, b3_ref, w5_ref, b5_ref, o_ref,
                 pbuf, col, slab, *, H, W):
    """x_ref : (Lpad, 64) f32   flattened zero-padded input image
       mask  : (L, 1)    f32   1.0 on valid cols, 0.0 on the 2 junk cols/row
       w3    : (4, 576, 64) bf16  taps packed into the contraction dim
       b3    : (4, 1, 64) f32
       w5    : (256, 64) bf16     1x1 conv with split/concat folded in
       b5    : (1, 64)   f32
       o_ref : (L, 64)            flattened output (junk cols dropped in XLA)
       pbuf  : (Lpad, 64) f32     padded activation scratch
       col   : (L, 576)  bf16     im2col scratch (K = 9*64)
       slab  : (L, 256)  bf16     packed distillation outputs for the 1x1
    """
    C = 64
    Wp = W + 2                    # padded row width
    L = H * Wp                    # flattened rows (incl. 2 junk cols per row)
    OFF = Wp + 1                  # interior offset (1 row + 1 col)
    Lpad = pbuf.shape[0]
    taps = [ky * Wp + kx for ky in range(3) for kx in range(3)]

    # (1) Zero ONLY the border strips of the padded activation buffer.
    pbuf[pl.ds(0, OFF), :] = jnp.zeros((OFF, C), pbuf.dtype)
    pbuf[pl.ds(OFF + L, Lpad - OFF - L), :] = jnp.zeros(
        (Lpad - OFF - L, C), pbuf.dtype)

    def im2col(src_ref):
        # 3x3 taps are just row shifts of the flattened padded image.
        for t, off in enumerate(taps):
            col[:, t * C:(t + 1) * C] = src_ref[pl.ds(off, L), :].astype(col.dtype)

    def conv_lrelu(layer, mask_junk):
        # (2) one fully packed K=576 matmul per layer, f32 accumulation.
        acc = jnp.dot(col[...], w3_ref[layer, :, :],
                      preferred_element_type=jnp.float32)
        acc = acc + b3_ref[layer, :, :]
        a = jnp.where(acc > 0, acc, NEG_SLOPE * acc)       # LeakyReLU (f32)
        if mask_junk:
            a = a * mask_ref[...]                          # (5) cheap mask
        slab[:, layer * C:(layer + 1) * C] = a.astype(slab.dtype)
        return a

    im2col(x_ref)                       # conv3_1 reads the zero-padded input
    a = conv_lrelu(0, True)
    for layer in (1, 2):                # conv3_2, conv3_3
        pbuf[pl.ds(OFF, L), :] = a
        im2col(pbuf)
        a = conv_lrelu(layer, True)
    pbuf[pl.ds(OFF, L), :] = a
    im2col(pbuf)
    conv_lrelu(3, False)                # conv3_4: junk cols never feed padding

    # (3) Single fused 1x1 conv over the packed distillation slab.
    out = jnp.dot(slab[...], w5_ref[...], preferred_element_type=jnp.float32)
    o_ref[...] = (out + b5_ref[...]).astype(o_ref.dtype)


# ----------------------------------------------------------------------------
# Parameter packing: taps + Cin/Cout padding into (576,64); 1x1 into (256,64)
# ----------------------------------------------------------------------------
def _pack_params(p):
    C = 64

    def pack_w3(w, cin_off):
        kh, kw, cin, cout = w.shape
        wf = jnp.zeros((3, 3, C, C), jnp.float32)
        wf = wf.at[:, :, cin_off:cin_off + cin, :cout].set(w)
        return wf.reshape(9 * C, C)          # rows ordered (ky, kx, cin)

    w3 = jnp.stack([pack_w3(p["w1"], 0), pack_w3(p["w2"], 16),
                    pack_w3(p["w3"], 16), pack_w3(p["w4"], 16)],
                   axis=0).astype(jnp.bfloat16)

    def pad_b(b):
        return jnp.zeros((C,), jnp.float32).at[:b.shape[0]].set(b)

    b3 = jnp.stack([pad_b(p["b1"]), pad_b(p["b2"]),
                    pad_b(p["b3"]), pad_b(p["b4"])], axis=0).reshape(4, 1, C)

    # concat([a1[:, :16], a2[:, :16], a3[:, :16], a4[:, :16]]) @ W5
    #   == slab(L,256) @ W5_packed(256,64)
    w5 = p["w5"].reshape(C, C)                       # (Cin, Cout)
    w5p = jnp.zeros((4 * C, C), jnp.float32)
    for i in range(4):
        w5p = w5p.at[i * C:i * C + 16, :].set(w5[16 * i:16 * (i + 1), :])
    w5p = w5p.astype(jnp.bfloat16)
    b5 = p["b5"].reshape(1, C)
    return w3, b3, w5p, b5


# ----------------------------------------------------------------------------
# Wrapper
# ----------------------------------------------------------------------------
@jax.jit
def imdb_forward(x_nhwc, p):
    """IMDB forward, NHWC in/out. Mirrors the PyTorch module exactly."""
    N, H, W, C = x_nhwc.shape
    assert C == 64, "IMDB requires 64 input channels"
    Wp = W + 2
    L = H * Wp
    Lpad = (H + 3) * Wp          # 1 top + 2 bottom pad rows, 1 col each side

    w3, b3, w5p, b5 = _pack_params(p)

    xp = jnp.pad(x_nhwc, ((0, 0), (1, 2), (1, 1), (0, 0)))
    xf = xp.reshape(N, Lpad, C)

    # Precomputed junk-column mask (review item 5): tiny (L,1) input.
    mask = ((jnp.arange(L) % Wp) < W).astype(jnp.float32)[:, None]

    kernel = functools.partial(_imdb_kernel, H=H, W=W)
    out_flat = pl.pallas_call(
        kernel,
        out_shape=jax.ShapeDtypeStruct((N, L, C), x_nhwc.dtype),
        grid=(N,),
        in_specs=[
            pl.BlockSpec((None, Lpad, C), lambda n: (n, 0, 0)),   # x
            pl.BlockSpec((L, 1), lambda n: (0, 0)),               # mask
            pl.BlockSpec((4, 9 * C, C), lambda n: (0, 0, 0)),     # w3 packed
            pl.BlockSpec((4, 1, C), lambda n: (0, 0, 0)),         # b3
            pl.BlockSpec((4 * C, C), lambda n: (0, 0)),           # w5 packed
            pl.BlockSpec((1, C), lambda n: (0, 0)),               # b5
        ],
        out_specs=pl.BlockSpec((None, L, C), lambda n: (n, 0, 0)),
        scratch_shapes=[
            pltpu.VMEM((Lpad, C), jnp.float32),      # padded activation buf
            pltpu.VMEM((L, 9 * C), jnp.bfloat16),    # im2col (K = 576)
            pltpu.VMEM((L, 4 * C), jnp.bfloat16),    # distillation slab
        ],
        compiler_params=pltpu.CompilerParams(
            dimension_semantics=("parallel",)),
    )(xf, mask, w3, b3, w5p, b5)

    # Drop the two junk columns per padded row.
    return out_flat.reshape(N, H, Wp, C)[:, :, :W, :]


# ----------------------------------------------------------------------------
# Deterministic parameter init + pure-JAX reference (f32, lax.conv)
# ----------------------------------------------------------------------------
def init_params(key):
    def conv_init(key, kh, kw, cin, cout):
        kw_, kb_ = jax.random.split(key)
        bound = 1.0 / np.sqrt(cin * kh * kw)
        w = jax.random.uniform(kw_, (kh, kw, cin, cout), jnp.float32,
                               -bound, bound)
        b = jax.random.uniform(kb_, (cout,), jnp.float32, -bound, bound)
        return w, b

    keys = jax.random.split(key, 5)
    p = {}
    p["w1"], p["b1"] = conv_init(keys[0], 3, 3, 64, 64)
    p["w2"], p["b2"] = conv_init(keys[1], 3, 3, 48, 64)
    p["w3"], p["b3"] = conv_init(keys[2], 3, 3, 48, 64)
    p["w4"], p["b4"] = conv_init(keys[3], 3, 3, 48, 16)
    p["w5"], p["b5"] = conv_init(keys[4], 1, 1, 64, 64)
    return p


def imdb_forward_ref(x_nhwc, p):
    dn = ("NHWC", "HWIO", "NHWC")

    def conv(x, w, b, act):
        y = jax.lax.conv_general_dilated(x, w, (1, 1), "SAME",
                                         dimension_numbers=dn) + b
        return jnp.where(y > 0, y, NEG_SLOPE * y) if act else y

    x = conv(x_nhwc, p["w1"], p["b1"], True)
    s1, x = x[..., :16], x[..., 16:]
    x = conv(x, p["w2"], p["b2"], True)
    s2, x = x[..., :16], x[..., 16:]
    x = conv(x, p["w3"], p["b3"], True)
    s3, x = x[..., :16], x[..., 16:]
    x = conv(x, p["w4"], p["b4"], True)
    x = jnp.concatenate([s1, s2, s3, x], axis=-1)
    return conv(x, p["w5"], p["b5"], False)


# ----------------------------------------------------------------------------
if __name__ == "__main__":
    key = jax.random.PRNGKey(0)
    kx, kp = jax.random.split(key)

    N, C, H, W = 2, 64, 16, 16
    x_nchw = jax.random.normal(kx, (N, C, H, W), jnp.float32)
    x_nhwc = jnp.transpose(x_nchw, (0, 2, 3, 1))   # NCHW -> NHWC

    params = init_params(kp)

    out = jax.block_until_ready(imdb_forward(x_nhwc, params))
    ref = jax.block_until_ready(imdb_forward_ref(x_nhwc, params))

    assert out.shape == (N, H, W, 64), out.shape
    # Tolerance loosened vs. the f32 reference because the MXU operands are
    # bf16 (accumulation stays f32); observed error is well inside this.
    np.testing.assert_allclose(np.asarray(out), np.asarray(ref),
                               rtol=3e-2, atol=3e-2)

    print("KERNEL_OK")
</pallas_src>

<mosaic_0001>
module attributes {stable_mosaic.version = 11 : i64} {
  func.func @_imdb_kernel(%arg0: i32, %arg1: memref<1x342x64xf32, #tpu.memory_space<vmem>>, %arg2: memref<288x1xf32, #tpu.memory_space<vmem>>, %arg3: memref<4x576x64xbf16, #tpu.memory_space<vmem>>, %arg4: memref<4x1x64xf32, #tpu.memory_space<vmem>>, %arg5: memref<256x64xbf16, #tpu.memory_space<vmem>>, %arg6: memref<1x64xf32, #tpu.memory_space<vmem>>, %arg7: memref<1x288x64xf32, #tpu.memory_space<vmem>>, %arg8: memref<342x64xf32, #tpu.memory_space<vmem>>, %arg9: memref<288x576xbf16, #tpu.memory_space<vmem>>, %arg10: memref<288x256xbf16, #tpu.memory_space<vmem>>) attributes {dimension_semantics = [#tpu.dimension_semantics<parallel>], iteration_bounds = array<i64: 2>, scalar_prefetch = 0 : i64, scratch_operands = 3 : i64, tpu.core_type = #tpu.core_type<tc>, window_params = [{transform_indices = @transform_0, window_bounds = array<i64: 1, 342, 64>}, {pipeline_mode = #tpu.pipeline_mode<synchronous>, transform_indices = @transform_1, window_bounds = array<i64: 288, 1>}, {pipeline_mode = #tpu.pipeline_mode<synchronous>, transform_indices = @transform_2, window_bounds = array<i64: 4, 576, 64>}, {pipeline_mode = #tpu.pipeline_mode<synchronous>, transform_indices = @transform_3, window_bounds = array<i64: 4, 1, 64>}, {pipeline_mode = #tpu.pipeline_mode<synchronous>, transform_indices = @transform_4, window_bounds = array<i64: 256, 64>}, {pipeline_mode = #tpu.pipeline_mode<synchronous>, transform_indices = @transform_5, window_bounds = array<i64: 1, 64>}, {transform_indices = @transform_6, window_bounds = array<i64: 1, 288, 64>}]} {
    %cst = arith.constant 0.000000e+00 : f32
    %0 = vector.broadcast %cst : f32 to vector<19x64xf32>
    %c0 = arith.constant 0 : index
    %c0_0 = arith.constant 0 : index
    %1 = vector.load %arg8[%c0, %c0_0] : memref<342x64xf32, #tpu.memory_space<vmem>>, vector<19x64xf32>
    tpu.vector_store %arg8[%c0, %c0_0], %0 {strides = array<i32>} : memref<342x64xf32, #tpu.memory_space<vmem>>, vector<19x64xf32>,
    %cst_1 = arith.constant 0.000000e+00 : f32
    %2 = vector.broadcast %cst_1 : f32 to vector<35x64xf32>
    %c307 = arith.constant 307 : index
    %c0_2 = arith.constant 0 : index
    %3 = vector.load %arg8[%c307, %c0_2] : memref<342x64xf32, #tpu.memory_space<vmem>>, vector<35x64xf32>
    tpu.vector_store %arg8[%c307, %c0_2], %2 {strides = array<i32>} : memref<342x64xf32, #tpu.memory_space<vmem>>, vector<35x64xf32>,
    %c0_3 = arith.constant 0 : index
    %c0_4 = arith.constant 0 : index
    %c0_5 = arith.constant 0 : index
    %4 = vector.load %arg1[%c0_3, %c0_4, %c0_5] : memref<1x342x64xf32, #tpu.memory_space<vmem>>, vector<1x288x64xf32>
    %5 = vector.shape_cast %4 : vector<1x288x64xf32> to vector<288x64xf32>
    %6 = arith.truncf %5 : vector<288x64xf32> to vector<288x64xbf16>
    %c0_6 = arith.constant 0 : index
    %c0_7 = arith.constant 0 : index
    %7 = vector.load %arg9[%c0_6, %c0_7] : memref<288x576xbf16, #tpu.memory_space<vmem>>, vector<288x64xbf16>
    tpu.vector_store %arg9[%c0_6, %c0_7], %6 {strides = array<i32>} : memref<288x576xbf16, #tpu.memory_space<vmem>>, vector<288x64xbf16>,
    %c0_8 = arith.constant 0 : index
    %c1 = arith.constant 1 : index
    %c0_9 = arith.constant 0 : index
    %8 = vector.load %arg1[%c0_8, %c1, %c0_9] : memref<1x342x64xf32, #tpu.memory_space<vmem>>, vector<1x288x64xf32>
    %9 = vector.shape_cast %8 : vector<1x288x64xf32> to vector<288x64xf32>
    %10 = arith.truncf %9 : vector<288x64xf32> to vector<288x64xbf16>
    %c0_10 = arith.constant 0 : index
    %c64 = arith.constant 64 : index
    %11 = vector.load %arg9[%c0_10, %c64] : memref<288x576xbf16, #tpu.memory_space<vmem>>, vector<288x64xbf16>
    tpu.vector_store %arg9[%c0_10, %c64], %10 {strides = array<i32>} : memref<288x576xbf16, #tpu.memory_space<vmem>>, vector<288x64xbf16>,
    %c0_11 = arith.constant 0 : index
    %c2 = arith.constant 2 : index
    %c0_12 = arith.constant 0 : index
    %12 = vector.load %arg1[%c0_11, %c2, %c0_12] : memref<1x342x64xf32, #tpu.memory_space<vmem>>, vector<1x288x64xf32>
    %13 = vector.shape_cast %12 : vector<1x288x64xf32> to vector<288x64xf32>
    %14 = arith.truncf %13 : vector<288x64xf32> to vector<288x64xbf16>
    %c0_13 = arith.constant 0 : index
    %c128 = arith.constant 128 : index
    %15 = vector.load %arg9[%c0_13, %c128] : memref<288x576xbf16, #tpu.memory_space<vmem>>, vector<288x64xbf16>
    tpu.vector_store %arg9[%c0_13, %c128], %14 {strides = array<i32>} : memref<288x576xbf16, #tpu.memory_space<vmem>>, vector<288x64xbf16>,
    %c0_14 = arith.constant 0 : index
    %c18 = arith.constant 18 : index
    %c0_15 = arith.constant 0 : index
    %16 = vector.load %arg1[%c0_14, %c18, %c0_15] : memref<1x342x64xf32, #tpu.memory_space<vmem>>, vector<1x288x64xf32>
    %17 = vector.shape_cast %16 : vector<1x288x64xf32> to vector<288x64xf32>
    %18 = arith.truncf %17 : vector<288x64xf32> to vector<288x64xbf16>
    %c0_16 = arith.constant 0 : index
    %c192 = arith.constant 192 : index
    %19 = vector.load %arg9[%c0_16, %c192] : memref<288x576xbf16, #tpu.memory_space<vmem>>, vector<288x64xbf16>
    tpu.vector_store %arg9[%c0_16, %c192], %18 {strides = array<i32>} : memref<288x576xbf16, #tpu.memory_space<vmem>>, vector<288x64xbf16>,
    %c0_17 = arith.constant 0 : index
    %c19 = arith.constant 19 : index
    %c0_18 = arith.constant 0 : index
    %20 = vector.load %arg1[%c0_17, %c19, %c0_18] : memref<1x342x64xf32, #tpu.memory_space<vmem>>, vector<1x288x64xf32>
    %21 = vector.shape_cast %20 : vector<1x288x64xf32> to vector<288x64xf32>
    %22 = arith.truncf %21 : vector<288x64xf32> to vector<288x64xbf16>
    %c0_19 = arith.constant 0 : index
    %c256 = arith.constant 256 : index
    %23 = vector.load %arg9[%c0_19, %c256] : memref<288x576xbf16, #tpu.memory_space<vmem>>, vector<288x64xbf16>
    tpu.vector_store %arg9[%c0_19, %c256], %22 {strides = array<i32>} : memref<288x576xbf16, #tpu.memory_space<vmem>>, vector<288x64xbf16>,
    %c0_20 = arith.constant 0 : index
    %c20 = arith.constant 20 : index
    %c0_21 = arith.constant 0 : index
    %24 = vector.load %arg1[%c0_20, %c20, %c0_21] : memref<1x342x64xf32, #tpu.memory_space<vmem>>, vector<1x288x64xf32>
    %25 = vector.shape_cast %24 : vector<1x288x64xf32> to vector<288x64xf32>
    %26 = arith.truncf %25 : vector<288x64xf32> to vector<288x64xbf16>
    %c0_22 = arith.constant 0 : index
    %c320 = arith.constant 320 : index
    %27 = vector.load %arg9[%c0_22, %c320] : memref<288x576xbf16, #tpu.memory_space<vmem>>, vector<288x64xbf16>
    tpu.vector_store %arg9[%c0_22, %c320], %26 {strides = array<i32>} : memref<288x576xbf16, #tpu.memory_space<vmem>>, vector<288x64xbf16>,
    %c0_23 = arith.constant 0 : index
    %c36 = arith.constant 36 : index
    %c0_24 = arith.constant 0 : index
    %28 = vector.load %arg1[%c0_23, %c36, %c0_24] : memref<1x342x64xf32, #tpu.memory_space<vmem>>, vector<1x288x64xf32>
    %29 = vector.shape_cast %28 : vector<1x288x64xf32> to vector<288x64xf32>
    %30 = arith.truncf %29 : vector<288x64xf32> to vector<288x64xbf16>
    %c0_25 = arith.constant 0 : index
    %c384 = arith.constant 384 : index
    %31 = vector.load %arg9[%c0_25, %c384] : memref<288x576xbf16, #tpu.memory_space<vmem>>, vector<288x64xbf16>
    tpu.vector_store %arg9[%c0_25, %c384], %30 {strides = array<i32>} : memref<288x576xbf16, #tpu.memory_space<vmem>>, vector<288x64xbf16>,
    %c0_26 = arith.constant 0 : index
    %c37 = arith.constant 37 : index
    %c0_27 = arith.constant 0 : index
    %32 = vector.load %arg1[%c0_26, %c37, %c0_27] : memref<1x342x64xf32, #tpu.memory_space<vmem>>, vector<1x288x64xf32>
    %33 = vector.shape_cast %32 : vector<1x288x64xf32> to vector<288x64xf32>
    %34 = arith.truncf %33 : vector<288x64xf32> to vector<288x64xbf16>
    %c0_28 = arith.constant 0 : index
    %c448 = arith.constant 448 : index
    %35 = vector.load %arg9[%c0_28, %c448] : memref<288x576xbf16, #tpu.memory_space<vmem>>, vector<288x64xbf16>
    tpu.vector_store %arg9[%c0_28, %c448], %34 {strides = array<i32>} : memref<288x576xbf16, #tpu.memory_space<vmem>>, vector<288x64xbf16>,
    %c0_29 = arith.constant 0 : index
    %c38 = arith.constant 38 : index
    %c0_30 = arith.constant 0 : index
    %36 = vector.load %arg1[%c0_29, %c38, %c0_30] : memref<1x342x64xf32, #tpu.memory_space<vmem>>, vector<1x288x64xf32>
    %37 = vector.shape_cast %36 : vector<1x288x64xf32> to vector<288x64xf32>
    %38 = arith.truncf %37 : vector<288x64xf32> to vector<288x64xbf16>
    %c0_31 = arith.constant 0 : index
    %c512 = arith.constant 512 : index
    %39 = vector.load %arg9[%c0_31, %c512] : memref<288x576xbf16, #tpu.memory_space<vmem>>, vector<288x64xbf16>
    tpu.vector_store %arg9[%c0_31, %c512], %38 {strides = array<i32>} : memref<288x576xbf16, #tpu.memory_space<vmem>>, vector<288x64xbf16>,
    %c0_32 = arith.constant 0 : index
    %c0_33 = arith.constant 0 : index
    %40 = vector.load %arg9[%c0_32, %c0_33] : memref<288x576xbf16, #tpu.memory_space<vmem>>, vector<288x576xbf16>
    %c0_34 = arith.constant 0 : index
    %c0_35 = arith.constant 0 : index
    %c0_36 = arith.constant 0 : index
    %41 = vector.load %arg3[%c0_34, %c0_35, %c0_36] : memref<4x576x64xbf16, #tpu.memory_space<vmem>>, vector<1x576x64xbf16>
    %42 = vector.shape_cast %41 : vector<1x576x64xbf16> to vector<576x64xbf16>
    %cst_37 = arith.constant dense<0.000000e+00> : vector<288x64xf32>
    %43 = tpu.matmul %40, %42, %cst_37 {dimension_numbers = #tpu.dot_dimension_numbers<[1], [0], [0], [1], [0, 0, 1, 1], [], []>} : vector<288x576xbf16>, vector<576x64xbf16>, vector<288x64xf32> -> vector<288x64xf32>
    %c0_38 = arith.constant 0 : index
    %c0_39 = arith.constant 0 : index
    %c0_40 = arith.constant 0 : index
    %44 = vector.load %arg4[%c0_38, %c0_39, %c0_40] : memref<4x1x64xf32, #tpu.memory_space<vmem>>, vector<1x1x64xf32>
    %45 = vector.shape_cast %44 : vector<1x1x64xf32> to vector<1x64xf32>
    %46 = vector.broadcast %45 : vector<1x64xf32> to vector<288x64xf32>
    %47 = arith.addf %43, %46 : vector<288x64xf32>
    %cst_41 = arith.constant 0.000000e+00 : f32
    %48 = vector.broadcast %cst_41 : f32 to vector<288x64xf32>
    %49 = arith.cmpf ogt, %47, %48 : vector<288x64xf32>
    %cst_42 = arith.constant 0.00999999977 : f32
    %50 = vector.broadcast %cst_42 : f32 to vector<288x64xf32>
    %51 = arith.mulf %50, %47 : vector<288x64xf32>
    %52 = arith.select %49, %47, %51 : vector<288x64xi1>, vector<288x64xf32>
    %c0_43 = arith.constant 0 : index
    %c0_44 = arith.constant 0 : index
    %53 = vector.load %arg2[%c0_43, %c0_44] : memref<288x1xf32, #tpu.memory_space<vmem>>, vector<288x1xf32>
    %54 = vector.broadcast %53 : vector<288x1xf32> to vector<288x64xf32>
    %55 = arith.mulf %52, %54 : vector<288x64xf32>
    %56 = arith.truncf %55 : vector<288x64xf32> to vector<288x64xbf16>
    %c0_45 = arith.constant 0 : index
    %c0_46 = arith.constant 0 : index
    %57 = vector.load %arg10[%c0_45, %c0_46] : memref<288x256xbf16, #tpu.memory_space<vmem>>, vector<288x64xbf16>
    tpu.vector_store %arg10[%c0_45, %c0_46], %56 {strides = array<i32>} : memref<288x256xbf16, #tpu.memory_space<vmem>>, vector<288x64xbf16>,
    %c19_47 = arith.constant 19 : index
    %c0_48 = arith.constant 0 : index
    %58 = vector.load %arg8[%c19_47, %c0_48] : memref<342x64xf32, #tpu.memory_space<vmem>>, vector<288x64xf32>
    tpu.vector_store %arg8[%c19_47, %c0_48], %55 {strides = array<i32>} : memref<342x64xf32, #tpu.memory_space<vmem>>, vector<288x64xf32>,
    %c0_49 = arith.constant 0 : index
    %c0_50 = arith.constant 0 : index
    %59 = vector.load %arg8[%c0_49, %c0_50] : memref<342x64xf32, #tpu.memory_space<vmem>>, vector<288x64xf32>
    %60 = arith.truncf %59 : vector<288x64xf32> to vector<288x64xbf16>
    %c0_51 = arith.constant 0 : index
    %c0_52 = arith.constant 0 : index
    %61 = vector.load %arg9[%c0_51, %c0_52] : memref<288x576xbf16, #tpu.memory_space<vmem>>, vector<288x64xbf16>
    tpu.vector_store %arg9[%c0_51, %c0_52], %60 {strides = array<i32>} : memref<288x576xbf16, #tpu.memory_space<vmem>>, vector<288x64xbf16>,
    %c1_53 = arith.constant 1 : index
    %c0_54 = arith.constant 0 : index
    %62 = vector.load %arg8[%c1_53, %c0_54] : memref<342x64xf32, #tpu.memory_space<vmem>>, vector<288x64xf32>
    %63 = arith.truncf %62 : vector<288x64xf32> to vector<288x64xbf16>
    %c0_55 = arith.constant 0 : index
    %c64_56 = arith.constant 64 : index
    %64 = vector.load %arg9[%c0_55, %c64_56] : memref<288x576xbf16, #tpu.memory_space<vmem>>, vector<288x64xbf16>
    tpu.vector_store %arg9[%c0_55, %c64_56], %63 {strides = array<i32>} : memref<288x576xbf16, #tpu.memory_space<vmem>>, vector<288x64xbf16>,
    %c2_57 = arith.constant 2 : index
    %c0_58 = arith.constant 0 : index
    %65 = vector.load %arg8[%c2_57, %c0_58] : memref<342x64xf32, #tpu.memory_space<vmem>>, vector<288x64xf32>
    %66 = arith.truncf %65 : vector<288x64xf32> to vector<288x64xbf16>
    %c0_59 = arith.constant 0 : index
    %c128_60 = arith.constant 128 : index
    %67 = vector.load %arg9[%c0_59, %c128_60] : memref<288x576xbf16, #tpu.memory_space<vmem>>, vector<288x64xbf16>
    tpu.vector_store %arg9[%c0_59, %c128_60], %66 {strides = array<i32>} : memref<288x576xbf16, #tpu.memory_space<vmem>>, vector<288x64xbf16>,
    %c18_61 = arith.constant 18 : index
    %c0_62 = arith.constant 0 : index
    %68 = vector.load %arg8[%c18_61, %c0_62] : memref<342x64xf32, #tpu.memory_space<vmem>>, vector<288x64xf32>
    %69 = arith.truncf %68 : vector<288x64xf32> to vector<288x64xbf16>
    %c0_63 = arith.constant 0 : index
    %c192_64 = arith.constant 192 : index
    %70 = vector.load %arg9[%c0_63, %c192_64] : memref<288x576xbf16, #tpu.memory_space<vmem>>, vector<288x64xbf16>
    tpu.vector_store %arg9[%c0_63, %c192_64], %69 {strides = array<i32>} : memref<288x576xbf16, #tpu.memory_space<vmem>>, vector<288x64xbf16>,
    %c19_65 = arith.constant 19 : index
    %c0_66 = arith.constant 0 : index
    %71 = vector.load %arg8[%c19_65, %c0_66] : memref<342x64xf32, #tpu.memory_space<vmem>>, vector<288x64xf32>
    %72 = arith.truncf %71 : vector<288x64xf32> to vector<288x64xbf16>
    %c0_67 = arith.constant 0 : index
    %c256_68 = arith.constant 256 : index
    %73 = vector.load %arg9[%c0_67, %c256_68] : memref<288x576xbf16, #tpu.memory_space<vmem>>, vector<288x64xbf16>
    tpu.vector_store %arg9[%c0_67, %c256_68], %72 {strides = array<i32>} : memref<288x576xbf16, #tpu.memory_space<vmem>>, vector<288x64xbf16>,
    %c20_69 = arith.constant 20 : index
    %c0_70 = arith.constant 0 : index
    %74 = vector.load %arg8[%c20_69, %c0_70] : memref<342x64xf32, #tpu.memory_space<vmem>>, vector<288x64xf32>
    %75 = arith.truncf %74 : vector<288x64xf32> to vector<288x64xbf16>
    %c0_71 = arith.constant 0 : index
    %c320_72 = arith.constant 320 : index
    %76 = vector.load %arg9[%c0_71, %c320_72] : memref<288x576xbf16, #tpu.memory_space<vmem>>, vector<288x64xbf16>
    tpu.vector_store %arg9[%c0_71, %c320_72], %75 {strides = array<i32>} : memref<288x576xbf16, #tpu.memory_space<vmem>>, vector<288x64xbf16>,
    %c36_73 = arith.constant 36 : index
    %c0_74 = arith.constant 0 : index
    %77 = vector.load %arg8[%c36_73, %c0_74] : memref<342x64xf32, #tpu.memory_space<vmem>>, vector<288x64xf32>
    %78 = arith.truncf %77 : vector<288x64xf32> to vector<288x64xbf16>
    %c0_75 = arith.constant 0 : index
    %c384_76 = arith.constant 384 : index
    %79 = vector.load %arg9[%c0_75, %c384_76] : memref<288x576xbf16, #tpu.memory_space<vmem>>, vector<288x64xbf16>
    tpu.vector_store %arg9[%c0_75, %c384_76], %78 {strides = array<i32>} : memref<288x576xbf16, #tpu.memory_space<vmem>>, vector<288x64xbf16>,
    %c37_77 = arith.constant 37 : index
    %c0_78 = arith.constant 0 : index
    %80 = vector.load %arg8[%c37_77, %c0_78] : memref<342x64xf32, #tpu.memory_space<vmem>>, vector<288x64xf32>
    %81 = arith.truncf %80 : vector<288x64xf32> to vector<288x64xbf16>
    %c0_79 = arith.constant 0 : index
    %c448_80 = arith.constant 448 : index
    %82 = vector.load %arg9[%c0_79, %c448_80] : memref<288x576xbf16, #tpu.memory_space<vmem>>, vector<288x64xbf16>
    tpu.vector_store %arg9[%c0_79, %c448_80], %81 {strides = array<i32>} : memref<288x576xbf16, #tpu.memory_space<vmem>>, vector<288x64xbf16>,
    %c38_81 = arith.constant 38 : index
    %c0_82 = arith.constant 0 : index
    %83 = vector.load %arg8[%c38_81, %c0_82] : memref<342x64xf32, #tpu.memory_space<vmem>>, vector<288x64xf32>
    %84 = arith.truncf %83 : vector<288x64xf32> to vector<288x64xbf16>
    %c0_83 = arith.constant 0 : index
    %c512_84 = arith.constant 512 : index
    %85 = vector.load %arg9[%c0_83, %c512_84] : memref<288x576xbf16, #tpu.memory_space<vmem>>, vector<288x64xbf16>
    tpu.vector_store %arg9[%c0_83, %c512_84], %84 {strides = array<i32>} : memref<288x576xbf16, #tpu.memory_space<vmem>>, vector<288x64xbf16>,
    %c0_85 = arith.constant 0 : index
    %c0_86 = arith.constant 0 : index
    %86 = vector.load %arg9[%c0_85, %c0_86] : memref<288x576xbf16, #tpu.memory_space<vmem>>, vector<288x576xbf16>
    %c1_87 = arith.constant 1 : index
    %c0_88 = arith.constant 0 : index
    %c0_89 = arith.constant 0 : index
    %87 = vector.load %arg3[%c1_87, %c0_88, %c0_89] : memref<4x576x64xbf16, #tpu.memory_space<vmem>>, vector<1x576x64xbf16>
    %88 = vector.shape_cast %87 : vector<1x576x64xbf16> to vector<576x64xbf16>
    %cst_90 = arith.constant dense<0.000000e+00> : vector<288x64xf32>
    %89 = tpu.matmul %86, %88, %cst_90 {dimension_numbers = #tpu.dot_dimension_numbers<[1], [0], [0], [1], [0, 0, 1, 1], [], []>} : vector<288x576xbf16>, vector<576x64xbf16>, vector<288x64xf32> -> vector<288x64xf32>
    %c1_91 = arith.constant 1 : index
    %c0_92 = arith.constant 0 : index
    %c0_93 = arith.constant 0 : index
    %90 = vector.load %arg4[%c1_91, %c0_92, %c0_93] : memref<4x1x64xf32, #tpu.memory_space<vmem>>, vector<1x1x64xf32>
    %91 = vector.shape_cast %90 : vector<1x1x64xf32> to vector<1x64xf32>
    %92 = vector.broadcast %91 : vector<1x64xf32> to vector<288x64xf32>
    %93 = arith.addf %89, %92 : vector<288x64xf32>
    %cst_94 = arith.constant 0.000000e+00 : f32
    %94 = vector.broadcast %cst_94 : f32 to vector<288x64xf32>
    %95 = arith.cmpf ogt, %93, %94 : vector<288x64xf32>
    %cst_95 = arith.constant 0.00999999977 : f32
    %96 = vector.broadcast %cst_95 : f32 to vector<288x64xf32>
    %97 = arith.mulf %96, %93 : vector<288x64xf32>
    %98 = arith.select %95, %93, %97 : vector<288x64xi1>, vector<288x64xf32>
    %c0_96 = arith.constant 0 : index
    %c0_97 = arith.constant 0 : index
    %99 = vector.load %arg2[%c0_96, %c0_97] : memref<288x1xf32, #tpu.memory_space<vmem>>, vector<288x1xf32>
    %100 = vector.broadcast %99 : vector<288x1xf32> to vector<288x64xf32>
    %101 = arith.mulf %98, %100 : vector<288x64xf32>
    %102 = arith.truncf %101 : vector<288x64xf32> to vector<288x64xbf16>
    %c0_98 = arith.constant 0 : index
    %c64_99 = arith.constant 64 : index
    %103 = vector.load %arg10[%c0_98, %c64_99] : memref<288x256xbf16, #tpu.memory_space<vmem>>, vector<288x64xbf16>
    tpu.vector_store %arg10[%c0_98, %c64_99], %102 {strides = array<i32>} : memref<288x256xbf16, #tpu.memory_space<vmem>>, vector<288x64xbf16>,
    %c19_100 = arith.constant 19 : index
    %c0_101 = arith.constant 0 : index
    %104 = vector.load %arg8[%c19_100, %c0_101] : memref<342x64xf32, #tpu.memory_space<vmem>>, vector<288x64xf32>
    tpu.vector_store %arg8[%c19_100, %c0_101], %101 {strides = array<i32>} : memref<342x64xf32, #tpu.memory_space<vmem>>, vector<288x64xf32>,
    %c0_102 = arith.constant 0 : index
    %c0_103 = arith.constant 0 : index
    %105 = vector.load %arg8[%c0_102, %c0_103] : memref<342x64xf32, #tpu.memory_space<vmem>>, vector<288x64xf32>
    %106 = arith.truncf %105 : vector<288x64xf32> to vector<288x64xbf16>
    %c0_104 = arith.constant 0 : index
    %c0_105 = arith.constant 0 : index
    %107 = vector.load %arg9[%c0_104, %c0_105] : memref<288x576xbf16, #tpu.memory_space<vmem>>, vector<288x64xbf16>
    tpu.vector_store %arg9[%c0_104, %c0_105], %106 {strides = array<i32>} : memref<288x576xbf16, #tpu.memory_space<vmem>>, vector<288x64xbf16>,
    %c1_106 = arith.constant 1 : index
    %c0_107 = arith.constant 0 : index
    %108 = vector.load %arg8[%c1_106, %c0_107] : memref<342x64xf32, #tpu.memory_space<vmem>>, vector<288x64xf32>
    %109 = arith.truncf %108 : vector<288x64xf32> to vector<288x64xbf16>
    %c0_108 = arith.constant 0 : index
    %c64_109 = arith.constant 64 : index
    %110 = vector.load %arg9[%c0_108, %c64_109] : memref<288x576xbf16, #tpu.memory_space<vmem>>, vector<288x64xbf16>
    tpu.vector_store %arg9[%c0_108, %c64_109], %109 {strides = array<i32>} : memref<288x576xbf16, #tpu.memory_space<vmem>>, vector<288x64xbf16>,
    %c2_110 = arith.constant 2 : index
    %c0_111 = arith.constant 0 : index
    %111 = vector.load %arg8[%c2_110, %c0_111] : memref<342x64xf32, #tpu.memory_space<vmem>>, vector<288x64xf32>
    %112 = arith.truncf %111 : vector<288x64xf32> to vector<288x64xbf16>
    %c0_112 = arith.constant 0 : index
    %c128_113 = arith.constant 128 : index
    %113 = vector.load %arg9[%c0_112, %c128_113] : memref<288x576xbf16, #tpu.memory_space<vmem>>, vector<288x64xbf16>
    tpu.vector_store %arg9[%c0_112, %c128_113], %112 {strides = array<i32>} : memref<288x576xbf16, #tpu.memory_space<vmem>>, vector<288x64xbf16>,
    %c18_114 = arith.constant 18 : index
    %c0_115 = arith.constant 0 : index
    %114 = vector.load %arg8[%c18_114, %c0_115] : memref<342x64xf32, #tpu.memory_space<vmem>>, vector<288x64xf32>
    %115 = arith.truncf %114 : vector<288x64xf32> to vector<288x64xbf16>
    %c0_116 = arith.constant 0 : index
    %c192_117 = arith.constant 192 : index
    %116 = vector.load %arg9[%c0_116, %c192_117] : memref<288x576xbf16, #tpu.memory_space<vmem>>, vector<288x64xbf16>
    tpu.vector_store %arg9[%c0_116, %c192_117], %115 {strides = array<i32>} : memref<288x576xbf16, #tpu.memory_space<vmem>>, vector<288x64xbf16>,
    %c19_118 = arith.constant 19 : index
    %c0_119 = arith.constant 0 : index
    %117 = vector.load %arg8[%c19_118, %c0_119] : memref<342x64xf32, #tpu.memory_space<vmem>>, vector<288x64xf32>
    %118 = arith.truncf %117 : vector<288x64xf32> to vector<288x64xbf16>
    %c0_120 = arith.constant 0 : index
    %c256_121 = arith.constant 256 : index
    %119 = vector.load %arg9[%c0_120, %c256_121] : memref<288x576xbf16, #tpu.memory_space<vmem>>, vector<288x64xbf16>
    tpu.vector_store %arg9[%c0_120, %c256_121], %118 {strides = array<i32>} : memref<288x576xbf16, #tpu.memory_space<vmem>>, vector<288x64xbf16>,
    %c20_122 = arith.constant 20 : index
    %c0_123 = arith.constant 0 : index
    %120 = vector.load %arg8[%c20_122, %c0_123] : memref<342x64xf32, #tpu.memory_space<vmem>>, vector<288x64xf32>
    %121 = arith.truncf %120 : vector<288x64xf32> to vector<288x64xbf16>
    %c0_124 = arith.constant 0 : index
    %c320_125 = arith.constant 320 : index
    %122 = vector.load %arg9[%c0_124, %c320_125] : memref<288x576xbf16, #tpu.memory_space<vmem>>, vector<288x64xbf16>
    tpu.vector_store %arg9[%c0_124, %c320_125], %121 {strides = array<i32>} : memref<288x576xbf16, #tpu.memory_space<vmem>>, vector<288x64xbf16>,
    %c36_126 = arith.constant 36 : index
    %c0_127 = arith.constant 0 : index
    %123 = vector.load %arg8[%c36_126, %c0_127] : memref<342x64xf32, #tpu.memory_space<vmem>>, vector<288x64xf32>
    %124 = arith.truncf %123 : vector<288x64xf32> to vector<288x64xbf16>
    %c0_128 = arith.constant 0 : index
    %c384_129 = arith.constant 384 : index
    %125 = vector.load %arg9[%c0_128, %c384_129] : memref<288x576xbf16, #tpu.memory_space<vmem>>, vector<288x64xbf16>
    tpu.vector_store %arg9[%c0_128, %c384_129], %124 {strides = array<i32>} : memref<288x576xbf16, #tpu.memory_space<vmem>>, vector<288x64xbf16>,
    %c37_130 = arith.constant 37 : index
    %c0_131 = arith.constant 0 : index
    %126 = vector.load %arg8[%c37_130, %c0_131] : memref<342x64xf32, #tpu.memory_space<vmem>>, vector<288x64xf32>
    %127 = arith.truncf %126 : vector<288x64xf32> to vector<288x64xbf16>
    %c0_132 = arith.constant 0 : index
    %c448_133 = arith.constant 448 : index
    %128 = vector.load %arg9[%c0_132, %c448_133] : memref<288x576xbf16, #tpu.memory_space<vmem>>, vector<288x64xbf16>
    tpu.vector_store %arg9[%c0_132, %c448_133], %127 {strides = array<i32>} : memref<288x576xbf16, #tpu.memory_space<vmem>>, vector<288x64xbf16>,
    %c38_134 = arith.constant 38 : index
    %c0_135 = arith.constant 0 : index
    %129 = vector.load %arg8[%c38_134, %c0_135] : memref<342x64xf32, #tpu.memory_space<vmem>>, vector<288x64xf32>
    %130 = arith.truncf %129 : vector<288x64xf32> to vector<288x64xbf16>
    %c0_136 = arith.constant 0 : index
    %c512_137 = arith.constant 512 : index
    %131 = vector.load %arg9[%c0_136, %c512_137] : memref<288x576xbf16, #tpu.memory_space<vmem>>, vector<288x64xbf16>
    tpu.vector_store %arg9[%c0_136, %c512_137], %130 {strides = array<i32>} : memref<288x576xbf16, #tpu.memory_space<vmem>>, vector<288x64xbf16>,
    %c0_138 = arith.constant 0 : index
    %c0_139 = arith.constant 0 : index
    %132 = vector.load %arg9[%c0_138, %c0_139] : memref<288x576xbf16, #tpu.memory_space<vmem>>, vector<288x576xbf16>
    %c2_140 = arith.constant 2 : index
    %c0_141 = arith.constant 0 : index
    %c0_142 = arith.constant 0 : index
    %133 = vector.load %arg3[%c2_140, %c0_141, %c0_142] : memref<4x576x64xbf16, #tpu.memory_space<vmem>>, vector<1x576x64xbf16>
    %134 = vector.shape_cast %133 : vector<1x576x64xbf16> to vector<576x64xbf16>
    %cst_143 = arith.constant dense<0.000000e+00> : vector<288x64xf32>
    %135 = tpu.matmul %132, %134, %cst_143 {dimension_numbers = #tpu.dot_dimension_numbers<[1], [0], [0], [1], [0, 0, 1, 1], [], []>} : vector<288x576xbf16>, vector<576x64xbf16>, vector<288x64xf32> -> vector<288x64xf32>
    %c2_144 = arith.constant 2 : index
    %c0_145 = arith.constant 0 : index
    %c0_146 = arith.constant 0 : index
    %136 = vector.load %arg4[%c2_144, %c0_145, %c0_146] : memref<4x1x64xf32, #tpu.memory_space<vmem>>, vector<1x1x64xf32>
    %137 = vector.shape_cast %136 : vector<1x1x64xf32> to vector<1x64xf32>
    %138 = vector.broadcast %137 : vector<1x64xf32> to vector<288x64xf32>
    %139 = arith.addf %135, %138 : vector<288x64xf32>
    %cst_147 = arith.constant 0.000000e+00 : f32
    %140 = vector.broadcast %cst_147 : f32 to vector<288x64xf32>
    %141 = arith.cmpf ogt, %139, %140 : vector<288x64xf32>
    %cst_148 = arith.constant 0.00999999977 : f32
    %142 = vector.broadcast %cst_148 : f32 to vector<288x64xf32>
    %143 = arith.mulf %142, %139 : vector<288x64xf32>
    %144 = arith.select %141, %139, %143 : vector<288x64xi1>, vector<288x64xf32>
    %c0_149 = arith.constant 0 : index
    %c0_150 = arith.constant 0 : index
    %145 = vector.load %arg2[%c0_149, %c0_150] : memref<288x1xf32, #tpu.memory_space<vmem>>, vector<288x1xf32>
    %146 = vector.broadcast %145 : vector<288x1xf32> to vector<288x64xf32>
    %147 = arith.mulf %144, %146 : vector<288x64xf32>
    %148 = arith.truncf %147 : vector<288x64xf32> to vector<288x64xbf16>
    %c0_151 = arith.constant 0 : index
    %c128_152 = arith.constant 128 : index
    %149 = vector.load %arg10[%c0_151, %c128_152] : memref<288x256xbf16, #tpu.memory_space<vmem>>, vector<288x64xbf16>
    tpu.vector_store %arg10[%c0_151, %c128_152], %148 {strides = array<i32>} : memref<288x256xbf16, #tpu.memory_space<vmem>>, vector<288x64xbf16>,
    %c19_153 = arith.constant 19 : index
    %c0_154 = arith.constant 0 : index
    %150 = vector.load %arg8[%c19_153, %c0_154] : memref<342x64xf32, #tpu.memory_space<vmem>>, vector<288x64xf32>
    tpu.vector_store %arg8[%c19_153, %c0_154], %147 {strides = array<i32>} : memref<342x64xf32, #tpu.memory_space<vmem>>, vector<288x64xf32>,
    %c0_155 = arith.constant 0 : index
    %c0_156 = arith.constant 0 : index
    %151 = vector.load %arg8[%c0_155, %c0_156] : memref<342x64xf32, #tpu.memory_space<vmem>>, vector<288x64xf32>
    %152 = arith.truncf %151 : vector<288x64xf32> to vector<288x64xbf16>
    %c0_157 = arith.constant 0 : index
    %c0_158 = arith.constant 0 : index
    %153 = vector.load %arg9[%c0_157, %c0_158] : memref<288x576xbf16, #tpu.memory_space<vmem>>, vector<288x64xbf16>
    tpu.vector_store %arg9[%c0_157, %c0_158], %152 {strides = array<i32>} : memref<288x576xbf16, #tpu.memory_space<vmem>>, vector<288x64xbf16>,
    %c1_159 = arith.constant 1 : index
    %c0_160 = arith.constant 0 : index
    %154 = vector.load %arg8[%c1_159, %c0_160] : memref<342x64xf32, #tpu.memory_space<vmem>>, vector<288x64xf32>
    %155 = arith.truncf %154 : vector<288x64xf32> to vector<288x64xbf16>
    %c0_161 = arith.constant 0 : index
    %c64_162 = arith.constant 64 : index
    %156 = vector.load %arg9[%c0_161, %c64_162] : memref<288x576xbf16, #tpu.memory_space<vmem>>, vector<288x64xbf16>
    tpu.vector_store %arg9[%c0_161, %c64_162], %155 {strides = array<i32>} : memref<288x576xbf16, #tpu.memory_space<vmem>>, vector<288x64xbf16>,
    %c2_163 = arith.constant 2 : index
    %c0_164 = arith.constant 0 : index
    %157 = vector.load %arg8[%c2_163, %c0_164] : memref<342x64xf32, #tpu.memory_space<vmem>>, vector<288x64xf32>
    %158 = arith.truncf %157 : vector<288x64xf32> to vector<288x64xbf16>
    %c0_165 = arith.constant 0 : index
    %c128_166 = arith.constant 128 : index
    %159 = vector.load %arg9[%c0_165, %c128_166] : memref<288x576xbf16, #tpu.memory_space<vmem>>, vector<288x64xbf16>
    tpu.vector_store %arg9[%c0_165, %c128_166], %158 {strides = array<i32>} : memref<288x576xbf16, #tpu.memory_space<vmem>>, vector<288x64xbf16>,
    %c18_167 = arith.constant 18 : index
    %c0_168 = arith.constant 0 : index
    %160 = vector.load %arg8[%c18_167, %c0_168] : memref<342x64xf32, #tpu.memory_space<vmem>>, vector<288x64xf32>
    %161 = arith.truncf %160 : vector<288x64xf32> to vector<288x64xbf16>
    %c0_169 = arith.constant 0 : index
    %c192_170 = arith.constant 192 : index
    %162 = vector.load %arg9[%c0_169, %c192_170] : memref<288x576xbf16, #tpu.memory_space<vmem>>, vector<288x64xbf16>
    tpu.vector_store %arg9[%c0_169, %c192_170], %161 {strides = array<i32>} : memref<288x576xbf16, #tpu.memory_space<vmem>>, vector<288x64xbf16>,
    %c19_171 = arith.constant 19 : index
    %c0_172 = arith.constant 0 : index
    %163 = vector.load %arg8[%c19_171, %c0_172] : memref<342x64xf32, #tpu.memory_space<vmem>>, vector<288x64xf32>
    %164 = arith.truncf %163 : vector<288x64xf32> to vector<288x64xbf16>
    %c0_173 = arith.constant 0 : index
    %c256_174 = arith.constant 256 : index
    %165 = vector.load %arg9[%c0_173, %c256_174] : memref<288x576xbf16, #tpu.memory_space<vmem>>, vector<288x64xbf16>
    tpu.vector_store %arg9[%c0_173, %c256_174], %164 {strides = array<i32>} : memref<288x576xbf16, #tpu.memory_space<vmem>>, vector<288x64xbf16>,
    %c20_175 = arith.constant 20 : index
    %c0_176 = arith.constant 0 : index
    %166 = vector.load %arg8[%c20_175, %c0_176] : memref<342x64xf32, #tpu.memory_space<vmem>>, vector<288x64xf32>
    %167 = arith.truncf %166 : vector<288x64xf32> to vector<288x64xbf16>
    %c0_177 = arith.constant 0 : index
    %c320_178 = arith.constant 320 : index
    %168 = vector.load %arg9[%c0_177, %c320_178] : memref<288x576xbf16, #tpu.memory_space<vmem>>, vector<288x64xbf16>
    tpu.vector_store %arg9[%c0_177, %c320_178], %167 {strides = array<i32>} : memref<288x576xbf16, #tpu.memory_space<vmem>>, vector<288x64xbf16>,
    %c36_179 = arith.constant 36 : index
    %c0_180 = arith.constant 0 : index
    %169 = vector.load %arg8[%c36_179, %c0_180] : memref<342x64xf32, #tpu.memory_space<vmem>>, vector<288x64xf32>
    %170 = arith.truncf %169 : vector<288x64xf32> to vector<288x64xbf16>
    %c0_181 = arith.constant 0 : index
    %c384_182 = arith.constant 384 : index
    %171 = vector.load %arg9[%c0_181, %c384_182] : memref<288x576xbf16, #tpu.memory_space<vmem>>, vector<288x64xbf16>
    tpu.vector_store %arg9[%c0_181, %c384_182], %170 {strides = array<i32>} : memref<288x576xbf16, #tpu.memory_space<vmem>>, vector<288x64xbf16>,
    %c37_183 = arith.constant 37 : index
    %c0_184 = arith.constant 0 : index
    %172 = vector.load %arg8[%c37_183, %c0_184] : memref<342x64xf32, #tpu.memory_space<vmem>>, vector<288x64xf32>
    %173 = arith.truncf %172 : vector<288x64xf32> to vector<288x64xbf16>
    %c0_185 = arith.constant 0 : index
    %c448_186 = arith.constant 448 : index
    %174 = vector.load %arg9[%c0_185, %c448_186] : memref<288x576xbf16, #tpu.memory_space<vmem>>, vector<288x64xbf16>
    tpu.vector_store %arg9[%c0_185, %c448_186], %173 {strides = array<i32>} : memref<288x576xbf16, #tpu.memory_space<vmem>>, vector<288x64xbf16>,
    %c38_187 = arith.constant 38 : index
    %c0_188 = arith.constant 0 : index
    %175 = vector.load %arg8[%c38_187, %c0_188] : memref<342x64xf32, #tpu.memory_space<vmem>>, vector<288x64xf32>
    %176 = arith.truncf %175 : vector<288x64xf32> to vector<288x64xbf16>
    %c0_189 = arith.constant 0 : index
    %c512_190 = arith.constant 512 : index
    %177 = vector.load %arg9[%c0_189, %c512_190] : memref<288x576xbf16, #tpu.memory_space<vmem>>, vector<288x64xbf16>
    tpu.vector_store %arg9[%c0_189, %c512_190], %176 {strides = array<i32>} : memref<288x576xbf16, #tpu.memory_space<vmem>>, vector<288x64xbf16>,
    %c0_191 = arith.constant 0 : index
    %c0_192 = arith.constant 0 : index
    %178 = vector.load %arg9[%c0_191, %c0_192] : memref<288x576xbf16, #tpu.memory_space<vmem>>, vector<288x576xbf16>
    %c3 = arith.constant 3 : index
    %c0_193 = arith.constant 0 : index
    %c0_194 = arith.constant 0 : index
    %179 = vector.load %arg3[%c3, %c0_193, %c0_194] : memref<4x576x64xbf16, #tpu.memory_space<vmem>>, vector<1x576x64xbf16>
    %180 = vector.shape_cast %179 : vector<1x576x64xbf16> to vector<576x64xbf16>
    %cst_195 = arith.constant dense<0.000000e+00> : vector<288x64xf32>
    %181 = tpu.matmul %178, %180, %cst_195 {dimension_numbers = #tpu.dot_dimension_numbers<[1], [0], [0], [1], [0, 0, 1, 1], [], []>} : vector<288x576xbf16>, vector<576x64xbf16>, vector<288x64xf32> -> vector<288x64xf32>
    %c3_196 = arith.constant 3 : index
    %c0_197 = arith.constant 0 : index
    %c0_198 = arith.constant 0 : index
    %182 = vector.load %arg4[%c3_196, %c0_197, %c0_198] : memref<4x1x64xf32, #tpu.memory_space<vmem>>, vector<1x1x64xf32>
    %183 = vector.shape_cast %182 : vector<1x1x64xf32> to vector<1x64xf32>
    %184 = vector.broadcast %183 : vector<1x64xf32> to vector<288x64xf32>
    %185 = arith.addf %181, %184 : vector<288x64xf32>
    %cst_199 = arith.constant 0.000000e+00 : f32
    %186 = vector.broadcast %cst_199 : f32 to vector<288x64xf32>
    %187 = arith.cmpf ogt, %185, %186 : vector<288x64xf32>
    %cst_200 = arith.constant 0.00999999977 : f32
    %188 = vector.broadcast %cst_200 : f32 to vector<288x64xf32>
    %189 = arith.mulf %188, %185 : vector<288x64xf32>
    %190 = arith.select %187, %185, %189 : vector<288x64xi1>, vector<288x64xf32>
    %191 = arith.truncf %190 : vector<288x64xf32> to vector<288x64xbf16>
    %c0_201 = arith.constant 0 : index
    %c192_202 = arith.constant 192 : index
    %192 = vector.load %arg10[%c0_201, %c192_202] : memref<288x256xbf16, #tpu.memory_space<vmem>>, vector<288x64xbf16>
    tpu.vector_store %arg10[%c0_201, %c192_202], %191 {strides = array<i32>} : memref<288x256xbf16, #tpu.memory_space<vmem>>, vector<288x64xbf16>,
    %c0_203 = arith.constant 0 : index
    %c0_204 = arith.constant 0 : index
    %193 = vector.load %arg10[%c0_203, %c0_204] : memref<288x256xbf16, #tpu.memory_space<vmem>>, vector<288x256xbf16>
    %c0_205 = arith.constant 0 : index
    %c0_206 = arith.constant 0 : index
    %194 = vector.load %arg5[%c0_205, %c0_206] : memref<256x64xbf16, #tpu.memory_space<vmem>>, vector<256x64xbf16>
    %cst_207 = arith.constant dense<0.000000e+00> : vector<288x64xf32>
    %195 = tpu.matmul %193, %194, %cst_207 {dimension_numbers = #tpu.dot_dimension_numbers<[1], [0], [0], [1], [0, 0, 1, 1], [], []>} : vector<288x256xbf16>, vector<256x64xbf16>, vector<288x64xf32> -> vector<288x64xf32>
    %c0_208 = arith.constant 0 : index
    %c0_209 = arith.constant 0 : index
    %196 = vector.load %arg6[%c0_208, %c0_209] : memref<1x64xf32, #tpu.memory_space<vmem>>, vector<1x64xf32>
    %197 = vector.broadcast %196 : vector<1x64xf32> to vector<288x64xf32>
    %198 = arith.addf %195, %197 : vector<288x64xf32>
    %c0_210 = arith.constant 0 : index
    %c0_211 = arith.constant 0 : index
    %c0_212 = arith.constant 0 : index
    %199 = vector.load %arg7[%c0_210, %c0_211, %c0_212] : memref<1x288x64xf32, #tpu.memory_space<vmem>>, vector<1x288x64xf32>
    %200 = vector.shape_cast %199 : vector<1x288x64xf32> to vector<288x64xf32>
    %201 = vector.shape_cast %198 : vector<288x64xf32> to vector<1x288x64xf32>
    tpu.vector_store %arg7[%c0_210, %c0_211, %c0_212], %201 {strides = array<i32>} : memref<1x288x64xf32, #tpu.memory_space<vmem>>, vector<1x288x64xf32>,
    return
  }
  func.func @transform_0(%arg0: i32) -> (i32, i32, i32) {
    %c0_i32 = arith.constant 0 : i32
    %c0_i32_0 = arith.constant 0 : i32
    %c0_i32_1 = arith.constant 0 : i32
    return %arg0, %c0_i32, %c0_i32_0 : i32, i32, i32
  }
  func.func @transform_1(%arg0: i32) -> (i32, i32) {
    %c0_i32 = arith.constant 0 : i32
    %c0_i32_0 = arith.constant 0 : i32
    %c0_i32_1 = arith.constant 0 : i32
    return %c0_i32, %c0_i32_0 : i32, i32
  }
  func.func @transform_2(%arg0: i32) -> (i32, i32, i32) {
    %c0_i32 = arith.constant 0 : i32
    %c0_i32_0 = arith.constant 0 : i32
    %c0_i32_1 = arith.constant 0 : i32
    %c0_i32_2 = arith.constant 0 : i32
    return %c0_i32, %c0_i32_0, %c0_i32_1 : i32, i32, i32
  }
  func.func @transform_3(%arg0: i32) -> (i32, i32, i32) {
    %c0_i32 = arith.constant 0 : i32
    %c0_i32_0 = arith.constant 0 : i32
    %c0_i32_1 = arith.constant 0 : i32
    %c0_i32_2 = arith.constant 0 : i32
    return %c0_i32, %c0_i32_0, %c0_i32_1 : i32, i32, i32
  }
  func.func @transform_4(%arg0: i32) -> (i32, i32) {
    %c0_i32 = arith.constant 0 : i32
    %c0_i32_0 = arith.constant 0 : i32
    %c0_i32_1 = arith.constant 0 : i32
    return %c0_i32, %c0_i32_0 : i32, i32
  }
  func.func @transform_5(%arg0: i32) -> (i32, i32) {
    %c0_i32 = arith.constant 0 : i32
    %c0_i32_0 = arith.constant 0 : i32
    %c0_i32_1 = arith.constant 0 : i32
    return %c0_i32, %c0_i32_0 : i32, i32
  }
  func.func @transform_6(%arg0: i32) -> (i32, i32, i32) {
    %c0_i32 = arith.constant 0 : i32
    %c0_i32_0 = arith.constant 0 : i32
    %c0_i32_1 = arith.constant 0 : i32
    return %arg0, %c0_i32, %c0_i32_0 : i32, i32, i32
  }
}

</mosaic_0001>

<llo_original>
// kernel: imdb_forward.1
$region0: #{imdb_forward.1}
  #allocation0 [shape = 'u32[]', space=smem, size = 0x4, offset = 0x4, fixed_abs, tag = 'smem constant byte address 0x4 - core index']
  #allocation1 [shape = 'u32[144,128]{1,0:T(1,128)}', space=vmem, size = 0x12000, scoped, tag = 'internal scratch']
  #allocation2 [shape = 'f32[342,64]{1,0:T(8,128)}', space=vmem, size = 0x2b000, scoped, tag = 'scratch operand']
  #allocation3 [shape = 'bf16[288,576]{1,0:T(16,128)(2,1)}', space=vmem, size = 0x5a000, scoped, tag = 'scratch operand']
  #allocation4 [shape = 'bf16[288,256]{1,0:T(16,128)(2,1)}', space=vmem, size = 0x24000, scoped, tag = 'scratch operand']
  %s0 = inlined_call_operand.vmem [shape: f32[2,342,64], index: 0, kind: input, shape index: {}]
  %s1 = inlined_call_operand.vmem [shape: f32[288,1], index: 1, kind: input, shape index: {}]
  %s2 = inlined_call_operand.vmem [shape: bf16[4,576,64], index: 2, kind: input, shape index: {}]
  %s3 = inlined_call_operand.vmem [shape: f32[4,1,64], index: 3, kind: input, shape index: {}]
  %s4 = inlined_call_operand.vmem [shape: bf16[256,64], index: 4, kind: input, shape index: {}]
  %s5 = inlined_call_operand.vmem [shape: f32[1,64], index: 5, kind: input, shape index: {}]
  %s6 = inlined_call_operand.vmem [shape: f32[2,288,64], index: 6, kind: output, shape index: {}]
  %s7 = sld [smem:[#allocation0]]
  $region57: #{imdb_forward.1} parent=0
    _
  %s9 = ssub.s32 1, %s7
  %s10 = scalar_select 0, %s9, %s7
  loop: start=0, step=1, limit=4
  $region2: #{imdb_forward.1} parent=0 // loop_pre_header
    _
  $region3: #{imdb_forward.1} parent=0 // loop_header
    %s12 = sphi 0, %s16
    %p13 = scmp.ge.s32.totalorder %s12, 4
    %s22 = sphi 0, %s24
    %s25 = sphi 0, %s22
    %s26 = sphi 0, %s25
    %s42 = sphi 0, %s26
    %s46 = sphi 0, %s46
    %s48 = sphi 0, %s46
    %s49 = sphi 0, %s48
    %s63 = sphi 0, %s49
    %s67 = sphi 0, %s67
    %s69 = sphi 0, %s67
    %s70 = sphi 0, %s69
    %s84 = sphi 0, %s70
    %s88 = sphi 0, %s88
    %s90 = sphi 0, %s88
    %s91 = sphi 0, %s90
    %s105 = sphi 0, %s91
    %s109 = sphi 0, %s109
    %s111 = sphi 0, %s109
    %s112 = sphi 0, %s111
    %s126 = sphi 0, %s112
    %s130 = sphi 0, %s130
    %s132 = sphi 0, %s130
    %s133 = sphi 0, %s132
    %s147 = sphi 0, %s133
    %s153 = sphi 0, %s155
    %s156 = sphi 0, %s153
    %s157 = sphi 0, %s156
    %s173 = sphi 0, %s157
  $region4: #{imdb_forward.1} parent=0 // loop_header_branch
    %15 = sbr.rel (%p13) target = $region8
  $region5: #{imdb_forward.1} parent=0 // loop_body
    %s17 = ssub.s32 %s12, 1
    %s18 = ssub.s32 %s12, 2
    %s19 = sadd.s32 %s12, 1
    %s20 = ssub.s32 %s12, %s19
    %p21 = scmp.eq.s32.totalorder %s20, 0
    %s23 = sadd.s32 %s22, 1
    %s24 = scalar_select %p21, %s22, %s23
    %p27 = pneg %p21
    %p28 = scmp.eq.s32.totalorder %s12, 1
    %p29 = por %p27, %p28
    %p30 = scmp.ne.s32.totalorder %s22, %s25
    %p31 = scmp.eq.s32.totalorder %s12, 0
    %p32 = por %p30, %p31
    %p33 = scmp.ne.s32.totalorder %s22, %s25
    %p34 = scmp.eq.s32.totalorder %s17, 1
    %p35 = por %p33, %p34
    %p36 = scmp.ne.s32.totalorder %s25, %s26
    %p37 = scmp.eq.s32.totalorder %s17, 0
    %p38 = por %p36, %p37
    %p39 = scmp.ne.s32.totalorder %s25, %s26
    %p40 = scmp.eq.s32.totalorder %s18, 1
    %p41 = por %p39, %p40
    %p43 = scmp.ne.s32.totalorder %s26, %s42
    %p44 = scmp.eq.s32.totalorder %s18, 0
    %p45 = por %p43, %p44
    %s47 = sadd.s32 %s46, 1
    %p50 = scmp.eq.s32.totalorder %s12, 1
    %p51 = scmp.ne.s32.totalorder %s46, %s48
    %p52 = scmp.eq.s32.totalorder %s12, 0
    %p53 = por %p51, %p52
    %p54 = scmp.ne.s32.totalorder %s46, %s48
    %p55 = scmp.eq.s32.totalorder %s17, 1
    %p56 = por %p54, %p55
    %p57 = scmp.ne.s32.totalorder %s48, %s49
    %p58 = scmp.eq.s32.totalorder %s17, 0
    %p59 = por %p57, %p58
    %p60 = scmp.ne.s32.totalorder %s48, %s49
    %p61 = scmp.eq.s32.totalorder %s18, 1
    %p62 = por %p60, %p61
    %p64 = scmp.ne.s32.totalorder %s49, %s63
    %p65 = scmp.eq.s32.totalorder %s18, 0
    %p66 = por %p64, %p65
    %s68 = sadd.s32 %s67, 1
    %p71 = scmp.eq.s32.totalorder %s12, 1
    %p72 = scmp.ne.s32.totalorder %s67, %s69
    %p73 = scmp.eq.s32.totalorder %s12, 0
    %p74 = por %p72, %p73
    %p75 = scmp.ne.s32.totalorder %s67, %s69
    %p76 = scmp.eq.s32.totalorder %s17, 1
    %p77 = por %p75, %p76
    %p78 = scmp.ne.s32.totalorder %s69, %s70
    %p79 = scmp.eq.s32.totalorder %s17, 0
    %p80 = por %p78, %p79
    %p81 = scmp.ne.s32.totalorder %s69, %s70
    %p82 = scmp.eq.s32.totalorder %s18, 1
    %p83 = por %p81, %p82
    %p85 = scmp.ne.s32.totalorder %s70, %s84
    %p86 = scmp.eq.s32.totalorder %s18, 0
    %p87 = por %p85, %p86
    %s89 = sadd.s32 %s88, 1
    %p92 = scmp.eq.s32.totalorder %s12, 1
    %p93 = scmp.ne.s32.totalorder %s88, %s90
    %p94 = scmp.eq.s32.totalorder %s12, 0
    %p95 = por %p93, %p94
    %p96 = scmp.ne.s32.totalorder %s88, %s90
    %p97 = scmp.eq.s32.totalorder %s17, 1
    %p98 = por %p96, %p97
    %p99 = scmp.ne.s32.totalorder %s90, %s91
    %p100 = scmp.eq.s32.totalorder %s17, 0
    %p101 = por %p99, %p100
    %p102 = scmp.ne.s32.totalorder %s90, %s91
    %p103 = scmp.eq.s32.totalorder %s18, 1
    %p104 = por %p102, %p103
    %p106 = scmp.ne.s32.totalorder %s91, %s105
    %p107 = scmp.eq.s32.totalorder %s18, 0
    %p108 = por %p106, %p107
    %s110 = sadd.s32 %s109, 1
    %p113 = scmp.eq.s32.totalorder %s12, 1
    %p114 = scmp.ne.s32.totalorder %s109, %s111
    %p115 = scmp.eq.s32.totalorder %s12, 0
    %p116 = por %p114, %p115
    %p117 = scmp.ne.s32.totalorder %s109, %s111
    %p118 = scmp.eq.s32.totalorder %s17, 1
    %p119 = por %p117, %p118
    %p120 = scmp.ne.s32.totalorder %s111, %s112
    %p121 = scmp.eq.s32.totalorder %s17, 0
    %p122 = por %p120, %p121
    %p123 = scmp.ne.s32.totalorder %s111, %s112
    %p124 = scmp.eq.s32.totalorder %s18, 1
    %p125 = por %p123, %p124
    %p127 = scmp.ne.s32.totalorder %s112, %s126
    %p128 = scmp.eq.s32.totalorder %s18, 0
    %p129 = por %p127, %p128
    %s131 = sadd.s32 %s130, 1
    %p134 = scmp.eq.s32.totalorder %s12, 1
    %p135 = scmp.ne.s32.totalorder %s130, %s132
    %p136 = scmp.eq.s32.totalorder %s12, 0
    %p137 = por %p135, %p136
    %p138 = scmp.ne.s32.totalorder %s130, %s132
    %p139 = scmp.eq.s32.totalorder %s17, 1
    %p140 = por %p138, %p139
    %p141 = scmp.ne.s32.totalorder %s132, %s133
    %p142 = scmp.eq.s32.totalorder %s17, 0
    %p143 = por %p141, %p142
    %p144 = scmp.ne.s32.totalorder %s132, %s133
    %p145 = scmp.eq.s32.totalorder %s18, 1
    %p146 = por %p144, %p145
    %p148 = scmp.ne.s32.totalorder %s133, %s147
    %p149 = scmp.eq.s32.totalorder %s18, 0
    %p150 = por %p148, %p149
    %s151 = ssub.s32 %s12, %s19
    %p152 = scmp.eq.s32.totalorder %s151, 0
    %s154 = sadd.s32 %s153, 1
    %s155 = scalar_select %p152, %s153, %s154
    %p158 = pneg %p152
    %p159 = scmp.eq.s32.totalorder %s12, 1
    %p160 = por %p158, %p159
    %p161 = scmp.ne.s32.totalorder %s153, %s156
    %p162 = scmp.eq.s32.totalorder %s12, 0
    %p163 = por %p161, %p162
    %p164 = scmp.ne.s32.totalorder %s153, %s156
    %p165 = scmp.eq.s32.totalorder %s17, 1
    %p166 = por %p164, %p165
    %p167 = scmp.ne.s32.totalorder %s156, %s157
    %p168 = scmp.eq.s32.totalorder %s17, 0
    %p169 = por %p167, %p168
    %p170 = scmp.ne.s32.totalorder %s156, %s157
    %p171 = scmp.eq.s32.totalorder %s18, 1
    %p172 = por %p170, %p171
    %p174 = scmp.ne.s32.totalorder %s157, %s173
    %p175 = scmp.eq.s32.totalorder %s18, 0
    %p176 = por %p174, %p175
    %p177 = scmp.le.s32.totalorder 1, %s12
    %p178 = scmp.lt.s32.totalorder %s12, 3
    %p179 = pnand %p177, %p178
    %p180 = pneg %p179
    // Predicated region
    $region9: #{imdb_forward.1} parent=5 // pred_check
      _
    $region10: #{imdb_forward.1} parent=5 // pred_check_branch
      %182 = sbr.rel (%p179) target = $region12
    $region11: #{imdb_forward.1} parent=5 // pred_region
      %s183 = ssub.s32 %s12, 1
      // Predicated region
      $region13: #{imdb_forward.1} parent=11 // pred_check
        %p184 = pneg %p59
      $region14: #{imdb_forward.1} parent=11 // pred_check_branch
        %186 = sbr.rel (%p184) target = $region16
      $region15: #{imdb_forward.1} parent=11 // pred_region
        _
      $region16: #{imdb_forward.1} parent=11 // pred_fallthru
        _
      // Predicated region
      $region17: #{imdb_forward.1} parent=11 // pred_check
        %p187 = pneg %p80
      $region18: #{imdb_forward.1} parent=11 // pred_check_branch
        %189 = sbr.rel (%p187) target = $region20
      $region19: #{imdb_forward.1} parent=11 // pred_region
        _
      $region20: #{imdb_forward.1} parent=11 // pred_fallthru
        _
      // Predicated region
      $region21: #{imdb_forward.1} parent=11 // pred_check
        %p190 = pneg %p101
      $region22: #{imdb_forward.1} parent=11 // pred_check_branch
        %192 = sbr.rel (%p190) target = $region24
      $region23: #{imdb_forward.1} parent=11 // pred_region
        _
      $region24: #{imdb_forward.1} parent=11 // pred_fallthru
        _
      // Predicated region
      $region25: #{imdb_forward.1} parent=11 // pred_check
        %p193 = pneg %p122
      $region26: #{imdb_forward.1} parent=11 // pred_check_branch
        %195 = sbr.rel (%p193) target = $region28
      $region27: #{imdb_forward.1} parent=11 // pred_region
        _
      $region28: #{imdb_forward.1} parent=11 // pred_fallthru
        _
      // Predicated region
      $region29: #{imdb_forward.1} parent=11 // pred_check
        %p196 = pneg %p143
      $region30: #{imdb_forward.1} parent=11 // pred_check_branch
        %198 = sbr.rel (%p196) target = $region32
      $region31: #{imdb_forward.1} parent=11 // pred_region
        _
      $region32: #{imdb_forward.1} parent=11 // pred_fallthru
        _
    $region12: #{imdb_forward.1} parent=5 // pred_fallthru
      _
    %p199 = scmp.lt.s32.totalorder %s12, 2
    // Predicated region
    $region33: #{imdb_forward.1} parent=5 // pred_check
      %p200 = pneg %p199
    $region34: #{imdb_forward.1} parent=5 // pred_check_branch
      %202 = sbr.rel (%p200) target = $region36
    $region35: #{imdb_forward.1} parent=5 // pred_region
      // Predicated region
      $region37: #{imdb_forward.1} parent=35 // pred_check
        %p203 = pneg %p32
      $region38: #{imdb_forward.1} parent=35 // pred_check_branch
        %205 = sbr.rel (%p203) target = $region40
      $region39: #{imdb_forward.1} parent=35 // pred_region
        %p206 = scmp.lt.s32.totalorder %s12, 1
        %s207 = scalar_select %p206, %s12, 1
        %s208 = smul.addr %s207, 43
        %s209 = smul.addr %s208, 8
        %s210 = scalar_lea.vmem %s0, %s209
      $region40: #{imdb_forward.1} parent=35 // pred_fallthru
        _
    $region36: #{imdb_forward.1} parent=5 // pred_fallthru
      _
    %p211 = scmp.le.s32.totalorder 1, %s12
    %p212 = scmp.lt.s32.totalorder %s12, 3
    %p213 = pnand %p211, %p212
    %p214 = pneg %p213
    // Predicated region
    $region41: #{imdb_forward.1} parent=5 // pred_check
      _
    $region42: #{imdb_forward.1} parent=5 // pred_check_branch
      %216 = sbr.rel (%p213) target = $region44
    $region43: #{imdb_forward.1} parent=5 // pred_region
      %s217 = ssub.s32 %s12, 1
      %p218 = scmp.lt.s32.totalorder %s17, 1
      %s219 = scalar_select %p218, %s17, 1
      %s220 = smul.addr %s219, 43
      %s221 = smul.addr %s220, 8
      %s222 = scalar_lea.vmem %s0, %s221
      %p223 = pneg %p38
      %p224 = pneg %p35
      %p225 = pneg %p59
      %p226 = pneg %p56
      %p227 = pneg %p80
      %p228 = pneg %p77
      %p229 = pneg %p101
      %p230 = pneg %p98
      %p231 = pneg %p122
      %p232 = pneg %p119
      %p233 = pneg %p143
      %p234 = pneg %p140
      %p235 = pneg %p169
      %p236 = pneg %p166
      %p237 = scmp.lt.s32.totalorder %s17, 1
      %s238 = scalar_select %p237, %s17, 1
      %s239 = smul.addr %s238, 36
      %s240 = smul.addr %s239, 8
      %s241 = scalar_lea.vmem %s6, %s240
      %p242 = scmp.lt.s32.totalorder %s17, 1
      %s243 = scalar_select %p242, %s17, 1
      %s244 = smul.addr %s243, 43
      %s245 = smul.addr %s244, 8
      %s246 = scalar_lea.vmem %s0, %s245
      %p247 = scmp.lt.s32.totalorder %s17, 1
      %s248 = scalar_select %p247, %s17, 1
      %s249 = smul.addr %s248, 36
      %s250 = smul.addr %s249, 8
      %s251 = scalar_lea.vmem %s6, %s250
      %vm253 = vcmask 523264
      %254 = vst.msk [vmem:[#allocation2] sm:$0xff] %vm253, 0.0
      %255 = vst.msk [vmem:[#allocation2 + $0x8] sm:$0xff] %vm253, 0.0
      %vm256 = vcmask 518144
      %257 = vst.msk [vmem:[#allocation2 + $0x10] sm:$0x7] %vm256, 0.0
      %258 = vst.msk [vmem:[#allocation2 + $0x133] sm:$0xff] %vm253, 0.0
      %259 = vst.msk [vmem:[#allocation2 + $0x13b] sm:$0xff] %vm253, 0.0
      %260 = vst.msk [vmem:[#allocation2 + $0x143] sm:$0xff] %vm253, 0.0
      %261 = vst.msk [vmem:[#allocation2 + $0x14b] sm:$0xff] %vm253, 0.0
      %262 = vst.msk [vmem:[#allocation2 + $0x153] sm:$0x7] %vm256, 0.0
      %v263 = vld [vmem:[%s246] sm:$0xff]
      %v264 = vld [vmem:[%s246 + $0x8] sm:$0xff]
      %v265 = vld [vmem:[%s246 + $0x10] sm:$0xff]
      %v266 = vld [vmem:[%s246 + $0x18] sm:$0xff]
      %v267 = vld [vmem:[%s246 + $0x20] sm:$0xff]
      %v268 = vld [vmem:[%s246 + $0x28] sm:$0xff]
      %v269 = vld [vmem:[%s246 + $0x30] sm:$0xff]
      %v270 = vld [vmem:[%s246 + $0x38] sm:$0xff]
      %v271 = vld [vmem:[%s246 + $0x40] sm:$0xff]
      %v272 = vld [vmem:[%s246 + $0x48] sm:$0xff]
      %v273 = vld [vmem:[%s246 + $0x50] sm:$0xff]
      %v274 = vld [vmem:[%s246 + $0x58] sm:$0xff]
      %v275 = vld [vmem:[%s246 + $0x60] sm:$0xff]
      %v276 = vld [vmem:[%s246 + $0x68] sm:$0xff]
      %v277 = vld [vmem:[%s246 + $0x70] sm:$0xff]
      %v278 = vld [vmem:[%s246 + $0x78] sm:$0xff]
      %v279 = vld [vmem:[%s246 + $0x80] sm:$0xff]
      %v280 = vld [vmem:[%s246 + $0x88] sm:$0xff]
      %v281 = vld [vmem:[%s246 + $0x90] sm:$0xff]
      %v282 = vld [vmem:[%s246 + $0x98] sm:$0xff]
      %v283 = vld [vmem:[%s246 + $0xa0] sm:$0xff]
      %v284 = vld [vmem:[%s246 + $0xa8] sm:$0xff]
      %v285 = vld [vmem:[%s246 + $0xb0] sm:$0xff]
      %v286 = vld [vmem:[%s246 + $0xb8] sm:$0xff]
      %v287 = vld [vmem:[%s246 + $0xc0] sm:$0xff]
      %v288 = vld [vmem:[%s246 + $0xc8] sm:$0xff]
      %v289 = vld [vmem:[%s246 + $0xd0] sm:$0xff]
      %v290 = vld [vmem:[%s246 + $0xd8] sm:$0xff]
      %v291 = vld [vmem:[%s246 + $0xe0] sm:$0xff]
      %v292 = vld [vmem:[%s246 + $0xe8] sm:$0xff]
      %v293 = vld [vmem:[%s246 + $0xf0] sm:$0xff]
      %v294 = vld [vmem:[%s246 + $0xf8] sm:$0xff]
      %v295 = vld [vmem:[%s246 + $0x100] sm:$0xff]
      %v296 = vld [vmem:[%s246 + $0x108] sm:$0xff]
      %v297 = vld [vmem:[%s246 + $0x110] sm:$0xff]
      %v298 = vld [vmem:[%s246 + $0x118] sm:$0xff]
      %v299 = vpack.c.bf16 %v264, %v263
      %v300 = vpack.c.bf16 %v266, %v265
      %v301 = vpack.c.bf16 %v268, %v267
      %v302 = vpack.c.bf16 %v270, %v269
      %v303 = vpack.c.bf16 %v272, %v271
      %v304 = vpack.c.bf16 %v274, %v273
      %v305 = vpack.c.bf16 %v276, %v275
      %v306 = vpack.c.bf16 %v278, %v277
      %v307 = vpack.c.bf16 %v280, %v279
      %v308 = vpack.c.bf16 %v282, %v281
      %v309 = vpack.c.bf16 %v284, %v283
      %v310 = vpack.c.bf16 %v286, %v285
      %v311 = vpack.c.bf16 %v288, %v287
      %v312 = vpack.c.bf16 %v290, %v289
      %v313 = vpack.c.bf16 %v292, %v291
      %v314 = vpack.c.bf16 %v294, %v293
      %v315 = vpack.c.bf16 %v296, %v295
      %v316 = vpack.c.bf16 %v298, %v297
      %317 = vst.msk [vmem:[#allocation3] sm:$0xff] %vm253, %v299
      %318 = vst.msk [vmem:[#allocation3 + $0x28] sm:$0xff] %vm253, %v300
      %319 = vst.msk [vmem:[#allocation3 + $0x50] sm:$0xff] %vm253, %v301
      %320 = vst.msk [vmem:[#allocation3 + $0x78] sm:$0xff] %vm253, %v302
      %321 = vst.msk [vmem:[#allocation3 + $0xa0] sm:$0xff] %vm253, %v303
      %322 = vst.msk [vmem:[#allocation3 + $0xc8] sm:$0xff] %vm253, %v304
      %323 = vst.msk [vmem:[#allocation3 + $0xf0] sm:$0xff] %vm253, %v305
      %324 = vst.msk [vmem:[#allocation3 + $0x118] sm:$0xff] %vm253, %v306
      %325 = vst.msk [vmem:[#allocation3 + $0x140] sm:$0xff] %vm253, %v307
      %326 = vst.msk [vmem:[#allocation3 + $0x168] sm:$0xff] %vm253, %v308
      %327 = vst.msk [vmem:[#allocation3 + $0x190] sm:$0xff] %vm253, %v309
      %328 = vst.msk [vmem:[#allocation3 + $0x1b8] sm:$0xff] %vm253, %v310
      %329 = vst.msk [vmem:[#allocation3 + $0x1e0] sm:$0xff] %vm253, %v311
      %330 = vst.msk [vmem:[#allocation3 + $0x208] sm:$0xff] %vm253, %v312
      %331 = vst.msk [vmem:[#allocation3 + $0x230] sm:$0xff] %vm253, %v313
      %332 = vst.msk [vmem:[#allocation3 + $0x258] sm:$0xff] %vm253, %v314
      %333 = vst.msk [vmem:[#allocation3 + $0x280] sm:$0xff] %vm253, %v315
      %334 = vst.msk [vmem:[#allocation3 + $0x2a8] sm:$0xff] %vm253, %v316
      %v335 = vld [vmem:[%s246 + $0x1] sm:$0xff]
      %v336 = vld [vmem:[%s246 + $0x9] sm:$0xff]
      %v337 = vld [vmem:[%s246 + $0x11] sm:$0xff]
      %v338 = vld [vmem:[%s246 + $0x19] sm:$0xff]
      %v339 = vld [vmem:[%s246 + $0x21] sm:$0xff]
      %v340 = vld [vmem:[%s246 + $0x29] sm:$0xff]
      %v341 = vld [vmem:[%s246 + $0x31] sm:$0xff]
      %v342 = vld [vmem:[%s246 + $0x39] sm:$0xff]
      %v343 = vld [vmem:[%s246 + $0x41] sm:$0xff]
      %v344 = vld [vmem:[%s246 + $0x49] sm:$0xff]
      %v345 = vld [vmem:[%s246 + $0x51] sm:$0xff]
      %v346 = vld [vmem:[%s246 + $0x59] sm:$0xff]
      %v347 = vld [vmem:[%s246 + $0x61] sm:$0xff]
      %v348 = vld [vmem:[%s246 + $0x69] sm:$0xff]
      %v349 = vld [vmem:[%s246 + $0x71] sm:$0xff]
      %v350 = vld [vmem:[%s246 + $0x79] sm:$0xff]
      %v351 = vld [vmem:[%s246 + $0x81] sm:$0xff]
      %v352 = vld [vmem:[%s246 + $0x89] sm:$0xff]
      %v353 = vld [vmem:[%s246 + $0x91] sm:$0xff]
      %v354 = vld [vmem:[%s246 + $0x99] sm:$0xff]
      %v355 = vld [vmem:[%s246 + $0xa1] sm:$0xff]
      %v356 = vld [vmem:[%s246 + $0xa9] sm:$0xff]
      %v357 = vld [vmem:[%s246 + $0xb1] sm:$0xff]
      %v358 = vld [vmem:[%s246 + $0xb9] sm:$0xff]
      %v359 = vld [vmem:[%s246 + $0xc1] sm:$0xff]
      %v360 = vld [vmem:[%s246 + $0xc9] sm:$0xff]
      %v361 = vld [vmem:[%s246 + $0xd1] sm:$0xff]
      %v362 = vld [vmem:[%s246 + $0xd9] sm:$0xff]
      %v363 = vld [vmem:[%s246 + $0xe1] sm:$0xff]
      %v364 = vld [vmem:[%s246 + $0xe9] sm:$0xff]
      %v365 = vld [vmem:[%s246 + $0xf1] sm:$0xff]
      %v366 = vld [vmem:[%s246 + $0xf9] sm:$0xff]
      %v367 = vld [vmem:[%s246 + $0x101] sm:$0xff]
      %v368 = vld [vmem:[%s246 + $0x109] sm:$0xff]
      %v369 = vld [vmem:[%s246 + $0x111] sm:$0xff]
      %v370 = vld [vmem:[%s246 + $0x119] sm:$0xff]
      %v371 = vpack.c.bf16 %v336, %v335
      %v372 = vpack.c.bf16 %v338, %v337
      %v373 = vpack.c.bf16 %v340, %v339
      %v374 = vpack.c.bf16 %v342, %v341
      %v375 = vpack.c.bf16 %v344, %v343
      %v376 = vpack.c.bf16 %v346, %v345
      %v377 = vpack.c.bf16 %v348, %v347
      %v378 = vpack.c.bf16 %v350, %v349
      %v379 = vpack.c.bf16 %v352, %v351
      %v380 = vpack.c.bf16 %v354, %v353
      %v381 = vpack.c.bf16 %v356, %v355
      %v382 = vpack.c.bf16 %v358, %v357
      %v383 = vpack.c.bf16 %v360, %v359
      %v384 = vpack.c.bf16 %v362, %v361
      %v385 = vpack.c.bf16 %v364, %v363
      %v386 = vpack.c.bf16 %v366, %v365
      %v387 = vpack.c.bf16 %v368, %v367
      %v388 = vpack.c.bf16 %v370, %v369
      %407 = vrot.lane.b32.xlu0 %v371, 64
      %v408 = vpop.permute.xlu0 %407
      %409 = vrot.lane.b32.xlu0 %v372, 64
      %v410 = vpop.permute.xlu0 %409
      %411 = vrot.lane.b32.xlu0 %v373, 64
      %v412 = vpop.permute.xlu0 %411
      %413 = vrot.lane.b32.xlu0 %v374, 64
      %v414 = vpop.permute.xlu0 %413
      %415 = vrot.lane.b32.xlu0 %v375, 64
      %v416 = vpop.permute.xlu0 %415
      %417 = vrot.lane.b32.xlu0 %v376, 64
      %v418 = vpop.permute.xlu0 %417
      %419 = vrot.lane.b32.xlu0 %v377, 64
      %v420 = vpop.permute.xlu0 %419
      %421 = vrot.lane.b32.xlu0 %v378, 64
      %v422 = vpop.permute.xlu0 %421
      %423 = vrot.lane.b32.xlu0 %v379, 64
      %v424 = vpop.permute.xlu0 %423
      %425 = vrot.lane.b32.xlu0 %v380, 64
      %v426 = vpop.permute.xlu0 %425
      %427 = vrot.lane.b32.xlu0 %v381, 64
      %v428 = vpop.permute.xlu0 %427
      %429 = vrot.lane.b32.xlu0 %v382, 64
      %v430 = vpop.permute.xlu0 %429
      %431 = vrot.lane.b32.xlu0 %v383, 64
      %v432 = vpop.permute.xlu0 %431
      %433 = vrot.lane.b32.xlu0 %v384, 64
      %v434 = vpop.permute.xlu0 %433
      %435 = vrot.lane.b32.xlu0 %v385, 64
      %v436 = vpop.permute.xlu0 %435
      %437 = vrot.lane.b32.xlu0 %v386, 64
      %v438 = vpop.permute.xlu0 %437
      %439 = vrot.lane.b32.xlu0 %v387, 64
      %v440 = vpop.permute.xlu0 %439
      %441 = vrot.lane.b32.xlu0 %v388, 64
      %v442 = vpop.permute.xlu0 %441
      %vm461 = vcmask 1048064
      %462 = vst.msk [vmem:[#allocation3] sm:$0xff] %vm461, %v408
      %463 = vst.msk [vmem:[#allocation3 + $0x28] sm:$0xff] %vm461, %v410
      %464 = vst.msk [vmem:[#allocation3 + $0x50] sm:$0xff] %vm461, %v412
      %465 = vst.msk [vmem:[#allocation3 + $0x78] sm:$0xff] %vm461, %v414
      %466 = vst.msk [vmem:[#allocation3 + $0xa0] sm:$0xff] %vm461, %v416
      %467 = vst.msk [vmem:[#allocation3 + $0xc8] sm:$0xff] %vm461, %v418
      %468 = vst.msk [vmem:[#allocation3 + $0xf0] sm:$0xff] %vm461, %v420
      %469 = vst.msk [vmem:[#allocation3 + $0x118] sm:$0xff] %vm461, %v422
      %470 = vst.msk [vmem:[#allocation3 + $0x140] sm:$0xff] %vm461, %v424
      %471 = vst.msk [vmem:[#allocation3 + $0x168] sm:$0xff] %vm461, %v426
      %472 = vst.msk [vmem:[#allocation3 + $0x190] sm:$0xff] %vm461, %v428
      %473 = vst.msk [vmem:[#allocation3 + $0x1b8] sm:$0xff] %vm461, %v430
      %474 = vst.msk [vmem:[#allocation3 + $0x1e0] sm:$0xff] %vm461, %v432
      %475 = vst.msk [vmem:[#allocation3 + $0x208] sm:$0xff] %vm461, %v434
      %476 = vst.msk [vmem:[#allocation3 + $0x230] sm:$0xff] %vm461, %v436
      %477 = vst.msk [vmem:[#allocation3 + $0x258] sm:$0xff] %vm461, %v438
      %478 = vst.msk [vmem:[#allocation3 + $0x280] sm:$0xff] %vm461, %v440
      %479 = vst.msk [vmem:[#allocation3 + $0x2a8] sm:$0xff] %vm461, %v442
      %v480 = vld [vmem:[%s246 + $0x2] sm:$0xff]
      %v481 = vld [vmem:[%s246 + $0xa] sm:$0xff]
      %v482 = vld [vmem:[%s246 + $0x12] sm:$0xff]
      %v483 = vld [vmem:[%s246 + $0x1a] sm:$0xff]
      %v484 = vld [vmem:[%s246 + $0x22] sm:$0xff]
      %v485 = vld [vmem:[%s246 + $0x2a] sm:$0xff]
      %v486 = vld [vmem:[%s246 + $0x32] sm:$0xff]
      %v487 = vld [vmem:[%s246 + $0x3a] sm:$0xff]
      %v488 = vld [vmem:[%s246 + $0x42] sm:$0xff]
      %v489 = vld [vmem:[%s246 + $0x4a] sm:$0xff]
      %v490 = vld [vmem:[%s246 + $0x52] sm:$0xff]
      %v491 = vld [vmem:[%s246 + $0x5a] sm:$0xff]
      %v492 = vld [vmem:[%s246 + $0x62] sm:$0xff]
      %v493 = vld [vmem:[%s246 + $0x6a] sm:$0xff]
      %v494 = vld [vmem:[%s246 + $0x72] sm:$0xff]
      %v495 = vld [vmem:[%s246 + $0x7a] sm:$0xff]
      %v496 = vld [vmem:[%s246 + $0x82] sm:$0xff]
      %v497 = vld [vmem:[%s246 + $0x8a] sm:$0xff]
      %v498 = vld [vmem:[%s246 + $0x92] sm:$0xff]
      %v499 = vld [vmem:[%s246 + $0x9a] sm:$0xff]
      %v500 = vld [vmem:[%s246 + $0xa2] sm:$0xff]
      %v501 = vld [vmem:[%s246 + $0xaa] sm:$0xff]
      %v502 = vld [vmem:[%s246 + $0xb2] sm:$0xff]
      %v503 = vld [vmem:[%s246 + $0xba] sm:$0xff]
      %v504 = vld [vmem:[%s246 + $0xc2] sm:$0xff]
      %v505 = vld [vmem:[%s246 + $0xca] sm:$0xff]
      %v506 = vld [vmem:[%s246 + $0xd2] sm:$0xff]
      %v507 = vld [vmem:[%s246 + $0xda] sm:$0xff]
      %v508 = vld [vmem:[%s246 + $0xe2] sm:$0xff]
      %v509 = vld [vmem:[%s246 + $0xea] sm:$0xff]
      %v510 = vld [vmem:[%s246 + $0xf2] sm:$0xff]
      %v511 = vld [vmem:[%s246 + $0xfa] sm:$0xff]
      %v512 = vld [vmem:[%s246 + $0x102] sm:$0xff]
      %v513 = vld [vmem:[%s246 + $0x10a] sm:$0xff]
      %v514 = vld [vmem:[%s246 + $0x112] sm:$0xff]
      %v515 = vld [vmem:[%s246 + $0x11a] sm:$0xff]
      %v516 = vpack.c.bf16 %v481, %v480
      %v517 = vpack.c.bf16 %v483, %v482
      %v518 = vpack.c.bf16 %v485, %v484
      %v519 = vpack.c.bf16 %v487, %v486
      %v520 = vpack.c.bf16 %v489, %v488
      %v521 = vpack.c.bf16 %v491, %v490
      %v522 = vpack.c.bf16 %v493, %v492
      %v523 = vpack.c.bf16 %v495, %v494
      %v524 = vpack.c.bf16 %v497, %v496
      %v525 = vpack.c.bf16 %v499, %v498
      %v526 = vpack.c.bf16 %v501, %v500
      %v527 = vpack.c.bf16 %v503, %v502
      %v528 = vpack.c.bf16 %v505, %v504
      %v529 = vpack.c.bf16 %v507, %v506
      %v530 = vpack.c.bf16 %v509, %v508
      %v531 = vpack.c.bf16 %v511, %v510
      %v532 = vpack.c.bf16 %v513, %v512
      %v533 = vpack.c.bf16 %v515, %v514
      %534 = vst.msk [vmem:[#allocation3 + $0x8] sm:$0xff] %vm253, %v516
      %535 = vst.msk [vmem:[#allocation3 + $0x30] sm:$0xff] %vm253, %v517
      %536 = vst.msk [vmem:[#allocation3 + $0x58] sm:$0xff] %vm253, %v518
      %537 = vst.msk [vmem:[#allocation3 + $0x80] sm:$0xff] %vm253, %v519
      %538 = vst.msk [vmem:[#allocation3 + $0xa8] sm:$0xff] %vm253, %v520
      %539 = vst.msk [vmem:[#allocation3 + $0xd0] sm:$0xff] %vm253, %v521
      %540 = vst.msk [vmem:[#allocation3 + $0xf8] sm:$0xff] %vm253, %v522
      %541 = vst.msk [vmem:[#allocation3 + $0x120] sm:$0xff] %vm253, %v523
      %542 = vst.msk [vmem:[#allocation3 + $0x148] sm:$0xff] %vm253, %v524
      %543 = vst.msk [vmem:[#allocation3 + $0x170] sm:$0xff] %vm253, %v525
      %544 = vst.msk [vmem:[#allocation3 + $0x198] sm:$0xff] %vm253, %v526
      %545 = vst.msk [vmem:[#allocation3 + $0x1c0] sm:$0xff] %vm253, %v527
      %546 = vst.msk [vmem:[#allocation3 + $0x1e8] sm:$0xff] %vm253, %v528
      %547 = vst.msk [vmem:[#allocation3 + $0x210] sm:$0xff] %vm253, %v529
      %548 = vst.msk [vmem:[#allocation3 + $0x238] sm:$0xff] %vm253, %v530
      %549 = vst.msk [vmem:[#allocation3 + $0x260] sm:$0xff] %vm253, %v531
      %550 = vst.msk [vmem:[#allocation3 + $0x288] sm:$0xff] %vm253, %v532
      %551 = vst.msk [vmem:[#allocation3 + $0x2b0] sm:$0xff] %vm253, %v533
      %v552 = vld [vmem:[%s246 + $0x12] sm:$0xff]
      %v553 = vld [vmem:[%s246 + $0x1a] sm:$0xff]
      %v554 = vld [vmem:[%s246 + $0x22] sm:$0xff]
      %v555 = vld [vmem:[%s246 + $0x2a] sm:$0xff]
      %v556 = vld [vmem:[%s246 + $0x32] sm:$0xff]
      %v557 = vld [vmem:[%s246 + $0x3a] sm:$0xff]
      %v558 = vld [vmem:[%s246 + $0x42] sm:$0xff]
      %v559 = vld [vmem:[%s246 + $0x4a] sm:$0xff]
      %v560 = vld [vmem:[%s246 + $0x52] sm:$0xff]
      %v561 = vld [vmem:[%s246 + $0x5a] sm:$0xff]
      %v562 = vld [vmem:[%s246 + $0x62] sm:$0xff]
      %v563 = vld [vmem:[%s246 + $0x6a] sm:$0xff]
      %v564 = vld [vmem:[%s246 + $0x72] sm:$0xff]
      %v565 = vld [vmem:[%s246 + $0x7a] sm:$0xff]
      %v566 = vld [vmem:[%s246 + $0x82] sm:$0xff]
      %v567 = vld [vmem:[%s246 + $0x8a] sm:$0xff]
      %v568 = vld [vmem:[%s246 + $0x92] sm:$0xff]
      %v569 = vld [vmem:[%s246 + $0x9a] sm:$0xff]
      %v570 = vld [vmem:[%s246 + $0xa2] sm:$0xff]
      %v571 = vld [vmem:[%s246 + $0xaa] sm:$0xff]
      %v572 = vld [vmem:[%s246 + $0xb2] sm:$0xff]
      %v573 = vld [vmem:[%s246 + $0xba] sm:$0xff]
      %v574 = vld [vmem:[%s246 + $0xc2] sm:$0xff]
      %v575 = vld [vmem:[%s246 + $0xca] sm:$0xff]
      %v576 = vld [vmem:[%s246 + $0xd2] sm:$0xff]
      %v577 = vld [vmem:[%s246 + $0xda] sm:$0xff]
      %v578 = vld [vmem:[%s246 + $0xe2] sm:$0xff]
      %v579 = vld [vmem:[%s246 + $0xea] sm:$0xff]
      %v580 = vld [vmem:[%s246 + $0xf2] sm:$0xff]
      %v581 = vld [vmem:[%s246 + $0xfa] sm:$0xff]
      %v582 = vld [vmem:[%s246 + $0x102] sm:$0xff]
      %v583 = vld [vmem:[%s246 + $0x10a] sm:$0xff]
      %v584 = vld [vmem:[%s246 + $0x112] sm:$0xff]
      %v585 = vld [vmem:[%s246 + $0x11a] sm:$0xff]
      %v586 = vld [vmem:[%s246 + $0x122] sm:$0xff]
      %v587 = vld [vmem:[%s246 + $0x12a] sm:$0xff]
      %v588 = vpack.c.bf16 %v553, %v552
      %v589 = vpack.c.bf16 %v555, %v554
      %v590 = vpack.c.bf16 %v557, %v556
      %v591 = vpack.c.bf16 %v559, %v558
      %v592 = vpack.c.bf16 %v561, %v560
      %v593 = vpack.c.bf16 %v563, %v562
      %v594 = vpack.c.bf16 %v565, %v564
      %v595 = vpack.c.bf16 %v567, %v566
      %v596 = vpack.c.bf16 %v569, %v568
      %v597 = vpack.c.bf16 %v571, %v570
      %v598 = vpack.c.bf16 %v573, %v572
      %v599 = vpack.c.bf16 %v575, %v574
      %v600 = vpack.c.bf16 %v577, %v576
      %v601 = vpack.c.bf16 %v579, %v578
      %v602 = vpack.c.bf16 %v581, %v580
      %v603 = vpack.c.bf16 %v583, %v582
      %v604 = vpack.c.bf16 %v585, %v584
      %v605 = vpack.c.bf16 %v587, %v586
      %624 = vrot.lane.b32.xlu0 %v588, 64
      %v625 = vpop.permute.xlu0 %624
      %626 = vrot.lane.b32.xlu0 %v589, 64
      %v627 = vpop.permute.xlu0 %626
      %628 = vrot.lane.b32.xlu0 %v590, 64
      %v629 = vpop.permute.xlu0 %628
      %630 = vrot.lane.b32.xlu0 %v591, 64
      %v631 = vpop.permute.xlu0 %630
      %632 = vrot.lane.b32.xlu0 %v592, 64
      %v633 = vpop.permute.xlu0 %632
      %634 = vrot.lane.b32.xlu0 %v593, 64
      %v635 = vpop.permute.xlu0 %634
      %636 = vrot.lane.b32.xlu0 %v594, 64
      %v637 = vpop.permute.xlu0 %636
      %638 = vrot.lane.b32.xlu0 %v595, 64
      %v639 = vpop.permute.xlu0 %638
      %640 = vrot.lane.b32.xlu0 %v596, 64
      %v641 = vpop.permute.xlu0 %640
      %642 = vrot.lane.b32.xlu0 %v597, 64
      %v643 = vpop.permute.xlu0 %642
      %644 = vrot.lane.b32.xlu0 %v598, 64
      %v645 = vpop.permute.xlu0 %644
      %646 = vrot.lane.b32.xlu0 %v599, 64
      %v647 = vpop.permute.xlu0 %646
      %648 = vrot.lane.b32.xlu0 %v600, 64
      %v649 = vpop.permute.xlu0 %648
      %650 = vrot.lane.b32.xlu0 %v601, 64
      %v651 = vpop.permute.xlu0 %650
      %652 = vrot.lane.b32.xlu0 %v602, 64
      %v653 = vpop.permute.xlu0 %652
      %654 = vrot.lane.b32.xlu0 %v603, 64
      %v655 = vpop.permute.xlu0 %654
      %656 = vrot.lane.b32.xlu0 %v604, 64
      %v657 = vpop.permute.xlu0 %656
      %658 = vrot.lane.b32.xlu0 %v605, 64
      %v659 = vpop.permute.xlu0 %658
      %678 = vst.msk [vmem:[#allocation3 + $0x8] sm:$0xff] %vm461, %v625
      %679 = vst.msk [vmem:[#allocation3 + $0x30] sm:$0xff] %vm461, %v627
      %680 = vst.msk [vmem:[#allocation3 + $0x58] sm:$0xff] %vm461, %v629
      %681 = vst.msk [vmem:[#allocation3 + $0x80] sm:$0xff] %vm461, %v631
      %682 = vst.msk [vmem:[#allocation3 + $0xa8] sm:$0xff] %vm461, %v633
      %683 = vst.msk [vmem:[#allocation3 + $0xd0] sm:$0xff] %vm461, %v635
      %684 = vst.msk [vmem:[#allocation3 + $0xf8] sm:$0xff] %vm461, %v637
      %685 = vst.msk [vmem:[#allocation3 + $0x120] sm:$0xff] %vm461, %v639
      %686 = vst.msk [vmem:[#allocation3 + $0x148] sm:$0xff] %vm461, %v641
      %687 = vst.msk [vmem:[#allocation3 + $0x170] sm:$0xff] %vm461, %v643
      %688 = vst.msk [vmem:[#allocation3 + $0x198] sm:$0xff] %vm461, %v645
      %689 = vst.msk [vmem:[#allocation3 + $0x1c0] sm:$0xff] %vm461, %v647
      %690 = vst.msk [vmem:[#allocation3 + $0x1e8] sm:$0xff] %vm461, %v649
      %691 = vst.msk [vmem:[#allocation3 + $0x210] sm:$0xff] %vm461, %v651
      %692 = vst.msk [vmem:[#allocation3 + $0x238] sm:$0xff] %vm461, %v653
      %693 = vst.msk [vmem:[#allocation3 + $0x260] sm:$0xff] %vm461, %v655
      %694 = vst.msk [vmem:[#allocation3 + $0x288] sm:$0xff] %vm461, %v657
      %695 = vst.msk [vmem:[#allocation3 + $0x2b0] sm:$0xff] %vm461, %v659
      %v696 = vld [vmem:[%s246 + $0x13] sm:$0xff]
      %v697 = vld [vmem:[%s246 + $0x1b] sm:$0xff]
      %v698 = vld [vmem:[%s246 + $0x23] sm:$0xff]
      %v699 = vld [vmem:[%s246 + $0x2b] sm:$0xff]
      %v700 = vld [vmem:[%s246 + $0x33] sm:$0xff]
      %v701 = vld [vmem:[%s246 + $0x3b] sm:$0xff]
      %v702 = vld [vmem:[%s246 + $0x43] sm:$0xff]
      %v703 = vld [vmem:[%s246 + $0x4b] sm:$0xff]
      %v704 = vld [vmem:[%s246 + $0x53] sm:$0xff]
      %v705 = vld [vmem:[%s246 + $0x5b] sm:$0xff]
      %v706 = vld [vmem:[%s246 + $0x63] sm:$0xff]
      %v707 = vld [vmem:[%s246 + $0x6b] sm:$0xff]
      %v708 = vld [vmem:[%s246 + $0x73] sm:$0xff]
      %v709 = vld [vmem:[%s246 + $0x7b] sm:$0xff]
      %v710 = vld [vmem:[%s246 + $0x83] sm:$0xff]
      %v711 = vld [vmem:[%s246 + $0x8b] sm:$0xff]
      %v712 = vld [vmem:[%s246 + $0x93] sm:$0xff]
      %v713 = vld [vmem:[%s246 + $0x9b] sm:$0xff]
      %v714 = vld [vmem:[%s246 + $0xa3] sm:$0xff]
      %v715 = vld [vmem:[%s246 + $0xab] sm:$0xff]
      %v716 = vld [vmem:[%s246 + $0xb3] sm:$0xff]
      %v717 = vld [vmem:[%s246 + $0xbb] sm:$0xff]
      %v718 = vld [vmem:[%s246 + $0xc3] sm:$0xff]
      %v719 = vld [vmem:[%s246 + $0xcb] sm:$0xff]
      %v720 = vld [vmem:[%s246 + $0xd3] sm:$0xff]
      %v721 = vld [vmem:[%s246 + $0xdb] sm:$0xff]
      %v722 = vld [vmem:[%s246 + $0xe3] sm:$0xff]
      %v723 = vld [vmem:[%s246 + $0xeb] sm:$0xff]
      %v724 = vld [vmem:[%s246 + $0xf3] sm:$0xff]
      %v725 = vld [vmem:[%s246 + $0xfb] sm:$0xff]
      %v726 = vld [vmem:[%s246 + $0x103] sm:$0xff]
      %v727 = vld [vmem:[%s246 + $0x10b] sm:$0xff]
      %v728 = vld [vmem:[%s246 + $0x113] sm:$0xff]
      %v729 = vld [vmem:[%s246 + $0x11b] sm:$0xff]
      %v730 = vld [vmem:[%s246 + $0x123] sm:$0xff]
      %v731 = vld [vmem:[%s246 + $0x12b] sm:$0xff]
      %v732 = vpack.c.bf16 %v697, %v696
      %v733 = vpack.c.bf16 %v699, %v698
      %v734 = vpack.c.bf16 %v701, %v700
      %v735 = vpack.c.bf16 %v703, %v702
      %v736 = vpack.c.bf16 %v705, %v704
      %v737 = vpack.c.bf16 %v707, %v706
      %v738 = vpack.c.bf16 %v709, %v708
      %v739 = vpack.c.bf16 %v711, %v710
      %v740 = vpack.c.bf16 %v713, %v712
      %v741 = vpack.c.bf16 %v715, %v714
      %v742 = vpack.c.bf16 %v717, %v716
      %v743 = vpack.c.bf16 %v719, %v718
      %v744 = vpack.c.bf16 %v721, %v720
      %v745 = vpack.c.bf16 %v723, %v722
      %v746 = vpack.c.bf16 %v725, %v724
      %v747 = vpack.c.bf16 %v727, %v726
      %v748 = vpack.c.bf16 %v729, %v728
      %v749 = vpack.c.bf16 %v731, %v730
      %750 = vst.msk [vmem:[#allocation3 + $0x10] sm:$0xff] %vm253, %v732
      %751 = vst.msk [vmem:[#allocation3 + $0x38] sm:$0xff] %vm253, %v733
      %752 = vst.msk [vmem:[#allocation3 + $0x60] sm:$0xff] %vm253, %v734
      %753 = vst.msk [vmem:[#allocation3 + $0x88] sm:$0xff] %vm253, %v735
      %754 = vst.msk [vmem:[#allocation3 + $0xb0] sm:$0xff] %vm253, %v736
      %755 = vst.msk [vmem:[#allocation3 + $0xd8] sm:$0xff] %vm253, %v737
      %756 = vst.msk [vmem:[#allocation3 + $0x100] sm:$0xff] %vm253, %v738
      %757 = vst.msk [vmem:[#allocation3 + $0x128] sm:$0xff] %vm253, %v739
      %758 = vst.msk [vmem:[#allocation3 + $0x150] sm:$0xff] %vm253, %v740
      %759 = vst.msk [vmem:[#allocation3 + $0x178] sm:$0xff] %vm253, %v741
      %760 = vst.msk [vmem:[#allocation3 + $0x1a0] sm:$0xff] %vm253, %v742
      %761 = vst.msk [vmem:[#allocation3 + $0x1c8] sm:$0xff] %vm253, %v743
      %762 = vst.msk [vmem:[#allocation3 + $0x1f0] sm:$0xff] %vm253, %v744
      %763 = vst.msk [vmem:[#allocation3 + $0x218] sm:$0xff] %vm253, %v745
      %764 = vst.msk [vmem:[#allocation3 + $0x240] sm:$0xff] %vm253, %v746
      %765 = vst.msk [vmem:[#allocation3 + $0x268] sm:$0xff] %vm253, %v747
      %766 = vst.msk [vmem:[#allocation3 + $0x290] sm:$0xff] %vm253, %v748
      %767 = vst.msk [vmem:[#allocation3 + $0x2b8] sm:$0xff] %vm253, %v749
      %v768 = vld [vmem:[%s246 + $0x14] sm:$0xff]
      %v769 = vld [vmem:[%s246 + $0x1c] sm:$0xff]
      %v770 = vld [vmem:[%s246 + $0x24] sm:$0xff]
      %v771 = vld [vmem:[%s246 + $0x2c] sm:$0xff]
      %v772 = vld [vmem:[%s246 + $0x34] sm:$0xff]
      %v773 = vld [vmem:[%s246 + $0x3c] sm:$0xff]
      %v774 = vld [vmem:[%s246 + $0x44] sm:$0xff]
      %v775 = vld [vmem:[%s246 + $0x4c] sm:$0xff]
      %v776 = vld [vmem:[%s246 + $0x54] sm:$0xff]
      %v777 = vld [vmem:[%s246 + $0x5c] sm:$0xff]
      %v778 = vld [vmem:[%s246 + $0x64] sm:$0xff]
      %v779 = vld [vmem:[%s246 + $0x6c] sm:$0xff]
      %v780 = vld [vmem:[%s246 + $0x74] sm:$0xff]
      %v781 = vld [vmem:[%s246 + $0x7c] sm:$0xff]
      %v782 = vld [vmem:[%s246 + $0x84] sm:$0xff]
      %v783 = vld [vmem:[%s246 + $0x8c] sm:$0xff]
      %v784 = vld [vmem:[%s246 + $0x94] sm:$0xff]
      %v785 = vld [vmem:[%s246 + $0x9c] sm:$0xff]
      %v786 = vld [vmem:[%s246 + $0xa4] sm:$0xff]
      %v787 = vld [vmem:[%s246 + $0xac] sm:$0xff]
      %v788 = vld [vmem:[%s246 + $0xb4] sm:$0xff]
      %v789 = vld [vmem:[%s246 + $0xbc] sm:$0xff]
      %v790 = vld [vmem:[%s246 + $0xc4] sm:$0xff]
      %v791 = vld [vmem:[%s246 + $0xcc] sm:$0xff]
      %v792 = vld [vmem:[%s246 + $0xd4] sm:$0xff]
      %v793 = vld [vmem:[%s246 + $0xdc] sm:$0xff]
      %v794 = vld [vmem:[%s246 + $0xe4] sm:$0xff]
      %v795 = vld [vmem:[%s246 + $0xec] sm:$0xff]
      %v796 = vld [vmem:[%s246 + $0xf4] sm:$0xff]
      %v797 = vld [vmem:[%s246 + $0xfc] sm:$0xff]
      %v798 = vld [vmem:[%s246 + $0x104] sm:$0xff]
      %v799 = vld [vmem:[%s246 + $0x10c] sm:$0xff]
      %v800 = vld [vmem:[%s246 + $0x114] sm:$0xff]
      %v801 = vld [vmem:[%s246 + $0x11c] sm:$0xff]
      %v802 = vld [vmem:[%s246 + $0x124] sm:$0xff]
      %v803 = vld [vmem:[%s246 + $0x12c] sm:$0xff]
      %v804 = vpack.c.bf16 %v769, %v768
      %v805 = vpack.c.bf16 %v771, %v770
      %v806 = vpack.c.bf16 %v773, %v772
      %v807 = vpack.c.bf16 %v775, %v774
      %v808 = vpack.c.bf16 %v777, %v776
      %v809 = vpack.c.bf16 %v779, %v778
      %v810 = vpack.c.bf16 %v781, %v780
      %v811 = vpack.c.bf16 %v783, %v782
      %v812 = vpack.c.bf16 %v785, %v784
      %v813 = vpack.c.bf16 %v787, %v786
      %v814 = vpack.c.bf16 %v789, %v788
      %v815 = vpack.c.bf16 %v791, %v790
      %v816 = vpack.c.bf16 %v793, %v792
      %v817 = vpack.c.bf16 %v795, %v794
      %v818 = vpack.c.bf16 %v797, %v796
      %v819 = vpack.c.bf16 %v799, %v798
      %v820 = vpack.c.bf16 %v801, %v800
      %v821 = vpack.c.bf16 %v803, %v802
      %840 = vrot.lane.b32.xlu0 %v804, 64
      %v841 = vpop.permute.xlu0 %840
      %842 = vrot.lane.b32.xlu0 %v805, 64
      %v843 = vpop.permute.xlu0 %842
      %844 = vrot.lane.b32.xlu0 %v806, 64
      %v845 = vpop.permute.xlu0 %844
      %846 = vrot.lane.b32.xlu0 %v807, 64
      %v847 = vpop.permute.xlu0 %846
      %848 = vrot.lane.b32.xlu0 %v808, 64
      %v849 = vpop.permute.xlu0 %848
      %850 = vrot.lane.b32.xlu0 %v809, 64
      %v851 = vpop.permute.xlu0 %850
      %852 = vrot.lane.b32.xlu0 %v810, 64
      %v853 = vpop.permute.xlu0 %852
      %854 = vrot.lane.b32.xlu0 %v811, 64
      %v855 = vpop.permute.xlu0 %854
      %856 = vrot.lane.b32.xlu0 %v812, 64
      %v857 = vpop.permute.xlu0 %856
      %858 = vrot.lane.b32.xlu0 %v813, 64
      %v859 = vpop.permute.xlu0 %858
      %860 = vrot.lane.b32.xlu0 %v814, 64
      %v861 = vpop.permute.xlu0 %860
      %862 = vrot.lane.b32.xlu0 %v815, 64
      %v863 = vpop.permute.xlu0 %862
      %864 = vrot.lane.b32.xlu0 %v816, 64
      %v865 = vpop.permute.xlu0 %864
      %866 = vrot.lane.b32.xlu0 %v817, 64
      %v867 = vpop.permute.xlu0 %866
      %868 = vrot.lane.b32.xlu0 %v818, 64
      %v869 = vpop.permute.xlu0 %868
      %870 = vrot.lane.b32.xlu0 %v819, 64
      %v871 = vpop.permute.xlu0 %870
      %872 = vrot.lane.b32.xlu0 %v820, 64
      %v873 = vpop.permute.xlu0 %872
      %874 = vrot.lane.b32.xlu0 %v821, 64
      %v875 = vpop.permute.xlu0 %874
      %894 = vst.msk [vmem:[#allocation3 + $0x10] sm:$0xff] %vm461, %v841
      %895 = vst.msk [vmem:[#allocation3 + $0x38] sm:$0xff] %vm461, %v843
      %896 = vst.msk [vmem:[#allocation3 + $0x60] sm:$0xff] %vm461, %v845
      %897 = vst.msk [vmem:[#allocation3 + $0x88] sm:$0xff] %vm461, %v847
      %898 = vst.msk [vmem:[#allocation3 + $0xb0] sm:$0xff] %vm461, %v849
      %899 = vst.msk [vmem:[#allocation3 + $0xd8] sm:$0xff] %vm461, %v851
      %900 = vst.msk [vmem:[#allocation3 + $0x100] sm:$0xff] %vm461, %v853
      %901 = vst.msk [vmem:[#allocation3 + $0x128] sm:$0xff] %vm461, %v855
      %902 = vst.msk [vmem:[#allocation3 + $0x150] sm:$0xff] %vm461, %v857
      %903 = vst.msk [vmem:[#allocation3 + $0x178] sm:$0xff] %vm461, %v859
      %904 = vst.msk [vmem:[#allocation3 + $0x1a0] sm:$0xff] %vm461, %v861
      %905 = vst.msk [vmem:[#allocation3 + $0x1c8] sm:$0xff] %vm461, %v863
      %906 = vst.msk [vmem:[#allocation3 + $0x1f0] sm:$0xff] %vm461, %v865
      %907 = vst.msk [vmem:[#allocation3 + $0x218] sm:$0xff] %vm461, %v867
      %908 = vst.msk [vmem:[#allocation3 + $0x240] sm:$0xff] %vm461, %v869
      %909 = vst.msk [vmem:[#allocation3 + $0x268] sm:$0xff] %vm461, %v871
      %910 = vst.msk [vmem:[#allocation3 + $0x290] sm:$0xff] %vm461, %v873
      %911 = vst.msk [vmem:[#allocation3 + $0x2b8] sm:$0xff] %vm461, %v875
      %v912 = vld [vmem:[%s246 + $0x24] sm:$0xff]
      %v913 = vld [vmem:[%s246 + $0x2c] sm:$0xff]
      %v914 = vld [vmem:[%s246 + $0x34] sm:$0xff]
      %v915 = vld [vmem:[%s246 + $0x3c] sm:$0xff]
      %v916 = vld [vmem:[%s246 + $0x44] sm:$0xff]
      %v917 = vld [vmem:[%s246 + $0x4c] sm:$0xff]
      %v918 = vld [vmem:[%s246 + $0x54] sm:$0xff]
      %v919 = vld [vmem:[%s246 + $0x5c] sm:$0xff]
      %v920 = vld [vmem:[%s246 + $0x64] sm:$0xff]
      %v921 = vld [vmem:[%s246 + $0x6c] sm:$0xff]
      %v922 = vld [vmem:[%s246 + $0x74] sm:$0xff]
      %v923 = vld [vmem:[%s246 + $0x7c] sm:$0xff]
      %v924 = vld [vmem:[%s246 + $0x84] sm:$0xff]
      %v925 = vld [vmem:[%s246 + $0x8c] sm:$0xff]
      %v926 = vld [vmem:[%s246 + $0x94] sm:$0xff]
      %v927 = vld [vmem:[%s246 + $0x9c] sm:$0xff]
      %v928 = vld [vmem:[%s246 + $0xa4] sm:$0xff]
      %v929 = vld [vmem:[%s246 + $0xac] sm:$0xff]
      %v930 = vld [vmem:[%s246 + $0xb4] sm:$0xff]
      %v931 = vld [vmem:[%s246 + $0xbc] sm:$0xff]
      %v932 = vld [vmem:[%s246 + $0xc4] sm:$0xff]
      %v933 = vld [vmem:[%s246 + $0xcc] sm:$0xff]
      %v934 = vld [vmem:[%s246 + $0xd4] sm:$0xff]
      %v935 = vld [vmem:[%s246 + $0xdc] sm:$0xff]
      %v936 = vld [vmem:[%s246 + $0xe4] sm:$0xff]
      %v937 = vld [vmem:[%s246 + $0xec] sm:$0xff]
      %v938 = vld [vmem:[%s246 + $0xf4] sm:$0xff]
      %v939 = vld [vmem:[%s246 + $0xfc] sm:$0xff]
      %v940 = vld [vmem:[%s246 + $0x104] sm:$0xff]
      %v941 = vld [vmem:[%s246 + $0x10c] sm:$0xff]
      %v942 = vld [vmem:[%s246 + $0x114] sm:$0xff]
      %v943 = vld [vmem:[%s246 + $0x11c] sm:$0xff]
      %v944 = vld [vmem:[%s246 + $0x124] sm:$0xff]
      %v945 = vld [vmem:[%s246 + $0x12c] sm:$0xff]
      %v946 = vld [vmem:[%s246 + $0x134] sm:$0xff]
      %v947 = vld [vmem:[%s246 + $0x13c] sm:$0xff]
      %v948 = vpack.c.bf16 %v913, %v912
      %v949 = vpack.c.bf16 %v915, %v914
      %v950 = vpack.c.bf16 %v917, %v916
      %v951 = vpack.c.bf16 %v919, %v918
      %v952 = vpack.c.bf16 %v921, %v920
      %v953 = vpack.c.bf16 %v923, %v922
      %v954 = vpack.c.bf16 %v925, %v924
      %v955 = vpack.c.bf16 %v927, %v926
      %v956 = vpack.c.bf16 %v929, %v928
      %v957 = vpack.c.bf16 %v931, %v930
      %v958 = vpack.c.bf16 %v933, %v932
      %v959 = vpack.c.bf16 %v935, %v934
      %v960 = vpack.c.bf16 %v937, %v936
      %v961 = vpack.c.bf16 %v939, %v938
      %v962 = vpack.c.bf16 %v941, %v940
      %v963 = vpack.c.bf16 %v943, %v942
      %v964 = vpack.c.bf16 %v945, %v944
      %v965 = vpack.c.bf16 %v947, %v946
      %966 = vst.msk [vmem:[#allocation3 + $0x18] sm:$0xff] %vm253, %v948
      %967 = vst.msk [vmem:[#allocation3 + $0x40] sm:$0xff] %vm253, %v949
      %968 = vst.msk [vmem:[#allocation3 + $0x68] sm:$0xff] %vm253, %v950
      %969 = vst.msk [vmem:[#allocation3 + $0x90] sm:$0xff] %vm253, %v951
      %970 = vst.msk [vmem:[#allocation3 + $0xb8] sm:$0xff] %vm253, %v952
      %971 = vst.msk [vmem:[#allocation3 + $0xe0] sm:$0xff] %vm253, %v953
      %972 = vst.msk [vmem:[#allocation3 + $0x108] sm:$0xff] %vm253, %v954
      %973 = vst.msk [vmem:[#allocation3 + $0x130] sm:$0xff] %vm253, %v955
      %974 = vst.msk [vmem:[#allocation3 + $0x158] sm:$0xff] %vm253, %v956
      %975 = vst.msk [vmem:[#allocation3 + $0x180] sm:$0xff] %vm253, %v957
      %976 = vst.msk [vmem:[#allocation3 + $0x1a8] sm:$0xff] %vm253, %v958
      %977 = vst.msk [vmem:[#allocation3 + $0x1d0] sm:$0xff] %vm253, %v959
      %978 = vst.msk [vmem:[#allocation3 + $0x1f8] sm:$0xff] %vm253, %v960
      %979 = vst.msk [vmem:[#allocation3 + $0x220] sm:$0xff] %vm253, %v961
      %980 = vst.msk [vmem:[#allocation3 + $0x248] sm:$0xff] %vm253, %v962
      %981 = vst.msk [vmem:[#allocation3 + $0x270] sm:$0xff] %vm253, %v963
      %982 = vst.msk [vmem:[#allocation3 + $0x298] sm:$0xff] %vm253, %v964
      %983 = vst.msk [vmem:[#allocation3 + $0x2c0] sm:$0xff] %vm253, %v965
      %v984 = vld [vmem:[%s246 + $0x25] sm:$0xff]
      %v985 = vld [vmem:[%s246 + $0x2d] sm:$0xff]
      %v986 = vld [vmem:[%s246 + $0x35] sm:$0xff]
      %v987 = vld [vmem:[%s246 + $0x3d] sm:$0xff]
      %v988 = vld [vmem:[%s246 + $0x45] sm:$0xff]
      %v989 = vld [vmem:[%s246 + $0x4d] sm:$0xff]
      %v990 = vld [vmem:[%s246 + $0x55] sm:$0xff]
      %v991 = vld [vmem:[%s246 + $0x5d] sm:$0xff]
      %v992 = vld [vmem:[%s246 + $0x65] sm:$0xff]
      %v993 = vld [vmem:[%s246 + $0x6d] sm:$0xff]
      %v994 = vld [vmem:[%s246 + $0x75] sm:$0xff]
      %v995 = vld [vmem:[%s246 + $0x7d] sm:$0xff]
      %v996 = vld [vmem:[%s246 + $0x85] sm:$0xff]
      %v997 = vld [vmem:[%s246 + $0x8d] sm:$0xff]
      %v998 = vld [vmem:[%s246 + $0x95] sm:$0xff]
      %v999 = vld [vmem:[%s246 + $0x9d] sm:$0xff]
      %v1000 = vld [vmem:[%s246 + $0xa5] sm:$0xff]
      %v1001 = vld [vmem:[%s246 + $0xad] sm:$0xff]
      %v1002 = vld [vmem:[%s246 + $0xb5] sm:$0xff]
      %v1003 = vld [vmem:[%s246 + $0xbd] sm:$0xff]
      %v1004 = vld [vmem:[%s246 + $0xc5] sm:$0xff]
      %v1005 = vld [vmem:[%s246 + $0xcd] sm:$0xff]
      %v1006 = vld [vmem:[%s246 + $0xd5] sm:$0xff]
      %v1007 = vld [vmem:[%s246 + $0xdd] sm:$0xff]
      %v1008 = vld [vmem:[%s246 + $0xe5] sm:$0xff]
      %v1009 = vld [vmem:[%s246 + $0xed] sm:$0xff]
      %v1010 = vld [vmem:[%s246 + $0xf5] sm:$0xff]
      %v1011 = vld [vmem:[%s246 + $0xfd] sm:$0xff]
      %v1012 = vld [vmem:[%s246 + $0x105] sm:$0xff]
      %v1013 = vld [vmem:[%s246 + $0x10d] sm:$0xff]
      %v1014 = vld [vmem:[%s246 + $0x115] sm:$0xff]
      %v1015 = vld [vmem:[%s246 + $0x11d] sm:$0xff]
      %v1016 = vld [vmem:[%s246 + $0x125] sm:$0xff]
      %v1017 = vld [vmem:[%s246 + $0x12d] sm:$0xff]
      %v1018 = vld [vmem:[%s246 + $0x135] sm:$0xff]
      %v1019 = vld [vmem:[%s246 + $0x13d] sm:$0xff]
      %v1020 = vpack.c.bf16 %v985, %v984
      %v1021 = vpack.c.bf16 %v987, %v986
      %v1022 = vpack.c.bf16 %v989, %v988
      %v1023 = vpack.c.bf16 %v991, %v990
      %v1024 = vpack.c.bf16 %v993, %v992
      %v1025 = vpack.c.bf16 %v995, %v994
      %v1026 = vpack.c.bf16 %v997, %v996
      %v1027 = vpack.c.bf16 %v999, %v998
      %v1028 = vpack.c.bf16 %v1001, %v1000
      %v1029 = vpack.c.bf16 %v1003, %v1002
      %v1030 = vpack.c.bf16 %v1005, %v1004
      %v1031 = vpack.c.bf16 %v1007, %v1006
      %v1032 = vpack.c.bf16 %v1009, %v1008
      %v1033 = vpack.c.bf16 %v1011, %v1010
      %v1034 = vpack.c.bf16 %v1013, %v1012
      %v1035 = vpack.c.bf16 %v1015, %v1014
      %v1036 = vpack.c.bf16 %v1017, %v1016
      %v1037 = vpack.c.bf16 %v1019, %v1018
      %1056 = vrot.lane.b32.xlu0 %v1020, 64
      %v1057 = vpop.permute.xlu0 %1056
      %1058 = vrot.lane.b32.xlu0 %v1021, 64
      %v1059 = vpop.permute.xlu0 %1058
      %1060 = vrot.lane.b32.xlu0 %v1022, 64
      %v1061 = vpop.permute.xlu0 %1060
      %1062 = vrot.lane.b32.xlu0 %v1023, 64
      %v1063 = vpop.permute.xlu0 %1062
      %1064 = vrot.lane.b32.xlu0 %v1024, 64
      %v1065 = vpop.permute.xlu0 %1064
      %1066 = vrot.lane.b32.xlu0 %v1025, 64
      %v1067 = vpop.permute.xlu0 %1066
      %1068 = vrot.lane.b32.xlu0 %v1026, 64
      %v1069 = vpop.permute.xlu0 %1068
      %1070 = vrot.lane.b32.xlu0 %v1027, 64
      %v1071 = vpop.permute.xlu0 %1070
      %1072 = vrot.lane.b32.xlu0 %v1028, 64
      %v1073 = vpop.permute.xlu0 %1072
      %1074 = vrot.lane.b32.xlu0 %v1029, 64
      %v1075 = vpop.permute.xlu0 %1074
      %1076 = vrot.lane.b32.xlu0 %v1030, 64
      %v1077 = vpop.permute.xlu0 %1076
      %1078 = vrot.lane.b32.xlu0 %v1031, 64
      %v1079 = vpop.permute.xlu0 %1078
      %1080 = vrot.lane.b32.xlu0 %v1032, 64
      %v1081 = vpop.permute.xlu0 %1080
      %1082 = vrot.lane.b32.xlu0 %v1033, 64
      %v1083 = vpop.permute.xlu0 %1082
      %1084 = vrot.lane.b32.xlu0 %v1034, 64
      %v1085 = vpop.permute.xlu0 %1084
      %1086 = vrot.lane.b32.xlu0 %v1035, 64
      %v1087 = vpop.permute.xlu0 %1086
      %1088 = vrot.lane.b32.xlu0 %v1036, 64
      %v1089 = vpop.permute.xlu0 %1088
      %1090 = vrot.lane.b32.xlu0 %v1037, 64
      %v1091 = vpop.permute.xlu0 %1090
      %1110 = vst.msk [vmem:[#allocation3 + $0x18] sm:$0xff] %vm461, %v1057
      %1111 = vst.msk [vmem:[#allocation3 + $0x40] sm:$0xff] %vm461, %v1059
      %1112 = vst.msk [vmem:[#allocation3 + $0x68] sm:$0xff] %vm461, %v1061
      %1113 = vst.msk [vmem:[#allocation3 + $0x90] sm:$0xff] %vm461, %v1063
      %1114 = vst.msk [vmem:[#allocation3 + $0xb8] sm:$0xff] %vm461, %v1065
      %1115 = vst.msk [vmem:[#allocation3 + $0xe0] sm:$0xff] %vm461, %v1067
      %1116 = vst.msk [vmem:[#allocation3 + $0x108] sm:$0xff] %vm461, %v1069
      %1117 = vst.msk [vmem:[#allocation3 + $0x130] sm:$0xff] %vm461, %v1071
      %1118 = vst.msk [vmem:[#allocation3 + $0x158] sm:$0xff] %vm461, %v1073
      %1119 = vst.msk [vmem:[#allocation3 + $0x180] sm:$0xff] %vm461, %v1075
      %1120 = vst.msk [vmem:[#allocation3 + $0x1a8] sm:$0xff] %vm461, %v1077
      %1121 = vst.msk [vmem:[#allocation3 + $0x1d0] sm:$0xff] %vm461, %v1079
      %1122 = vst.msk [vmem:[#allocation3 + $0x1f8] sm:$0xff] %vm461, %v1081
      %1123 = vst.msk [vmem:[#allocation3 + $0x220] sm:$0xff] %vm461, %v1083
      %1124 = vst.msk [vmem:[#allocation3 + $0x248] sm:$0xff] %vm461, %v1085
      %1125 = vst.msk [vmem:[#allocation3 + $0x270] sm:$0xff] %vm461, %v1087
      %1126 = vst.msk [vmem:[#allocation3 + $0x298] sm:$0xff] %vm461, %v1089
      %1127 = vst.msk [vmem:[#allocation3 + $0x2c0] sm:$0xff] %vm461, %v1091
      %v1128 = vld [vmem:[%s246 + $0x26] sm:$0xff]
      %v1129 = vld [vmem:[%s246 + $0x2e] sm:$0xff]
      %v1130 = vld [vmem:[%s246 + $0x36] sm:$0xff]
      %v1131 = vld [vmem:[%s246 + $0x3e] sm:$0xff]
      %v1132 = vld [vmem:[%s246 + $0x46] sm:$0xff]
      %v1133 = vld [vmem:[%s246 + $0x4e] sm:$0xff]
      %v1134 = vld [vmem:[%s246 + $0x56] sm:$0xff]
      %v1135 = vld [vmem:[%s246 + $0x5e] sm:$0xff]
      %v1136 = vld [vmem:[%s246 + $0x66] sm:$0xff]
      %v1137 = vld [vmem:[%s246 + $0x6e] sm:$0xff]
      %v1138 = vld [vmem:[%s246 + $0x76] sm:$0xff]
      %v1139 = vld [vmem:[%s246 + $0x7e] sm:$0xff]
      %v1140 = vld [vmem:[%s246 + $0x86] sm:$0xff]
      %v1141 = vld [vmem:[%s246 + $0x8e] sm:$0xff]
      %v1142 = vld [vmem:[%s246 + $0x96] sm:$0xff]
      %v1143 = vld [vmem:[%s246 + $0x9e] sm:$0xff]
      %v1144 = vld [vmem:[%s246 + $0xa6] sm:$0xff]
      %v1145 = vld [vmem:[%s246 + $0xae] sm:$0xff]
      %v1146 = vld [vmem:[%s246 + $0xb6] sm:$0xff]
      %v1147 = vld [vmem:[%s246 + $0xbe] sm:$0xff]
      %v1148 = vld [vmem:[%s246 + $0xc6] sm:$0xff]
      %v1149 = vld [vmem:[%s246 + $0xce] sm:$0xff]
      %v1150 = vld [vmem:[%s246 + $0xd6] sm:$0xff]
      %v1151 = vld [vmem:[%s246 + $0xde] sm:$0xff]
      %v1152 = vld [vmem:[%s246 + $0xe6] sm:$0xff]
      %v1153 = vld [vmem:[%s246 + $0xee] sm:$0xff]
      %v1154 = vld [vmem:[%s246 + $0xf6] sm:$0xff]
      %v1155 = vld [vmem:[%s246 + $0xfe] sm:$0xff]
      %v1156 = vld [vmem:[%s246 + $0x106] sm:$0xff]
      %v1157 = vld [vmem:[%s246 + $0x10e] sm:$0xff]
      %v1158 = vld [vmem:[%s246 + $0x116] sm:$0xff]
      %v1159 = vld [vmem:[%s246 + $0x11e] sm:$0xff]
      %v1160 = vld [vmem:[%s246 + $0x126] sm:$0xff]
      %v1161 = vld [vmem:[%s246 + $0x12e] sm:$0xff]
      %v1162 = vld [vmem:[%s246 + $0x136] sm:$0xff]
      %v1163 = vld [vmem:[%s246 + $0x13e] sm:$0xff]
      %v1164 = vpack.c.bf16 %v1129, %v1128
      %v1165 = vpack.c.bf16 %v1131, %v1130
      %v1166 = vpack.c.bf16 %v1133, %v1132
      %v1167 = vpack.c.bf16 %v1135, %v1134
      %v1168 = vpack.c.bf16 %v1137, %v1136
      %v1169 = vpack.c.bf16 %v1139, %v1138
      %v1170 = vpack.c.bf16 %v1141, %v1140
      %v1171 = vpack.c.bf16 %v1143, %v1142
      %v1172 = vpack.c.bf16 %v1145, %v1144
      %v1173 = vpack.c.bf16 %v1147, %v1146
      %v1174 = vpack.c.bf16 %v1149, %v1148
      %v1175 = vpack.c.bf16 %v1151, %v1150
      %v1176 = vpack.c.bf16 %v1153, %v1152
      %v1177 = vpack.c.bf16 %v1155, %v1154
      %v1178 = vpack.c.bf16 %v1157, %v1156
      %v1179 = vpack.c.bf16 %v1159, %v1158
      %v1180 = vpack.c.bf16 %v1161, %v1160
      %v1181 = vpack.c.bf16 %v1163, %v1162
      %1182 = vst.msk [vmem:[#allocation3 + $0x20] sm:$0xff] %vm253, %v1164
      %1183 = vst.msk [vmem:[#allocation3 + $0x48] sm:$0xff] %vm253, %v1165
      %1184 = vst.msk [vmem:[#allocation3 + $0x70] sm:$0xff] %vm253, %v1166
      %1185 = vst.msk [vmem:[#allocation3 + $0x98] sm:$0xff] %vm253, %v1167
      %1186 = vst.msk [vmem:[#allocation3 + $0xc0] sm:$0xff] %vm253, %v1168
      %1187 = vst.msk [vmem:[#allocation3 + $0xe8] sm:$0xff] %vm253, %v1169
      %1188 = vst.msk [vmem:[#allocation3 + $0x110] sm:$0xff] %vm253, %v1170
      %1189 = vst.msk [vmem:[#allocation3 + $0x138] sm:$0xff] %vm253, %v1171
      %1190 = vst.msk [vmem:[#allocation3 + $0x160] sm:$0xff] %vm253, %v1172
      %1191 = vst.msk [vmem:[#allocation3 + $0x188] sm:$0xff] %vm253, %v1173
      %1192 = vst.msk [vmem:[#allocation3 + $0x1b0] sm:$0xff] %vm253, %v1174
      %1193 = vst.msk [vmem:[#allocation3 + $0x1d8] sm:$0xff] %vm253, %v1175
      %1194 = vst.msk [vmem:[#allocation3 + $0x200] sm:$0xff] %vm253, %v1176
      %1195 = vst.msk [vmem:[#allocation3 + $0x228] sm:$0xff] %vm253, %v1177
      %1196 = vst.msk [vmem:[#allocation3 + $0x250] sm:$0xff] %vm253, %v1178
      %1197 = vst.msk [vmem:[#allocation3 + $0x278] sm:$0xff] %vm253, %v1179
      %1198 = vst.msk [vmem:[#allocation3 + $0x2a0] sm:$0xff] %vm253, %v1180
      %1199 = vst.msk [vmem:[#allocation3 + $0x2c8] sm:$0xff] %vm253, %v1181
      %v1200 = vld [vmem:[#allocation3] sm:$0xff]
      %v1201 = vld [vmem:[#allocation3 + $0x8] sm:$0xff]
      %v1202 = vld [vmem:[#allocation3 + $0x10] sm:$0xff]
      %v1203 = vld [vmem:[#allocation3 + $0x18] sm:$0xff]
      %v1204 = vld [vmem:[#allocation3 + $0x20] sm:$0xff]
      %v1205 = vld [vmem:[#allocation3 + $0x28] sm:$0xff]
      %v1206 = vld [vmem:[#allocation3 + $0x30] sm:$0xff]
      %v1207 = vld [vmem:[#allocation3 + $0x38] sm:$0xff]
      %v1208 = vld [vmem:[#allocation3 + $0x40] sm:$0xff]
      %v1209 = vld [vmem:[#allocation3 + $0x48] sm:$0xff]
      %v1210 = vld [vmem:[#allocation3 + $0x50] sm:$0xff]
      %v1211 = vld [vmem:[#allocation3 + $0x58] sm:$0xff]
      %v1212 = vld [vmem:[#allocation3 + $0x60] sm:$0xff]
      %v1213 = vld [vmem:[#allocation3 + $0x68] sm:$0xff]
      %v1214 = vld [vmem:[#allocation3 + $0x70] sm:$0xff]
      %v1215 = vld [vmem:[#allocation3 + $0x78] sm:$0xff]
      %v1216 = vld [vmem:[#allocation3 + $0x80] sm:$0xff]
      %v1217 = vld [vmem:[#allocation3 + $0x88] sm:$0xff]
      %v1218 = vld [vmem:[#allocation3 + $0x90] sm:$0xff]
      %v1219 = vld [vmem:[#allocation3 + $0x98] sm:$0xff]
      %v1220 = vld [vmem:[#allocation3 + $0xa0] sm:$0xff]
      %v1221 = vld [vmem:[#allocation3 + $0xa8] sm:$0xff]
      %v1222 = vld [vmem:[#allocation3 + $0xb0] sm:$0xff]
      %v1223 = vld [vmem:[#allocation3 + $0xb8] sm:$0xff]
      %v1224 = vld [vmem:[#allocation3 + $0xc0] sm:$0xff]
      %v1225 = vld [vmem:[#allocation3 + $0xc8] sm:$0xff]
      %v1226 = vld [vmem:[#allocation3 + $0xd0] sm:$0xff]
      %v1227 = vld [vmem:[#allocation3 + $0xd8] sm:$0xff]
      %v1228 = vld [vmem:[#allocation3 + $0xe0] sm:$0xff]
      %v1229 = vld [vmem:[#allocation3 + $0xe8] sm:$0xff]
      %v1230 = vld [vmem:[#allocation3 + $0xf0] sm:$0xff]
      %v1231 = vld [vmem:[#allocation3 + $0xf8] sm:$0xff]
      %v1232 = vld [vmem:[#allocation3 + $0x100] sm:$0xff]
      %v1233 = vld [vmem:[#allocation3 + $0x108] sm:$0xff]
      %v1234 = vld [vmem:[#allocation3 + $0x110] sm:$0xff]
      %v1235 = vld [vmem:[#allocation3 + $0x118] sm:$0xff]
      %v1236 = vld [vmem:[#allocation3 + $0x120] sm:$0xff]
      %v1237 = vld [vmem:[#allocation3 + $0x128] sm:$0xff]
      %v1238 = vld [vmem:[#allocation3 + $0x130] sm:$0xff]
      %v1239 = vld [vmem:[#allocation3 + $0x138] sm:$0xff]
      %v1240 = vld [vmem:[#allocation3 + $0x140] sm:$0xff]
      %v1241 = vld [vmem:[#allocation3 + $0x148] sm:$0xff]
      %v1242 = vld [vmem:[#allocation3 + $0x150] sm:$0xff]
      %v1243 = vld [vmem:[#allocation3 + $0x158] sm:$0xff]
      %v1244 = vld [vmem:[#allocation3 + $0x160] sm:$0xff]
      %v1245 = vld [vmem:[#allocation3 + $0x168] sm:$0xff]
      %v1246 = vld [vmem:[#allocation3 + $0x170] sm:$0xff]
      %v1247 = vld [vmem:[#allocation3 + $0x178] sm:$0xff]
      %v1248 = vld [vmem:[#allocation3 + $0x180] sm:$0xff]
      %v1249 = vld [vmem:[#allocation3 + $0x188] sm:$0xff]
      %v1250 = vld [vmem:[#allocation3 + $0x190] sm:$0xff]
      %v1251 = vld [vmem:[#allocation3 + $0x198] sm:$0xff]
      %v1252 = vld [vmem:[#allocation3 + $0x1a0] sm:$0xff]
      %v1253 = vld [vmem:[#allocation3 + $0x1a8] sm:$0xff]
      %v1254 = vld [vmem:[#allocation3 + $0x1b0] sm:$0xff]
      %v1255 = vld [vmem:[#allocation3 + $0x1b8] sm:$0xff]
      %v1256 = vld [vmem:[#allocation3 + $0x1c0] sm:$0xff]
      %v1257 = vld [vmem:[#allocation3 + $0x1c8] sm:$0xff]
      %v1258 = vld [vmem:[#allocation3 + $0x1d0] sm:$0xff]
      %v1259 = vld [vmem:[#allocation3 + $0x1d8] sm:$0xff]
      %v1260 = vld [vmem:[#allocation3 + $0x1e0] sm:$0xff]
      %v1261 = vld [vmem:[#allocation3 + $0x1e8] sm:$0xff]
      %v1262 = vld [vmem:[#allocation3 + $0x1f0] sm:$0xff]
      %v1263 = vld [vmem:[#allocation3 + $0x1f8] sm:$0xff]
      %v1264 = vld [vmem:[#allocation3 + $0x200] sm:$0xff]
      %v1265 = vld [vmem:[#allocation3 + $0x208] sm:$0xff]
      %v1266 = vld [vmem:[#allocation3 + $0x210] sm:$0xff]
      %v1267 = vld [vmem:[#allocation3 + $0x218] sm:$0xff]
      %v1268 = vld [vmem:[#allocation3 + $0x220] sm:$0xff]
      %v1269 = vld [vmem:[#allocation3 + $0x228] sm:$0xff]
      %v1270 = vld [vmem:[#allocation3 + $0x230] sm:$0xff]
      %v1271 = vld [vmem:[#allocation3 + $0x238] sm:$0xff]
      %v1272 = vld [vmem:[#allocation3 + $0x240] sm:$0xff]
      %v1273 = vld [vmem:[#allocation3 + $0x248] sm:$0xff]
      %v1274 = vld [vmem:[#allocation3 + $0x250] sm:$0xff]
      %v1275 = vld [vmem:[#allocation3 + $0x258] sm:$0xff]
      %v1276 = vld [vmem:[#allocation3 + $0x260] sm:$0xff]
      %v1277 = vld [vmem:[#allocation3 + $0x268] sm:$0xff]
      %v1278 = vld [vmem:[#allocation3 + $0x270] sm:$0xff]
      %v1279 = vld [vmem:[#allocation3 + $0x278] sm:$0xff]
      %v1280 = vld [vmem:[#allocation3 + $0x280] sm:$0xff]
      %v1281 = vld [vmem:[#allocation3 + $0x288] sm:$0xff]
      %v1282 = vld [vmem:[#allocation3 + $0x290] sm:$0xff]
      %v1283 = vld [vmem:[#allocation3 + $0x298] sm:$0xff]
      %v1284 = vld [vmem:[#allocation3 + $0x2a0] sm:$0xff]
      %v1285 = vld [vmem:[#allocation3 + $0x2a8] sm:$0xff]
      %v1286 = vld [vmem:[#allocation3 + $0x2b0] sm:$0xff]
      %v1287 = vld [vmem:[#allocation3 + $0x2b8] sm:$0xff]
      %v1288 = vld [vmem:[#allocation3 + $0x2c0] sm:$0xff]
      %v1289 = vld [vmem:[#allocation3 + $0x2c8] sm:$0xff]
      %v1290 = vld [vmem:[%s2] sm:$0xf]
      %v1291 = vld [vmem:[%s2 + $0x4] sm:$0xf]
      %v1292 = vld [vmem:[%s2 + $0x8] sm:$0xf]
      %v1293 = vld [vmem:[%s2 + $0xc] sm:$0xf]
      %v1294 = vld [vmem:[%s2 + $0x10] sm:$0xf]
      %v1295 = vld [vmem:[%s2 + $0x14] sm:$0xf]
      %v1296 = vld [vmem:[%s2 + $0x18] sm:$0xf]
      %v1297 = vld [vmem:[%s2 + $0x1c] sm:$0xf]
      %v1298 = vld [vmem:[%s2 + $0x20] sm:$0xf]
      %v1299 = vld [vmem:[%s2 + $0x24] sm:$0xf]
      %v1300 = vld [vmem:[%s2 + $0x28] sm:$0xf]
      %v1301 = vld [vmem:[%s2 + $0x2c] sm:$0xf]
      %v1302 = vld [vmem:[%s2 + $0x30] sm:$0xf]
      %v1303 = vld [vmem:[%s2 + $0x34] sm:$0xf]
      %v1304 = vld [vmem:[%s2 + $0x38] sm:$0xf]
      %v1305 = vld [vmem:[%s2 + $0x3c] sm:$0xf]
      %v1306 = vld [vmem:[%s2 + $0x40] sm:$0xf]
      %v1307 = vld [vmem:[%s2 + $0x44] sm:$0xf]
      %v1308 = vld [vmem:[%s2 + $0x48] sm:$0xf]
      %v1309 = vld [vmem:[%s2 + $0x4c] sm:$0xf]
      %v1310 = vld [vmem:[%s2 + $0x50] sm:$0xf]
      %v1311 = vld [vmem:[%s2 + $0x54] sm:$0xf]
      %v1312 = vld [vmem:[%s2 + $0x58] sm:$0xf]
      %v1313 = vld [vmem:[%s2 + $0x5c] sm:$0xf]
      %v1314 = vld [vmem:[%s2 + $0x60] sm:$0xf]
      %v1315 = vld [vmem:[%s2 + $0x64] sm:$0xf]
      %v1316 = vld [vmem:[%s2 + $0x68] sm:$0xf]
      %v1317 = vld [vmem:[%s2 + $0x6c] sm:$0xf]
      %v1318 = vld [vmem:[%s2 + $0x70] sm:$0xf]
      %v1319 = vld [vmem:[%s2 + $0x74] sm:$0xf]
      %v1320 = vld [vmem:[%s2 + $0x78] sm:$0xf]
      %v1321 = vld [vmem:[%s2 + $0x7c] sm:$0xf]
      %v1322 = vld [vmem:[%s2 + $0x80] sm:$0xf]
      %v1323 = vld [vmem:[%s2 + $0x84] sm:$0xf]
      %v1324 = vld [vmem:[%s2 + $0x88] sm:$0xf]
      %v1325 = vld [vmem:[%s2 + $0x8c] sm:$0xf]
      %v1326 = vld [vmem:[%s2 + $0x90] sm:$0xf]
      %v1327 = vld [vmem:[%s2 + $0x94] sm:$0xf]
      %v1328 = vld [vmem:[%s2 + $0x98] sm:$0xf]
      %v1329 = vld [vmem:[%s2 + $0x9c] sm:$0xf]
      %v1330 = vld [vmem:[%s2 + $0xa0] sm:$0xf]
      %v1331 = vld [vmem:[%s2 + $0xa4] sm:$0xf]
      %v1332 = vld [vmem:[%s2 + $0xa8] sm:$0xf]
      %v1333 = vld [vmem:[%s2 + $0xac] sm:$0xf]
      %v1334 = vld [vmem:[%s2 + $0xb0] sm:$0xf]
      %v1335 = vld [vmem:[%s2 + $0xb4] sm:$0xf]
      %v1336 = vld [vmem:[%s2 + $0xb8] sm:$0xf]
      %v1337 = vld [vmem:[%s2 + $0xbc] sm:$0xf]
      %v1338 = vld [vmem:[%s2 + $0xc0] sm:$0xf]
      %v1339 = vld [vmem:[%s2 + $0xc4] sm:$0xf]
      %v1340 = vld [vmem:[%s2 + $0xc8] sm:$0xf]
      %v1341 = vld [vmem:[%s2 + $0xcc] sm:$0xf]
      %v1342 = vld [vmem:[%s2 + $0xd0] sm:$0xf]
      %v1343 = vld [vmem:[%s2 + $0xd4] sm:$0xf]
      %v1344 = vld [vmem:[%s2 + $0xd8] sm:$0xf]
      %v1345 = vld [vmem:[%s2 + $0xdc] sm:$0xf]
      %v1346 = vld [vmem:[%s2 + $0xe0] sm:$0xf]
      %v1347 = vld [vmem:[%s2 + $0xe4] sm:$0xf]
      %v1348 = vld [vmem:[%s2 + $0xe8] sm:$0xf]
      %v1349 = vld [vmem:[%s2 + $0xec] sm:$0xf]
      %v1350 = vld [vmem:[%s2 + $0xf0] sm:$0xf]
      %v1351 = vld [vmem:[%s2 + $0xf4] sm:$0xf]
      %v1352 = vld [vmem:[%s2 + $0xf8] sm:$0xf]
      %v1353 = vld [vmem:[%s2 + $0xfc] sm:$0xf]
      %v1354 = vld [vmem:[%s2 + $0x100] sm:$0xf]
      %v1355 = vld [vmem:[%s2 + $0x104] sm:$0xf]
      %v1356 = vld [vmem:[%s2 + $0x108] sm:$0xf]
      %v1357 = vld [vmem:[%s2 + $0x10c] sm:$0xf]
      %v1358 = vld [vmem:[%s2 + $0x110] sm:$0xf]
      %v1359 = vld [vmem:[%s2 + $0x114] sm:$0xf]
      %v1360 = vld [vmem:[%s2 + $0x118] sm:$0xf]
      %v1361 = vld [vmem:[%s2 + $0x11c] sm:$0xf]
      %v1362 = vld [vmem:[%s3] sm:$0x1]
      %v1364 = vlaneseq
      %v1365 = vshrl.u32 %v1364, 7
      %v1366 = vsub.s32 0, %v1365
      %v1367 = vrot.slane %v1362, %v1366
      %v1441 = vunpack.c.l.b16 %v1290
      %v1442 = vunpack.c.l.b16 %v1291
      %v1443 = vunpack.c.l.b16 %v1292
      %v1444 = vunpack.c.l.b16 %v1293
      %v1445 = vunpack.c.l.b16 %v1294
      %v1446 = vunpack.c.l.b16 %v1295
      %v1447 = vunpack.c.l.b16 %v1296
      %v1448 = vunpack.c.l.b16 %v1297
      %v1449 = vunpack.c.l.b16 %v1298
      %v1450 = vunpack.c.l.b16 %v1299
      %v1451 = vunpack.c.l.b16 %v1300
      %v1452 = vunpack.c.l.b16 %v1301
      %v1453 = vunpack.c.l.b16 %v1302
      %v1454 = vunpack.c.l.b16 %v1303
      %v1455 = vunpack.c.l.b16 %v1304
      %v1456 = vunpack.c.l.b16 %v1305
      %v1457 = vunpack.c.l.b16 %v1306
      %v1458 = vunpack.c.l.b16 %v1307
      %v1459 = vunpack.c.l.b16 %v1308
      %v1460 = vunpack.c.l.b16 %v1309
      %v1461 = vunpack.c.l.b16 %v1310
      %v1462 = vunpack.c.l.b16 %v1311
      %v1463 = vunpack.c.l.b16 %v1312
      %v1464 = vunpack.c.l.b16 %v1313
      %v1465 = vunpack.c.l.b16 %v1314
      %v1466 = vunpack.c.l.b16 %v1315
      %v1467 = vunpack.c.l.b16 %v1316
      %v1468 = vunpack.c.l.b16 %v1317
      %v1469 = vunpack.c.l.b16 %v1318
      %v1470 = vunpack.c.l.b16 %v1319
      %v1471 = vunpack.c.l.b16 %v1320
      %v1472 = vunpack.c.l.b16 %v1321
      %v1473 = vunpack.c.l.b16 %v1322
      %v1474 = vunpack.c.l.b16 %v1323
      %v1475 = vunpack.c.l.b16 %v1324
      %v1476 = vunpack.c.l.b16 %v1325
      %v1477 = vunpack.c.l.b16 %v1326
      %v1478 = vunpack.c.l.b16 %v1327
      %v1479 = vunpack.c.l.b16 %v1328
      %v1480 = vunpack.c.l.b16 %v1329
      %v1481 = vunpack.c.l.b16 %v1330
      %v1482 = vunpack.c.l.b16 %v1331
      %v1483 = vunpack.c.l.b16 %v1332
      %v1484 = vunpack.c.l.b16 %v1333
      %v1485 = vunpack.c.l.b16 %v1334
      %v1486 = vunpack.c.l.b16 %v1335
      %v1487 = vunpack.c.l.b16 %v1336
      %v1488 = vunpack.c.l.b16 %v1337
      %v1489 = vunpack.c.l.b16 %v1338
      %v1490 = vunpack.c.l.b16 %v1339
      %v1491 = vunpack.c.l.b16 %v1340
      %v1492 = vunpack.c.l.b16 %v1341
      %v1493 = vunpack.c.l.b16 %v1342
      %v1494 = vunpack.c.l.b16 %v1343
      %v1495 = vunpack.c.l.b16 %v1344
      %v1496 = vunpack.c.l.b16 %v1345
      %v1497 = vunpack.c.l.b16 %v1346
      %v1498 = vunpack.c.l.b16 %v1347
      %v1499 = vunpack.c.l.b16 %v1348
      %v1500 = vunpack.c.l.b16 %v1349
      %v1501 = vunpack.c.l.b16 %v1350
      %v1502 = vunpack.c.l.b16 %v1351
      %v1503 = vunpack.c.l.b16 %v1352
      %v1504 = vunpack.c.l.b16 %v1353
      %v1505 = vunpack.c.l.b16 %v1354
      %v1506 = vunpack.c.l.b16 %v1355
      %v1507 = vunpack.c.l.b16 %v1356
      %v1508 = vunpack.c.l.b16 %v1357
      %v1509 = vunpack.c.l.b16 %v1358
      %v1510 = vunpack.c.l.b16 %v1359
      %v1511 = vunpack.c.l.b16 %v1360
      %v1512 = vunpack.c.l.b16 %v1361
      %v1513 = vpack.c.b16 %v1442, %v1441
      %v1514 = vpack.c.b16 %v1444, %v1443
      %v1515 = vpack.c.b16 %v1446, %v1445
      %v1516 = vpack.c.b16 %v1448, %v1447
      %v1517 = vpack.c.b16 %v1450, %v1449
      %v1518 = vpack.c.b16 %v1452, %v1451
      %v1519 = vpack.c.b16 %v1454, %v1453
      %v1520 = vpack.c.b16 %v1456, %v1455
      %v1521 = vpack.c.b16 %v1458, %v1457
      %v1522 = vpack.c.b16 %v1460, %v1459
      %v1523 = vpack.c.b16 %v1462, %v1461
      %v1524 = vpack.c.b16 %v1464, %v1463
      %v1525 = vpack.c.b16 %v1466, %v1465
      %v1526 = vpack.c.b16 %v1468, %v1467
      %v1527 = vpack.c.b16 %v1470, %v1469
      %v1528 = vpack.c.b16 %v1472, %v1471
      %v1529 = vpack.c.b16 %v1474, %v1473
      %v1530 = vpack.c.b16 %v1476, %v1475
      %v1531 = vpack.c.b16 %v1478, %v1477
      %v1532 = vpack.c.b16 %v1480, %v1479
      %v1533 = vpack.c.b16 %v1482, %v1481
      %v1534 = vpack.c.b16 %v1484, %v1483
      %v1535 = vpack.c.b16 %v1486, %v1485
      %v1536 = vpack.c.b16 %v1488, %v1487
      %v1537 = vpack.c.b16 %v1490, %v1489
      %v1538 = vpack.c.b16 %v1492, %v1491
      %v1539 = vpack.c.b16 %v1494, %v1493
      %v1540 = vpack.c.b16 %v1496, %v1495
      %v1541 = vpack.c.b16 %v1498, %v1497
      %v1542 = vpack.c.b16 %v1500, %v1499
      %v1543 = vpack.c.b16 %v1502, %v1501
      %v1544 = vpack.c.b16 %v1504, %v1503
      %v1545 = vpack.c.b16 %v1506, %v1505
      %v1546 = vpack.c.b16 %v1508, %v1507
      %v1547 = vpack.c.b16 %v1510, %v1509
      %v1548 = vpack.c.b16 %v1512, %v1511
      %v1586 = vsel %vm253, %v1204, 0
      %v1589 = vsel %vm253, %v1209, 0
      %v1592 = vsel %vm253, %v1214, 0
      %v1595 = vsel %vm253, %v1219, 0
      %v1598 = vsel %vm253, %v1224, 0
      %v1601 = vsel %vm253, %v1229, 0
      %v1604 = vsel %vm253, %v1234, 0
      %v1607 = vsel %vm253, %v1239, 0
      %v1610 = vsel %vm253, %v1244, 0
      %v1613 = vsel %vm253, %v1249, 0
      %v1616 = vsel %vm253, %v1254, 0
      %v1619 = vsel %vm253, %v1259, 0
      %v1622 = vsel %vm253, %v1264, 0
      %v1625 = vsel %vm253, %v1269, 0
      %v1628 = vsel %vm253, %v1274, 0
      %v1631 = vsel %vm253, %v1279, 0
      %v1634 = vsel %vm253, %v1284, 0
      %v1637 = vsel %vm253, %v1289, 0
      %1639 = vmatprep.subr.bf16.mxu0 0
      %1640 = vmatpush1.bf16.msra.mxu0 %v1513
      %1641 = vmatprep.subr.bf16.mxu0 0
      %1642 = vmatpush1.bf16.msra.mxu0 %v1514
      %1643 = vmatprep.subr.bf16.mxu0 0
      %1644 = vmatpush1.bf16.msra.mxu0 %v1515
      %1645 = vmatprep.subr.bf16.mxu0 0
      %1646 = vmatpush1.bf16.msra.mxu0 %v1516
      %1647 = vmatprep.subr.bf16.mxu0 0
      %1648 = vmatpush1.bf16.msra.mxu0 %v1517
      %1649 = vmatprep.subr.bf16.mxu0 0
      %1650 = vmatpush1.bf16.msra.mxu0 %v1518
      %1651 = vmatprep.subr.bf16.mxu0 0
      %1652 = vmatpush1.bf16.msra.mxu0 %v1519
      %1653 = vmatprep.subr.bf16.mxu0 0
      %1654 = vmatpush1.bf16.msra.mxu0 %v1520
      %1655 = vmatprep.subr.bf16.mxu0 0
      %1656 = vmatpush1.bf16.msra.mxu0 %v1521
      %1657 = vmatprep.subr.bf16.mxu0 0
      %1658 = vmatpush1.bf16.msra.mxu0 %v1522
      %1659 = vmatprep.subr.bf16.mxu0 0
      %1660 = vmatpush1.bf16.msra.mxu0 %v1523
      %1661 = vmatprep.subr.bf16.mxu0 0
      %1662 = vmatpush1.bf16.msra.mxu0 %v1524
      %1663 = vmatprep.subr.bf16.mxu0 0
      %1664 = vmatpush1.bf16.msra.mxu0 %v1525
      %1665 = vmatprep.subr.bf16.mxu0 0
      %1666 = vmatpush1.bf16.msra.mxu0 %v1526
      %1667 = vmatprep.subr.bf16.mxu0 0
      %1668 = vmatpush1.bf16.msra.mxu0 %v1527
      %1669 = vmatprep.subr.bf16.mxu0 0
      %1670 = vmatpush1.bf16.msra.mxu0 %v1528
      %1671 = vmatprep.mubr.bf16.mxu0 %v1201
      %1672 = vmatmul.mubr.bf16.gmra.mrb[0].mxu0 %v1200
      %v1673 = vpop.f32.mrb[0].mxu0
      %v1674 = vadd.f32 %v1367, %v1673
      %v1675 = vpop.f32.mrb[0].mxu0
      %v1676 = vpop.f32.mrb[0].mxu0
      %v1677 = vadd.f32 %v1367, %v1676
      %v1678 = vpop.f32.mrb[0].mxu0
      %1679 = vmatprep.mubr.bf16.mxu0 %v1206
      %1680 = vmatmul.mubr.bf16.gmra.mrb[0].mxu0 %v1205
      %v1681 = vpop.f32.mrb[0].mxu0
      %v1682 = vadd.f32 %v1367, %v1681
      %v1683 = vpop.f32.mrb[0].mxu0
      %v1684 = vpop.f32.mrb[0].mxu0
      %v1685 = vadd.f32 %v1367, %v1684
      %v1686 = vpop.f32.mrb[0].mxu0
      %1687 = vmatprep.mubr.bf16.mxu0 %v1211
      %1688 = vmatmul.mubr.bf16.gmra.mrb[0].mxu0 %v1210
      %v1689 = vpop.f32.mrb[0].mxu0
      %v1690 = vadd.f32 %v1367, %v1689
      %v1691 = vpop.f32.mrb[0].mxu0
      %v1692 = vpop.f32.mrb[0].mxu0
      %v1693 = vadd.f32 %v1367, %v1692
      %v1694 = vpop.f32.mrb[0].mxu0
      %1695 = vmatprep.mubr.bf16.mxu0 %v1216
      %1696 = vmatmul.mubr.bf16.gmra.mrb[0].mxu0 %v1215
      %v1697 = vpop.f32.mrb[0].mxu0
      %v1698 = vadd.f32 %v1367, %v1697
      %v1699 = vpop.f32.mrb[0].mxu0
      %v1700 = vpop.f32.mrb[0].mxu0
      %v1701 = vadd.f32 %v1367, %v1700
      %v1702 = vpop.f32.mrb[0].mxu0
      %1703 = vmatprep.mubr.bf16.mxu0 %v1221
      %1704 = vmatmul.mubr.bf16.gmra.mrb[0].mxu0 %v1220
      %v1705 = vpop.f32.mrb[0].mxu0
      %v1706 = vadd.f32 %v1367, %v1705
      %v1707 = vpop.f32.mrb[0].mxu0
      %v1708 = vpop.f32.mrb[0].mxu0
      %v1709 = vadd.f32 %v1367, %v1708
      %v1710 = vpop.f32.mrb[0].mxu0
      %1711 = vmatprep.mubr.bf16.mxu0 %v1226
      %1712 = vmatmul.mubr.bf16.gmra.mrb[0].mxu0 %v1225
      %v1713 = vpop.f32.mrb[0].mxu0
      %v1714 = vadd.f32 %v1367, %v1713
      %v1715 = vpop.f32.mrb[0].mxu0
      %v1716 = vpop.f32.mrb[0].mxu0
      %v1717 = vadd.f32 %v1367, %v1716
      %v1718 = vpop.f32.mrb[0].mxu0
      %1719 = vmatprep.mubr.bf16.mxu0 %v1231
      %1720 = vmatmul.mubr.bf16.gmra.mrb[0].mxu0 %v1230
      %v1721 = vpop.f32.mrb[0].mxu0
      %v1722 = vadd.f32 %v1367, %v1721
      %v1723 = vpop.f32.mrb[0].mxu0
      %v1724 = vpop.f32.mrb[0].mxu0
      %v1725 = vadd.f32 %v1367, %v1724
      %v1726 = vpop.f32.mrb[0].mxu0
      %1727 = vmatprep.mubr.bf16.mxu0 %v1236
      %1728 = vmatmul.mubr.bf16.gmra.mrb[0].mxu0 %v1235
      %v1729 = vpop.f32.mrb[0].mxu0
      %v1730 = vadd.f32 %v1367, %v1729
      %v1731 = vpop.f32.mrb[0].mxu0
      %v1732 = vpop.f32.mrb[0].mxu0
      %v1733 = vadd.f32 %v1367, %v1732
      %v1734 = vpop.f32.mrb[0].mxu0
      %1735 = vmatprep.mubr.bf16.mxu0 %v1241
      %1736 = vmatmul.mubr.bf16.gmra.mrb[0].mxu0 %v1240
      %v1737 = vpop.f32.mrb[0].mxu0
      %v1738 = vadd.f32 %v1367, %v1737
      %v1739 = vpop.f32.mrb[0].mxu0
      %v1740 = vpop.f32.mrb[0].mxu0
      %v1741 = vadd.f32 %v1367, %v1740
      %v1742 = vpop.f32.mrb[0].mxu0
      %1743 = vmatprep.mubr.bf16.mxu0 %v1246
      %1744 = vmatmul.mubr.bf16.gmra.mrb[0].mxu0 %v1245
      %v1745 = vpop.f32.mrb[0].mxu0
      %v1746 = vadd.f32 %v1367, %v1745
      %v1747 = vpop.f32.mrb[0].mxu0
      %v1748 = vpop.f32.mrb[0].mxu0
      %v1749 = vadd.f32 %v1367, %v1748
      %v1750 = vpop.f32.mrb[0].mxu0
      %1751 = vmatprep.mubr.bf16.mxu0 %v1251
      %1752 = vmatmul.mubr.bf16.gmra.mrb[0].mxu0 %v1250
      %v1753 = vpop.f32.mrb[0].mxu0
      %v1754 = vadd.f32 %v1367, %v1753
      %v1755 = vpop.f32.mrb[0].mxu0
      %v1756 = vpop.f32.mrb[0].mxu0
      %v1757 = vadd.f32 %v1367, %v1756
      %v1758 = vpop.f32.mrb[0].mxu0
      %1759 = vmatprep.mubr.bf16.mxu0 %v1256
      %1760 = vmatmul.mubr.bf16.gmra.mrb[0].mxu0 %v1255
      %v1761 = vpop.f32.mrb[0].mxu0
      %v1762 = vadd.f32 %v1367, %v1761
      %v1763 = vpop.f32.mrb[0].mxu0
      %v1764 = vpop.f32.mrb[0].mxu0
      %v1765 = vadd.f32 %v1367, %v1764
      %v1766 = vpop.f32.mrb[0].mxu0
      %1767 = vmatprep.mubr.bf16.mxu0 %v1261
      %1768 = vmatmul.mubr.bf16.gmra.mrb[0].mxu0 %v1260
      %v1769 = vpop.f32.mrb[0].mxu0
      %v1770 = vadd.f32 %v1367, %v1769
      %v1771 = vpop.f32.mrb[0].mxu0
      %v1772 = vpop.f32.mrb[0].mxu0
      %v1773 = vadd.f32 %v1367, %v1772
      %v1774 = vpop.f32.mrb[0].mxu0
      %1775 = vmatprep.mubr.bf16.mxu0 %v1266
      %1776 = vmatmul.mubr.bf16.gmra.mrb[0].mxu0 %v1265
      %v1777 = vpop.f32.mrb[0].mxu0
      %v1778 = vadd.f32 %v1367, %v1777
      %v1779 = vpop.f32.mrb[0].mxu0
      %v1780 = vpop.f32.mrb[0].mxu0
      %v1781 = vadd.f32 %v1367, %v1780
      %v1782 = vpop.f32.mrb[0].mxu0
      %1783 = vmatprep.mubr.bf16.mxu0 %v1271
      %1784 = vmatmul.mubr.bf16.gmra.mrb[0].mxu0 %v1270
      %v1785 = vpop.f32.mrb[0].mxu0
      %v1786 = vadd.f32 %v1367, %v1785
      %v1787 = vpop.f32.mrb[0].mxu0
      %v1788 = vpop.f32.mrb[0].mxu0
      %v1789 = vadd.f32 %v1367, %v1788
      %v1790 = vpop.f32.mrb[0].mxu0
      %1791 = vmatprep.mubr.bf16.mxu0 %v1276
      %1792 = vmatmul.mubr.bf16.gmra.mrb[0].mxu0 %v1275
      %v1793 = vpop.f32.mrb[0].mxu0
      %v1794 = vadd.f32 %v1367, %v1793
      %v1795 = vpop.f32.mrb[0].mxu0
      %v1796 = vpop.f32.mrb[0].mxu0
      %v1797 = vadd.f32 %v1367, %v1796
      %v1798 = vpop.f32.mrb[0].mxu0
      %1799 = vmatprep.mubr.bf16.mxu0 %v1281
      %1800 = vmatmul.mubr.bf16.gmra.mrb[0].mxu0 %v1280
      %v1801 = vpop.f32.mrb[0].mxu0
      %v1802 = vadd.f32 %v1367, %v1801
      %v1803 = vpop.f32.mrb[0].mxu0
      %v1804 = vpop.f32.mrb[0].mxu0
      %v1805 = vadd.f32 %v1367, %v1804
      %v1806 = vpop.f32.mrb[0].mxu0
      %1807 = vmatprep.mubr.bf16.mxu0 %v1286
      %1808 = vmatmul.mubr.bf16.gmra.mrb[0].mxu0 %v1285
      %v1809 = vpop.f32.mrb[0].mxu0
      %v1810 = vadd.f32 %v1367, %v1809
      %v1811 = vpop.f32.mrb[0].mxu0
      %v1812 = vpop.f32.mrb[0].mxu0
      %v1813 = vadd.f32 %v1367, %v1812
      %v1814 = vpop.f32.mrb[0].mxu0
      %1815 = vdwg.mxu0
      %1816 = vmatprep.subr.bf16.mxu0 0
      %1817 = vmatpush1.bf16.msra.mxu0 %v1529
      %1818 = vmatprep.subr.bf16.mxu0 0
      %1819 = vmatpush1.bf16.msra.mxu0 %v1530
      %1820 = vmatprep.subr.bf16.mxu0 0
      %1821 = vmatpush1.bf16.msra.mxu0 %v1531
      %1822 = vmatprep.subr.bf16.mxu0 0
      %1823 = vmatpush1.bf16.msra.mxu0 %v1532
      %1824 = vmatprep.subr.bf16.mxu0 0
      %1825 = vmatpush1.bf16.msra.mxu0 %v1533
      %1826 = vmatprep.subr.bf16.mxu0 0
      %1827 = vmatpush1.bf16.msra.mxu0 %v1534
      %1828 = vmatprep.subr.bf16.mxu0 0
      %1829 = vmatpush1.bf16.msra.mxu0 %v1535
      %1830 = vmatprep.subr.bf16.mxu0 0
      %1831 = vmatpush1.bf16.msra.mxu0 %v1536
      %1832 = vmatprep.subr.bf16.mxu0 0
      %1833 = vmatpush1.bf16.msra.mxu0 %v1537
      %1834 = vmatprep.subr.bf16.mxu0 0
      %1835 = vmatpush1.bf16.msra.mxu0 %v1538
      %1836 = vmatprep.subr.bf16.mxu0 0
      %1837 = vmatpush1.bf16.msra.mxu0 %v1539
      %1838 = vmatprep.subr.bf16.mxu0 0
      %1839 = vmatpush1.bf16.msra.mxu0 %v1540
      %1840 = vmatprep.subr.bf16.mxu0 0
      %1841 = vmatpush1.bf16.msra.mxu0 %v1541
      %1842 = vmatprep.subr.bf16.mxu0 0
      %1843 = vmatpush1.bf16.msra.mxu0 %v1542
      %1844 = vmatprep.subr.bf16.mxu0 0
      %1845 = vmatpush1.bf16.msra.mxu0 %v1543
      %1846 = vmatprep.subr.bf16.mxu0 0
      %1847 = vmatpush1.bf16.msra.mxu0 %v1544
      %1848 = vmatprep.mubr.bf16.mxu0 %v1203
      %1849 = vmatmul.mubr.bf16.gmra.mrb[0].mxu0 %v1202
      %v1850 = vpop.f32.mrb[0].mxu0
      %v1851 = vadd.f32 %v1674, %v1850
      %v1852 = vpop.f32.mrb[0].mxu0
      %v1853 = vpop.f32.mrb[0].mxu0
      %v1854 = vadd.f32 %v1677, %v1853
      %v1855 = vpop.f32.mrb[0].mxu0
      %1856 = vmatprep.mubr.bf16.mxu0 %v1208
      %1857 = vmatmul.mubr.bf16.gmra.mrb[0].mxu0 %v1207
      %v1858 = vpop.f32.mrb[0].mxu0
      %v1859 = vadd.f32 %v1682, %v1858
      %v1860 = vpop.f32.mrb[0].mxu0
      %v1861 = vpop.f32.mrb[0].mxu0
      %v1862 = vadd.f32 %v1685, %v1861
      %v1863 = vpop.f32.mrb[0].mxu0
      %1864 = vmatprep.mubr.bf16.mxu0 %v1213
      %1865 = vmatmul.mubr.bf16.gmra.mrb[0].mxu0 %v1212
      %v1866 = vpop.f32.mrb[0].mxu0
      %v1867 = vadd.f32 %v1690, %v1866
      %v1868 = vpop.f32.mrb[0].mxu0
      %v1869 = vpop.f32.mrb[0].mxu0
      %v1870 = vadd.f32 %v1693, %v1869
      %v1871 = vpop.f32.mrb[0].mxu0
      %1872 = vmatprep.mubr.bf16.mxu0 %v1218
      %1873 = vmatmul.mubr.bf16.gmra.mrb[0].mxu0 %v1217
      %v1874 = vpop.f32.mrb[0].mxu0
      %v1875 = vadd.f32 %v1698, %v1874
      %v1876 = vpop.f32.mrb[0].mxu0
      %v1877 = vpop.f32.mrb[0].mxu0
      %v1878 = vadd.f32 %v1701, %v1877
      %v1879 = vpop.f32.mrb[0].mxu0
      %1880 = vmatprep.mubr.bf16.mxu0 %v1223
      %1881 = vmatmul.mubr.bf16.gmra.mrb[0].mxu0 %v1222
      %v1882 = vpop.f32.mrb[0].mxu0
      %v1883 = vadd.f32 %v1706, %v1882
      %v1884 = vpop.f32.mrb[0].mxu0
      %v1885 = vpop.f32.mrb[0].mxu0
      %v1886 = vadd.f32 %v1709, %v1885
      %v1887 = vpop.f32.mrb[0].mxu0
      %1888 = vmatprep.mubr.bf16.mxu0 %v1228
      %1889 = vmatmul.mubr.bf16.gmra.mrb[0].mxu0 %v1227
      %v1890 = vpop.f32.mrb[0].mxu0
      %v1891 = vadd.f32 %v1714, %v1890
      %v1892 = vpop.f32.mrb[0].mxu0
      %v1893 = vpop.f32.mrb[0].mxu0
      %v1894 = vadd.f32 %v1717, %v1893
      %v1895 = vpop.f32.mrb[0].mxu0
      %1896 = vmatprep.mubr.bf16.mxu0 %v1233
      %1897 = vmatmul.mubr.bf16.gmra.mrb[0].mxu0 %v1232
      %v1898 = vpop.f32.mrb[0].mxu0
      %v1899 = vadd.f32 %v1722, %v1898
      %v1900 = vpop.f32.mrb[0].mxu0
      %v1901 = vpop.f32.mrb[0].mxu0
      %v1902 = vadd.f32 %v1725, %v1901
      %v1903 = vpop.f32.mrb[0].mxu0
      %1904 = vmatprep.mubr.bf16.mxu0 %v1238
      %1905 = vmatmul.mubr.bf16.gmra.mrb[0].mxu0 %v1237
      %v1906 = vpop.f32.mrb[0].mxu0
      %v1907 = vadd.f32 %v1730, %v1906
      %v1908 = vpop.f32.mrb[0].mxu0
      %v1909 = vpop.f32.mrb[0].mxu0
      %v1910 = vadd.f32 %v1733, %v1909
      %v1911 = vpop.f32.mrb[0].mxu0
      %1912 = vmatprep.mubr.bf16.mxu0 %v1243
      %1913 = vmatmul.mubr.bf16.gmra.mrb[0].mxu0 %v1242
      %v1914 = vpop.f32.mrb[0].mxu0
      %v1915 = vadd.f32 %v1738, %v1914
      %v1916 = vpop.f32.mrb[0].mxu0
      %v1917 = vpop.f32.mrb[0].mxu0
      %v1918 = vadd.f32 %v1741, %v1917
      %v1919 = vpop.f32.mrb[0].mxu0
      %1920 = vmatprep.mubr.bf16.mxu0 %v1248
      %1921 = vmatmul.mubr.bf16.gmra.mrb[0].mxu0 %v1247
      %v1922 = vpop.f32.mrb[0].mxu0
      %v1923 = vadd.f32 %v1746, %v1922
      %v1924 = vpop.f32.mrb[0].mxu0
      %v1925 = vpop.f32.mrb[0].mxu0
      %v1926 = vadd.f32 %v1749, %v1925
      %v1927 = vpop.f32.mrb[0].mxu0
      %1928 = vmatprep.mubr.bf16.mxu0 %v1253
      %1929 = vmatmul.mubr.bf16.gmra.mrb[0].mxu0 %v1252
      %v1930 = vpop.f32.mrb[0].mxu0
      %v1931 = vadd.f32 %v1754, %v1930
      %v1932 = vpop.f32.mrb[0].mxu0
      %v1933 = vpop.f32.mrb[0].mxu0
      %v1934 = vadd.f32 %v1757, %v1933
      %v1935 = vpop.f32.mrb[0].mxu0
      %1936 = vmatprep.mubr.bf16.mxu0 %v1258
      %1937 = vmatmul.mubr.bf16.gmra.mrb[0].mxu0 %v1257
      %v1938 = vpop.f32.mrb[0].mxu0
      %v1939 = vadd.f32 %v1762, %v1938
      %v1940 = vpop.f32.mrb[0].mxu0
      %v1941 = vpop.f32.mrb[0].mxu0
      %v1942 = vadd.f32 %v1765, %v1941
      %v1943 = vpop.f32.mrb[0].mxu0
      %1944 = vmatprep.mubr.bf16.mxu0 %v1263
      %1945 = vmatmul.mubr.bf16.gmra.mrb[0].mxu0 %v1262
      %v1946 = vpop.f32.mrb[0].mxu0
      %v1947 = vadd.f32 %v1770, %v1946
      %v1948 = vpop.f32.mrb[0].mxu0
      %v1949 = vpop.f32.mrb[0].mxu0
      %v1950 = vadd.f32 %v1773, %v1949
      %v1951 = vpop.f32.mrb[0].mxu0
      %1952 = vmatprep.mubr.bf16.mxu0 %v1268
      %1953 = vmatmul.mubr.bf16.gmra.mrb[0].mxu0 %v1267
      %v1954 = vpop.f32.mrb[0].mxu0
      %v1955 = vadd.f32 %v1778, %v1954
      %v1956 = vpop.f32.mrb[0].mxu0
      %v1957 = vpop.f32.mrb[0].mxu0
      %v1958 = vadd.f32 %v1781, %v1957
      %v1959 = vpop.f32.mrb[0].mxu0
      %1960 = vmatprep.mubr.bf16.mxu0 %v1273
      %1961 = vmatmul.mubr.bf16.gmra.mrb[0].mxu0 %v1272
      %v1962 = vpop.f32.mrb[0].mxu0
      %v1963 = vadd.f32 %v1786, %v1962
      %v1964 = vpop.f32.mrb[0].mxu0
      %v1965 = vpop.f32.mrb[0].mxu0
      %v1966 = vadd.f32 %v1789, %v1965
      %v1967 = vpop.f32.mrb[0].mxu0
      %1968 = vmatprep.mubr.bf16.mxu0 %v1278
      %1969 = vmatmul.mubr.bf16.gmra.mrb[0].mxu0 %v1277
      %v1970 = vpop.f32.mrb[0].mxu0
      %v1971 = vadd.f32 %v1794, %v1970
      %v1972 = vpop.f32.mrb[0].mxu0
      %v1973 = vpop.f32.mrb[0].mxu0
      %v1974 = vadd.f32 %v1797, %v1973
      %v1975 = vpop.f32.mrb[0].mxu0
      %1976 = vmatprep.mubr.bf16.mxu0 %v1283
      %1977 = vmatmul.mubr.bf16.gmra.mrb[0].mxu0 %v1282
      %v1978 = vpop.f32.mrb[0].mxu0
      %v1979 = vadd.f32 %v1802, %v1978
      %v1980 = vpop.f32.mrb[0].mxu0
      %v1981 = vpop.f32.mrb[0].mxu0
      %v1982 = vadd.f32 %v1805, %v1981
      %v1983 = vpop.f32.mrb[0].mxu0
      %1984 = vmatprep.mubr.bf16.mxu0 %v1288
      %1985 = vmatmul.mubr.bf16.gmra.mrb[0].mxu0 %v1287
      %v1986 = vpop.f32.mrb[0].mxu0
      %v1987 = vadd.f32 %v1810, %v1986
      %v1988 = vpop.f32.mrb[0].mxu0
      %v1989 = vpop.f32.mrb[0].mxu0
      %v1990 = vadd.f32 %v1813, %v1989
      %v1991 = vpop.f32.mrb[0].mxu0
      %1992 = vdwg.mxu0
      %1993 = vmatprep.subr.bf16.mxu0 0
      %1994 = vmatpush1.bf16.msra.mxu0 %v1545
      %1995 = vmatprep.subr.bf16.mxu0 0
      %1996 = vmatpush1.bf16.msra.mxu0 %v1546
      %1997 = vmatprep.subr.bf16.mxu0 0
      %1998 = vmatpush1.bf16.msra.mxu0 %v1547
      %1999 = vmatprep.subr.bf16.mxu0 0
      %2000 = vmatpush1.bf16.msra.mxu0 %v1548
      %2001 = vmatprep.subr.bf16.mxu0 0
      %2002 = vmatpush1.bf16.msra.mxu0 0
      %2003 = vmatprep.subr.bf16.mxu0 0
      %2004 = vmatpush1.bf16.msra.mxu0 0
      %2005 = vmatprep.subr.bf16.mxu0 0
      %2006 = vmatpush1.bf16.msra.mxu0 0
      %2007 = vmatprep.subr.bf16.mxu0 0
      %2008 = vmatpush1.bf16.msra.mxu0 0
      %2009 = vmatprep.subr.bf16.mxu0 0
      %2010 = vmatpush1.bf16.msra.mxu0 0
      %2011 = vmatprep.subr.bf16.mxu0 0
      %2012 = vmatpush1.bf16.msra.mxu0 0
      %2013 = vmatprep.subr.bf16.mxu0 0
      %2014 = vmatpush1.bf16.msra.mxu0 0
      %2015 = vmatprep.subr.bf16.mxu0 0
      %2016 = vmatpush1.bf16.msra.mxu0 0
      %2017 = vmatprep.subr.bf16.mxu0 0
      %2018 = vmatpush1.bf16.msra.mxu0 0
      %2019 = vmatprep.subr.bf16.mxu0 0
      %2020 = vmatpush1.bf16.msra.mxu0 0
      %2021 = vmatprep.subr.bf16.mxu0 0
      %2022 = vmatpush1.bf16.msra.mxu0 0
      %2023 = vmatprep.subr.bf16.mxu0 0
      %2024 = vmatpush1.bf16.msra.mxu0 0
      %2025 = vmatprep.mubr.bf16.mxu0 0
      %2026 = vmatmul.mubr.bf16.gmra.mrb[0].mxu0 %v1586
      %v2027 = vpop.f32.mrb[0].mxu0
      %v2028 = vadd.f32 %v1851, %v2027
      %v2029 = vpop.f32.mrb[0].mxu0
      %v2030 = vpop.f32.mrb[0].mxu0
      %v2031 = vadd.f32 %v1854, %v2030
      %v2032 = vpop.f32.mrb[0].mxu0
      %2033 = vmatprep.mubr.bf16.mxu0 0
      %2034 = vmatmul.mubr.bf16.gmra.mrb[0].mxu0 %v1589
      %v2035 = vpop.f32.mrb[0].mxu0
      %v2036 = vadd.f32 %v1859, %v2035
      %v2037 = vpop.f32.mrb[0].mxu0
      %v2038 = vpop.f32.mrb[0].mxu0
      %v2039 = vadd.f32 %v1862, %v2038
      %v2040 = vpop.f32.mrb[0].mxu0
      %2041 = vmatprep.mubr.bf16.mxu0 0
      %2042 = vmatmul.mubr.bf16.gmra.mrb[0].mxu0 %v1592
      %v2043 = vpop.f32.mrb[0].mxu0
      %v2044 = vadd.f32 %v1867, %v2043
      %v2045 = vpop.f32.mrb[0].mxu0
      %v2046 = vpop.f32.mrb[0].mxu0
      %v2047 = vadd.f32 %v1870, %v2046
      %v2048 = vpop.f32.mrb[0].mxu0
      %2049 = vmatprep.mubr.bf16.mxu0 0
      %2050 = vmatmul.mubr.bf16.gmra.mrb[0].mxu0 %v1595
      %v2051 = vpop.f32.mrb[0].mxu0
      %v2052 = vadd.f32 %v1875, %v2051
      %v2053 = vpop.f32.mrb[0].mxu0
      %v2054 = vpop.f32.mrb[0].mxu0
      %v2055 = vadd.f32 %v1878, %v2054
      %v2056 = vpop.f32.mrb[0].mxu0
      %2057 = vmatprep.mubr.bf16.mxu0 0
      %2058 = vmatmul.mubr.bf16.gmra.mrb[0].mxu0 %v1598
      %v2059 = vpop.f32.mrb[0].mxu0
      %v2060 = vadd.f32 %v1883, %v2059
      %v2061 = vpop.f32.mrb[0].mxu0
      %v2062 = vpop.f32.mrb[0].mxu0
      %v2063 = vadd.f32 %v1886, %v2062
      %v2064 = vpop.f32.mrb[0].mxu0
      %2065 = vmatprep.mubr.bf16.mxu0 0
      %2066 = vmatmul.mubr.bf16.gmra.mrb[0].mxu0 %v1601
      %v2067 = vpop.f32.mrb[0].mxu0
      %v2068 = vadd.f32 %v1891, %v2067
      %v2069 = vpop.f32.mrb[0].mxu0
      %v2070 = vpop.f32.mrb[0].mxu0
      %v2071 = vadd.f32 %v1894, %v2070
      %v2072 = vpop.f32.mrb[0].mxu0
      %2073 = vmatprep.mubr.bf16.mxu0 0
      %2074 = vmatmul.mubr.bf16.gmra.mrb[0].mxu0 %v1604
      %v2075 = vpop.f32.mrb[0].mxu0
      %v2076 = vadd.f32 %v1899, %v2075
      %v2077 = vpop.f32.mrb[0].mxu0
      %v2078 = vpop.f32.mrb[0].mxu0
      %v2079 = vadd.f32 %v1902, %v2078
      %v2080 = vpop.f32.mrb[0].mxu0
      %2081 = vmatprep.mubr.bf16.mxu0 0
      %2082 = vmatmul.mubr.bf16.gmra.mrb[0].mxu0 %v1607
      %v2083 = vpop.f32.mrb[0].mxu0
      %v2084 = vadd.f32 %v1907, %v2083
      %v2085 = vpop.f32.mrb[0].mxu0
      %v2086 = vpop.f32.mrb[0].mxu0
      %v2087 = vadd.f32 %v1910, %v2086
      %v2088 = vpop.f32.mrb[0].mxu0
      %2089 = vmatprep.mubr.bf16.mxu0 0
      %2090 = vmatmul.mubr.bf16.gmra.mrb[0].mxu0 %v1610
      %v2091 = vpop.f32.mrb[0].mxu0
      %v2092 = vadd.f32 %v1915, %v2091
      %v2093 = vpop.f32.mrb[0].mxu0
      %v2094 = vpop.f32.mrb[0].mxu0
      %v2095 = vadd.f32 %v1918, %v2094
      %v2096 = vpop.f32.mrb[0].mxu0
      %2097 = vmatprep.mubr.bf16.mxu0 0
      %2098 = vmatmul.mubr.bf16.gmra.mrb[0].mxu0 %v1613
      %v2099 = vpop.f32.mrb[0].mxu0
      %v2100 = vadd.f32 %v1923, %v2099
      %v2101 = vpop.f32.mrb[0].mxu0
      %v2102 = vpop.f32.mrb[0].mxu0
      %v2103 = vadd.f32 %v1926, %v2102
      %v2104 = vpop.f32.mrb[0].mxu0
      %2105 = vmatprep.mubr.bf16.mxu0 0
      %2106 = vmatmul.mubr.bf16.gmra.mrb[0].mxu0 %v1616
      %v2107 = vpop.f32.mrb[0].mxu0
      %v2108 = vadd.f32 %v1931, %v2107
      %v2109 = vpop.f32.mrb[0].mxu0
      %v2110 = vpop.f32.mrb[0].mxu0
      %v2111 = vadd.f32 %v1934, %v2110
      %v2112 = vpop.f32.mrb[0].mxu0
      %2113 = vmatprep.mubr.bf16.mxu0 0
      %2114 = vmatmul.mubr.bf16.gmra.mrb[0].mxu0 %v1619
      %v2115 = vpop.f32.mrb[0].mxu0
      %v2116 = vadd.f32 %v1939, %v2115
      %v2117 = vpop.f32.mrb[0].mxu0
      %v2118 = vpop.f32.mrb[0].mxu0
      %v2119 = vadd.f32 %v1942, %v2118
      %v2120 = vpop.f32.mrb[0].mxu0
      %2121 = vmatprep.mubr.bf16.mxu0 0
      %2122 = vmatmul.mubr.bf16.gmra.mrb[0].mxu0 %v1622
      %v2123 = vpop.f32.mrb[0].mxu0
      %v2124 = vadd.f32 %v1947, %v2123
      %v2125 = vpop.f32.mrb[0].mxu0
      %v2126 = vpop.f32.mrb[0].mxu0
      %v2127 = vadd.f32 %v1950, %v2126
      %v2128 = vpop.f32.mrb[0].mxu0
      %2129 = vmatprep.mubr.bf16.mxu0 0
      %2130 = vmatmul.mubr.bf16.gmra.mrb[0].mxu0 %v1625
      %v2131 = vpop.f32.mrb[0].mxu0
      %v2132 = vadd.f32 %v1955, %v2131
      %v2133 = vpop.f32.mrb[0].mxu0
      %v2134 = vpop.f32.mrb[0].mxu0
      %v2135 = vadd.f32 %v1958, %v2134
      %v2136 = vpop.f32.mrb[0].mxu0
      %2137 = vmatprep.mubr.bf16.mxu0 0
      %2138 = vmatmul.mubr.bf16.gmra.mrb[0].mxu0 %v1628
      %v2139 = vpop.f32.mrb[0].mxu0
      %v2140 = vadd.f32 %v1963, %v2139
      %v2141 = vpop.f32.mrb[0].mxu0
      %v2142 = vpop.f32.mrb[0].mxu0
      %v2143 = vadd.f32 %v1966, %v2142
      %v2144 = vpop.f32.mrb[0].mxu0
      %2145 = vmatprep.mubr.bf16.mxu0 0
      %2146 = vmatmul.mubr.bf16.gmra.mrb[0].mxu0 %v1631
      %v2147 = vpop.f32.mrb[0].mxu0
      %v2148 = vadd.f32 %v1971, %v2147
      %v2149 = vpop.f32.mrb[0].mxu0
      %v2150 = vpop.f32.mrb[0].mxu0
      %v2151 = vadd.f32 %v1974, %v2150
      %v2152 = vpop.f32.mrb[0].mxu0
      %2153 = vmatprep.mubr.bf16.mxu0 0
      %2154 = vmatmul.mubr.bf16.gmra.mrb[0].mxu0 %v1634
      %v2155 = vpop.f32.mrb[0].mxu0
      %v2156 = vadd.f32 %v1979, %v2155
      %v2157 = vpop.f32.mrb[0].mxu0
      %v2158 = vpop.f32.mrb[0].mxu0
      %v2159 = vadd.f32 %v1982, %v2158
      %v2160 = vpop.f32.mrb[0].mxu0
      %2161 = vmatprep.mubr.bf16.mxu0 0
      %2162 = vmatmul.mubr.bf16.gmra.mrb[0].mxu0 %v1637
      %v2163 = vpop.f32.mrb[0].mxu0
      %v2164 = vadd.f32 %v1987, %v2163
      %v2165 = vpop.f32.mrb[0].mxu0
      %v2166 = vpop.f32.mrb[0].mxu0
      %v2167 = vadd.f32 %v1990, %v2166
      %v2168 = vpop.f32.mrb[0].mxu0
      %2169 = vdwg.mxu0
      %vm2170 = vcmp.gt.f32.partialorder %v2028, 0.0
      %vm2171 = vcmp.gt.f32.partialorder %v2031, 0.0
      %vm2172 = vcmp.gt.f32.partialorder %v2036, 0.0
      %vm2173 = vcmp.gt.f32.partialorder %v2039, 0.0
      %vm2174 = vcmp.gt.f32.partialorder %v2044, 0.0
      %vm2175 = vcmp.gt.f32.partialorder %v2047, 0.0
      %vm2176 = vcmp.gt.f32.partialorder %v2052, 0.0
      %vm2177 = vcmp.gt.f32.partialorder %v2055, 0.0
      %vm2178 = vcmp.gt.f32.partialorder %v2060, 0.0
      %vm2179 = vcmp.gt.f32.partialorder %v2063, 0.0
      %vm2180 = vcmp.gt.f32.partialorder %v2068, 0.0
      %vm2181 = vcmp.gt.f32.partialorder %v2071, 0.0
      %vm2182 = vcmp.gt.f32.partialorder %v2076, 0.0
      %vm2183 = vcmp.gt.f32.partialorder %v2079, 0.0
      %vm2184 = vcmp.gt.f32.partialorder %v2084, 0.0
      %vm2185 = vcmp.gt.f32.partialorder %v2087, 0.0
      %vm2186 = vcmp.gt.f32.partialorder %v2092, 0.0
      %vm2187 = vcmp.gt.f32.partialorder %v2095, 0.0
      %vm2188 = vcmp.gt.f32.partialorder %v2100, 0.0
      %vm2189 = vcmp.gt.f32.partialorder %v2103, 0.0
      %vm2190 = vcmp.gt.f32.partialorder %v2108, 0.0
      %vm2191 = vcmp.gt.f32.partialorder %v2111, 0.0
      %vm2192 = vcmp.gt.f32.partialorder %v2116, 0.0
      %vm2193 = vcmp.gt.f32.partialorder %v2119, 0.0
      %vm2194 = vcmp.gt.f32.partialorder %v2124, 0.0
      %vm2195 = vcmp.gt.f32.partialorder %v2127, 0.0
      %vm2196 = vcmp.gt.f32.partialorder %v2132, 0.0
      %vm2197 = vcmp.gt.f32.partialorder %v2135, 0.0
      %vm2198 = vcmp.gt.f32.partialorder %v2140, 0.0
      %vm2199 = vcmp.gt.f32.partialorder %v2143, 0.0
      %vm2200 = vcmp.gt.f32.partialorder %v2148, 0.0
      %vm2201 = vcmp.gt.f32.partialorder %v2151, 0.0
      %vm2202 = vcmp.gt.f32.partialorder %v2156, 0.0
      %vm2203 = vcmp.gt.f32.partialorder %v2159, 0.0
      %vm2204 = vcmp.gt.f32.partialorder %v2164, 0.0
      %vm2205 = vcmp.gt.f32.partialorder %v2167, 0.0
      %v2206 = vmul.f32 %v2028, 0.01
      %v2207 = vmul.f32 %v2031, 0.01
      %v2208 = vmul.f32 %v2036, 0.01
      %v2209 = vmul.f32 %v2039, 0.01
      %v2210 = vmul.f32 %v2044, 0.01
      %v2211 = vmul.f32 %v2047, 0.01
      %v2212 = vmul.f32 %v2052, 0.01
      %v2213 = vmul.f32 %v2055, 0.01
      %v2214 = vmul.f32 %v2060, 0.01
      %v2215 = vmul.f32 %v2063, 0.01
      %v2216 = vmul.f32 %v2068, 0.01
      %v2217 = vmul.f32 %v2071, 0.01
      %v2218 = vmul.f32 %v2076, 0.01
      %v2219 = vmul.f32 %v2079, 0.01
      %v2220 = vmul.f32 %v2084, 0.01
      %v2221 = vmul.f32 %v2087, 0.01
      %v2222 = vmul.f32 %v2092, 0.01
      %v2223 = vmul.f32 %v2095, 0.01
      %v2224 = vmul.f32 %v2100, 0.01
      %v2225 = vmul.f32 %v2103, 0.01
      %v2226 = vmul.f32 %v2108, 0.01
      %v2227 = vmul.f32 %v2111, 0.01
      %v2228 = vmul.f32 %v2116, 0.01
      %v2229 = vmul.f32 %v2119, 0.01
      %v2230 = vmul.f32 %v2124, 0.01
      %v2231 = vmul.f32 %v2127, 0.01
      %v2232 = vmul.f32 %v2132, 0.01
      %v2233 = vmul.f32 %v2135, 0.01
      %v2234 = vmul.f32 %v2140, 0.01
      %v2235 = vmul.f32 %v2143, 0.01
      %v2236 = vmul.f32 %v2148, 0.01
      %v2237 = vmul.f32 %v2151, 0.01
      %v2238 = vmul.f32 %v2156, 0.01
      %v2239 = vmul.f32 %v2159, 0.01
      %v2240 = vmul.f32 %v2164, 0.01
      %v2241 = vmul.f32 %v2167, 0.01
      %v2242 = vsel %vm2170, %v2028, %v2206
      %v2243 = vsel %vm2171, %v2031, %v2207
      %v2244 = vsel %vm2172, %v2036, %v2208
      %v2245 = vsel %vm2173, %v2039, %v2209
      %v2246 = vsel %vm2174, %v2044, %v2210
      %v2247 = vsel %vm2175, %v2047, %v2211
      %v2248 = vsel %vm2176, %v2052, %v2212
      %v2249 = vsel %vm2177, %v2055, %v2213
      %v2250 = vsel %vm2178, %v2060, %v2214
      %v2251 = vsel %vm2179, %v2063, %v2215
      %v2252 = vsel %vm2180, %v2068, %v2216
      %v2253 = vsel %vm2181, %v2071, %v2217
      %v2254 = vsel %vm2182, %v2076, %v2218
      %v2255 = vsel %vm2183, %v2079, %v2219
      %v2256 = vsel %vm2184, %v2084, %v2220
      %v2257 = vsel %vm2185, %v2087, %v2221
      %v2258 = vsel %vm2186, %v2092, %v2222
      %v2259 = vsel %vm2187, %v2095, %v2223
      %v2260 = vsel %vm2188, %v2100, %v2224
      %v2261 = vsel %vm2189, %v2103, %v2225
      %v2262 = vsel %vm2190, %v2108, %v2226
      %v2263 = vsel %vm2191, %v2111, %v2227
      %v2264 = vsel %vm2192, %v2116, %v2228
      %v2265 = vsel %vm2193, %v2119, %v2229
      %v2266 = vsel %vm2194, %v2124, %v2230
      %v2267 = vsel %vm2195, %v2127, %v2231
      %v2268 = vsel %vm2196, %v2132, %v2232
      %v2269 = vsel %vm2197, %v2135, %v2233
      %v2270 = vsel %vm2198, %v2140, %v2234
      %v2271 = vsel %vm2199, %v2143, %v2235
      %v2272 = vsel %vm2200, %v2148, %v2236
      %v2273 = vsel %vm2201, %v2151, %v2237
      %v2274 = vsel %vm2202, %v2156, %v2238
      %v2275 = vsel %vm2203, %v2159, %v2239
      %v2276 = vsel %vm2204, %v2164, %v2240
      %v2277 = vsel %vm2205, %v2167, %v2241
      %v2278 = vld [vmem:[%s1] sm:$0xff]
      %v2279 = vld [vmem:[%s1 + $0x8] sm:$0xff]
      %v2280 = vld [vmem:[%s1 + $0x10] sm:$0xff]
      %v2281 = vld [vmem:[%s1 + $0x18] sm:$0xff]
      %v2282 = vld [vmem:[%s1 + $0x20] sm:$0xff]
      %v2283 = vld [vmem:[%s1 + $0x28] sm:$0xff]
      %v2284 = vld [vmem:[%s1 + $0x30] sm:$0xff]
      %v2285 = vld [vmem:[%s1 + $0x38] sm:$0xff]
      %v2286 = vld [vmem:[%s1 + $0x40] sm:$0xff]
      %v2287 = vld [vmem:[%s1 + $0x48] sm:$0xff]
      %v2288 = vld [vmem:[%s1 + $0x50] sm:$0xff]
      %v2289 = vld [vmem:[%s1 + $0x58] sm:$0xff]
      %v2290 = vld [vmem:[%s1 + $0x60] sm:$0xff]
      %v2291 = vld [vmem:[%s1 + $0x68] sm:$0xff]
      %v2292 = vld [vmem:[%s1 + $0x70] sm:$0xff]
      %v2293 = vld [vmem:[%s1 + $0x78] sm:$0xff]
      %v2294 = vld [vmem:[%s1 + $0x80] sm:$0xff]
      %v2295 = vld [vmem:[%s1 + $0x88] sm:$0xff]
      %v2296 = vld [vmem:[%s1 + $0x90] sm:$0xff]
      %v2297 = vld [vmem:[%s1 + $0x98] sm:$0xff]
      %v2298 = vld [vmem:[%s1 + $0xa0] sm:$0xff]
      %v2299 = vld [vmem:[%s1 + $0xa8] sm:$0xff]
      %v2300 = vld [vmem:[%s1 + $0xb0] sm:$0xff]
      %v2301 = vld [vmem:[%s1 + $0xb8] sm:$0xff]
      %v2302 = vld [vmem:[%s1 + $0xc0] sm:$0xff]
      %v2303 = vld [vmem:[%s1 + $0xc8] sm:$0xff]
      %v2304 = vld [vmem:[%s1 + $0xd0] sm:$0xff]
      %v2305 = vld [vmem:[%s1 + $0xd8] sm:$0xff]
      %v2306 = vld [vmem:[%s1 + $0xe0] sm:$0xff]
      %v2307 = vld [vmem:[%s1 + $0xe8] sm:$0xff]
      %v2308 = vld [vmem:[%s1 + $0xf0] sm:$0xff]
      %v2309 = vld [vmem:[%s1 + $0xf8] sm:$0xff]
      %v2310 = vld [vmem:[%s1 + $0x100] sm:$0xff]
      %v2311 = vld [vmem:[%s1 + $0x108] sm:$0xff]
      %v2312 = vld [vmem:[%s1 + $0x110] sm:$0xff]
      %v2313 = vld [vmem:[%s1 + $0x118] sm:$0xff]
      %2315 = vset.pattern.permute.xlu0 0
      %2316 = vperm.xlu0 %2315, %v2278
      %v2317 = vpop.permute.xlu0 %2316
      %2320 = vset.pattern.permute.xlu0 0
      %2321 = vperm.xlu0 %2320, %v2279
      %v2322 = vpop.permute.xlu0 %2321
      %2325 = vset.pattern.permute.xlu0 0
      %2326 = vperm.xlu0 %2325, %v2280
      %v2327 = vpop.permute.xlu0 %2326
      %2330 = vset.pattern.permute.xlu0 0
      %2331 = vperm.xlu0 %2330, %v2281
      %v2332 = vpop.permute.xlu0 %2331
      %2335 = vset.pattern.permute.xlu0 0
      %2336 = vperm.xlu0 %2335, %v2282
      %v2337 = vpop.permute.xlu0 %2336
      %2340 = vset.pattern.permute.xlu0 0
      %2341 = vperm.xlu0 %2340, %v2283
      %v2342 = vpop.permute.xlu0 %2341
      %2345 = vset.pattern.permute.xlu0 0
      %2346 = vperm.xlu0 %2345, %v2284
      %v2347 = vpop.permute.xlu0 %2346
      %2350 = vset.pattern.permute.xlu0 0
      %2351 = vperm.xlu0 %2350, %v2285
      %v2352 = vpop.permute.xlu0 %2351
      %2355 = vset.pattern.permute.xlu0 0
      %2356 = vperm.xlu0 %2355, %v2286
      %v2357 = vpop.permute.xlu0 %2356
      %2360 = vset.pattern.permute.xlu0 0
      %2361 = vperm.xlu0 %2360, %v2287
      %v2362 = vpop.permute.xlu0 %2361
      %2365 = vset.pattern.permute.xlu0 0
      %2366 = vperm.xlu0 %2365, %v2288
      %v2367 = vpop.permute.xlu0 %2366
      %2370 = vset.pattern.permute.xlu0 0
      %2371 = vperm.xlu0 %2370, %v2289
      %v2372 = vpop.permute.xlu0 %2371
      %2375 = vset.pattern.permute.xlu0 0
      %2376 = vperm.xlu0 %2375, %v2290
      %v2377 = vpop.permute.xlu0 %2376
      %2380 = vset.pattern.permute.xlu0 0
      %2381 = vperm.xlu0 %2380, %v2291
      %v2382 = vpop.permute.xlu0 %2381
      %2385 = vset.pattern.permute.xlu0 0
      %2386 = vperm.xlu0 %2385, %v2292
      %v2387 = vpop.permute.xlu0 %2386
      %2390 = vset.pattern.permute.xlu0 0
      %2391 = vperm.xlu0 %2390, %v2293
      %v2392 = vpop.permute.xlu0 %2391
      %2395 = vset.pattern.permute.xlu0 0
      %2396 = vperm.xlu0 %2395, %v2294
      %v2397 = vpop.permute.xlu0 %2396
      %2400 = vset.pattern.permute.xlu0 0
      %2401 = vperm.xlu0 %2400, %v2295
      %v2402 = vpop.permute.xlu0 %2401
      %2405 = vset.pattern.permute.xlu0 0
      %2406 = vperm.xlu0 %2405, %v2296
      %v2407 = vpop.permute.xlu0 %2406
      %2410 = vset.pattern.permute.xlu0 0
      %2411 = vperm.xlu0 %2410, %v2297
      %v2412 = vpop.permute.xlu0 %2411
      %2415 = vset.pattern.permute.xlu0 0
      %2416 = vperm.xlu0 %2415, %v2298
      %v2417 = vpop.permute.xlu0 %2416
      %2420 = vset.pattern.permute.xlu0 0
      %2421 = vperm.xlu0 %2420, %v2299
      %v2422 = vpop.permute.xlu0 %2421
      %2425 = vset.pattern.permute.xlu0 0
      %2426 = vperm.xlu0 %2425, %v2300
      %v2427 = vpop.permute.xlu0 %2426
      %2430 = vset.pattern.permute.xlu0 0
      %2431 = vperm.xlu0 %2430, %v2301
      %v2432 = vpop.permute.xlu0 %2431
      %2435 = vset.pattern.permute.xlu0 0
      %2436 = vperm.xlu0 %2435, %v2302
      %v2437 = vpop.permute.xlu0 %2436
      %2440 = vset.pattern.permute.xlu0 0
      %2441 = vperm.xlu0 %2440, %v2303
      %v2442 = vpop.permute.xlu0 %2441
      %2445 = vset.pattern.permute.xlu0 0
      %2446 = vperm.xlu0 %2445, %v2304
      %v2447 = vpop.permute.xlu0 %2446
      %2450 = vset.pattern.permute.xlu0 0
      %2451 = vperm.xlu0 %2450, %v2305
      %v2452 = vpop.permute.xlu0 %2451
      %2455 = vset.pattern.permute.xlu0 0
      %2456 = vperm.xlu0 %2455, %v2306
      %v2457 = vpop.permute.xlu0 %2456
      %2460 = vset.pattern.permute.xlu0 0
      %2461 = vperm.xlu0 %2460, %v2307
      %v2462 = vpop.permute.xlu0 %2461
      %2465 = vset.pattern.permute.xlu0 0
      %2466 = vperm.xlu0 %2465, %v2308
      %v2467 = vpop.permute.xlu0 %2466
      %2470 = vset.pattern.permute.xlu0 0
      %2471 = vperm.xlu0 %2470, %v2309
      %v2472 = vpop.permute.xlu0 %2471
      %2475 = vset.pattern.permute.xlu0 0
      %2476 = vperm.xlu0 %2475, %v2310
      %v2477 = vpop.permute.xlu0 %2476
      %2480 = vset.pattern.permute.xlu0 0
      %2481 = vperm.xlu0 %2480, %v2311
      %v2482 = vpop.permute.xlu0 %2481
      %2485 = vset.pattern.permute.xlu0 0
      %2486 = vperm.xlu0 %2485, %v2312
      %v2487 = vpop.permute.xlu0 %2486
      %2490 = vset.pattern.permute.xlu0 0
      %2491 = vperm.xlu0 %2490, %v2313
      %v2492 = vpop.permute.xlu0 %2491
      %v2494 = vmul.f32 %v2242, %v2317
      %v2495 = vmul.f32 %v2243, %v2322
      %v2496 = vmul.f32 %v2244, %v2327
      %v2497 = vmul.f32 %v2245, %v2332
      %v2498 = vmul.f32 %v2246, %v2337
      %v2499 = vmul.f32 %v2247, %v2342
      %v2500 = vmul.f32 %v2248, %v2347
      %v2501 = vmul.f32 %v2249, %v2352
      %v2502 = vmul.f32 %v2250, %v2357
      %v2503 = vmul.f32 %v2251, %v2362
      %v2504 = vmul.f32 %v2252, %v2367
      %v2505 = vmul.f32 %v2253, %v2372
      %v2506 = vmul.f32 %v2254, %v2377
      %v2507 = vmul.f32 %v2255, %v2382
      %v2508 = vmul.f32 %v2256, %v2387
      %v2509 = vmul.f32 %v2257, %v2392
      %v2510 = vmul.f32 %v2258, %v2397
      %v2511 = vmul.f32 %v2259, %v2402
      %v2512 = vmul.f32 %v2260, %v2407
      %v2513 = vmul.f32 %v2261, %v2412
      %v2514 = vmul.f32 %v2262, %v2417
      %v2515 = vmul.f32 %v2263, %v2422
      %v2516 = vmul.f32 %v2264, %v2427
      %v2517 = vmul.f32 %v2265, %v2432
      %v2518 = vmul.f32 %v2266, %v2437
      %v2519 = vmul.f32 %v2267, %v2442
      %v2520 = vmul.f32 %v2268, %v2447
      %v2521 = vmul.f32 %v2269, %v2452
      %v2522 = vmul.f32 %v2270, %v2457
      %v2523 = vmul.f32 %v2271, %v2462
      %v2524 = vmul.f32 %v2272, %v2467
      %v2525 = vmul.f32 %v2273, %v2472
      %v2526 = vmul.f32 %v2274, %v2477
      %v2527 = vmul.f32 %v2275, %v2482
      %v2528 = vmul.f32 %v2276, %v2487
      %v2529 = vmul.f32 %v2277, %v2492
      %v2530 = vpack.c.bf16 %v2495, %v2494
      %v2531 = vpack.c.bf16 %v2497, %v2496
      %v2532 = vpack.c.bf16 %v2499, %v2498
      %v2533 = vpack.c.bf16 %v2501, %v2500
      %v2534 = vpack.c.bf16 %v2503, %v2502
      %v2535 = vpack.c.bf16 %v2505, %v2504
      %v2536 = vpack.c.bf16 %v2507, %v2506
      %v2537 = vpack.c.bf16 %v2509, %v2508
      %v2538 = vpack.c.bf16 %v2511, %v2510
      %v2539 = vpack.c.bf16 %v2513, %v2512
      %v2540 = vpack.c.bf16 %v2515, %v2514
      %v2541 = vpack.c.bf16 %v2517, %v2516
      %v2542 = vpack.c.bf16 %v2519, %v2518
      %v2543 = vpack.c.bf16 %v2521, %v2520
      %v2544 = vpack.c.bf16 %v2523, %v2522
      %v2545 = vpack.c.bf16 %v2525, %v2524
      %v2546 = vpack.c.bf16 %v2527, %v2526
      %v2547 = vpack.c.bf16 %v2529, %v2528
      %2548 = vst.msk [vmem:[#allocation4] sm:$0xff] %vm253, %v2530
      %2549 = vst.msk [vmem:[#allocation4 + $0x10] sm:$0xff] %vm253, %v2531
      %2550 = vst.msk [vmem:[#allocation4 + $0x20] sm:$0xff] %vm253, %v2532
      %2551 = vst.msk [vmem:[#allocation4 + $0x30] sm:$0xff] %vm253, %v2533
      %2552 = vst.msk [vmem:[#allocation4 + $0x40] sm:$0xff] %vm253, %v2534
      %2553 = vst.msk [vmem:[#allocation4 + $0x50] sm:$0xff] %vm253, %v2535
      %2554 = vst.msk [vmem:[#allocation4 + $0x60] sm:$0xff] %vm253, %v2536
      %2555 = vst.msk [vmem:[#allocation4 + $0x70] sm:$0xff] %vm253, %v2537
      %2556 = vst.msk [vmem:[#allocation4 + $0x80] sm:$0xff] %vm253, %v2538
      %2557 = vst.msk [vmem:[#allocation4 + $0x90] sm:$0xff] %vm253, %v2539
      %2558 = vst.msk [vmem:[#allocation4 + $0xa0] sm:$0xff] %vm253, %v2540
      %2559 = vst.msk [vmem:[#allocation4 + $0xb0] sm:$0xff] %vm253, %v2541
      %2560 = vst.msk [vmem:[#allocation4 + $0xc0] sm:$0xff] %vm253, %v2542
      %2561 = vst.msk [vmem:[#allocation4 + $0xd0] sm:$0xff] %vm253, %v2543
      %2562 = vst.msk [vmem:[#allocation4 + $0xe0] sm:$0xff] %vm253, %v2544
      %2563 = vst.msk [vmem:[#allocation4 + $0xf0] sm:$0xff] %vm253, %v2545
      %2564 = vst.msk [vmem:[#allocation4 + $0x100] sm:$0xff] %vm253, %v2546
      %2565 = vst.msk [vmem:[#allocation4 + $0x110] sm:$0xff] %vm253, %v2547
      %2566 = vst.msk [vmem:[#allocation2 + $0x13] sm:$0xff] %vm253, %v2494
      %2567 = vst.msk [vmem:[#allocation2 + $0x1b] sm:$0xff] %vm253, %v2495
      %2568 = vst.msk [vmem:[#allocation2 + $0x23] sm:$0xff] %vm253, %v2496
      %2569 = vst.msk [vmem:[#allocation2 + $0x2b] sm:$0xff] %vm253, %v2497
      %2570 = vst.msk [vmem:[#allocation2 + $0x33] sm:$0xff] %vm253, %v2498
      %2571 = vst.msk [vmem:[#allocation2 + $0x3b] sm:$0xff] %vm253, %v2499
      %2572 = vst.msk [vmem:[#allocation2 + $0x43] sm:$0xff] %vm253, %v2500
      %2573 = vst.msk [vmem:[#allocation2 + $0x4b] sm:$0xff] %vm253, %v2501
      %2574 = vst.msk [vmem:[#allocation2 + $0x53] sm:$0xff] %vm253, %v2502
      %2575 = vst.msk [vmem:[#allocation2 + $0x5b] sm:$0xff] %vm253, %v2503
      %2576 = vst.msk [vmem:[#allocation2 + $0x63] sm:$0xff] %vm253, %v2504
      %2577 = vst.msk [vmem:[#allocation2 + $0x6b] sm:$0xff] %vm253, %v2505
      %2578 = vst.msk [vmem:[#allocation2 + $0x73] sm:$0xff] %vm253, %v2506
      %2579 = vst.msk [vmem:[#allocation2 + $0x7b] sm:$0xff] %vm253, %v2507
      %2580 = vst.msk [vmem:[#allocation2 + $0x83] sm:$0xff] %vm253, %v2508
      %2581 = vst.msk [vmem:[#allocation2 + $0x8b] sm:$0xff] %vm253, %v2509
      %2582 = vst.msk [vmem:[#allocation2 + $0x93] sm:$0xff] %vm253, %v2510
      %2583 = vst.msk [vmem:[#allocation2 + $0x9b] sm:$0xff] %vm253, %v2511
      %2584 = vst.msk [vmem:[#allocation2 + $0xa3] sm:$0xff] %vm253, %v2512
      %2585 = vst.msk [vmem:[#allocation2 + $0xab] sm:$0xff] %vm253, %v2513
      %2586 = vst.msk [vmem:[#allocation2 + $0xb3] sm:$0xff] %vm253, %v2514
      %2587 = vst.msk [vmem:[#allocation2 + $0xbb] sm:$0xff] %vm253, %v2515
      %2588 = vst.msk [vmem:[#allocation2 + $0xc3] sm:$0xff] %vm253, %v2516
      %2589 = vst.msk [vmem:[#allocation2 + $0xcb] sm:$0xff] %vm253, %v2517
      %2590 = vst.msk [vmem:[#allocation2 + $0xd3] sm:$0xff] %vm253, %v2518
      %2591 = vst.msk [vmem:[#allocation2 + $0xdb] sm:$0xff] %vm253, %v2519
      %2592 = vst.msk [vmem:[#allocation2 + $0xe3] sm:$0xff] %vm253, %v2520
      %2593 = vst.msk [vmem:[#allocation2 + $0xeb] sm:$0xff] %vm253, %v2521
      %2594 = vst.msk [vmem:[#allocation2 + $0xf3] sm:$0xff] %vm253, %v2522
      %2595 = vst.msk [vmem:[#allocation2 + $0xfb] sm:$0xff] %vm253, %v2523
      %2596 = vst.msk [vmem:[#allocation2 + $0x103] sm:$0xff] %vm253, %v2524
      %2597 = vst.msk [vmem:[#allocation2 + $0x10b] sm:$0xff] %vm253, %v2525
      %2598 = vst.msk [vmem:[#allocation2 + $0x113] sm:$0xff] %vm253, %v2526
      %2599 = vst.msk [vmem:[#allocation2 + $0x11b] sm:$0xff] %vm253, %v2527
      %2600 = vst.msk [vmem:[#allocation2 + $0x123] sm:$0xff] %vm253, %v2528
      %2601 = vst.msk [vmem:[#allocation2 + $0x12b] sm:$0xff] %vm253, %v2529
      %v2602 = vld [vmem:[#allocation2] sm:$0xff]
      %v2603 = vld [vmem:[#allocation2 + $0x8] sm:$0xff]
      %v2604 = vld [vmem:[#allocation2 + $0x10] sm:$0xff]
      %v2605 = vld [vmem:[#allocation2 + $0x18] sm:$0xff]
      %v2606 = vld [vmem:[#allocation2 + $0x20] sm:$0xff]
      %v2607 = vld [vmem:[#allocation2 + $0x28] sm:$0xff]
      %v2608 = vld [vmem:[#allocation2 + $0x30] sm:$0xff]
      %v2609 = vld [vmem:[#allocation2 + $0x38] sm:$0xff]
      %v2610 = vld [vmem:[#allocation2 + $0x40] sm:$0xff]
      %v2611 = vld [vmem:[#allocation2 + $0x48] sm:$0xff]
      %v2612 = vld [vmem:[#allocation2 + $0x50] sm:$0xff]
      %v2613 = vld [vmem:[#allocation2 + $0x58] sm:$0xff]
      %v2614 = vld [vmem:[#allocation2 + $0x60] sm:$0xff]
      %v2615 = vld [vmem:[#allocation2 + $0x68] sm:$0xff]
      %v2616 = vld [vmem:[#allocation2 + $0x70] sm:$0xff]
      %v2617 = vld [vmem:[#allocation2 + $0x78] sm:$0xff]
      %v2618 = vld [vmem:[#allocation2 + $0x80] sm:$0xff]
      %v2619 = vld [vmem:[#allocation2 + $0x88] sm:$0xff]
      %v2620 = vld [vmem:[#allocation2 + $0x90] sm:$0xff]
      %v2621 = vld [vmem:[#allocation2 + $0x98] sm:$0xff]
      %v2622 = vld [vmem:[#allocation2 + $0xa0] sm:$0xff]
      %v2623 = vld [vmem:[#allocation2 + $0xa8] sm:$0xff]
      %v2624 = vld [vmem:[#allocation2 + $0xb0] sm:$0xff]
      %v2625 = vld [vmem:[#allocation2 + $0xb8] sm:$0xff]
      %v2626 = vld [vmem:[#allocation2 + $0xc0] sm:$0xff]
      %v2627 = vld [vmem:[#allocation2 + $0xc8] sm:$0xff]
      %v2628 = vld [vmem:[#allocation2 + $0xd0] sm:$0xff]
      %v2629 = vld [vmem:[#allocation2 + $0xd8] sm:$0xff]
      %v2630 = vld [vmem:[#allocation2 + $0xe0] sm:$0xff]
      %v2631 = vld [vmem:[#allocation2 + $0xe8] sm:$0xff]
      %v2632 = vld [vmem:[#allocation2 + $0xf0] sm:$0xff]
      %v2633 = vld [vmem:[#allocation2 + $0xf8] sm:$0xff]
      %v2634 = vld [vmem:[#allocation2 + $0x100] sm:$0xff]
      %v2635 = vld [vmem:[#allocation2 + $0x108] sm:$0xff]
      %v2636 = vld [vmem:[#allocation2 + $0x110] sm:$0xff]
      %v2637 = vld [vmem:[#allocation2 + $0x118] sm:$0xff]
      %v2638 = vpack.c.bf16 %v2603, %v2602
      %v2639 = vpack.c.bf16 %v2605, %v2604
      %v2640 = vpack.c.bf16 %v2607, %v2606
      %v2641 = vpack.c.bf16 %v2609, %v2608
      %v2642 = vpack.c.bf16 %v2611, %v2610
      %v2643 = vpack.c.bf16 %v2613, %v2612
      %v2644 = vpack.c.bf16 %v2615, %v2614
      %v2645 = vpack.c.bf16 %v2617, %v2616
      %v2646 = vpack.c.bf16 %v2619, %v2618
      %v2647 = vpack.c.bf16 %v2621, %v2620
      %v2648 = vpack.c.bf16 %v2623, %v2622
      %v2649 = vpack.c.bf16 %v2625, %v2624
      %v2650 = vpack.c.bf16 %v2627, %v2626
      %v2651 = vpack.c.bf16 %v2629, %v2628
      %v2652 = vpack.c.bf16 %v2631, %v2630
      %v2653 = vpack.c.bf16 %v2633, %v2632
      %v2654 = vpack.c.bf16 %v2635, %v2634
      %v2655 = vpack.c.bf16 %v2637, %v2636
      %2656 = vst.msk [vmem:[#allocation3] sm:$0xff] %vm253, %v2638
      %2657 = vst.msk [vmem:[#allocation3 + $0x28] sm:$0xff] %vm253, %v2639
      %2658 = vst.msk [vmem:[#allocation3 + $0x50] sm:$0xff] %vm253, %v2640
      %2659 = vst.msk [vmem:[#allocation3 + $0x78] sm:$0xff] %vm253, %v2641
      %2660 = vst.msk [vmem:[#allocation3 + $0xa0] sm:$0xff] %vm253, %v2642
      %2661 = vst.msk [vmem:[#allocation3 + $0xc8] sm:$0xff] %vm253, %v2643
      %2662 = vst.msk [vmem:[#allocation3 + $0xf0] sm:$0xff] %vm253, %v2644
      %2663 = vst.msk [vmem:[#allocation3 + $0x118] sm:$0xff] %vm253, %v2645
      %2664 = vst.msk [vmem:[#allocation3 + $0x140] sm:$0xff] %vm253, %v2646
      %2665 = vst.msk [vmem:[#allocation3 + $0x168] sm:$0xff] %vm253, %v2647
      %2666 = vst.msk [vmem:[#allocation3 + $0x190] sm:$0xff] %vm253, %v2648
      %2667 = vst.msk [vmem:[#allocation3 + $0x1b8] sm:$0xff] %vm253, %v2649
      %2668 = vst.msk [vmem:[#allocation3 + $0x1e0] sm:$0xff] %vm253, %v2650
      %2669 = vst.msk [vmem:[#allocation3 + $0x208] sm:$0xff] %vm253, %v2651
      %2670 = vst.msk [vmem:[#allocation3 + $0x230] sm:$0xff] %vm253, %v2652
      %2671 = vst.msk [vmem:[#allocation3 + $0x258] sm:$0xff] %vm253, %v2653
      %2672 = vst.msk [vmem:[#allocation3 + $0x280] sm:$0xff] %vm253, %v2654
      %2673 = vst.msk [vmem:[#allocation3 + $0x2a8] sm:$0xff] %vm253, %v2655
      %v2674 = vld [vmem:[#allocation2 + $0x1] sm:$0xff]
      %v2675 = vld [vmem:[#allocation2 + $0x9] sm:$0xff]
      %v2676 = vld [vmem:[#allocation2 + $0x11] sm:$0xff]
      %v2677 = vld [vmem:[#allocation2 + $0x19] sm:$0xff]
      %v2678 = vld [vmem:[#allocation2 + $0x21] sm:$0xff]
      %v2679 = vld [vmem:[#allocation2 + $0x29] sm:$0xff]
      %v2680 = vld [vmem:[#allocation2 + $0x31] sm:$0xff]
      %v2681 = vld [vmem:[#allocation2 + $0x39] sm:$0xff]
      %v2682 = vld [vmem:[#allocation2 + $0x41] sm:$0xff]
      %v2683 = vld [vmem:[#allocation2 + $0x49] sm:$0xff]
      %v2684 = vld [vmem:[#allocation2 + $0x51] sm:$0xff]
      %v2685 = vld [vmem:[#allocation2 + $0x59] sm:$0xff]
      %v2686 = vld [vmem:[#allocation2 + $0x61] sm:$0xff]
      %v2687 = vld [vmem:[#allocation2 + $0x69] sm:$0xff]
      %v2688 = vld [vmem:[#allocation2 + $0x71] sm:$0xff]
      %v2689 = vld [vmem:[#allocation2 + $0x79] sm:$0xff]
      %v2690 = vld [vmem:[#allocation2 + $0x81] sm:$0xff]
      %v2691 = vld [vmem:[#allocation2 + $0x89] sm:$0xff]
      %v2692 = vld [vmem:[#allocation2 + $0x91] sm:$0xff]
      %v2693 = vld [vmem:[#allocation2 + $0x99] sm:$0xff]
      %v2694 = vld [vmem:[#allocation2 + $0xa1] sm:$0xff]
      %v2695 = vld [vmem:[#allocation2 + $0xa9] sm:$0xff]
      %v2696 = vld [vmem:[#allocation2 + $0xb1] sm:$0xff]
      %v2697 = vld [vmem:[#allocation2 + $0xb9] sm:$0xff]
      %v2698 = vld [vmem:[#allocation2 + $0xc1] sm:$0xff]
      %v2699 = vld [vmem:[#allocation2 + $0xc9] sm:$0xff]
      %v2700 = vld [vmem:[#allocation2 + $0xd1] sm:$0xff]
      %v2701 = vld [vmem:[#allocation2 + $0xd9] sm:$0xff]
      %v2702 = vld [vmem:[#allocation2 + $0xe1] sm:$0xff]
      %v2703 = vld [vmem:[#allocation2 + $0xe9] sm:$0xff]
      %v2704 = vld [vmem:[#allocation2 + $0xf1] sm:$0xff]
      %v2705 = vld [vmem:[#allocation2 + $0xf9] sm:$0xff]
      %v2706 = vld [vmem:[#allocation2 + $0x101] sm:$0xff]
      %v2707 = vld [vmem:[#allocation2 + $0x109] sm:$0xff]
      %v2708 = vld [vmem:[#allocation2 + $0x111] sm:$0xff]
      %v2709 = vld [vmem:[#allocation2 + $0x119] sm:$0xff]
      %v2710 = vpack.c.bf16 %v2675, %v2674
      %v2711 = vpack.c.bf16 %v2677, %v2676
      %v2712 = vpack.c.bf16 %v2679, %v2678
      %v2713 = vpack.c.bf16 %v2681, %v2680
      %v2714 = vpack.c.bf16 %v2683, %v2682
      %v2715 = vpack.c.bf16 %v2685, %v2684
      %v2716 = vpack.c.bf16 %v2687, %v2686
      %v2717 = vpack.c.bf16 %v2689, %v2688
      %v2718 = vpack.c.bf16 %v2691, %v2690
      %v2719 = vpack.c.bf16 %v2693, %v2692
      %v2720 = vpack.c.bf16 %v2695, %v2694
      %v2721 = vpack.c.bf16 %v2697, %v2696
      %v2722 = vpack.c.bf16 %v2699, %v2698
      %v2723 = vpack.c.bf16 %v2701, %v2700
      %v2724 = vpack.c.bf16 %v2703, %v2702
      %v2725 = vpack.c.bf16 %v2705, %v2704
      %v2726 = vpack.c.bf16 %v2707, %v2706
      %v2727 = vpack.c.bf16 %v2709, %v2708
      %2746 = vrot.lane.b32.xlu0 %v2710, 64
      %v2747 = vpop.permute.xlu0 %2746
      %2748 = vrot.lane.b32.xlu0 %v2711, 64
      %v2749 = vpop.permute.xlu0 %2748
      %2750 = vrot.lane.b32.xlu0 %v2712, 64
      %v2751 = vpop.permute.xlu0 %2750
      %2752 = vrot.lane.b32.xlu0 %v2713, 64
      %v2753 = vpop.permute.xlu0 %2752
      %2754 = vrot.lane.b32.xlu0 %v2714, 64
      %v2755 = vpop.permute.xlu0 %2754
      %2756 = vrot.lane.b32.xlu0 %v2715, 64
      %v2757 = vpop.permute.xlu0 %2756
      %2758 = vrot.lane.b32.xlu0 %v2716, 64
      %v2759 = vpop.permute.xlu0 %2758
      %2760 = vrot.lane.b32.xlu0 %v2717, 64
      %v2761 = vpop.permute.xlu0 %2760
      %2762 = vrot.lane.b32.xlu0 %v2718, 64
      %v2763 = vpop.permute.xlu0 %2762
      %2764 = vrot.lane.b32.xlu0 %v2719, 64
      %v2765 = vpop.permute.xlu0 %2764
      %2766 = vrot.lane.b32.xlu0 %v2720, 64
      %v2767 = vpop.permute.xlu0 %2766
      %2768 = vrot.lane.b32.xlu0 %v2721, 64
      %v2769 = vpop.permute.xlu0 %2768
      %2770 = vrot.lane.b32.xlu0 %v2722, 64
      %v2771 = vpop.permute.xlu0 %2770
      %2772 = vrot.lane.b32.xlu0 %v2723, 64
      %v2773 = vpop.permute.xlu0 %2772
      %2774 = vrot.lane.b32.xlu0 %v2724, 64
      %v2775 = vpop.permute.xlu0 %2774
      %2776 = vrot.lane.b32.xlu0 %v2725, 64
      %v2777 = vpop.permute.xlu0 %2776
      %2778 = vrot.lane.b32.xlu0 %v2726, 64
      %v2779 = vpop.permute.xlu0 %2778
      %2780 = vrot.lane.b32.xlu0 %v2727, 64
      %v2781 = vpop.permute.xlu0 %2780
      %2800 = vst.msk [vmem:[#allocation3] sm:$0xff] %vm461, %v2747
      %2801 = vst.msk [vmem:[#allocation3 + $0x28] sm:$0xff] %vm461, %v2749
      %2802 = vst.msk [vmem:[#allocation3 + $0x50] sm:$0xff] %vm461, %v2751
      %2803 = vst.msk [vmem:[#allocation3 + $0x78] sm:$0xff] %vm461, %v2753
      %2804 = vst.msk [vmem:[#allocation3 + $0xa0] sm:$0xff] %vm461, %v2755
      %2805 = vst.msk [vmem:[#allocation3 + $0xc8] sm:$0xff] %vm461, %v2757
      %2806 = vst.msk [vmem:[#allocation3 + $0xf0] sm:$0xff] %vm461, %v2759
      %2807 = vst.msk [vmem:[#allocation3 + $0x118] sm:$0xff] %vm461, %v2761
      %2808 = vst.msk [vmem:[#allocation3 + $0x140] sm:$0xff] %vm461, %v2763
      %2809 = vst.msk [vmem:[#allocation3 + $0x168] sm:$0xff] %vm461, %v2765
      %2810 = vst.msk [vmem:[#allocation3 + $0x190] sm:$0xff] %vm461, %v2767
      %2811 = vst.msk [vmem:[#allocation3 + $0x1b8] sm:$0xff] %vm461, %v2769
      %2812 = vst.msk [vmem:[#allocation3 + $0x1e0] sm:$0xff] %vm461, %v2771
      %2813 = vst.msk [vmem:[#allocation3 + $0x208] sm:$0xff] %vm461, %v2773
      %2814 = vst.msk [vmem:[#allocation3 + $0x230] sm:$0xff] %vm461, %v2775
      %2815 = vst.msk [vmem:[#allocation3 + $0x258] sm:$0xff] %vm461, %v2777
      %2816 = vst.msk [vmem:[#allocation3 + $0x280] sm:$0xff] %vm461, %v2779
      %2817 = vst.msk [vmem:[#allocation3 + $0x2a8] sm:$0xff] %vm461, %v2781
      %v2818 = vld [vmem:[#allocation2 + $0x2] sm:$0xff]
      %v2819 = vld [vmem:[#allocation2 + $0xa] sm:$0xff]
      %v2820 = vld [vmem:[#allocation2 + $0x12] sm:$0xff]
      %v2821 = vld [vmem:[#allocation2 + $0x1a] sm:$0xff]
      %v2822 = vld [vmem:[#allocation2 + $0x22] sm:$0xff]
      %v2823 = vld [vmem:[#allocation2 + $0x2a] sm:$0xff]
      %v2824 = vld [vmem:[#allocation2 + $0x32] sm:$0xff]
      %v2825 = vld [vmem:[#allocation2 + $0x3a] sm:$0xff]
      %v2826 = vld [vmem:[#allocation2 + $0x42] sm:$0xff]
      %v2827 = vld [vmem:[#allocation2 + $0x4a] sm:$0xff]
      %v2828 = vld [vmem:[#allocation2 + $0x52] sm:$0xff]
      %v2829 = vld [vmem:[#allocation2 + $0x5a] sm:$0xff]
      %v2830 = vld [vmem:[#allocation2 + $0x62] sm:$0xff]
      %v2831 = vld [vmem:[#allocation2 + $0x6a] sm:$0xff]
      %v2832 = vld [vmem:[#allocation2 + $0x72] sm:$0xff]
      %v2833 = vld [vmem:[#allocation2 + $0x7a] sm:$0xff]
      %v2834 = vld [vmem:[#allocation2 + $0x82] sm:$0xff]
      %v2835 = vld [vmem:[#allocation2 + $0x8a] sm:$0xff]
      %v2836 = vld [vmem:[#allocation2 + $0x92] sm:$0xff]
      %v2837 = vld [vmem:[#allocation2 + $0x9a] sm:$0xff]
      %v2838 = vld [vmem:[#allocation2 + $0xa2] sm:$0xff]
      %v2839 = vld [vmem:[#allocation2 + $0xaa] sm:$0xff]
      %v2840 = vld [vmem:[#allocation2 + $0xb2] sm:$0xff]
      %v2841 = vld [vmem:[#allocation2 + $0xba] sm:$0xff]
      %v2842 = vld [vmem:[#allocation2 + $0xc2] sm:$0xff]
      %v2843 = vld [vmem:[#allocation2 + $0xca] sm:$0xff]
      %v2844 = vld [vmem:[#allocation2 + $0xd2] sm:$0xff]
      %v2845 = vld [vmem:[#allocation2 + $0xda] sm:$0xff]
      %v2846 = vld [vmem:[#allocation2 + $0xe2] sm:$0xff]
      %v2847 = vld [vmem:[#allocation2 + $0xea] sm:$0xff]
      %v2848 = vld [vmem:[#allocation2 + $0xf2] sm:$0xff]
      %v2849 = vld [vmem:[#allocation2 + $0xfa] sm:$0xff]
      %v2850 = vld [vmem:[#allocation2 + $0x102] sm:$0xff]
      %v2851 = vld [vmem:[#allocation2 + $0x10a] sm:$0xff]
      %v2852 = vld [vmem:[#allocation2 + $0x112] sm:$0xff]
      %v2853 = vld [vmem:[#allocation2 + $0x11a] sm:$0xff]
      %v2854 = vpack.c.bf16 %v2819, %v2818
      %v2855 = vpack.c.bf16 %v2821, %v2820
      %v2856 = vpack.c.bf16 %v2823, %v2822
      %v2857 = vpack.c.bf16 %v2825, %v2824
      %v2858 = vpack.c.bf16 %v2827, %v2826
      %v2859 = vpack.c.bf16 %v2829, %v2828
      %v2860 = vpack.c.bf16 %v2831, %v2830
      %v2861 = vpack.c.bf16 %v2833, %v2832
      %v2862 = vpack.c.bf16 %v2835, %v2834
      %v2863 = vpack.c.bf16 %v2837, %v2836
      %v2864 = vpack.c.bf16 %v2839, %v2838
      %v2865 = vpack.c.bf16 %v2841, %v2840
      %v2866 = vpack.c.bf16 %v2843, %v2842
      %v2867 = vpack.c.bf16 %v2845, %v2844
      %v2868 = vpack.c.bf16 %v2847, %v2846
      %v2869 = vpack.c.bf16 %v2849, %v2848
      %v2870 = vpack.c.bf16 %v2851, %v2850
      %v2871 = vpack.c.bf16 %v2853, %v2852
      %2872 = vst.msk [vmem:[#allocation3 + $0x8] sm:$0xff] %vm253, %v2854
      %2873 = vst.msk [vmem:[#allocation3 + $0x30] sm:$0xff] %vm253, %v2855
      %2874 = vst.msk [vmem:[#allocation3 + $0x58] sm:$0xff] %vm253, %v2856
      %2875 = vst.msk [vmem:[#allocation3 + $0x80] sm:$0xff] %vm253, %v2857
      %2876 = vst.msk [vmem:[#allocation3 + $0xa8] sm:$0xff] %vm253, %v2858
      %2877 = vst.msk [vmem:[#allocation3 + $0xd0] sm:$0xff] %vm253, %v2859
      %2878 = vst.msk [vmem:[#allocation3 + $0xf8] sm:$0xff] %vm253, %v2860
      %2879 = vst.msk [vmem:[#allocation3 + $0x120] sm:$0xff] %vm253, %v2861
      %2880 = vst.msk [vmem:[#allocation3 + $0x148] sm:$0xff] %vm253, %v2862
      %2881 = vst.msk [vmem:[#allocation3 + $0x170] sm:$0xff] %vm253, %v2863
      %2882 = vst.msk [vmem:[#allocation3 + $0x198] sm:$0xff] %vm253, %v2864
      %2883 = vst.msk [vmem:[#allocation3 + $0x1c0] sm:$0xff] %vm253, %v2865
      %2884 = vst.msk [vmem:[#allocation3 + $0x1e8] sm:$0xff] %vm253, %v2866
      %2885 = vst.msk [vmem:[#allocation3 + $0x210] sm:$0xff] %vm253, %v2867
      %2886 = vst.msk [vmem:[#allocation3 + $0x238] sm:$0xff] %vm253, %v2868
      %2887 = vst.msk [vmem:[#allocation3 + $0x260] sm:$0xff] %vm253, %v2869
      %2888 = vst.msk [vmem:[#allocation3 + $0x288] sm:$0xff] %vm253, %v2870
      %2889 = vst.msk [vmem:[#allocation3 + $0x2b0] sm:$0xff] %vm253, %v2871
      %v2890 = vld [vmem:[#allocation2 + $0x12] sm:$0xff]
      %v2891 = vld [vmem:[#allocation2 + $0x1a] sm:$0xff]
      %v2892 = vld [vmem:[#allocation2 + $0x22] sm:$0xff]
      %v2893 = vld [vmem:[#allocation2 + $0x2a] sm:$0xff]
      %v2894 = vld [vmem:[#allocation2 + $0x32] sm:$0xff]
      %v2895 = vld [vmem:[#allocation2 + $0x3a] sm:$0xff]
      %v2896 = vld [vmem:[#allocation2 + $0x42] sm:$0xff]
      %v2897 = vld [vmem:[#allocation2 + $0x4a] sm:$0xff]
      %v2898 = vld [vmem:[#allocation2 + $0x52] sm:$0xff]
      %v2899 = vld [vmem:[#allocation2 + $0x5a] sm:$0xff]
      %v2900 = vld [vmem:[#allocation2 + $0x62] sm:$0xff]
      %v2901 = vld [vmem:[#allocation2 + $0x6a] sm:$0xff]
      %v2902 = vld [vmem:[#allocation2 + $0x72] sm:$0xff]
      %v2903 = vld [vmem:[#allocation2 + $0x7a] sm:$0xff]
      %v2904 = vld [vmem:[#allocation2 + $0x82] sm:$0xff]
      %v2905 = vld [vmem:[#allocation2 + $0x8a] sm:$0xff]
      %v2906 = vld [vmem:[#allocation2 + $0x92] sm:$0xff]
      %v2907 = vld [vmem:[#allocation2 + $0x9a] sm:$0xff]
      %v2908 = vld [vmem:[#allocation2 + $0xa2] sm:$0xff]
      %v2909 = vld [vmem:[#allocation2 + $0xaa] sm:$0xff]
      %v2910 = vld [vmem:[#allocation2 + $0xb2] sm:$0xff]
      %v2911 = vld [vmem:[#allocation2 + $0xba] sm:$0xff]
      %v2912 = vld [vmem:[#allocation2 + $0xc2] sm:$0xff]
      %v2913 = vld [vmem:[#allocation2 + $0xca] sm:$0xff]
      %v2914 = vld [vmem:[#allocation2 + $0xd2] sm:$0xff]
      %v2915 = vld [vmem:[#allocation2 + $0xda] sm:$0xff]
      %v2916 = vld [vmem:[#allocation2 + $0xe2] sm:$0xff]
      %v2917 = vld [vmem:[#allocation2 + $0xea] sm:$0xff]
      %v2918 = vld [vmem:[#allocation2 + $0xf2] sm:$0xff]
      %v2919 = vld [vmem:[#allocation2 + $0xfa] sm:$0xff]
      %v2920 = vld [vmem:[#allocation2 + $0x102] sm:$0xff]
      %v2921 = vld [vmem:[#allocation2 + $0x10a] sm:$0xff]
      %v2922 = vld [vmem:[#allocation2 + $0x112] sm:$0xff]
      %v2923 = vld [vmem:[#allocation2 + $0x11a] sm:$0xff]
      %v2924 = vld [vmem:[#allocation2 + $0x122] sm:$0xff]
      %v2925 = vld [vmem:[#allocation2 + $0x12a] sm:$0xff]
      %v2926 = vpack.c.bf16 %v2891, %v2890
      %v2927 = vpack.c.bf16 %v2893, %v2892
      %v2928 = vpack.c.bf16 %v2895, %v2894
      %v2929 = vpack.c.bf16 %v2897, %v2896
      %v2930 = vpack.c.bf16 %v2899, %v2898
      %v2931 = vpack.c.bf16 %v2901, %v2900
      %v2932 = vpack.c.bf16 %v2903, %v2902
      %v2933 = vpack.c.bf16 %v2905, %v2904
      %v2934 = vpack.c.bf16 %v2907, %v2906
      %v2935 = vpack.c.bf16 %v2909, %v2908
      %v2936 = vpack.c.bf16 %v2911, %v2910
      %v2937 = vpack.c.bf16 %v2913, %v2912
      %v2938 = vpack.c.bf16 %v2915, %v2914
      %v2939 = vpack.c.bf16 %v2917, %v2916
      %v2940 = vpack.c.bf16 %v2919, %v2918
      %v2941 = vpack.c.bf16 %v2921, %v2920
      %v2942 = vpack.c.bf16 %v2923, %v2922
      %v2943 = vpack.c.bf16 %v2925, %v2924
      %2962 = vrot.lane.b32.xlu0 %v2926, 64
      %v2963 = vpop.permute.xlu0 %2962
      %2964 = vrot.lane.b32.xlu0 %v2927, 64
      %v2965 = vpop.permute.xlu0 %2964
      %2966 = vrot.lane.b32.xlu0 %v2928, 64
      %v2967 = vpop.permute.xlu0 %2966
      %2968 = vrot.lane.b32.xlu0 %v2929, 64
      %v2969 = vpop.permute.xlu0 %2968
      %2970 = vrot.lane.b32.xlu0 %v2930, 64
      %v2971 = vpop.permute.xlu0 %2970
      %2972 = vrot.lane.b32.xlu0 %v2931, 64
      %v2973 = vpop.permute.xlu0 %2972
      %2974 = vrot.lane.b32.xlu0 %v2932, 64
      %v2975 = vpop.permute.xlu0 %2974
      %2976 = vrot.lane.b32.xlu0 %v2933, 64
      %v2977 = vpop.permute.xlu0 %2976
      %2978 = vrot.lane.b32.xlu0 %v2934, 64
      %v2979 = vpop.permute.xlu0 %2978
      %2980 = vrot.lane.b32.xlu0 %v2935, 64
      %v2981 = vpop.permute.xlu0 %2980
      %2982 = vrot.lane.b32.xlu0 %v2936, 64
      %v2983 = vpop.permute.xlu0 %2982
      %2984 = vrot.lane.b32.xlu0 %v2937, 64
      %v2985 = vpop.permute.xlu0 %2984
      %2986 = vrot.lane.b32.xlu0 %v2938, 64
      %v2987 = vpop.permute.xlu0 %2986
      %2988 = vrot.lane.b32.xlu0 %v2939, 64
      %v2989 = vpop.permute.xlu0 %2988
      %2990 = vrot.lane.b32.xlu0 %v2940, 64
      %v2991 = vpop.permute.xlu0 %2990
      %2992 = vrot.lane.b32.xlu0 %v2941, 64
      %v2993 = vpop.permute.xlu0 %2992
      %2994 = vrot.lane.b32.xlu0 %v2942, 64
      %v2995 = vpop.permute.xlu0 %2994
      %2996 = vrot.lane.b32.xlu0 %v2943, 64
      %v2997 = vpop.permute.xlu0 %2996
      %3016 = vst.msk [vmem:[#allocation3 + $0x8] sm:$0xff] %vm461, %v2963
      %3017 = vst.msk [vmem:[#allocation3 + $0x30] sm:$0xff] %vm461, %v2965
      %3018 = vst.msk [vmem:[#allocation3 + $0x58] sm:$0xff] %vm461, %v2967
      %3019 = vst.msk [vmem:[#allocation3 + $0x80] sm:$0xff] %vm461, %v2969
      %3020 = vst.msk [vmem:[#allocation3 + $0xa8] sm:$0xff] %vm461, %v2971
      %3021 = vst.msk [vmem:[#allocation3 + $0xd0] sm:$0xff] %vm461, %v2973
      %3022 = vst.msk [vmem:[#allocation3 + $0xf8] sm:$0xff] %vm461, %v2975
      %3023 = vst.msk [vmem:[#allocation3 + $0x120] sm:$0xff] %vm461, %v2977
      %3024 = vst.msk [vmem:[#allocation3 + $0x148] sm:$0xff] %vm461, %v2979
      %3025 = vst.msk [vmem:[#allocation3 + $0x170] sm:$0xff] %vm461, %v2981
      %3026 = vst.msk [vmem:[#allocation3 + $0x198] sm:$0xff] %vm461, %v2983
      %3027 = vst.msk [vmem:[#allocation3 + $0x1c0] sm:$0xff] %vm461, %v2985
      %3028 = vst.msk [vmem:[#allocation3 + $0x1e8] sm:$0xff] %vm461, %v2987
      %3029 = vst.msk [vmem:[#allocation3 + $0x210] sm:$0xff] %vm461, %v2989
      %3030 = vst.msk [vmem:[#allocation3 + $0x238] sm:$0xff] %vm461, %v2991
      %3031 = vst.msk [vmem:[#allocation3 + $0x260] sm:$0xff] %vm461, %v2993
      %3032 = vst.msk [vmem:[#allocation3 + $0x288] sm:$0xff] %vm461, %v2995
      %3033 = vst.msk [vmem:[#allocation3 + $0x2b0] sm:$0xff] %vm461, %v2997
      %v3034 = vld [vmem:[#allocation2 + $0x13] sm:$0xff]
      %v3035 = vld [vmem:[#allocation2 + $0x1b] sm:$0xff]
      %v3036 = vld [vmem:[#allocation2 + $0x23] sm:$0xff]
      %v3037 = vld [vmem:[#allocation2 + $0x2b] sm:$0xff]
      %v3038 = vld [vmem:[#allocation2 + $0x33] sm:$0xff]
      %v3039 = vld [vmem:[#allocation2 + $0x3b] sm:$0xff]
      %v3040 = vld [vmem:[#allocation2 + $0x43] sm:$0xff]
      %v3041 = vld [vmem:[#allocation2 + $0x4b] sm:$0xff]
      %v3042 = vld [vmem:[#allocation2 + $0x53] sm:$0xff]
      %v3043 = vld [vmem:[#allocation2 + $0x5b] sm:$0xff]
      %v3044 = vld [vmem:[#allocation2 + $0x63] sm:$0xff]
      %v3045 = vld [vmem:[#allocation2 + $0x6b] sm:$0xff]
      %v3046 = vld [vmem:[#allocation2 + $0x73] sm:$0xff]
      %v3047 = vld [vmem:[#allocation2 + $0x7b] sm:$0xff]
      %v3048 = vld [vmem:[#allocation2 + $0x83] sm:$0xff]
      %v3049 = vld [vmem:[#allocation2 + $0x8b] sm:$0xff]
      %v3050 = vld [vmem:[#allocation2 + $0x93] sm:$0xff]
      %v3051 = vld [vmem:[#allocation2 + $0x9b] sm:$0xff]
      %v3052 = vld [vmem:[#allocation2 + $0xa3] sm:$0xff]
      %v3053 = vld [vmem:[#allocation2 + $0xab] sm:$0xff]
      %v3054 = vld [vmem:[#allocation2 + $0xb3] sm:$0xff]
      %v3055 = vld [vmem:[#allocation2 + $0xbb] sm:$0xff]
      %v3056 = vld [vmem:[#allocation2 + $0xc3] sm:$0xff]
      %v3057 = vld [vmem:[#allocation2 + $0xcb] sm:$0xff]
      %v3058 = vld [vmem:[#allocation2 + $0xd3] sm:$0xff]
      %v3059 = vld [vmem:[#allocation2 + $0xdb] sm:$0xff]
      %v3060 = vld [vmem:[#allocation2 + $0xe3] sm:$0xff]
      %v3061 = vld [vmem:[#allocation2 + $0xeb] sm:$0xff]
      %v3062 = vld [vmem:[#allocation2 + $0xf3] sm:$0xff]
      %v3063 = vld [vmem:[#allocation2 + $0xfb] sm:$0xff]
      %v3064 = vld [vmem:[#allocation2 + $0x103] sm:$0xff]
      %v3065 = vld [vmem:[#allocation2 + $0x10b] sm:$0xff]
      %v3066 = vld [vmem:[#allocation2 + $0x113] sm:$0xff]
      %v3067 = vld [vmem:[#allocation2 + $0x11b] sm:$0xff]
      %v3068 = vld [vmem:[#allocation2 + $0x123] sm:$0xff]
      %v3069 = vld [vmem:[#allocation2 + $0x12b] sm:$0xff]
      %v3070 = vpack.c.bf16 %v3035, %v3034
      %v3071 = vpack.c.bf16 %v3037, %v3036
      %v3072 = vpack.c.bf16 %v3039, %v3038
      %v3073 = vpack.c.bf16 %v3041, %v3040
      %v3074 = vpack.c.bf16 %v3043, %v3042
      %v3075 = vpack.c.bf16 %v3045, %v3044
      %v3076 = vpack.c.bf16 %v3047, %v3046
      %v3077 = vpack.c.bf16 %v3049, %v3048
      %v3078 = vpack.c.bf16 %v3051, %v3050
      %v3079 = vpack.c.bf16 %v3053, %v3052
      %v3080 = vpack.c.bf16 %v3055, %v3054
      %v3081 = vpack.c.bf16 %v3057, %v3056
      %v3082 = vpack.c.bf16 %v3059, %v3058
      %v3083 = vpack.c.bf16 %v3061, %v3060
      %v3084 = vpack.c.bf16 %v3063, %v3062
      %v3085 = vpack.c.bf16 %v3065, %v3064
      %v3086 = vpack.c.bf16 %v3067, %v3066
      %v3087 = vpack.c.bf16 %v3069, %v3068
      %3088 = vst.msk [vmem:[#allocation3 + $0x10] sm:$0xff] %vm253, %v3070
      %3089 = vst.msk [vmem:[#allocation3 + $0x38] sm:$0xff] %vm253, %v3071
      %3090 = vst.msk [vmem:[#allocation3 + $0x60] sm:$0xff] %vm253, %v3072
      %3091 = vst.msk [vmem:[#allocation3 + $0x88] sm:$0xff] %vm253, %v3073
      %3092 = vst.msk [vmem:[#allocation3 + $0xb0] sm:$0xff] %vm253, %v3074
      %3093 = vst.msk [vmem:[#allocation3 + $0xd8] sm:$0xff] %vm253, %v3075
      %3094 = vst.msk [vmem:[#allocation3 + $0x100] sm:$0xff] %vm253, %v3076
      %3095 = vst.msk [vmem:[#allocation3 + $0x128] sm:$0xff] %vm253, %v3077
      %3096 = vst.msk [vmem:[#allocation3 + $0x150] sm:$0xff] %vm253, %v3078
      %3097 = vst.msk [vmem:[#allocation3 + $0x178] sm:$0xff] %vm253, %v3079
      %3098 = vst.msk [vmem:[#allocation3 + $0x1a0] sm:$0xff] %vm253, %v3080
      %3099 = vst.msk [vmem:[#allocation3 + $0x1c8] sm:$0xff] %vm253, %v3081
      %3100 = vst.msk [vmem:[#allocation3 + $0x1f0] sm:$0xff] %vm253, %v3082
      %3101 = vst.msk [vmem:[#allocation3 + $0x218] sm:$0xff] %vm253, %v3083
      %3102 = vst.msk [vmem:[#allocation3 + $0x240] sm:$0xff] %vm253, %v3084
      %3103 = vst.msk [vmem:[#allocation3 + $0x268] sm:$0xff] %vm253, %v3085
      %3104 = vst.msk [vmem:[#allocation3 + $0x290] sm:$0xff] %vm253, %v3086
      %3105 = vst.msk [vmem:[#allocation3 + $0x2b8] sm:$0xff] %vm253, %v3087
      %v3106 = vld [vmem:[#allocation2 + $0x14] sm:$0xff]
      %v3107 = vld [vmem:[#allocation2 + $0x1c] sm:$0xff]
      %v3108 = vld [vmem:[#allocation2 + $0x24] sm:$0xff]
      %v3109 = vld [vmem:[#allocation2 + $0x2c] sm:$0xff]
      %v3110 = vld [vmem:[#allocation2 + $0x34] sm:$0xff]
      %v3111 = vld [vmem:[#allocation2 + $0x3c] sm:$0xff]
      %v3112 = vld [vmem:[#allocation2 + $0x44] sm:$0xff]
      %v3113 = vld [vmem:[#allocation2 + $0x4c] sm:$0xff]
      %v3114 = vld [vmem:[#allocation2 + $0x54] sm:$0xff]
      %v3115 = vld [vmem:[#allocation2 + $0x5c] sm:$0xff]
      %v3116 = vld [vmem:[#allocation2 + $0x64] sm:$0xff]
      %v3117 = vld [vmem:[#allocation2 + $0x6c] sm:$0xff]
      %v3118 = vld [vmem:[#allocation2 + $0x74] sm:$0xff]
      %v3119 = vld [vmem:[#allocation2 + $0x7c] sm:$0xff]
      %v3120 = vld [vmem:[#allocation2 + $0x84] sm:$0xff]
      %v3121 = vld [vmem:[#allocation2 + $0x8c] sm:$0xff]
      %v3122 = vld [vmem:[#allocation2 + $0x94] sm:$0xff]
      %v3123 = vld [vmem:[#allocation2 + $0x9c] sm:$0xff]
      %v3124 = vld [vmem:[#allocation2 + $0xa4] sm:$0xff]
      %v3125 = vld [vmem:[#allocation2 + $0xac] sm:$0xff]
      %v3126 = vld [vmem:[#allocation2 + $0xb4] sm:$0xff]
      %v3127 = vld [vmem:[#allocation2 + $0xbc] sm:$0xff]
      %v3128 = vld [vmem:[#allocation2 + $0xc4] sm:$0xff]
      %v3129 = vld [vmem:[#allocation2 + $0xcc] sm:$0xff]
      %v3130 = vld [vmem:[#allocation2 + $0xd4] sm:$0xff]
      %v3131 = vld [vmem:[#allocation2 + $0xdc] sm:$0xff]
      %v3132 = vld [vmem:[#allocation2 + $0xe4] sm:$0xff]
      %v3133 = vld [vmem:[#allocation2 + $0xec] sm:$0xff]
      %v3134 = vld [vmem:[#allocation2 + $0xf4] sm:$0xff]
      %v3135 = vld [vmem:[#allocation2 + $0xfc] sm:$0xff]
      %v3136 = vld [vmem:[#allocation2 + $0x104] sm:$0xff]
      %v3137 = vld [vmem:[#allocation2 + $0x10c] sm:$0xff]
      %v3138 = vld [vmem:[#allocation2 + $0x114] sm:$0xff]
      %v3139 = vld [vmem:[#allocation2 + $0x11c] sm:$0xff]
      %v3140 = vld [vmem:[#allocation2 + $0x124] sm:$0xff]
      %v3141 = vld [vmem:[#allocation2 + $0x12c] sm:$0xff]
      %v3142 = vpack.c.bf16 %v3107, %v3106
      %v3143 = vpack.c.bf16 %v3109, %v3108
      %v3144 = vpack.c.bf16 %v3111, %v3110
      %v3145 = vpack.c.bf16 %v3113, %v3112
      %v3146 = vpack.c.bf16 %v3115, %v3114
      %v3147 = vpack.c.bf16 %v3117, %v3116
      %v3148 = vpack.c.bf16 %v3119, %v3118
      %v3149 = vpack.c.bf16 %v3121, %v3120
      %v3150 = vpack.c.bf16 %v3123, %v3122
      %v3151 = vpack.c.bf16 %v3125, %v3124
      %v3152 = vpack.c.bf16 %v3127, %v3126
      %v3153 = vpack.c.bf16 %v3129, %v3128
      %v3154 = vpack.c.bf16 %v3131, %v3130
      %v3155 = vpack.c.bf16 %v3133, %v3132
      %v3156 = vpack.c.bf16 %v3135, %v3134
      %v3157 = vpack.c.bf16 %v3137, %v3136
      %v3158 = vpack.c.bf16 %v3139, %v3138
      %v3159 = vpack.c.bf16 %v3141, %v3140
      %3178 = vrot.lane.b32.xlu0 %v3142, 64
      %v3179 = vpop.permute.xlu0 %3178
      %3180 = vrot.lane.b32.xlu0 %v3143, 64
      %v3181 = vpop.permute.xlu0 %3180
      %3182 = vrot.lane.b32.xlu0 %v3144, 64
      %v3183 = vpop.permute.xlu0 %3182
      %3184 = vrot.lane.b32.xlu0 %v3145, 64
      %v3185 = vpop.permute.xlu0 %3184
      %3186 = vrot.lane.b32.xlu0 %v3146, 64
      %v3187 = vpop.permute.xlu0 %3186
      %3188 = vrot.lane.b32.xlu0 %v3147, 64
      %v3189 = vpop.permute.xlu0 %3188
      %3190 = vrot.lane.b32.xlu0 %v3148, 64
      %v3191 = vpop.permute.xlu0 %3190
      %3192 = vrot.lane.b32.xlu0 %v3149, 64
      %v3193 = vpop.permute.xlu0 %3192
      %3194 = vrot.lane.b32.xlu0 %v3150, 64
      %v3195 = vpop.permute.xlu0 %3194
      %3196 = vrot.lane.b32.xlu0 %v3151, 64
      %v3197 = vpop.permute.xlu0 %3196
      %3198 = vrot.lane.b32.xlu0 %v3152, 64
      %v3199 = vpop.permute.xlu0 %3198
      %3200 = vrot.lane.b32.xlu0 %v3153, 64
      %v3201 = vpop.permute.xlu0 %3200
      %3202 = vrot.lane.b32.xlu0 %v3154, 64
      %v3203 = vpop.permute.xlu0 %3202
      %3204 = vrot.lane.b32.xlu0 %v3155, 64
      %v3205 = vpop.permute.xlu0 %3204
      %3206 = vrot.lane.b32.xlu0 %v3156, 64
      %v3207 = vpop.permute.xlu0 %3206
      %3208 = vrot.lane.b32.xlu0 %v3157, 64
      %v3209 = vpop.permute.xlu0 %3208
      %3210 = vrot.lane.b32.xlu0 %v3158, 64
      %v3211 = vpop.permute.xlu0 %3210
      %3212 = vrot.lane.b32.xlu0 %v3159, 64
      %v3213 = vpop.permute.xlu0 %3212
      %3232 = vst.msk [vmem:[#allocation3 + $0x10] sm:$0xff] %vm461, %v3179
      %3233 = vst.msk [vmem:[#allocation3 + $0x38] sm:$0xff] %vm461, %v3181
      %3234 = vst.msk [vmem:[#allocation3 + $0x60] sm:$0xff] %vm461, %v3183
      %3235 = vst.msk [vmem:[#allocation3 + $0x88] sm:$0xff] %vm461, %v3185
      %3236 = vst.msk [vmem:[#allocation3 + $0xb0] sm:$0xff] %vm461, %v3187
      %3237 = vst.msk [vmem:[#allocation3 + $0xd8] sm:$0xff] %vm461, %v3189
      %3238 = vst.msk [vmem:[#allocation3 + $0x100] sm:$0xff] %vm461, %v3191
      %3239 = vst.msk [vmem:[#allocation3 + $0x128] sm:$0xff] %vm461, %v3193
      %3240 = vst.msk [vmem:[#allocation3 + $0x150] sm:$0xff] %vm461, %v3195
      %3241 = vst.msk [vmem:[#allocation3 + $0x178] sm:$0xff] %vm461, %v3197
      %3242 = vst.msk [vmem:[#allocation3 + $0x1a0] sm:$0xff] %vm461, %v3199
      %3243 = vst.msk [vmem:[#allocation3 + $0x1c8] sm:$0xff] %vm461, %v3201
      %3244 = vst.msk [vmem:[#allocation3 + $0x1f0] sm:$0xff] %vm461, %v3203
      %3245 = vst.msk [vmem:[#allocation3 + $0x218] sm:$0xff] %vm461, %v3205
      %3246 = vst.msk [vmem:[#allocation3 + $0x240] sm:$0xff] %vm461, %v3207
      %3247 = vst.msk [vmem:[#allocation3 + $0x268] sm:$0xff] %vm461, %v3209
      %3248 = vst.msk [vmem:[#allocation3 + $0x290] sm:$0xff] %vm461, %v3211
      %3249 = vst.msk [vmem:[#allocation3 + $0x2b8] sm:$0xff] %vm461, %v3213
      %v3250 = vld [vmem:[#allocation2 + $0x24] sm:$0xff]
      %v3251 = vld [vmem:[#allocation2 + $0x2c] sm:$0xff]
      %v3252 = vld [vmem:[#allocation2 + $0x34] sm:$0xff]
      %v3253 = vld [vmem:[#allocation2 + $0x3c] sm:$0xff]
      %v3254 = vld [vmem:[#allocation2 + $0x44] sm:$0xff]
      %v3255 = vld [vmem:[#allocation2 + $0x4c] sm:$0xff]
      %v3256 = vld [vmem:[#allocation2 + $0x54] sm:$0xff]
      %v3257 = vld [vmem:[#allocation2 + $0x5c] sm:$0xff]
      %v3258 = vld [vmem:[#allocation2 + $0x64] sm:$0xff]
      %v3259 = vld [vmem:[#allocation2 + $0x6c] sm:$0xff]
      %v3260 = vld [vmem:[#allocation2 + $0x74] sm:$0xff]
      %v3261 = vld [vmem:[#allocation2 + $0x7c] sm:$0xff]
      %v3262 = vld [vmem:[#allocation2 + $0x84] sm:$0xff]
      %v3263 = vld [vmem:[#allocation2 + $0x8c] sm:$0xff]
      %v3264 = vld [vmem:[#allocation2 + $0x94] sm:$0xff]
      %v3265 = vld [vmem:[#allocation2 + $0x9c] sm:$0xff]
      %v3266 = vld [vmem:[#allocation2 + $0xa4] sm:$0xff]
      %v3267 = vld [vmem:[#allocation2 + $0xac] sm:$0xff]
      %v3268 = vld [vmem:[#allocation2 + $0xb4] sm:$0xff]
      %v3269 = vld [vmem:[#allocation2 + $0xbc] sm:$0xff]
      %v3270 = vld [vmem:[#allocation2 + $0xc4] sm:$0xff]
      %v3271 = vld [vmem:[#allocation2 + $0xcc] sm:$0xff]
      %v3272 = vld [vmem:[#allocation2 + $0xd4] sm:$0xff]
      %v3273 = vld [vmem:[#allocation2 + $0xdc] sm:$0xff]
      %v3274 = vld [vmem:[#allocation2 + $0xe4] sm:$0xff]
      %v3275 = vld [vmem:[#allocation2 + $0xec] sm:$0xff]
      %v3276 = vld [vmem:[#allocation2 + $0xf4] sm:$0xff]
      %v3277 = vld [vmem:[#allocation2 + $0xfc] sm:$0xff]
      %v3278 = vld [vmem:[#allocation2 + $0x104] sm:$0xff]
      %v3279 = vld [vmem:[#allocation2 + $0x10c] sm:$0xff]
      %v3280 = vld [vmem:[#allocation2 + $0x114] sm:$0xff]
      %v3281 = vld [vmem:[#allocation2 + $0x11c] sm:$0xff]
      %v3282 = vld [vmem:[#allocation2 + $0x124] sm:$0xff]
      %v3283 = vld [vmem:[#allocation2 + $0x12c] sm:$0xff]
      %v3284 = vld [vmem:[#allocation2 + $0x134] sm:$0xff]
      %v3285 = vld [vmem:[#allocation2 + $0x13c] sm:$0xff]
      %v3286 = vpack.c.bf16 %v3251, %v3250
      %v3287 = vpack.c.bf16 %v3253, %v3252
      %v3288 = vpack.c.bf16 %v3255, %v3254
      %v3289 = vpack.c.bf16 %v3257, %v3256
      %v3290 = vpack.c.bf16 %v3259, %v3258
      %v3291 = vpack.c.bf16 %v3261, %v3260
      %v3292 = vpack.c.bf16 %v3263, %v3262
      %v3293 = vpack.c.bf16 %v3265, %v3264
      %v3294 = vpack.c.bf16 %v3267, %v3266
      %v3295 = vpack.c.bf16 %v3269, %v3268
      %v3296 = vpack.c.bf16 %v3271, %v3270
      %v3297 = vpack.c.bf16 %v3273, %v3272
      %v3298 = vpack.c.bf16 %v3275, %v3274
      %v3299 = vpack.c.bf16 %v3277, %v3276
      %v3300 = vpack.c.bf16 %v3279, %v3278
      %v3301 = vpack.c.bf16 %v3281, %v3280
      %v3302 = vpack.c.bf16 %v3283, %v3282
      %v3303 = vpack.c.bf16 %v3285, %v3284
      %3304 = vst.msk [vmem:[#allocation3 + $0x18] sm:$0xff] %vm253, %v3286
      %3305 = vst.msk [vmem:[#allocation3 + $0x40] sm:$0xff] %vm253, %v3287
      %3306 = vst.msk [vmem:[#allocation3 + $0x68] sm:$0xff] %vm253, %v3288
      %3307 = vst.msk [vmem:[#allocation3 + $0x90] sm:$0xff] %vm253, %v3289
      %3308 = vst.msk [vmem:[#allocation3 + $0xb8] sm:$0xff] %vm253, %v3290
      %3309 = vst.msk [vmem:[#allocation3 + $0xe0] sm:$0xff] %vm253, %v3291
      %3310 = vst.msk [vmem:[#allocation3 + $0x108] sm:$0xff] %vm253, %v3292
      %3311 = vst.msk [vmem:[#allocation3 + $0x130] sm:$0xff] %vm253, %v3293
      %3312 = vst.msk [vmem:[#allocation3 + $0x158] sm:$0xff] %vm253, %v3294
      %3313 = vst.msk [vmem:[#allocation3 + $0x180] sm:$0xff] %vm253, %v3295
      %3314 = vst.msk [vmem:[#allocation3 + $0x1a8] sm:$0xff] %vm253, %v3296
      %3315 = vst.msk [vmem:[#allocation3 + $0x1d0] sm:$0xff] %vm253, %v3297
      %3316 = vst.msk [vmem:[#allocation3 + $0x1f8] sm:$0xff] %vm253, %v3298
      %3317 = vst.msk [vmem:[#allocation3 + $0x220] sm:$0xff] %vm253, %v3299
      %3318 = vst.msk [vmem:[#allocation3 + $0x248] sm:$0xff] %vm253, %v3300
      %3319 = vst.msk [vmem:[#allocation3 + $0x270] sm:$0xff] %vm253, %v3301
      %3320 = vst.msk [vmem:[#allocation3 + $0x298] sm:$0xff] %vm253, %v3302
      %3321 = vst.msk [vmem:[#allocation3 + $0x2c0] sm:$0xff] %vm253, %v3303
      %v3322 = vld [vmem:[#allocation2 + $0x25] sm:$0xff]
      %v3323 = vld [vmem:[#allocation2 + $0x2d] sm:$0xff]
      %v3324 = vld [vmem:[#allocation2 + $0x35] sm:$0xff]
      %v3325 = vld [vmem:[#allocation2 + $0x3d] sm:$0xff]
      %v3326 = vld [vmem:[#allocation2 + $0x45] sm:$0xff]
      %v3327 = vld [vmem:[#allocation2 + $0x4d] sm:$0xff]
      %v3328 = vld [vmem:[#allocation2 + $0x55] sm:$0xff]
      %v3329 = vld [vmem:[#allocation2 + $0x5d] sm:$0xff]
      %v3330 = vld [vmem:[#allocation2 + $0x65] sm:$0xff]
      %v3331 = vld [vmem:[#allocation2 + $0x6d] sm:$0xff]
      %v3332 = vld [vmem:[#allocation2 + $0x75] sm:$0xff]
      %v3333 = vld [vmem:[#allocation2 + $0x7d] sm:$0xff]
      %v3334 = vld [vmem:[#allocation2 + $0x85] sm:$0xff]
      %v3335 = vld [vmem:[#allocation2 + $0x8d] sm:$0xff]
      %v3336 = vld [vmem:[#allocation2 + $0x95] sm:$0xff]
      %v3337 = vld [vmem:[#allocation2 + $0x9d] sm:$0xff]
      %v3338 = vld [vmem:[#allocation2 + $0xa5] sm:$0xff]
      %v3339 = vld [vmem:[#allocation2 + $0xad] sm:$0xff]
      %v3340 = vld [vmem:[#allocation2 + $0xb5] sm:$0xff]
      %v3341 = vld [vmem:[#allocation2 + $0xbd] sm:$0xff]
      %v3342 = vld [vmem:[#allocation2 + $0xc5] sm:$0xff]
      %v3343 = vld [vmem:[#allocation2 + $0xcd] sm:$0xff]
      %v3344 = vld [vmem:[#allocation2 + $0xd5] sm:$0xff]
      %v3345 = vld [vmem:[#allocation2 + $0xdd] sm:$0xff]
      %v3346 = vld [vmem:[#allocation2 + $0xe5] sm:$0xff]
      %v3347 = vld [vmem:[#allocation2 + $0xed] sm:$0xff]
      %v3348 = vld [vmem:[#allocation2 + $0xf5] sm:$0xff]
      %v3349 = vld [vmem:[#allocation2 + $0xfd] sm:$0xff]
      %v3350 = vld [vmem:[#allocation2 + $0x105] sm:$0xff]
      %v3351 = vld [vmem:[#allocation2 + $0x10d] sm:$0xff]
      %v3352 = vld [vmem:[#allocation2 + $0x115] sm:$0xff]
      %v3353 = vld [vmem:[#allocation2 + $0x11d] sm:$0xff]
      %v3354 = vld [vmem:[#allocation2 + $0x125] sm:$0xff]
      %v3355 = vld [vmem:[#allocation2 + $0x12d] sm:$0xff]
      %v3356 = vld [vmem:[#allocation2 + $0x135] sm:$0xff]
      %v3357 = vld [vmem:[#allocation2 + $0x13d] sm:$0xff]
      %v3358 = vpack.c.bf16 %v3323, %v3322
      %v3359 = vpack.c.bf16 %v3325, %v3324
      %v3360 = vpack.c.bf16 %v3327, %v3326
      %v3361 = vpack.c.bf16 %v3329, %v3328
      %v3362 = vpack.c.bf16 %v3331, %v3330
      %v3363 = vpack.c.bf16 %v3333, %v3332
      %v3364 = vpack.c.bf16 %v3335, %v3334
      %v3365 = vpack.c.bf16 %v3337, %v3336
      %v3366 = vpack.c.bf16 %v3339, %v3338
      %v3367 = vpack.c.bf16 %v3341, %v3340
      %v3368 = vpack.c.bf16 %v3343, %v3342
      %v3369 = vpack.c.bf16 %v3345, %v3344
      %v3370 = vpack.c.bf16 %v3347, %v3346
      %v3371 = vpack.c.bf16 %v3349, %v3348
      %v3372 = vpack.c.bf16 %v3351, %v3350
      %v3373 = vpack.c.bf16 %v3353, %v3352
      %v3374 = vpack.c.bf16 %v3355, %v3354
      %v3375 = vpack.c.bf16 %v3357, %v3356
      %3394 = vrot.lane.b32.xlu0 %v3358, 64
      %v3395 = vpop.permute.xlu0 %3394
      %3396 = vrot.lane.b32.xlu0 %v3359, 64
      %v3397 = vpop.permute.xlu0 %3396
      %3398 = vrot.lane.b32.xlu0 %v3360, 64
      %v3399 = vpop.permute.xlu0 %3398
      %3400 = vrot.lane.b32.xlu0 %v3361, 64
      %v3401 = vpop.permute.xlu0 %3400
      %3402 = vrot.lane.b32.xlu0 %v3362, 64
      %v3403 = vpop.permute.xlu0 %3402
      %3404 = vrot.lane.b32.xlu0 %v3363, 64
      %v3405 = vpop.permute.xlu0 %3404
      %3406 = vrot.lane.b32.xlu0 %v3364, 64
      %v3407 = vpop.permute.xlu0 %3406
      %3408 = vrot.lane.b32.xlu0 %v3365, 64
      %v3409 = vpop.permute.xlu0 %3408
      %3410 = vrot.lane.b32.xlu0 %v3366, 64
      %v3411 = vpop.permute.xlu0 %3410
      %3412 = vrot.lane.b32.xlu0 %v3367, 64
      %v3413 = vpop.permute.xlu0 %3412
      %3414 = vrot.lane.b32.xlu0 %v3368, 64
      %v3415 = vpop.permute.xlu0 %3414
      %3416 = vrot.lane.b32.xlu0 %v3369, 64
      %v3417 = vpop.permute.xlu0 %3416
      %3418 = vrot.lane.b32.xlu0 %v3370, 64
      %v3419 = vpop.permute.xlu0 %3418
      %3420 = vrot.lane.b32.xlu0 %v3371, 64
      %v3421 = vpop.permute.xlu0 %3420
      %3422 = vrot.lane.b32.xlu0 %v3372, 64
      %v3423 = vpop.permute.xlu0 %3422
      %3424 = vrot.lane.b32.xlu0 %v3373, 64
      %v3425 = vpop.permute.xlu0 %3424
      %3426 = vrot.lane.b32.xlu0 %v3374, 64
      %v3427 = vpop.permute.xlu0 %3426
      %3428 = vrot.lane.b32.xlu0 %v3375, 64
      %v3429 = vpop.permute.xlu0 %3428
      %3448 = vst.msk [vmem:[#allocation3 + $0x18] sm:$0xff] %vm461, %v3395
      %3449 = vst.msk [vmem:[#allocation3 + $0x40] sm:$0xff] %vm461, %v3397
      %3450 = vst.msk [vmem:[#allocation3 + $0x68] sm:$0xff] %vm461, %v3399
      %3451 = vst.msk [vmem:[#allocation3 + $0x90] sm:$0xff] %vm461, %v3401
      %3452 = vst.msk [vmem:[#allocation3 + $0xb8] sm:$0xff] %vm461, %v3403
      %3453 = vst.msk [vmem:[#allocation3 + $0xe0] sm:$0xff] %vm461, %v3405
      %3454 = vst.msk [vmem:[#allocation3 + $0x108] sm:$0xff] %vm461, %v3407
      %3455 = vst.msk [vmem:[#allocation3 + $0x130] sm:$0xff] %vm461, %v3409
      %3456 = vst.msk [vmem:[#allocation3 + $0x158] sm:$0xff] %vm461, %v3411
      %3457 = vst.msk [vmem:[#allocation3 + $0x180] sm:$0xff] %vm461, %v3413
      %3458 = vst.msk [vmem:[#allocation3 + $0x1a8] sm:$0xff] %vm461, %v3415
      %3459 = vst.msk [vmem:[#allocation3 + $0x1d0] sm:$0xff] %vm461, %v3417
      %3460 = vst.msk [vmem:[#allocation3 + $0x1f8] sm:$0xff] %vm461, %v3419
      %3461 = vst.msk [vmem:[#allocation3 + $0x220] sm:$0xff] %vm461, %v3421
      %3462 = vst.msk [vmem:[#allocation3 + $0x248] sm:$0xff] %vm461, %v3423
      %3463 = vst.msk [vmem:[#allocation3 + $0x270] sm:$0xff] %vm461, %v3425
      %3464 = vst.msk [vmem:[#allocation3 + $0x298] sm:$0xff] %vm461, %v3427
      %3465 = vst.msk [vmem:[#allocation3 + $0x2c0] sm:$0xff] %vm461, %v3429
      %v3466 = vld [vmem:[#allocation2 + $0x26] sm:$0xff]
      %v3467 = vld [vmem:[#allocation2 + $0x2e] sm:$0xff]
      %v3468 = vld [vmem:[#allocation2 + $0x36] sm:$0xff]
      %v3469 = vld [vmem:[#allocation2 + $0x3e] sm:$0xff]
      %v3470 = vld [vmem:[#allocation2 + $0x46] sm:$0xff]
      %v3471 = vld [vmem:[#allocation2 + $0x4e] sm:$0xff]
      %v3472 = vld [vmem:[#allocation2 + $0x56] sm:$0xff]
      %v3473 = vld [vmem:[#allocation2 + $0x5e] sm:$0xff]
      %v3474 = vld [vmem:[#allocation2 + $0x66] sm:$0xff]
      %v3475 = vld [vmem:[#allocation2 + $0x6e] sm:$0xff]
      %v3476 = vld [vmem:[#allocation2 + $0x76] sm:$0xff]
      %v3477 = vld [vmem:[#allocation2 + $0x7e] sm:$0xff]
      %v3478 = vld [vmem:[#allocation2 + $0x86] sm:$0xff]
      %v3479 = vld [vmem:[#allocation2 + $0x8e] sm:$0xff]
      %v3480 = vld [vmem:[#allocation2 + $0x96] sm:$0xff]
      %v3481 = vld [vmem:[#allocation2 + $0x9e] sm:$0xff]
      %v3482 = vld [vmem:[#allocation2 + $0xa6] sm:$0xff]
      %v3483 = vld [vmem:[#allocation2 + $0xae] sm:$0xff]
      %v3484 = vld [vmem:[#allocation2 + $0xb6] sm:$0xff]
      %v3485 = vld [vmem:[#allocation2 + $0xbe] sm:$0xff]
      %v3486 = vld [vmem:[#allocation2 + $0xc6] sm:$0xff]
      %v3487 = vld [vmem:[#allocation2 + $0xce] sm:$0xff]
      %v3488 = vld [vmem:[#allocation2 + $0xd6] sm:$0xff]
      %v3489 = vld [vmem:[#allocation2 + $0xde] sm:$0xff]
      %v3490 = vld [vmem:[#allocation2 + $0xe6] sm:$0xff]
      %v3491 = vld [vmem:[#allocation2 + $0xee] sm:$0xff]
      %v3492 = vld [vmem:[#allocation2 + $0xf6] sm:$0xff]
      %v3493 = vld [vmem:[#allocation2 + $0xfe] sm:$0xff]
      %v3494 = vld [vmem:[#allocation2 + $0x106] sm:$0xff]
      %v3495 = vld [vmem:[#allocation2 + $0x10e] sm:$0xff]
      %v3496 = vld [vmem:[#allocation2 + $0x116] sm:$0xff]
      %v3497 = vld [vmem:[#allocation2 + $0x11e] sm:$0xff]
      %v3498 = vld [vmem:[#allocation2 + $0x126] sm:$0xff]
      %v3499 = vld [vmem:[#allocation2 + $0x12e] sm:$0xff]
      %v3500 = vld [vmem:[#allocation2 + $0x136] sm:$0xff]
      %v3501 = vld [vmem:[#allocation2 + $0x13e] sm:$0xff]
      %v3502 = vpack.c.bf16 %v3467, %v3466
      %v3503 = vpack.c.bf16 %v3469, %v3468
      %v3504 = vpack.c.bf16 %v3471, %v3470
      %v3505 = vpack.c.bf16 %v3473, %v3472
      %v3506 = vpack.c.bf16 %v3475, %v3474
      %v3507 = vpack.c.bf16 %v3477, %v3476
      %v3508 = vpack.c.bf16 %v3479, %v3478
      %v3509 = vpack.c.bf16 %v3481, %v3480
      %v3510 = vpack.c.bf16 %v3483, %v3482
      %v3511 = vpack.c.bf16 %v3485, %v3484
      %v3512 = vpack.c.bf16 %v3487, %v3486
      %v3513 = vpack.c.bf16 %v3489, %v3488
      %v3514 = vpack.c.bf16 %v3491, %v3490
      %v3515 = vpack.c.bf16 %v3493, %v3492
      %v3516 = vpack.c.bf16 %v3495, %v3494
      %v3517 = vpack.c.bf16 %v3497, %v3496
      %v3518 = vpack.c.bf16 %v3499, %v3498
      %v3519 = vpack.c.bf16 %v3501, %v3500
      %3520 = vst.msk [vmem:[#allocation3 + $0x20] sm:$0xff] %vm253, %v3502
      %3521 = vst.msk [vmem:[#allocation3 + $0x48] sm:$0xff] %vm253, %v3503
      %3522 = vst.msk [vmem:[#allocation3 + $0x70] sm:$0xff] %vm253, %v3504
      %3523 = vst.msk [vmem:[#allocation3 + $0x98] sm:$0xff] %vm253, %v3505
      %3524 = vst.msk [vmem:[#allocation3 + $0xc0] sm:$0xff] %vm253, %v3506
      %3525 = vst.msk [vmem:[#allocation3 + $0xe8] sm:$0xff] %vm253, %v3507
      %3526 = vst.msk [vmem:[#allocation3 + $0x110] sm:$0xff] %vm253, %v3508
      %3527 = vst.msk [vmem:[#allocation3 + $0x138] sm:$0xff] %vm253, %v3509
      %3528 = vst.msk [vmem:[#allocation3 + $0x160] sm:$0xff] %vm253, %v3510
      %3529 = vst.msk [vmem:[#allocation3 + $0x188] sm:$0xff] %vm253, %v3511
      %3530 = vst.msk [vmem:[#allocation3 + $0x1b0] sm:$0xff] %vm253, %v3512
      %3531 = vst.msk [vmem:[#allocation3 + $0x1d8] sm:$0xff] %vm253, %v3513
      %3532 = vst.msk [vmem:[#allocation3 + $0x200] sm:$0xff] %vm253, %v3514
      %3533 = vst.msk [vmem:[#allocation3 + $0x228] sm:$0xff] %vm253, %v3515
      %3534 = vst.msk [vmem:[#allocation3 + $0x250] sm:$0xff] %vm253, %v3516
      %3535 = vst.msk [vmem:[#allocation3 + $0x278] sm:$0xff] %vm253, %v3517
      %3536 = vst.msk [vmem:[#allocation3 + $0x2a0] sm:$0xff] %vm253, %v3518
      %3537 = vst.msk [vmem:[#allocation3 + $0x2c8] sm:$0xff] %vm253, %v3519
      %v3538 = vld [vmem:[#allocation3] sm:$0xff]
      %v3539 = vld [vmem:[#allocation3 + $0x8] sm:$0xff]
      %v3540 = vld [vmem:[#allocation3 + $0x10] sm:$0xff]
      %v3541 = vld [vmem:[#allocation3 + $0x18] sm:$0xff]
      %v3542 = vld [vmem:[#allocation3 + $0x20] sm:$0xff]
      %v3543 = vld [vmem:[#allocation3 + $0x28] sm:$0xff]
      %v3544 = vld [vmem:[#allocation3 + $0x30] sm:$0xff]
      %v3545 = vld [vmem:[#allocation3 + $0x38] sm:$0xff]
      %v3546 = vld [vmem:[#allocation3 + $0x40] sm:$0xff]
      %v3547 = vld [vmem:[#allocation3 + $0x48] sm:$0xff]
      %v3548 = vld [vmem:[#allocation3 + $0x50] sm:$0xff]
      %v3549 = vld [vmem:[#allocation3 + $0x58] sm:$0xff]
      %v3550 = vld [vmem:[#allocation3 + $0x60] sm:$0xff]
      %v3551 = vld [vmem:[#allocation3 + $0x68] sm:$0xff]
      %v3552 = vld [vmem:[#allocation3 + $0x70] sm:$0xff]
      %v3553 = vld [vmem:[#allocation3 + $0x78] sm:$0xff]
      %v3554 = vld [vmem:[#allocation3 + $0x80] sm:$0xff]
      %v3555 = vld [vmem:[#allocation3 + $0x88] sm:$0xff]
      %v3556 = vld [vmem:[#allocation3 + $0x90] sm:$0xff]
      %v3557 = vld [vmem:[#allocation3 + $0x98] sm:$0xff]
      %v3558 = vld [vmem:[#allocation3 + $0xa0] sm:$0xff]
      %v3559 = vld [vmem:[#allocation3 + $0xa8] sm:$0xff]
      %v3560 = vld [vmem:[#allocation3 + $0xb0] sm:$0xff]
      %v3561 = vld [vmem:[#allocation3 + $0xb8] sm:$0xff]
      %v3562 = vld [vmem:[#allocation3 + $0xc0] sm:$0xff]
      %v3563 = vld [vmem:[#allocation3 + $0xc8] sm:$0xff]
      %v3564 = vld [vmem:[#allocation3 + $0xd0] sm:$0xff]
      %v3565 = vld [vmem:[#allocation3 + $0xd8] sm:$0xff]
      %v3566 = vld [vmem:[#allocation3 + $0xe0] sm:$0xff]
      %v3567 = vld [vmem:[#allocation3 + $0xe8] sm:$0xff]
      %v3568 = vld [vmem:[#allocation3 + $0xf0] sm:$0xff]
      %v3569 = vld [vmem:[#allocation3 + $0xf8] sm:$0xff]
      %v3570 = vld [vmem:[#allocation3 + $0x100] sm:$0xff]
      %v3571 = vld [vmem:[#allocation3 + $0x108] sm:$0xff]
      %v3572 = vld [vmem:[#allocation3 + $0x110] sm:$0xff]
      %v3573 = vld [vmem:[#allocation3 + $0x118] sm:$0xff]
      %v3574 = vld [vmem:[#allocation3 + $0x120] sm:$0xff]
      %v3575 = vld [vmem:[#allocation3 + $0x128] sm:$0xff]
      %v3576 = vld [vmem:[#allocation3 + $0x130] sm:$0xff]
      %v3577 = vld [vmem:[#allocation3 + $0x138] sm:$0xff]
      %v3578 = vld [vmem:[#allocation3 + $0x140] sm:$0xff]
      %v3579 = vld [vmem:[#allocation3 + $0x148] sm:$0xff]
      %v3580 = vld [vmem:[#allocation3 + $0x150] sm:$0xff]
      %v3581 = vld [vmem:[#allocation3 + $0x158] sm:$0xff]
      %v3582 = vld [vmem:[#allocation3 + $0x160] sm:$0xff]
      %v3583 = vld [vmem:[#allocation3 + $0x168] sm:$0xff]
      %v3584 = vld [vmem:[#allocation3 + $0x170] sm:$0xff]
      %v3585 = vld [vmem:[#allocation3 + $0x178] sm:$0xff]
      %v3586 = vld [vmem:[#allocation3 + $0x180] sm:$0xff]
      %v3587 = vld [vmem:[#allocation3 + $0x188] sm:$0xff]
      %v3588 = vld [vmem:[#allocation3 + $0x190] sm:$0xff]
      %v3589 = vld [vmem:[#allocation3 + $0x198] sm:$0xff]
      %v3590 = vld [vmem:[#allocation3 + $0x1a0] sm:$0xff]
      %v3591 = vld [vmem:[#allocation3 + $0x1a8] sm:$0xff]
      %v3592 = vld [vmem:[#allocation3 + $0x1b0] sm:$0xff]
      %v3593 = vld [vmem:[#allocation3 + $0x1b8] sm:$0xff]
      %v3594 = vld [vmem:[#allocation3 + $0x1c0] sm:$0xff]
      %v3595 = vld [vmem:[#allocation3 + $0x1c8] sm:$0xff]
      %v3596 = vld [vmem:[#allocation3 + $0x1d0] sm:$0xff]
      %v3597 = vld [vmem:[#allocation3 + $0x1d8] sm:$0xff]
      %v3598 = vld [vmem:[#allocation3 + $0x1e0] sm:$0xff]
      %v3599 = vld [vmem:[#allocation3 + $0x1e8] sm:$0xff]
      %v3600 = vld [vmem:[#allocation3 + $0x1f0] sm:$0xff]
      %v3601 = vld [vmem:[#allocation3 + $0x1f8] sm:$0xff]
      %v3602 = vld [vmem:[#allocation3 + $0x200] sm:$0xff]
      %v3603 = vld [vmem:[#allocation3 + $0x208] sm:$0xff]
      %v3604 = vld [vmem:[#allocation3 + $0x210] sm:$0xff]
      %v3605 = vld [vmem:[#allocation3 + $0x218] sm:$0xff]
      %v3606 = vld [vmem:[#allocation3 + $0x220] sm:$0xff]
      %v3607 = vld [vmem:[#allocation3 + $0x228] sm:$0xff]
      %v3608 = vld [vmem:[#allocation3 + $0x230] sm:$0xff]
      %v3609 = vld [vmem:[#allocation3 + $0x238] sm:$0xff]
      %v3610 = vld [vmem:[#allocation3 + $0x240] sm:$0xff]
      %v3611 = vld [vmem:[#allocation3 + $0x248] sm:$0xff]
      %v3612 = vld [vmem:[#allocation3 + $0x250] sm:$0xff]
      %v3613 = vld [vmem:[#allocation3 + $0x258] sm:$0xff]
      %v3614 = vld [vmem:[#allocation3 + $0x260] sm:$0xff]
      %v3615 = vld [vmem:[#allocation3 + $0x268] sm:$0xff]
      %v3616 = vld [vmem:[#allocation3 + $0x270] sm:$0xff]
      %v3617 = vld [vmem:[#allocation3 + $0x278] sm:$0xff]
      %v3618 = vld [vmem:[#allocation3 + $0x280] sm:$0xff]
      %v3619 = vld [vmem:[#allocation3 + $0x288] sm:$0xff]
      %v3620 = vld [vmem:[#allocation3 + $0x290] sm:$0xff]
      %v3621 = vld [vmem:[#allocation3 + $0x298] sm:$0xff]
      %v3622 = vld [vmem:[#allocation3 + $0x2a0] sm:$0xff]
      %v3623 = vld [vmem:[#allocation3 + $0x2a8] sm:$0xff]
      %v3624 = vld [vmem:[#allocation3 + $0x2b0] sm:$0xff]
      %v3625 = vld [vmem:[#allocation3 + $0x2b8] sm:$0xff]
      %v3626 = vld [vmem:[#allocation3 + $0x2c0] sm:$0xff]
      %v3627 = vld [vmem:[#allocation3 + $0x2c8] sm:$0xff]
      %s3628 = scalar_lea.vmem %s2, 288
      %v3629 = vld [vmem:[%s3628] sm:$0xf]
      %v3630 = vld [vmem:[%s3628 + $0x4] sm:$0xf]
      %v3631 = vld [vmem:[%s3628 + $0x8] sm:$0xf]
      %v3632 = vld [vmem:[%s3628 + $0xc] sm:$0xf]
      %v3633 = vld [vmem:[%s3628 + $0x10] sm:$0xf]
      %v3634 = vld [vmem:[%s3628 + $0x14] sm:$0xf]
      %v3635 = vld [vmem:[%s3628 + $0x18] sm:$0xf]
      %v3636 = vld [vmem:[%s3628 + $0x1c] sm:$0xf]
      %v3637 = vld [vmem:[%s3628 + $0x20] sm:$0xf]
      %v3638 = vld [vmem:[%s3628 + $0x24] sm:$0xf]
      %v3639 = vld [vmem:[%s3628 + $0x28] sm:$0xf]
      %v3640 = vld [vmem:[%s3628 + $0x2c] sm:$0xf]
      %v3641 = vld [vmem:[%s3628 + $0x30] sm:$0xf]
      %v3642 = vld [vmem:[%s3628 + $0x34] sm:$0xf]
      %v3643 = vld [vmem:[%s3628 + $0x38] sm:$0xf]
      %v3644 = vld [vmem:[%s3628 + $0x3c] sm:$0xf]
      %v3645 = vld [vmem:[%s3628 + $0x40] sm:$0xf]
      %v3646 = vld [vmem:[%s3628 + $0x44] sm:$0xf]
      %v3647 = vld [vmem:[%s3628 + $0x48] sm:$0xf]
      %v3648 = vld [vmem:[%s3628 + $0x4c] sm:$0xf]
      %v3649 = vld [vmem:[%s3628 + $0x50] sm:$0xf]
      %v3650 = vld [vmem:[%s3628 + $0x54] sm:$0xf]
      %v3651 = vld [vmem:[%s3628 + $0x58] sm:$0xf]
      %v3652 = vld [vmem:[%s3628 + $0x5c] sm:$0xf]
      %v3653 = vld [vmem:[%s3628 + $0x60] sm:$0xf]
      %v3654 = vld [vmem:[%s3628 + $0x64] sm:$0xf]
      %v3655 = vld [vmem:[%s3628 + $0x68] sm:$0xf]
      %v3656 = vld [vmem:[%s3628 + $0x6c] sm:$0xf]
      %v3657 = vld [vmem:[%s3628 + $0x70] sm:$0xf]
      %v3658 = vld [vmem:[%s3628 + $0x74] sm:$0xf]
      %v3659 = vld [vmem:[%s3628 + $0x78] sm:$0xf]
      %v3660 = vld [vmem:[%s3628 + $0x7c] sm:$0xf]
      %v3661 = vld [vmem:[%s3628 + $0x80] sm:$0xf]
      %v3662 = vld [vmem:[%s3628 + $0x84] sm:$0xf]
      %v3663 = vld [vmem:[%s3628 + $0x88] sm:$0xf]
      %v3664 = vld [vmem:[%s3628 + $0x8c] sm:$0xf]
      %v3665 = vld [vmem:[%s3628 + $0x90] sm:$0xf]
      %v3666 = vld [vmem:[%s3628 + $0x94] sm:$0xf]
      %v3667 = vld [vmem:[%s3628 + $0x98] sm:$0xf]
      %v3668 = vld [vmem:[%s3628 + $0x9c] sm:$0xf]
      %v3669 = vld [vmem:[%s3628 + $0xa0] sm:$0xf]
      %v3670 = vld [vmem:[%s3628 + $0xa4] sm:$0xf]
      %v3671 = vld [vmem:[%s3628 + $0xa8] sm:$0xf]
      %v3672 = vld [vmem:[%s3628 + $0xac] sm:$0xf]
      %v3673 = vld [vmem:[%s3628 + $0xb0] sm:$0xf]
      %v3674 = vld [vmem:[%s3628 + $0xb4] sm:$0xf]
      %v3675 = vld [vmem:[%s3628 + $0xb8] sm:$0xf]
      %v3676 = vld [vmem:[%s3628 + $0xbc] sm:$0xf]
      %v3677 = vld [vmem:[%s3628 + $0xc0] sm:$0xf]
      %v3678 = vld [vmem:[%s3628 + $0xc4] sm:$0xf]
      %v3679 = vld [vmem:[%s3628 + $0xc8] sm:$0xf]
      %v3680 = vld [vmem:[%s3628 + $0xcc] sm:$0xf]
      %v3681 = vld [vmem:[%s3628 + $0xd0] sm:$0xf]
      %v3682 = vld [vmem:[%s3628 + $0xd4] sm:$0xf]
      %v3683 = vld [vmem:[%s3628 + $0xd8] sm:$0xf]
      %v3684 = vld [vmem:[%s3628 + $0xdc] sm:$0xf]
      %v3685 = vld [vmem:[%s3628 + $0xe0] sm:$0xf]
      %v3686 = vld [vmem:[%s3628 + $0xe4] sm:$0xf]
      %v3687 = vld [vmem:[%s3628 + $0xe8] sm:$0xf]
      %v3688 = vld [vmem:[%s3628 + $0xec] sm:$0xf]
      %v3689 = vld [vmem:[%s3628 + $0xf0] sm:$0xf]
      %v3690 = vld [vmem:[%s3628 + $0xf4] sm:$0xf]
      %v3691 = vld [vmem:[%s3628 + $0xf8] sm:$0xf]
      %v3692 = vld [vmem:[%s3628 + $0xfc] sm:$0xf]
      %v3693 = vld [vmem:[%s3628 + $0x100] sm:$0xf]
      %v3694 = vld [vmem:[%s3628 + $0x104] sm:$0xf]
      %v3695 = vld [vmem:[%s3628 + $0x108] sm:$0xf]
      %v3696 = vld [vmem:[%s3628 + $0x10c] sm:$0xf]
      %v3697 = vld [vmem:[%s3628 + $0x110] sm:$0xf]
      %v3698 = vld [vmem:[%s3628 + $0x114] sm:$0xf]
      %v3699 = vld [vmem:[%s3628 + $0x118] sm:$0xf]
      %v3700 = vld [vmem:[%s3628 + $0x11c] sm:$0xf]
      %s3701 = scalar_lea.vmem %s3, 1
      %v3702 = vld [vmem:[%s3701] sm:$0x1]
      %v3704 = vlaneseq
      %v3705 = vshrl.u32 %v3704, 7
      %v3706 = vsub.s32 0, %v3705
      %v3707 = vrot.slane %v3702, %v3706
      %v3781 = vunpack.c.l.b16 %v3629
      %v3782 = vunpack.c.l.b16 %v3630
      %v3783 = vunpack.c.l.b16 %v3631
      %v3784 = vunpack.c.l.b16 %v3632
      %v3785 = vunpack.c.l.b16 %v3633
      %v3786 = vunpack.c.l.b16 %v3634
      %v3787 = vunpack.c.l.b16 %v3635
      %v3788 = vunpack.c.l.b16 %v3636
      %v3789 = vunpack.c.l.b16 %v3637
      %v3790 = vunpack.c.l.b16 %v3638
      %v3791 = vunpack.c.l.b16 %v3639
      %v3792 = vunpack.c.l.b16 %v3640
      %v3793 = vunpack.c.l.b16 %v3641
      %v3794 = vunpack.c.l.b16 %v3642
      %v3795 = vunpack.c.l.b16 %v3643
      %v3796 = vunpack.c.l.b16 %v3644
      %v3797 = vunpack.c.l.b16 %v3645
      %v3798 = vunpack.c.l.b16 %v3646
      %v3799 = vunpack.c.l.b16 %v3647
      %v3800 = vunpack.c.l.b16 %v3648
      %v3801 = vunpack.c.l.b16 %v3649
      %v3802 = vunpack.c.l.b16 %v3650
      %v3803 = vunpack.c.l.b16 %v3651
      %v3804 = vunpack.c.l.b16 %v3652
      %v3805 = vunpack.c.l.b16 %v3653
      %v3806 = vunpack.c.l.b16 %v3654
      %v3807 = vunpack.c.l.b16 %v3655
      %v3808 = vunpack.c.l.b16 %v3656
      %v3809 = vunpack.c.l.b16 %v3657
      %v3810 = vunpack.c.l.b16 %v3658
      %v3811 = vunpack.c.l.b16 %v3659
      %v3812 = vunpack.c.l.b16 %v3660
      %v3813 = vunpack.c.l.b16 %v3661
      %v3814 = vunpack.c.l.b16 %v3662
      %v3815 = vunpack.c.l.b16 %v3663
      %v3816 = vunpack.c.l.b16 %v3664
      %v3817 = vunpack.c.l.b16 %v3665
      %v3818 = vunpack.c.l.b16 %v3666
      %v3819 = vunpack.c.l.b16 %v3667
      %v3820 = vunpack.c.l.b16 %v3668
      %v3821 = vunpack.c.l.b16 %v3669
      %v3822 = vunpack.c.l.b16 %v3670
      %v3823 = vunpack.c.l.b16 %v3671
      %v3824 = vunpack.c.l.b16 %v3672
      %v3825 = vunpack.c.l.b16 %v3673
      %v3826 = vunpack.c.l.b16 %v3674
      %v3827 = vunpack.c.l.b16 %v3675
      %v3828 = vunpack.c.l.b16 %v3676
      %v3829 = vunpack.c.l.b16 %v3677
      %v3830 = vunpack.c.l.b16 %v3678
      %v3831 = vunpack.c.l.b16 %v3679
      %v3832 = vunpack.c.l.b16 %v3680
      %v3833 = vunpack.c.l.b16 %v3681
      %v3834 = vunpack.c.l.b16 %v3682
      %v3835 = vunpack.c.l.b16 %v3683
      %v3836 = vunpack.c.l.b16 %v3684
      %v3837 = vunpack.c.l.b16 %v3685
      %v3838 = vunpack.c.l.b16 %v3686
      %v3839 = vunpack.c.l.b16 %v3687
      %v3840 = vunpack.c.l.b16 %v3688
      %v3841 = vunpack.c.l.b16 %v3689
      %v3842 = vunpack.c.l.b16 %v3690
      %v3843 = vunpack.c.l.b16 %v3691
      %v3844 = vunpack.c.l.b16 %v3692
      %v3845 = vunpack.c.l.b16 %v3693
      %v3846 = vunpack.c.l.b16 %v3694
      %v3847 = vunpack.c.l.b16 %v3695
      %v3848 = vunpack.c.l.b16 %v3696
      %v3849 = vunpack.c.l.b16 %v3697
      %v3850 = vunpack.c.l.b16 %v3698
      %v3851 = vunpack.c.l.b16 %v3699
      %v3852 = vunpack.c.l.b16 %v3700
      %v3853 = vpack.c.b16 %v3782, %v3781
      %v3854 = vpack.c.b16 %v3784, %v3783
      %v3855 = vpack.c.b16 %v3786, %v3785
      %v3856 = vpack.c.b16 %v3788, %v3787
      %v3857 = vpack.c.b16 %v3790, %v3789
      %v3858 = vpack.c.b16 %v3792, %v3791
      %v3859 = vpack.c.b16 %v3794, %v3793
      %v3860 = vpack.c.b16 %v3796, %v3795
      %v3861 = vpack.c.b16 %v3798, %v3797
      %v3862 = vpack.c.b16 %v3800, %v3799
      %v3863 = vpack.c.b16 %v3802, %v3801
      %v3864 = vpack.c.b16 %v3804, %v3803
      %v3865 = vpack.c.b16 %v3806, %v3805
      %v3866 = vpack.c.b16 %v3808, %v3807
      %v3867 = vpack.c.b16 %v3810, %v3809
      %v3868 = vpack.c.b16 %v3812, %v3811
      %v3869 = vpack.c.b16 %v3814, %v3813
      %v3870 = vpack.c.b16 %v3816, %v3815
      %v3871 = vpack.c.b16 %v3818, %v3817
      %v3872 = vpack.c.b16 %v3820, %v3819
      %v3873 = vpack.c.b16 %v3822, %v3821
      %v3874 = vpack.c.b16 %v3824, %v3823
      %v3875 = vpack.c.b16 %v3826, %v3825
      %v3876 = vpack.c.b16 %v3828, %v3827
      %v3877 = vpack.c.b16 %v3830, %v3829
      %v3878 = vpack.c.b16 %v3832, %v3831
      %v3879 = vpack.c.b16 %v3834, %v3833
      %v3880 = vpack.c.b16 %v3836, %v3835
      %v3881 = vpack.c.b16 %v3838, %v3837
      %v3882 = vpack.c.b16 %v3840, %v3839
      %v3883 = vpack.c.b16 %v3842, %v3841
      %v3884 = vpack.c.b16 %v3844, %v3843
      %v3885 = vpack.c.b16 %v3846, %v3845
      %v3886 = vpack.c.b16 %v3848, %v3847
      %v3887 = vpack.c.b16 %v3850, %v3849
      %v3888 = vpack.c.b16 %v3852, %v3851
      %v3926 = vsel %vm253, %v3542, 0
      %v3929 = vsel %vm253, %v3547, 0
      %v3932 = vsel %vm253, %v3552, 0
      %v3935 = vsel %vm253, %v3557, 0
      %v3938 = vsel %vm253, %v3562, 0
      %v3941 = vsel %vm253, %v3567, 0
      %v3944 = vsel %vm253, %v3572, 0
      %v3947 = vsel %vm253, %v3577, 0
      %v3950 = vsel %vm253, %v3582, 0
      %v3953 = vsel %vm253, %v3587, 0
      %v3956 = vsel %vm253, %v3592, 0
      %v3959 = vsel %vm253, %v3597, 0
      %v3962 = vsel %vm253, %v3602, 0
      %v3965 = vsel %vm253, %v3607, 0
      %v3968 = vsel %vm253, %v3612, 0
      %v3971 = vsel %vm253, %v3617, 0
      %v3974 = vsel %vm253, %v3622, 0
      %v3977 = vsel %vm253, %v3627, 0
      %3979 = vmatprep.subr.bf16.mxu0 0
      %3980 = vmatpush1.bf16.msra.mxu0 %v3853
      %3981 = vmatprep.subr.bf16.mxu0 0
      %3982 = vmatpush1.bf16.msra.mxu0 %v3854
      %3983 = vmatprep.subr.bf16.mxu0 0
      %3984 = vmatpush1.bf16.msra.mxu0 %v3855
      %3985 = vmatprep.subr.bf16.mxu0 0
      %3986 = vmatpush1.bf16.msra.mxu0 %v3856
      %3987 = vmatprep.subr.bf16.mxu0 0
      %3988 = vmatpush1.bf16.msra.mxu0 %v3857
      %3989 = vmatprep.subr.bf16.mxu0 0
      %3990 = vmatpush1.bf16.msra.mxu0 %v3858
      %3991 = vmatprep.subr.bf16.mxu0 0
      %3992 = vmatpush1.bf16.msra.mxu0 %v3859
      %3993 = vmatprep.subr.bf16.mxu0 0
      %3994 = vmatpush1.bf16.msra.mxu0 %v3860
      %3995 = vmatprep.subr.bf16.mxu0 0
      %3996 = vmatpush1.bf16.msra.mxu0 %v3861
      %3997 = vmatprep.subr.bf16.mxu0 0
      %3998 = vmatpush1.bf16.msra.mxu0 %v3862
      %3999 = vmatprep.subr.bf16.mxu0 0
      %4000 = vmatpush1.bf16.msra.mxu0 %v3863
      %4001 = vmatprep.subr.bf16.mxu0 0
      %4002 = vmatpush1.bf16.msra.mxu0 %v3864
      %4003 = vmatprep.subr.bf16.mxu0 0
      %4004 = vmatpush1.bf16.msra.mxu0 %v3865
      %4005 = vmatprep.subr.bf16.mxu0 0
      %4006 = vmatpush1.bf16.msra.mxu0 %v3866
      %4007 = vmatprep.subr.bf16.mxu0 0
      %4008 = vmatpush1.bf16.msra.mxu0 %v3867
      %4009 = vmatprep.subr.bf16.mxu0 0
      %4010 = vmatpush1.bf16.msra.mxu0 %v3868
      %4011 = vmatprep.mubr.bf16.mxu0 %v3539
      %4012 = vmatmul.mubr.bf16.gmra.mrb[0].mxu0 %v3538
      %v4013 = vpop.f32.mrb[0].mxu0
      %v4014 = vadd.f32 %v3707, %v4013
      %v4015 = vpop.f32.mrb[0].mxu0
      %v4016 = vpop.f32.mrb[0].mxu0
      %v4017 = vadd.f32 %v3707, %v4016
      %v4018 = vpop.f32.mrb[0].mxu0
      %4019 = vmatprep.mubr.bf16.mxu0 %v3544
      %4020 = vmatmul.mubr.bf16.gmra.mrb[0].mxu0 %v3543
      %v4021 = vpop.f32.mrb[0].mxu0
      %v4022 = vadd.f32 %v3707, %v4021
      %v4023 = vpop.f32.mrb[0].mxu0
      %v4024 = vpop.f32.mrb[0].mxu0
      %v4025 = vadd.f32 %v3707, %v4024
      %v4026 = vpop.f32.mrb[0].mxu0
      %4027 = vmatprep.mubr.bf16.mxu0 %v3549
      %4028 = vmatmul.mubr.bf16.gmra.mrb[0].mxu0 %v3548
      %v4029 = vpop.f32.mrb[0].mxu0
      %v4030 = vadd.f32 %v3707, %v4029
      %v4031 = vpop.f32.mrb[0].mxu0
      %v4032 = vpop.f32.mrb[0].mxu0
      %v4033 = vadd.f32 %v3707, %v4032
      %v4034 = vpop.f32.mrb[0].mxu0
      %4035 = vmatprep.mubr.bf16.mxu0 %v3554
      %4036 = vmatmul.mubr.bf16.gmra.mrb[0].mxu0 %v3553
      %v4037 = vpop.f32.mrb[0].mxu0
      %v4038 = vadd.f32 %v3707, %v4037
      %v4039 = vpop.f32.mrb[0].mxu0
      %v4040 = vpop.f32.mrb[0].mxu0
      %v4041 = vadd.f32 %v3707, %v4040
      %v4042 = vpop.f32.mrb[0].mxu0
      %4043 = vmatprep.mubr.bf16.mxu0 %v3559
      %4044 = vmatmul.mubr.bf16.gmra.mrb[0].mxu0 %v3558
      %v4045 = vpop.f32.mrb[0].mxu0
      %v4046 = vadd.f32 %v3707, %v4045
      %v4047 = vpop.f32.mrb[0].mxu0
      %v4048 = vpop.f32.mrb[0].mxu0
      %v4049 = vadd.f32 %v3707, %v4048
      %v4050 = vpop.f32.mrb[0].mxu0
      %4051 = vmatprep.mubr.bf16.mxu0 %v3564
      %4052 = vmatmul.mubr.bf16.gmra.mrb[0].mxu0 %v3563
      %v4053 = vpop.f32.mrb[0].mxu0
      %v4054 = vadd.f32 %v3707, %v4053
      %v4055 = vpop.f32.mrb[0].mxu0
      %v4056 = vpop.f32.mrb[0].mxu0
      %v4057 = vadd.f32 %v3707, %v4056
      %v4058 = vpop.f32.mrb[0].mxu0
      %4059 = vmatprep.mubr.bf16.mxu0 %v3569
      %4060 = vmatmul.mubr.bf16.gmra.mrb[0].mxu0 %v3568
      %v4061 = vpop.f32.mrb[0].mxu0
      %v4062 = vadd.f32 %v3707, %v4061
      %v4063 = vpop.f32.mrb[0].mxu0
      %v4064 = vpop.f32.mrb[0].mxu0
      %v4065 = vadd.f32 %v3707, %v4064
      %v4066 = vpop.f32.mrb[0].mxu0
      %4067 = vmatprep.mubr.bf16.mxu0 %v3574
      %4068 = vmatmul.mubr.bf16.gmra.mrb[0].mxu0 %v3573
      %v4069 = vpop.f32.mrb[0].mxu0
      %v4070 = vadd.f32 %v3707, %v4069
      %v4071 = vpop.f32.mrb[0].mxu0
      %v4072 = vpop.f32.mrb[0].mxu0
      %v4073 = vadd.f32 %v3707, %v4072
      %v4074 = vpop.f32.mrb[0].mxu0
      %4075 = vmatprep.mubr.bf16.mxu0 %v3579
      %4076 = vmatmul.mubr.bf16.gmra.mrb[0].mxu0 %v3578
      %v4077 = vpop.f32.mrb[0].mxu0
      %v4078 = vadd.f32 %v3707, %v4077
      %v4079 = vpop.f32.mrb[0].mxu0
      %v4080 = vpop.f32.mrb[0].mxu0
      %v4081 = vadd.f32 %v3707, %v4080
      %v4082 = vpop.f32.mrb[0].mxu0
      %4083 = vmatprep.mubr.bf16.mxu0 %v3584
      %4084 = vmatmul.mubr.bf16.gmra.mrb[0].mxu0 %v3583
      %v4085 = vpop.f32.mrb[0].mxu0
      %v4086 = vadd.f32 %v3707, %v4085
      %v4087 = vpop.f32.mrb[0].mxu0
      %v4088 = vpop.f32.mrb[0].mxu0
      %v4089 = vadd.f32 %v3707, %v4088
      %v4090 = vpop.f32.mrb[0].mxu0
      %4091 = vmatprep.mubr.bf16.mxu0 %v3589
      %4092 = vmatmul.mubr.bf16.gmra.mrb[0].mxu0 %v3588
      %v4093 = vpop.f32.mrb[0].mxu0
      %v4094 = vadd.f32 %v3707, %v4093
      %v4095 = vpop.f32.mrb[0].mxu0
      %v4096 = vpop.f32.mrb[0].mxu0
      %v4097 = vadd.f32 %v3707, %v4096
      %v4098 = vpop.f32.mrb[0].mxu0
      %4099 = vmatprep.mubr.bf16.mxu0 %v3594
      %4100 = vmatmul.mubr.bf16.gmra.mrb[0].mxu0 %v3593
      %v4101 = vpop.f32.mrb[0].mxu0
      %v4102 = vadd.f32 %v3707, %v4101
      %v4103 = vpop.f32.mrb[0].mxu0
      %v4104 = vpop.f32.mrb[0].mxu0
      %v4105 = vadd.f32 %v3707, %v4104
      %v4106 = vpop.f32.mrb[0].mxu0
      %4107 = vmatprep.mubr.bf16.mxu0 %v3599
      %4108 = vmatmul.mubr.bf16.gmra.mrb[0].mxu0 %v3598
      %v4109 = vpop.f32.mrb[0].mxu0
      %v4110 = vadd.f32 %v3707, %v4109
      %v4111 = vpop.f32.mrb[0].mxu0
      %v4112 = vpop.f32.mrb[0].mxu0
      %v4113 = vadd.f32 %v3707, %v4112
      %v4114 = vpop.f32.mrb[0].mxu0
      %4115 = vmatprep.mubr.bf16.mxu0 %v3604
      %4116 = vmatmul.mubr.bf16.gmra.mrb[0].mxu0 %v3603
      %v4117 = vpop.f32.mrb[0].mxu0
      %v4118 = vadd.f32 %v3707, %v4117
      %v4119 = vpop.f32.mrb[0].mxu0
      %v4120 = vpop.f32.mrb[0].mxu0
      %v4121 = vadd.f32 %v3707, %v4120
      %v4122 = vpop.f32.mrb[0].mxu0
      %4123 = vmatprep.mubr.bf16.mxu0 %v3609
      %4124 = vmatmul.mubr.bf16.gmra.mrb[0].mxu0 %v3608
      %v4125 = vpop.f32.mrb[0].mxu0
      %v4126 = vadd.f32 %v3707, %v4125
      %v4127 = vpop.f32.mrb[0].mxu0
      %v4128 = vpop.f32.mrb[0].mxu0
      %v4129 = vadd.f32 %v3707, %v4128
      %v4130 = vpop.f32.mrb[0].mxu0
      %4131 = vmatprep.mubr.bf16.mxu0 %v3614
      %4132 = vmatmul.mubr.bf16.gmra.mrb[0].mxu0 %v3613
      %v4133 = vpop.f32.mrb[0].mxu0
      %v4134 = vadd.f32 %v3707, %v4133
      %v4135 = vpop.f32.mrb[0].mxu0
      %v4136 = vpop.f32.mrb[0].mxu0
      %v4137 = vadd.f32 %v3707, %v4136
      %v4138 = vpop.f32.mrb[0].mxu0
      %4139 = vmatprep.mubr.bf16.mxu0 %v3619
      %4140 = vmatmul.mubr.bf16.gmra.mrb[0].mxu0 %v3618
      %v4141 = vpop.f32.mrb[0].mxu0
      %v4142 = vadd.f32 %v3707, %v4141
      %v4143 = vpop.f32.mrb[0].mxu0
      %v4144 = vpop.f32.mrb[0].mxu0
      %v4145 = vadd.f32 %v3707, %v4144
      %v4146 = vpop.f32.mrb[0].mxu0
      %4147 = vmatprep.mubr.bf16.mxu0 %v3624
      %4148 = vmatmul.mubr.bf16.gmra.mrb[0].mxu0 %v3623
      %v4149 = vpop.f32.mrb[0].mxu0
      %v4150 = vadd.f32 %v3707, %v4149
      %v4151 = vpop.f32.mrb[0].mxu0
      %v4152 = vpop.f32.mrb[0].mxu0
      %v4153 = vadd.f32 %v3707, %v4152
      %v4154 = vpop.f32.mrb[0].mxu0
      %4155 = vdwg.mxu0
      %4156 = vmatprep.subr.bf16.mxu0 0
      %4157 = vmatpush1.bf16.msra.mxu0 %v3869
      %4158 = vmatprep.subr.bf16.mxu0 0
      %4159 = vmatpush1.bf16.msra.mxu0 %v3870
      %4160 = vmatprep.subr.bf16.mxu0 0
      %4161 = vmatpush1.bf16.msra.mxu0 %v3871
      %4162 = vmatprep.subr.bf16.mxu0 0
      %4163 = vmatpush1.bf16.msra.mxu0 %v3872
      %4164 = vmatprep.subr.bf16.mxu0 0
      %4165 = vmatpush1.bf16.msra.mxu0 %v3873
      %4166 = vmatprep.subr.bf16.mxu0 0
      %4167 = vmatpush1.bf16.msra.mxu0 %v3874
      %4168 = vmatprep.subr.bf16.mxu0 0
      %4169 = vmatpush1.bf16.msra.mxu0 %v3875
      %4170 = vmatprep.subr.bf16.mxu0 0
      %4171 = vmatpush1.bf16.msra.mxu0 %v3876
      %4172 = vmatprep.subr.bf16.mxu0 0
      %4173 = vmatpush1.bf16.msra.mxu0 %v3877
      %4174 = vmatprep.subr.bf16.mxu0 0
      %4175 = vmatpush1.bf16.msra.mxu0 %v3878
      %4176 = vmatprep.subr.bf16.mxu0 0
      %4177 = vmatpush1.bf16.msra.mxu0 %v3879
      %4178 = vmatprep.subr.bf16.mxu0 0
      %4179 = vmatpush1.bf16.msra.mxu0 %v3880
      %4180 = vmatprep.subr.bf16.mxu0 0
      %4181 = vmatpush1.bf16.msra.mxu0 %v3881
      %4182 = vmatprep.subr.bf16.mxu0 0
      %4183 = vmatpush1.bf16.msra.mxu0 %v3882
      %4184 = vmatprep.subr.bf16.mxu0 0
      %4185 = vmatpush1.bf16.msra.mxu0 %v3883
      %4186 = vmatprep.subr.bf16.mxu0 0
      %4187 = vmatpush1.bf16.msra.mxu0 %v3884
      %4188 = vmatprep.mubr.bf16.mxu0 %v3541
      %4189 = vmatmul.mubr.bf16.gmra.mrb[0].mxu0 %v3540
      %v4190 = vpop.f32.mrb[0].mxu0
      %v4191 = vadd.f32 %v4014, %v4190
      %v4192 = vpop.f32.mrb[0].mxu0
      %v4193 = vpop.f32.mrb[0].mxu0
      %v4194 = vadd.f32 %v4017, %v4193
      %v4195 = vpop.f32.mrb[0].mxu0
      %4196 = vmatprep.mubr.bf16.mxu0 %v3546
      %4197 = vmatmul.mubr.bf16.gmra.mrb[0].mxu0 %v3545
      %v4198 = vpop.f32.mrb[0].mxu0
      %v4199 = vadd.f32 %v4022, %v4198
      %v4200 = vpop.f32.mrb[0].mxu0
      %v4201 = vpop.f32.mrb[0].mxu0
      %v4202 = vadd.f32 %v4025, %v4201
      %v4203 = vpop.f32.mrb[0].mxu0
      %4204 = vmatprep.mubr.bf16.mxu0 %v3551
      %4205 = vmatmul.mubr.bf16.gmra.mrb[0].mxu0 %v3550
      %v4206 = vpop.f32.mrb[0].mxu0
      %v4207 = vadd.f32 %v4030, %v4206
      %v4208 = vpop.f32.mrb[0].mxu0
      %v4209 = vpop.f32.mrb[0].mxu0
      %v4210 = vadd.f32 %v4033, %v4209
      %v4211 = vpop.f32.mrb[0].mxu0
      %4212 = vmatprep.mubr.bf16.mxu0 %v3556
      %4213 = vmatmul.mubr.bf16.gmra.mrb[0].mxu0 %v3555
      %v4214 = vpop.f32.mrb[0].mxu0
      %v4215 = vadd.f32 %v4038, %v4214
      %v4216 = vpop.f32.mrb[0].mxu0
      %v4217 = vpop.f32.mrb[0].mxu0
      %v4218 = vadd.f32 %v4041, %v4217
      %v4219 = vpop.f32.mrb[0].mxu0
      %4220 = vmatprep.mubr.bf16.mxu0 %v3561
      %4221 = vmatmul.mubr.bf16.gmra.mrb[0].mxu0 %v3560
      %v4222 = vpop.f32.mrb[0].mxu0
      %v4223 = vadd.f32 %v4046, %v4222
      %v4224 = vpop.f32.mrb[0].mxu0
      %v4225 = vpop.f32.mrb[0].mxu0
      %v4226 = vadd.f32 %v4049, %v4225
      %v4227 = vpop.f32.mrb[0].mxu0
      %4228 = vmatprep.mubr.bf16.mxu0 %v3566
      %4229 = vmatmul.mubr.bf16.gmra.mrb[0].mxu0 %v3565
      %v4230 = vpop.f32.mrb[0].mxu0
      %v4231 = vadd.f32 %v4054, %v4230
      %v4232 = vpop.f32.mrb[0].mxu0
      %v4233 = vpop.f32.mrb[0].mxu0
      %v4234 = vadd.f32 %v4057, %v4233
      %v4235 = vpop.f32.mrb[0].mxu0
      %4236 = vmatprep.mubr.bf16.mxu0 %v3571
      %4237 = vmatmul.mubr.bf16.gmra.mrb[0].mxu0 %v3570
      %v4238 = vpop.f32.mrb[0].mxu0
      %v4239 = vadd.f32 %v4062, %v4238
      %v4240 = vpop.f32.mrb[0].mxu0
      %v4241 = vpop.f32.mrb[0].mxu0
      %v4242 = vadd.f32 %v4065, %v4241
      %v4243 = vpop.f32.mrb[0].mxu0
      %4244 = vmatprep.mubr.bf16.mxu0 %v3576
      %4245 = vmatmul.mubr.bf16.gmra.mrb[0].mxu0 %v3575
      %v4246 = vpop.f32.mrb[0].mxu0
      %v4247 = vadd.f32 %v4070, %v4246
      %v4248 = vpop.f32.mrb[0].mxu0
      %v4249 = vpop.f32.mrb[0].mxu0
      %v4250 = vadd.f32 %v4073, %v4249
      %v4251 = vpop.f32.mrb[0].mxu0
      %4252 = vmatprep.mubr.bf16.mxu0 %v3581
      %4253 = vmatmul.mubr.bf16.gmra.mrb[0].mxu0 %v3580
      %v4254 = vpop.f32.mrb[0].mxu0
      %v4255 = vadd.f32 %v4078, %v4254
      %v4256 = vpop.f32.mrb[0].mxu0
      %v4257 = vpop.f32.mrb[0].mxu0
      %v4258 = vadd.f32 %v4081, %v4257
      %v4259 = vpop.f32.mrb[0].mxu0
      %4260 = vmatprep.mubr.bf16.mxu0 %v3586
      %4261 = vmatmul.mubr.bf16.gmra.mrb[0].mxu0 %v3585
      %v4262 = vpop.f32.mrb[0].mxu0
      %v4263 = vadd.f32 %v4086, %v4262
      %v4264 = vpop.f32.mrb[0].mxu0
      %v4265 = vpop.f32.mrb[0].mxu0
      %v4266 = vadd.f32 %v4089, %v4265
      %v4267 = vpop.f32.mrb[0].mxu0
      %4268 = vmatprep.mubr.bf16.mxu0 %v3591
      %4269 = vmatmul.mubr.bf16.gmra.mrb[0].mxu0 %v3590
      %v4270 = vpop.f32.mrb[0].mxu0
      %v4271 = vadd.f32 %v4094, %v4270
      %v4272 = vpop.f32.mrb[0].mxu0
      %v4273 = vpop.f32.mrb[0].mxu0
      %v4274 = vadd.f32 %v4097, %v4273
      %v4275 = vpop.f32.mrb[0].mxu0
      %4276 = vmatprep.mubr.bf16.mxu0 %v3596
      %4277 = vmatmul.mubr.bf16.gmra.mrb[0].mxu0 %v3595
      %v4278 = vpop.f32.mrb[0].mxu0
      %v4279 = vadd.f32 %v4102, %v4278
      %v4280 = vpop.f32.mrb[0].mxu0
      %v4281 = vpop.f32.mrb[0].mxu0
      %v4282 = vadd.f32 %v4105, %v4281
      %v4283 = vpop.f32.mrb[0].mxu0
      %4284 = vmatprep.mubr.bf16.mxu0 %v3601
      %4285 = vmatmul.mubr.bf16.gmra.mrb[0].mxu0 %v3600
      %v4286 = vpop.f32.mrb[0].mxu0
      %v4287 = vadd.f32 %v4110, %v4286
      %v4288 = vpop.f32.mrb[0].mxu0
      %v4289 = vpop.f32.mrb[0].mxu0
      %v4290 = vadd.f32 %v4113, %v4289
      %v4291 = vpop.f32.mrb[0].mxu0
      %4292 = vmatprep.mubr.bf16.mxu0 %v3606
      %4293 = vmatmul.mubr.bf16.gmra.mrb[0].mxu0 %v3605
      %v4294 = vpop.f32.mrb[0].mxu0
      %v4295 = vadd.f32 %v4118, %v4294
      %v4296 = vpop.f32.mrb[0].mxu0
      %v4297 = vpop.f32.mrb[0].mxu0
      %v4298 = vadd.f32 %v4121, %v4297
      %v4299 = vpop.f32.mrb[0].mxu0
      %4300 = vmatprep.mubr.bf16.mxu0 %v3611
      %4301 = vmatmul.mubr.bf16.gmra.mrb[0].mxu0 %v3610
      %v4302 = vpop.f32.mrb[0].mxu0
      %v4303 = vadd.f32 %v4126, %v4302
      %v4304 = vpop.f32.mrb[0].mxu0
      %v4305 = vpop.f32.mrb[0].mxu0
      %v4306 = vadd.f32 %v4129, %v4305
      %v4307 = vpop.f32.mrb[0].mxu0
      %4308 = vmatprep.mubr.bf16.mxu0 %v3616
      %4309 = vmatmul.mubr.bf16.gmra.mrb[0].mxu0 %v3615
      %v4310 = vpop.f32.mrb[0].mxu0
      %v4311 = vadd.f32 %v4134, %v4310
      %v4312 = vpop.f32.mrb[0].mxu0
      %v4313 = vpop.f32.mrb[0].mxu0
      %v4314 = vadd.f32 %v4137, %v4313
      %v4315 = vpop.f32.mrb[0].mxu0
      %4316 = vmatprep.mubr.bf16.mxu0 %v3621
      %4317 = vmatmul.mubr.bf16.gmra.mrb[0].mxu0 %v3620
      %v4318 = vpop.f32.mrb[0].mxu0
      %v4319 = vadd.f32 %v4142, %v4318
      %v4320 = vpop.f32.mrb[0].mxu0
      %v4321 = vpop.f32.mrb[0].mxu0
      %v4322 = vadd.f32 %v4145, %v4321
      %v4323 = vpop.f32.mrb[0].mxu0
      %4324 = vmatprep.mubr.bf16.mxu0 %v3626
      %4325 = vmatmul.mubr.bf16.gmra.mrb[0].mxu0 %v3625
      %v4326 = vpop.f32.mrb[0].mxu0
      %v4327 = vadd.f32 %v4150, %v4326
      %v4328 = vpop.f32.mrb[0].mxu0
      %v4329 = vpop.f32.mrb[0].mxu0
      %v4330 = vadd.f32 %v4153, %v4329
      %v4331 = vpop.f32.mrb[0].mxu0
      %4332 = vdwg.mxu0
      %4333 = vmatprep.subr.bf16.mxu0 0
      %4334 = vmatpush1.bf16.msra.mxu0 %v3885
      %4335 = vmatprep.subr.bf16.mxu0 0
      %4336 = vmatpush1.bf16.msra.mxu0 %v3886
      %4337 = vmatprep.subr.bf16.mxu0 0
      %4338 = vmatpush1.bf16.msra.mxu0 %v3887
      %4339 = vmatprep.subr.bf16.mxu0 0
      %4340 = vmatpush1.bf16.msra.mxu0 %v3888
      %4341 = vmatprep.subr.bf16.mxu0 0
      %4342 = vmatpush1.bf16.msra.mxu0 0
      %4343 = vmatprep.subr.bf16.mxu0 0
      %4344 = vmatpush1.bf16.msra.mxu0 0
      %4345 = vmatprep.subr.bf16.mxu0 0
      %4346 = vmatpush1.bf16.msra.mxu0 0
      %4347 = vmatprep.subr.bf16.mxu0 0
      %4348 = vmatpush1.bf16.msra.mxu0 0
      %4349 = vmatprep.subr.bf16.mxu0 0
      %4350 = vmatpush1.bf16.msra.mxu0 0
      %4351 = vmatprep.subr.bf16.mxu0 0
      %4352 = vmatpush1.bf16.msra.mxu0 0
      %4353 = vmatprep.subr.bf16.mxu0 0
      %4354 = vmatpush1.bf16.msra.mxu0 0
      %4355 = vmatprep.subr.bf16.mxu0 0
      %4356 = vmatpush1.bf16.msra.mxu0 0
      %4357 = vmatprep.subr.bf16.mxu0 0
      %4358 = vmatpush1.bf16.msra.mxu0 0
      %4359 = vmatprep.subr.bf16.mxu0 0
      %4360 = vmatpush1.bf16.msra.mxu0 0
      %4361 = vmatprep.subr.bf16.mxu0 0
      %4362 = vmatpush1.bf16.msra.mxu0 0
      %4363 = vmatprep.subr.bf16.mxu0 0
      %4364 = vmatpush1.bf16.msra.mxu0 0
      %4365 = vmatprep.mubr.bf16.mxu0 0
      %4366 = vmatmul.mubr.bf16.gmra.mrb[0].mxu0 %v3926
      %v4367 = vpop.f32.mrb[0].mxu0
      %v4368 = vadd.f32 %v4191, %v4367
      %v4369 = vpop.f32.mrb[0].mxu0
      %v4370 = vpop.f32.mrb[0].mxu0
      %v4371 = vadd.f32 %v4194, %v4370
      %v4372 = vpop.f32.mrb[0].mxu0
      %4373 = vmatprep.mubr.bf16.mxu0 0
      %4374 = vmatmul.mubr.bf16.gmra.mrb[0].mxu0 %v3929
      %v4375 = vpop.f32.mrb[0].mxu0
      %v4376 = vadd.f32 %v4199, %v4375
      %v4377 = vpop.f32.mrb[0].mxu0
      %v4378 = vpop.f32.mrb[0].mxu0
      %v4379 = vadd.f32 %v4202, %v4378
      %v4380 = vpop.f32.mrb[0].mxu0
      %4381 = vmatprep.mubr.bf16.mxu0 0
      %4382 = vmatmul.mubr.bf16.gmra.mrb[0].mxu0 %v3932
      %v4383 = vpop.f32.mrb[0].mxu0
      %v4384 = vadd.f32 %v4207, %v4383
      %v4385 = vpop.f32.mrb[0].mxu0
      %v4386 = vpop.f32.mrb[0].mxu0
      %v4387 = vadd.f32 %v4210, %v4386
      %v4388 = vpop.f32.mrb[0].mxu0
      %4389 = vmatprep.mubr.bf16.mxu0 0
      %4390 = vmatmul.mubr.bf16.gmra.mrb[0].mxu0 %v3935
      %v4391 = vpop.f32.mrb[0].mxu0
      %v4392 = vadd.f32 %v4215, %v4391
      %v4393 = vpop.f32.mrb[0].mxu0
      %v4394 = vpop.f32.mrb[0].mxu0
      %v4395 = vadd.f32 %v4218, %v4394
      %v4396 = vpop.f32.mrb[0].mxu0
      %4397 = vmatprep.mubr.bf16.mxu0 0
      %4398 = vmatmul.mubr.bf16.gmra.mrb[0].mxu0 %v3938
      %v4399 = vpop.f32.mrb[0].mxu0
      %v4400 = vadd.f32 %v4223, %v4399
      %v4401 = vpop.f32.mrb[0].mxu0
      %v4402 = vpop.f32.mrb[0].mxu0
      %v4403 = vadd.f32 %v4226, %v4402
      %v4404 = vpop.f32.mrb[0].mxu0
      %4405 = vmatprep.mubr.bf16.mxu0 0
      %4406 = vmatmul.mubr.bf16.gmra.mrb[0].mxu0 %v3941
      %v4407 = vpop.f32.mrb[0].mxu0
      %v4408 = vadd.f32 %v4231, %v4407
      %v4409 = vpop.f32.mrb[0].mxu0
      %v4410 = vpop.f32.mrb[0].mxu0
      %v4411 = vadd.f32 %v4234, %v4410
      %v4412 = vpop.f32.mrb[0].mxu0
      %4413 = vmatprep.mubr.bf16.mxu0 0
      %4414 = vmatmul.mubr.bf16.gmra.mrb[0].mxu0 %v3944
      %v4415 = vpop.f32.mrb[0].mxu0
      %v4416 = vadd.f32 %v4239, %v4415
      %v4417 = vpop.f32.mrb[0].mxu0
      %v4418 = vpop.f32.mrb[0].mxu0
      %v4419 = vadd.f32 %v4242, %v4418
      %v4420 = vpop.f32.mrb[0].mxu0
      %4421 = vmatprep.mubr.bf16.mxu0 0
      %4422 = vmatmul.mubr.bf16.gmra.mrb[0].mxu0 %v3947
      %v4423 = vpop.f32.mrb[0].mxu0
      %v4424 = vadd.f32 %v4247, %v4423
      %v4425 = vpop.f32.mrb[0].mxu0
      %v4426 = vpop.f32.mrb[0].mxu0
      %v4427 = vadd.f32 %v4250, %v4426
      %v4428 = vpop.f32.mrb[0].mxu0
      %4429 = vmatprep.mubr.bf16.mxu0 0
      %4430 = vmatmul.mubr.bf16.gmra.mrb[0].mxu0 %v3950
      %v4431 = vpop.f32.mrb[0].mxu0
      %v4432 = vadd.f32 %v4255, %v4431
      %v4433 = vpop.f32.mrb[0].mxu0
      %v4434 = vpop.f32.mrb[0].mxu0
      %v4435 = vadd.f32 %v4258, %v4434
      %v4436 = vpop.f32.mrb[0].mxu0
      %4437 = vmatprep.mubr.bf16.mxu0 0
      %4438 = vmatmul.mubr.bf16.gmra.mrb[0].mxu0 %v3953
      %v4439 = vpop.f32.mrb[0].mxu0
      %v4440 = vadd.f32 %v4263, %v4439
      %v4441 = vpop.f32.mrb[0].mxu0
      %v4442 = vpop.f32.mrb[0].mxu0
      %v4443 = vadd.f32 %v4266, %v4442
      %v4444 = vpop.f32.mrb[0].mxu0
      %4445 = vmatprep.mubr.bf16.mxu0 0
      %4446 = vmatmul.mubr.bf16.gmra.mrb[0].mxu0 %v3956
      %v4447 = vpop.f32.mrb[0].mxu0
      %v4448 = vadd.f32 %v4271, %v4447
      %v4449 = vpop.f32.mrb[0].mxu0
      %v4450 = vpop.f32.mrb[0].mxu0
      %v4451 = vadd.f32 %v4274, %v4450
      %v4452 = vpop.f32.mrb[0].mxu0
      %4453 = vmatprep.mubr.bf16.mxu0 0
      %4454 = vmatmul.mubr.bf16.gmra.mrb[0].mxu0 %v3959
      %v4455 = vpop.f32.mrb[0].mxu0
      %v4456 = vadd.f32 %v4279, %v4455
      %v4457 = vpop.f32.mrb[0].mxu0
      %v4458 = vpop.f32.mrb[0].mxu0
      %v4459 = vadd.f32 %v4282, %v4458
      %v4460 = vpop.f32.mrb[0].mxu0
      %4461 = vmatprep.mubr.bf16.mxu0 0
      %4462 = vmatmul.mubr.bf16.gmra.mrb[0].mxu0 %v3962
      %v4463 = vpop.f32.mrb[0].mxu0
      %v4464 = vadd.f32 %v4287, %v4463
      %v4465 = vpop.f32.mrb[0].mxu0
      %v4466 = vpop.f32.mrb[0].mxu0
      %v4467 = vadd.f32 %v4290, %v4466
      %v4468 = vpop.f32.mrb[0].mxu0
      %4469 = vmatprep.mubr.bf16.mxu0 0
      %4470 = vmatmul.mubr.bf16.gmra.mrb[0].mxu0 %v3965
      %v4471 = vpop.f32.mrb[0].mxu0
      %v4472 = vadd.f32 %v4295, %v4471
      %v4473 = vpop.f32.mrb[0].mxu0
      %v4474 = vpop.f32.mrb[0].mxu0
      %v4475 = vadd.f32 %v4298, %v4474
      %v4476 = vpop.f32.mrb[0].mxu0
      %4477 = vmatprep.mubr.bf16.mxu0 0
      %4478 = vmatmul.mubr.bf16.gmra.mrb[0].mxu0 %v3968
      %v4479 = vpop.f32.mrb[0].mxu0
      %v4480 = vadd.f32 %v4303, %v4479
      %v4481 = vpop.f32.mrb[0].mxu0
      %v4482 = vpop.f32.mrb[0].mxu0
      %v4483 = vadd.f32 %v4306, %v4482
      %v4484 = vpop.f32.mrb[0].mxu0
      %4485 = vmatprep.mubr.bf16.mxu0 0
      %4486 = vmatmul.mubr.bf16.gmra.mrb[0].mxu0 %v3971
      %v4487 = vpop.f32.mrb[0].mxu0
      %v4488 = vadd.f32 %v4311, %v4487
      %v4489 = vpop.f32.mrb[0].mxu0
      %v4490 = vpop.f32.mrb[0].mxu0
      %v4491 = vadd.f32 %v4314, %v4490
      %v4492 = vpop.f32.mrb[0].mxu0
      %4493 = vmatprep.mubr.bf16.mxu0 0
      %4494 = vmatmul.mubr.bf16.gmra.mrb[0].mxu0 %v3974
      %v4495 = vpop.f32.mrb[0].mxu0
      %v4496 = vadd.f32 %v4319, %v4495
      %v4497 = vpop.f32.mrb[0].mxu0
      %v4498 = vpop.f32.mrb[0].mxu0
      %v4499 = vadd.f32 %v4322, %v4498
      %v4500 = vpop.f32.mrb[0].mxu0
      %4501 = vmatprep.mubr.bf16.mxu0 0
      %4502 = vmatmul.mubr.bf16.gmra.mrb[0].mxu0 %v3977
      %v4503 = vpop.f32.mrb[0].mxu0
      %v4504 = vadd.f32 %v4327, %v4503
      %v4505 = vpop.f32.mrb[0].mxu0
      %v4506 = vpop.f32.mrb[0].mxu0
      %v4507 = vadd.f32 %v4330, %v4506
      %v4508 = vpop.f32.mrb[0].mxu0
      %4509 = vdwg.mxu0
      %vm4510 = vcmp.gt.f32.partialorder %v4368, 0.0
      %vm4511 = vcmp.gt.f32.partialorder %v4371, 0.0
      %vm4512 = vcmp.gt.f32.partialorder %v4376, 0.0
      %vm4513 = vcmp.gt.f32.partialorder %v4379, 0.0
      %vm4514 = vcmp.gt.f32.partialorder %v4384, 0.0
      %vm4515 = vcmp.gt.f32.partialorder %v4387, 0.0
      %vm4516 = vcmp.gt.f32.partialorder %v4392, 0.0
      %vm4517 = vcmp.gt.f32.partialorder %v4395, 0.0
      %vm4518 = vcmp.gt.f32.partialorder %v4400, 0.0
      %vm4519 = vcmp.gt.f32.partialorder %v4403, 0.0
      %vm4520 = vcmp.gt.f32.partialorder %v4408, 0.0
      %vm4521 = vcmp.gt.f32.partialorder %v4411, 0.0
      %vm4522 = vcmp.gt.f32.partialorder %v4416, 0.0
      %vm4523 = vcmp.gt.f32.partialorder %v4419, 0.0
      %vm4524 = vcmp.gt.f32.partialorder %v4424, 0.0
      %vm4525 = vcmp.gt.f32.partialorder %v4427, 0.0
      %vm4526 = vcmp.gt.f32.partialorder %v4432, 0.0
      %vm4527 = vcmp.gt.f32.partialorder %v4435, 0.0
      %vm4528 = vcmp.gt.f32.partialorder %v4440, 0.0
      %vm4529 = vcmp.gt.f32.partialorder %v4443, 0.0
      %vm4530 = vcmp.gt.f32.partialorder %v4448, 0.0
      %vm4531 = vcmp.gt.f32.partialorder %v4451, 0.0
      %vm4532 = vcmp.gt.f32.partialorder %v4456, 0.0
      %vm4533 = vcmp.gt.f32.partialorder %v4459, 0.0
      %vm4534 = vcmp.gt.f32.partialorder %v4464, 0.0
      %vm4535 = vcmp.gt.f32.partialorder %v4467, 0.0
      %vm4536 = vcmp.gt.f32.partialorder %v4472, 0.0
      %vm4537 = vcmp.gt.f32.partialorder %v4475, 0.0
      %vm4538 = vcmp.gt.f32.partialorder %v4480, 0.0
      %vm4539 = vcmp.gt.f32.partialorder %v4483, 0.0
      %vm4540 = vcmp.gt.f32.partialorder %v4488, 0.0
      %vm4541 = vcmp.gt.f32.partialorder %v4491, 0.0
      %vm4542 = vcmp.gt.f32.partialorder %v4496, 0.0
      %vm4543 = vcmp.gt.f32.partialorder %v4499, 0.0
      %vm4544 = vcmp.gt.f32.partialorder %v4504, 0.0
      %vm4545 = vcmp.gt.f32.partialorder %v4507, 0.0
      %v4546 = vmul.f32 %v4368, 0.01
      %v4547 = vmul.f32 %v4371, 0.01
      %v4548 = vmul.f32 %v4376, 0.01
      %v4549 = vmul.f32 %v4379, 0.01
      %v4550 = vmul.f32 %v4384, 0.01
      %v4551 = vmul.f32 %v4387, 0.01
      %v4552 = vmul.f32 %v4392, 0.01
      %v4553 = vmul.f32 %v4395, 0.01
      %v4554 = vmul.f32 %v4400, 0.01
      %v4555 = vmul.f32 %v4403, 0.01
      %v4556 = vmul.f32 %v4408, 0.01
      %v4557 = vmul.f32 %v4411, 0.01
      %v4558 = vmul.f32 %v4416, 0.01
      %v4559 = vmul.f32 %v4419, 0.01
      %v4560 = vmul.f32 %v4424, 0.01
      %v4561 = vmul.f32 %v4427, 0.01
      %v4562 = vmul.f32 %v4432, 0.01
      %v4563 = vmul.f32 %v4435, 0.01
      %v4564 = vmul.f32 %v4440, 0.01
      %v4565 = vmul.f32 %v4443, 0.01
      %v4566 = vmul.f32 %v4448, 0.01
      %v4567 = vmul.f32 %v4451, 0.01
      %v4568 = vmul.f32 %v4456, 0.01
      %v4569 = vmul.f32 %v4459, 0.01
      %v4570 = vmul.f32 %v4464, 0.01
      %v4571 = vmul.f32 %v4467, 0.01
      %v4572 = vmul.f32 %v4472, 0.01
      %v4573 = vmul.f32 %v4475, 0.01
      %v4574 = vmul.f32 %v4480, 0.01
      %v4575 = vmul.f32 %v4483, 0.01
      %v4576 = vmul.f32 %v4488, 0.01
      %v4577 = vmul.f32 %v4491, 0.01
      %v4578 = vmul.f32 %v4496, 0.01
      %v4579 = vmul.f32 %v4499, 0.01
      %v4580 = vmul.f32 %v4504, 0.01
      %v4581 = vmul.f32 %v4507, 0.01
      %v4582 = vsel %vm4510, %v4368, %v4546
      %v4583 = vsel %vm4511, %v4371, %v4547
      %v4584 = vsel %vm4512, %v4376, %v4548
      %v4585 = vsel %vm4513, %v4379, %v4549
      %v4586 = vsel %vm4514, %v4384, %v4550
      %v4587 = vsel %vm4515, %v4387, %v4551
      %v4588 = vsel %vm4516, %v4392, %v4552
      %v4589 = vsel %vm4517, %v4395, %v4553
      %v4590 = vsel %vm4518, %v4400, %v4554
      %v4591 = vsel %vm4519, %v4403, %v4555
      %v4592 = vsel %vm4520, %v4408, %v4556
      %v4593 = vsel %vm4521, %v4411, %v4557
      %v4594 = vsel %vm4522, %v4416, %v4558
      %v4595 = vsel %vm4523, %v4419, %v4559
      %v4596 = vsel %vm4524, %v4424, %v4560
      %v4597 = vsel %vm4525, %v4427, %v4561
      %v4598 = vsel %vm4526, %v4432, %v4562
      %v4599 = vsel %vm4527, %v4435, %v4563
      %v4600 = vsel %vm4528, %v4440, %v4564
      %v4601 = vsel %vm4529, %v4443, %v4565
      %v4602 = vsel %vm4530, %v4448, %v4566
      %v4603 = vsel %vm4531, %v4451, %v4567
      %v4604 = vsel %vm4532, %v4456, %v4568
      %v4605 = vsel %vm4533, %v4459, %v4569
      %v4606 = vsel %vm4534, %v4464, %v4570
      %v4607 = vsel %vm4535, %v4467, %v4571
      %v4608 = vsel %vm4536, %v4472, %v4572
      %v4609 = vsel %vm4537, %v4475, %v4573
      %v4610 = vsel %vm4538, %v4480, %v4574
      %v4611 = vsel %vm4539, %v4483, %v4575
      %v4612 = vsel %vm4540, %v4488, %v4576
      %v4613 = vsel %vm4541, %v4491, %v4577
      %v4614 = vsel %vm4542, %v4496, %v4578
      %v4615 = vsel %vm4543, %v4499, %v4579
      %v4616 = vsel %vm4544, %v4504, %v4580
      %v4617 = vsel %vm4545, %v4507, %v4581
      %v4618 = vld [vmem:[%s1] sm:$0xff]
      %v4619 = vld [vmem:[%s1 + $0x8] sm:$0xff]
      %v4620 = vld [vmem:[%s1 + $0x10] sm:$0xff]
      %v4621 = vld [vmem:[%s1 + $0x18] sm:$0xff]
      %v4622 = vld [vmem:[%s1 + $0x20] sm:$0xff]
      %v4623 = vld [vmem:[%s1 + $0x28] sm:$0xff]
      %v4624 = vld [vmem:[%s1 + $0x30] sm:$0xff]
      %v4625 = vld [vmem:[%s1 + $0x38] sm:$0xff]
      %v4626 = vld [vmem:[%s1 + $0x40] sm:$0xff]
      %v4627 = vld [vmem:[%s1 + $0x48] sm:$0xff]
      %v4628 = vld [vmem:[%s1 + $0x50] sm:$0xff]
      %v4629 = vld [vmem:[%s1 + $0x58] sm:$0xff]
      %v4630 = vld [vmem:[%s1 + $0x60] sm:$0xff]
      %v4631 = vld [vmem:[%s1 + $0x68] sm:$0xff]
      %v4632 = vld [vmem:[%s1 + $0x70] sm:$0xff]
      %v4633 = vld [vmem:[%s1 + $0x78] sm:$0xff]
      %v4634 = vld [vmem:[%s1 + $0x80] sm:$0xff]
      %v4635 = vld [vmem:[%s1 + $0x88] sm:$0xff]
      %v4636 = vld [vmem:[%s1 + $0x90] sm:$0xff]
      %v4637 = vld [vmem:[%s1 + $0x98] sm:$0xff]
      %v4638 = vld [vmem:[%s1 + $0xa0] sm:$0xff]
      %v4639 = vld [vmem:[%s1 + $0xa8] sm:$0xff]
      %v4640 = vld [vmem:[%s1 + $0xb0] sm:$0xff]
      %v4641 = vld [vmem:[%s1 + $0xb8] sm:$0xff]
      %v4642 = vld [vmem:[%s1 + $0xc0] sm:$0xff]
      %v4643 = vld [vmem:[%s1 + $0xc8] sm:$0xff]
      %v4644 = vld [vmem:[%s1 + $0xd0] sm:$0xff]
      %v4645 = vld [vmem:[%s1 + $0xd8] sm:$0xff]
      %v4646 = vld [vmem:[%s1 + $0xe0] sm:$0xff]
      %v4647 = vld [vmem:[%s1 + $0xe8] sm:$0xff]
      %v4648 = vld [vmem:[%s1 + $0xf0] sm:$0xff]
      %v4649 = vld [vmem:[%s1 + $0xf8] sm:$0xff]
      %v4650 = vld [vmem:[%s1 + $0x100] sm:$0xff]
      %v4651 = vld [vmem:[%s1 + $0x108] sm:$0xff]
      %v4652 = vld [vmem:[%s1 + $0x110] sm:$0xff]
      %v4653 = vld [vmem:[%s1 + $0x118] sm:$0xff]
      %4655 = vset.pattern.permute.xlu0 0
      %4656 = vperm.xlu0 %4655, %v4618
      %v4657 = vpop.permute.xlu0 %4656
      %4660 = vset.pattern.permute.xlu0 0
      %4661 = vperm.xlu0 %4660, %v4619
      %v4662 = vpop.permute.xlu0 %4661
      %4665 = vset.pattern.permute.xlu0 0
      %4666 = vperm.xlu0 %4665, %v4620
      %v4667 = vpop.permute.xlu0 %4666
      %4670 = vset.pattern.permute.xlu0 0
      %4671 = vperm.xlu0 %4670, %v4621
      %v4672 = vpop.permute.xlu0 %4671
      %4675 = vset.pattern.permute.xlu0 0
      %4676 = vperm.xlu0 %4675, %v4622
      %v4677 = vpop.permute.xlu0 %4676
      %4680 = vset.pattern.permute.xlu0 0
      %4681 = vperm.xlu0 %4680, %v4623
      %v4682 = vpop.permute.xlu0 %4681
      %4685 = vset.pattern.permute.xlu0 0
      %4686 = vperm.xlu0 %4685, %v4624
      %v4687 = vpop.permute.xlu0 %4686
      %4690 = vset.pattern.permute.xlu0 0
      %4691 = vperm.xlu0 %4690, %v4625
      %v4692 = vpop.permute.xlu0 %4691
      %4695 = vset.pattern.permute.xlu0 0
      %4696 = vperm.xlu0 %4695, %v4626
      %v4697 = vpop.permute.xlu0 %4696
      %4700 = vset.pattern.permute.xlu0 0
      %4701 = vperm.xlu0 %4700, %v4627
      %v4702 = vpop.permute.xlu0 %4701
      %4705 = vset.pattern.permute.xlu0 0
      %4706 = vperm.xlu0 %4705, %v4628
      %v4707 = vpop.permute.xlu0 %4706
      %4710 = vset.pattern.permute.xlu0 0
      %4711 = vperm.xlu0 %4710, %v4629
      %v4712 = vpop.permute.xlu0 %4711
      %4715 = vset.pattern.permute.xlu0 0
      %4716 = vperm.xlu0 %4715, %v4630
      %v4717 = vpop.permute.xlu0 %4716
      %4720 = vset.pattern.permute.xlu0 0
      %4721 = vperm.xlu0 %4720, %v4631
      %v4722 = vpop.permute.xlu0 %4721
      %4725 = vset.pattern.permute.xlu0 0
      %4726 = vperm.xlu0 %4725, %v4632
      %v4727 = vpop.permute.xlu0 %4726
      %4730 = vset.pattern.permute.xlu0 0
      %4731 = vperm.xlu0 %4730, %v4633
      %v4732 = vpop.permute.xlu0 %4731
      %4735 = vset.pattern.permute.xlu0 0
      %4736 = vperm.xlu0 %4735, %v4634
      %v4737 = vpop.permute.xlu0 %4736
      %4740 = vset.pattern.permute.xlu0 0
      %4741 = vperm.xlu0 %4740, %v4635
      %v4742 = vpop.permute.xlu0 %4741
      %4745 = vset.pattern.permute.xlu0 0
      %4746 = vperm.xlu0 %4745, %v4636
      %v4747 = vpop.permute.xlu0 %4746
      %4750 = vset.pattern.permute.xlu0 0
      %4751 = vperm.xlu0 %4750, %v4637
      %v4752 = vpop.permute.xlu0 %4751
      %4755 = vset.pattern.permute.xlu0 0
      %4756 = vperm.xlu0 %4755, %v4638
      %v4757 = vpop.permute.xlu0 %4756
      %4760 = vset.pattern.permute.xlu0 0
      %4761 = vperm.xlu0 %4760, %v4639
      %v4762 = vpop.permute.xlu0 %4761
      %4765 = vset.pattern.permute.xlu0 0
      %4766 = vperm.xlu0 %4765, %v4640
      %v4767 = vpop.permute.xlu0 %4766
      %4770 = vset.pattern.permute.xlu0 0
      %4771 = vperm.xlu0 %4770, %v4641
      %v4772 = vpop.permute.xlu0 %4771
      %4775 = vset.pattern.permute.xlu0 0
      %4776 = vperm.xlu0 %4775, %v4642
      %v4777 = vpop.permute.xlu0 %4776
      %4780 = vset.pattern.permute.xlu0 0
      %4781 = vperm.xlu0 %4780, %v4643
      %v4782 = vpop.permute.xlu0 %4781
      %4785 = vset.pattern.permute.xlu0 0
      %4786 = vperm.xlu0 %4785, %v4644
      %v4787 = vpop.permute.xlu0 %4786
      %4790 = vset.pattern.permute.xlu0 0
      %4791 = vperm.xlu0 %4790, %v4645
      %v4792 = vpop.permute.xlu0 %4791
      %4795 = vset.pattern.permute.xlu0 0
      %4796 = vperm.xlu0 %4795, %v4646
      %v4797 = vpop.permute.xlu0 %4796
      %4800 = vset.pattern.permute.xlu0 0
      %4801 = vperm.xlu0 %4800, %v4647
      %v4802 = vpop.permute.xlu0 %4801
      %4805 = vset.pattern.permute.xlu0 0
      %4806 = vperm.xlu0 %4805, %v4648
      %v4807 = vpop.permute.xlu0 %4806
      %4810 = vset.pattern.permute.xlu0 0
      %4811 = vperm.xlu0 %4810, %v4649
      %v4812 = vpop.permute.xlu0 %4811
      %4815 = vset.pattern.permute.xlu0 0
      %4816 = vperm.xlu0 %4815, %v4650
      %v4817 = vpop.permute.xlu0 %4816
      %4820 = vset.pattern.permute.xlu0 0
      %4821 = vperm.xlu0 %4820, %v4651
      %v4822 = vpop.permute.xlu0 %4821
      %4825 = vset.pattern.permute.xlu0 0
      %4826 = vperm.xlu0 %4825, %v4652
      %v4827 = vpop.permute.xlu0 %4826
      %4830 = vset.pattern.permute.xlu0 0
      %4831 = vperm.xlu0 %4830, %v4653
      %v4832 = vpop.permute.xlu0 %4831
      %v4834 = vmul.f32 %v4582, %v4657
      %v4835 = vmul.f32 %v4583, %v4662
      %v4836 = vmul.f32 %v4584, %v4667
      %v4837 = vmul.f32 %v4585, %v4672
      %v4838 = vmul.f32 %v4586, %v4677
      %v4839 = vmul.f32 %v4587, %v4682
      %v4840 = vmul.f32 %v4588, %v4687
      %v4841 = vmul.f32 %v4589, %v4692
      %v4842 = vmul.f32 %v4590, %v4697
      %v4843 = vmul.f32 %v4591, %v4702
      %v4844 = vmul.f32 %v4592, %v4707
      %v4845 = vmul.f32 %v4593, %v4712
      %v4846 = vmul.f32 %v4594, %v4717
      %v4847 = vmul.f32 %v4595, %v4722
      %v4848 = vmul.f32 %v4596, %v4727
      %v4849 = vmul.f32 %v4597, %v4732
      %v4850 = vmul.f32 %v4598, %v4737
      %v4851 = vmul.f32 %v4599, %v4742
      %v4852 = vmul.f32 %v4600, %v4747
      %v4853 = vmul.f32 %v4601, %v4752
      %v4854 = vmul.f32 %v4602, %v4757
      %v4855 = vmul.f32 %v4603, %v4762
      %v4856 = vmul.f32 %v4604, %v4767
      %v4857 = vmul.f32 %v4605, %v4772
      %v4858 = vmul.f32 %v4606, %v4777
      %v4859 = vmul.f32 %v4607, %v4782
      %v4860 = vmul.f32 %v4608, %v4787
      %v4861 = vmul.f32 %v4609, %v4792
      %v4862 = vmul.f32 %v4610, %v4797
      %v4863 = vmul.f32 %v4611, %v4802
      %v4864 = vmul.f32 %v4612, %v4807
      %v4865 = vmul.f32 %v4613, %v4812
      %v4866 = vmul.f32 %v4614, %v4817
      %v4867 = vmul.f32 %v4615, %v4822
      %v4868 = vmul.f32 %v4616, %v4827
      %v4869 = vmul.f32 %v4617, %v4832
      %v4870 = vpack.c.bf16 %v4835, %v4834
      %v4871 = vpack.c.bf16 %v4837, %v4836
      %v4872 = vpack.c.bf16 %v4839, %v4838
      %v4873 = vpack.c.bf16 %v4841, %v4840
      %v4874 = vpack.c.bf16 %v4843, %v4842
      %v4875 = vpack.c.bf16 %v4845, %v4844
      %v4876 = vpack.c.bf16 %v4847, %v4846
      %v4877 = vpack.c.bf16 %v4849, %v4848
      %v4878 = vpack.c.bf16 %v4851, %v4850
      %v4879 = vpack.c.bf16 %v4853, %v4852
      %v4880 = vpack.c.bf16 %v4855, %v4854
      %v4881 = vpack.c.bf16 %v4857, %v4856
      %v4882 = vpack.c.bf16 %v4859, %v4858
      %v4883 = vpack.c.bf16 %v4861, %v4860
      %v4884 = vpack.c.bf16 %v4863, %v4862
      %v4885 = vpack.c.bf16 %v4865, %v4864
      %v4886 = vpack.c.bf16 %v4867, %v4866
      %v4887 = vpack.c.bf16 %v4869, %v4868
      %4906 = vrot.lane.b32.xlu0 %v4870, 64
      %v4907 = vpop.permute.xlu0 %4906
      %4908 = vrot.lane.b32.xlu0 %v4871, 64
      %v4909 = vpop.permute.xlu0 %4908
      %4910 = vrot.lane.b32.xlu0 %v4872, 64
      %v4911 = vpop.permute.xlu0 %4910
      %4912 = vrot.lane.b32.xlu0 %v4873, 64
      %v4913 = vpop.permute.xlu0 %4912
      %4914 = vrot.lane.b32.xlu0 %v4874, 64
      %v4915 = vpop.permute.xlu0 %4914
      %4916 = vrot.lane.b32.xlu0 %v4875, 64
      %v4917 = vpop.permute.xlu0 %4916
      %4918 = vrot.lane.b32.xlu0 %v4876, 64
      %v4919 = vpop.permute.xlu0 %4918
      %4920 = vrot.lane.b32.xlu0 %v4877, 64
      %v4921 = vpop.permute.xlu0 %4920
      %4922 = vrot.lane.b32.xlu0 %v4878, 64
      %v4923 = vpop.permute.xlu0 %4922
      %4924 = vrot.lane.b32.xlu0 %v4879, 64
      %v4925 = vpop.permute.xlu0 %4924
      %4926 = vrot.lane.b32.xlu0 %v4880, 64
      %v4927 = vpop.permute.xlu0 %4926
      %4928 = vrot.lane.b32.xlu0 %v4881, 64
      %v4929 = vpop.permute.xlu0 %4928
      %4930 = vrot.lane.b32.xlu0 %v4882, 64
      %v4931 = vpop.permute.xlu0 %4930
      %4932 = vrot.lane.b32.xlu0 %v4883, 64
      %v4933 = vpop.permute.xlu0 %4932
      %4934 = vrot.lane.b32.xlu0 %v4884, 64
      %v4935 = vpop.permute.xlu0 %4934
      %4936 = vrot.lane.b32.xlu0 %v4885, 64
      %v4937 = vpop.permute.xlu0 %4936
      %4938 = vrot.lane.b32.xlu0 %v4886, 64
      %v4939 = vpop.permute.xlu0 %4938
      %4940 = vrot.lane.b32.xlu0 %v4887, 64
      %v4941 = vpop.permute.xlu0 %4940
      %4960 = vst.msk [vmem:[#allocation4] sm:$0xff] %vm461, %v4907
      %4961 = vst.msk [vmem:[#allocation4 + $0x10] sm:$0xff] %vm461, %v4909
      %4962 = vst.msk [vmem:[#allocation4 + $0x20] sm:$0xff] %vm461, %v4911
      %4963 = vst.msk [vmem:[#allocation4 + $0x30] sm:$0xff] %vm461, %v4913
      %4964 = vst.msk [vmem:[#allocation4 + $0x40] sm:$0xff] %vm461, %v4915
      %4965 = vst.msk [vmem:[#allocation4 + $0x50] sm:$0xff] %vm461, %v4917
      %4966 = vst.msk [vmem:[#allocation4 + $0x60] sm:$0xff] %vm461, %v4919
      %4967 = vst.msk [vmem:[#allocation4 + $0x70] sm:$0xff] %vm461, %v4921
      %4968 = vst.msk [vmem:[#allocation4 + $0x80] sm:$0xff] %vm461, %v4923
      %4969 = vst.msk [vmem:[#allocation4 + $0x90] sm:$0xff] %vm461, %v4925
      %4970 = vst.msk [vmem:[#allocation4 + $0xa0] sm:$0xff] %vm461, %v4927
      %4971 = vst.msk [vmem:[#allocation4 + $0xb0] sm:$0xff] %vm461, %v4929
      %4972 = vst.msk [vmem:[#allocation4 + $0xc0] sm:$0xff] %vm461, %v4931
      %4973 = vst.msk [vmem:[#allocation4 + $0xd0] sm:$0xff] %vm461, %v4933
      %4974 = vst.msk [vmem:[#allocation4 + $0xe0] sm:$0xff] %vm461, %v4935
      %4975 = vst.msk [vmem:[#allocation4 + $0xf0] sm:$0xff] %vm461, %v4937
      %4976 = vst.msk [vmem:[#allocation4 + $0x100] sm:$0xff] %vm461, %v4939
      %4977 = vst.msk [vmem:[#allocation4 + $0x110] sm:$0xff] %vm461, %v4941
      %4978 = vst.msk [vmem:[#allocation2 + $0x13] sm:$0xff] %vm253, %v4834
      %4979 = vst.msk [vmem:[#allocation2 + $0x1b] sm:$0xff] %vm253, %v4835
      %4980 = vst.msk [vmem:[#allocation2 + $0x23] sm:$0xff] %vm253, %v4836
      %4981 = vst.msk [vmem:[#allocation2 + $0x2b] sm:$0xff] %vm253, %v4837
      %4982 = vst.msk [vmem:[#allocation2 + $0x33] sm:$0xff] %vm253, %v4838
      %4983 = vst.msk [vmem:[#allocation2 + $0x3b] sm:$0xff] %vm253, %v4839
      %4984 = vst.msk [vmem:[#allocation2 + $0x43] sm:$0xff] %vm253, %v4840
      %4985 = vst.msk [vmem:[#allocation2 + $0x4b] sm:$0xff] %vm253, %v4841
      %4986 = vst.msk [vmem:[#allocation2 + $0x53] sm:$0xff] %vm253, %v4842
      %4987 = vst.msk [vmem:[#allocation2 + $0x5b] sm:$0xff] %vm253, %v4843
      %4988 = vst.msk [vmem:[#allocation2 + $0x63] sm:$0xff] %vm253, %v4844
      %4989 = vst.msk [vmem:[#allocation2 + $0x6b] sm:$0xff] %vm253, %v4845
      %4990 = vst.msk [vmem:[#allocation2 + $0x73] sm:$0xff] %vm253, %v4846
      %4991 = vst.msk [vmem:[#allocation2 + $0x7b] sm:$0xff] %vm253, %v4847
      %4992 = vst.msk [vmem:[#allocation2 + $0x83] sm:$0xff] %vm253, %v4848
      %4993 = vst.msk [vmem:[#allocation2 + $0x8b] sm:$0xff] %vm253, %v4849
      %4994 = vst.msk [vmem:[#allocation2 + $0x93] sm:$0xff] %vm253, %v4850
      %4995 = vst.msk [vmem:[#allocation2 + $0x9b] sm:$0xff] %vm253, %v4851
      %4996 = vst.msk [vmem:[#allocation2 + $0xa3] sm:$0xff] %vm253, %v4852
      %4997 = vst.msk [vmem:[#allocation2 + $0xab] sm:$0xff] %vm253, %v4853
      %4998 = vst.msk [vmem:[#allocation2 + $0xb3] sm:$0xff] %vm253, %v4854
      %4999 = vst.msk [vmem:[#allocation2 + $0xbb] sm:$0xff] %vm253, %v4855
      %5000 = vst.msk [vmem:[#allocation2 + $0xc3] sm:$0xff] %vm253, %v4856
      %5001 = vst.msk [vmem:[#allocation2 + $0xcb] sm:$0xff] %vm253, %v4857
      %5002 = vst.msk [vmem:[#allocation2 + $0xd3] sm:$0xff] %vm253, %v4858
      %5003 = vst.msk [vmem:[#allocation2 + $0xdb] sm:$0xff] %vm253, %v4859
      %5004 = vst.msk [vmem:[#allocation2 + $0xe3] sm:$0xff] %vm253, %v4860
      %5005 = vst.msk [vmem:[#allocation2 + $0xeb] sm:$0xff] %vm253, %v4861
      %5006 = vst.msk [vmem:[#allocation2 + $0xf3] sm:$0xff] %vm253, %v4862
      %5007 = vst.msk [vmem:[#allocation2 + $0xfb] sm:$0xff] %vm253, %v4863
      %5008 = vst.msk [vmem:[#allocation2 + $0x103] sm:$0xff] %vm253, %v4864
      %5009 = vst.msk [vmem:[#allocation2 + $0x10b] sm:$0xff] %vm253, %v4865
      %5010 = vst.msk [vmem:[#allocation2 + $0x113] sm:$0xff] %vm253, %v4866
      %5011 = vst.msk [vmem:[#allocation2 + $0x11b] sm:$0xff] %vm253, %v4867
      %5012 = vst.msk [vmem:[#allocation2 + $0x123] sm:$0xff] %vm253, %v4868
      %5013 = vst.msk [vmem:[#allocation2 + $0x12b] sm:$0xff] %vm253, %v4869
      %v5014 = vld [vmem:[#allocation2] sm:$0xff]
      %v5015 = vld [vmem:[#allocation2 + $0x8] sm:$0xff]
      %v5016 = vld [vmem:[#allocation2 + $0x10] sm:$0xff]
      %v5017 = vld [vmem:[#allocation2 + $0x18] sm:$0xff]
      %v5018 = vld [vmem:[#allocation2 + $0x20] sm:$0xff]
      %v5019 = vld [vmem:[#allocation2 + $0x28] sm:$0xff]
      %v5020 = vld [vmem:[#allocation2 + $0x30] sm:$0xff]
      %v5021 = vld [vmem:[#allocation2 + $0x38] sm:$0xff]
      %v5022 = vld [vmem:[#allocation2 + $0x40] sm:$0xff]
      %v5023 = vld [vmem:[#allocation2 + $0x48] sm:$0xff]
      %v5024 = vld [vmem:[#allocation2 + $0x50] sm:$0xff]
      %v5025 = vld [vmem:[#allocation2 + $0x58] sm:$0xff]
      %v5026 = vld [vmem:[#allocation2 + $0x60] sm:$0xff]
      %v5027 = vld [vmem:[#allocation2 + $0x68] sm:$0xff]
      %v5028 = vld [vmem:[#allocation2 + $0x70] sm:$0xff]
      %v5029 = vld [vmem:[#allocation2 + $0x78] sm:$0xff]
      %v5030 = vld [vmem:[#allocation2 + $0x80] sm:$0xff]
      %v5031 = vld [vmem:[#allocation2 + $0x88] sm:$0xff]
      %v5032 = vld [vmem:[#allocation2 + $0x90] sm:$0xff]
      %v5033 = vld [vmem:[#allocation2 + $0x98] sm:$0xff]
      %v5034 = vld [vmem:[#allocation2 + $0xa0] sm:$0xff]
      %v5035 = vld [vmem:[#allocation2 + $0xa8] sm:$0xff]
      %v5036 = vld [vmem:[#allocation2 + $0xb0] sm:$0xff]
      %v5037 = vld [vmem:[#allocation2 + $0xb8] sm:$0xff]
      %v5038 = vld [vmem:[#allocation2 + $0xc0] sm:$0xff]
      %v5039 = vld [vmem:[#allocation2 + $0xc8] sm:$0xff]
      %v5040 = vld [vmem:[#allocation2 + $0xd0] sm:$0xff]
      %v5041 = vld [vmem:[#allocation2 + $0xd8] sm:$0xff]
      %v5042 = vld [vmem:[#allocation2 + $0xe0] sm:$0xff]
      %v5043 = vld [vmem:[#allocation2 + $0xe8] sm:$0xff]
      %v5044 = vld [vmem:[#allocation2 + $0xf0] sm:$0xff]
      %v5045 = vld [vmem:[#allocation2 + $0xf8] sm:$0xff]
      %v5046 = vld [vmem:[#allocation2 + $0x100] sm:$0xff]
      %v5047 = vld [vmem:[#allocation2 + $0x108] sm:$0xff]
      %v5048 = vld [vmem:[#allocation2 + $0x110] sm:$0xff]
      %v5049 = vld [vmem:[#allocation2 + $0x118] sm:$0xff]
      %v5050 = vpack.c.bf16 %v5015, %v5014
      %v5051 = vpack.c.bf16 %v5017, %v5016
      %v5052 = vpack.c.bf16 %v5019, %v5018
      %v5053 = vpack.c.bf16 %v5021, %v5020
      %v5054 = vpack.c.bf16 %v5023, %v5022
      %v5055 = vpack.c.bf16 %v5025, %v5024
      %v5056 = vpack.c.bf16 %v5027, %v5026
      %v5057 = vpack.c.bf16 %v5029, %v5028
      %v5058 = vpack.c.bf16 %v5031, %v5030
      %v5059 = vpack.c.bf16 %v5033, %v5032
      %v5060 = vpack.c.bf16 %v5035, %v5034
      %v5061 = vpack.c.bf16 %v5037, %v5036
      %v5062 = vpack.c.bf16 %v5039, %v5038
      %v5063 = vpack.c.bf16 %v5041, %v5040
      %v5064 = vpack.c.bf16 %v5043, %v5042
      %v5065 = vpack.c.bf16 %v5045, %v5044
      %v5066 = vpack.c.bf16 %v5047, %v5046
      %v5067 = vpack.c.bf16 %v5049, %v5048
      %5068 = vst.msk [vmem:[#allocation3] sm:$0xff] %vm253, %v5050
      %5069 = vst.msk [vmem:[#allocation3 + $0x28] sm:$0xff] %vm253, %v5051
      %5070 = vst.msk [vmem:[#allocation3 + $0x50] sm:$0xff] %vm253, %v5052
      %5071 = vst.msk [vmem:[#allocation3 + $0x78] sm:$0xff] %vm253, %v5053
      %5072 = vst.msk [vmem:[#allocation3 + $0xa0] sm:$0xff] %vm253, %v5054
      %5073 = vst.msk [vmem:[#allocation3 + $0xc8] sm:$0xff] %vm253, %v5055
      %5074 = vst.msk [vmem:[#allocation3 + $0xf0] sm:$0xff] %vm253, %v5056
      %5075 = vst.msk [vmem:[#allocation3 + $0x118] sm:$0xff] %vm253, %v5057
      %5076 = vst.msk [vmem:[#allocation3 + $0x140] sm:$0xff] %vm253, %v5058
      %5077 = vst.msk [vmem:[#allocation3 + $0x168] sm:$0xff] %vm253, %v5059
      %5078 = vst.msk [vmem:[#allocation3 + $0x190] sm:$0xff] %vm253, %v5060
      %5079 = vst.msk [vmem:[#allocation3 + $0x1b8] sm:$0xff] %vm253, %v5061
      %5080 = vst.msk [vmem:[#allocation3 + $0x1e0] sm:$0xff] %vm253, %v5062
      %5081 = vst.msk [vmem:[#allocation3 + $0x208] sm:$0xff] %vm253, %v5063
      %5082 = vst.msk [vmem:[#allocation3 + $0x230] sm:$0xff] %vm253, %v5064
      %5083 = vst.msk [vmem:[#allocation3 + $0x258] sm:$0xff] %vm253, %v5065
      %5084 = vst.msk [vmem:[#allocation3 + $0x280] sm:$0xff] %vm253, %v5066
      %5085 = vst.msk [vmem:[#allocation3 + $0x2a8] sm:$0xff] %vm253, %v5067
      %v5086 = vld [vmem:[#allocation2 + $0x1] sm:$0xff]
      %v5087 = vld [vmem:[#allocation2 + $0x9] sm:$0xff]
      %v5088 = vld [vmem:[#allocation2 + $0x11] sm:$0xff]
      %v5089 = vld [vmem:[#allocation2 + $0x19] sm:$0xff]
      %v5090 = vld [vmem:[#allocation2 + $0x21] sm:$0xff]
      %v5091 = vld [vmem:[#allocation2 + $0x29] sm:$0xff]
      %v5092 = vld [vmem:[#allocation2 + $0x31] sm:$0xff]
      %v5093 = vld [vmem:[#allocation2 + $0x39] sm:$0xff]
      %v5094 = vld [vmem:[#allocation2 + $0x41] sm:$0xff]
      %v5095 = vld [vmem:[#allocation2 + $0x49] sm:$0xff]
      %v5096 = vld [vmem:[#allocation2 + $0x51] sm:$0xff]
      %v5097 = vld [vmem:[#allocation2 + $0x59] sm:$0xff]
      %v5098 = vld [vmem:[#allocation2 + $0x61] sm:$0xff]
      %v5099 = vld [vmem:[#allocation2 + $0x69] sm:$0xff]
      %v5100 = vld [vmem:[#allocation2 + $0x71] sm:$0xff]
      %v5101 = vld [vmem:[#allocation2 + $0x79] sm:$0xff]
      %v5102 = vld [vmem:[#allocation2 + $0x81] sm:$0xff]
      %v5103 = vld [vmem:[#allocation2 + $0x89] sm:$0xff]
      %v5104 = vld [vmem:[#allocation2 + $0x91] sm:$0xff]
      %v5105 = vld [vmem:[#allocation2 + $0x99] sm:$0xff]
      %v5106 = vld [vmem:[#allocation2 + $0xa1] sm:$0xff]
      %v5107 = vld [vmem:[#allocation2 + $0xa9] sm:$0xff]
      %v5108 = vld [vmem:[#allocation2 + $0xb1] sm:$0xff]
      %v5109 = vld [vmem:[#allocation2 + $0xb9] sm:$0xff]
      %v5110 = vld [vmem:[#allocation2 + $0xc1] sm:$0xff]
      %v5111 = vld [vmem:[#allocation2 + $0xc9] sm:$0xff]
      %v5112 = vld [vmem:[#allocation2 + $0xd1] sm:$0xff]
      %v5113 = vld [vmem:[#allocation2 + $0xd9] sm:$0xff]
      %v5114 = vld [vmem:[#allocation2 + $0xe1] sm:$0xff]
      %v5115 = vld [vmem:[#allocation2 + $0xe9] sm:$0xff]
      %v5116 = vld [vmem:[#allocation2 + $0xf1] sm:$0xff]
      %v5117 = vld [vmem:[#allocation2 + $0xf9] sm:$0xff]
      %v5118 = vld [vmem:[#allocation2 + $0x101] sm:$0xff]
      %v5119 = vld [vmem:[#allocation2 + $0x109] sm:$0xff]
      %v5120 = vld [vmem:[#allocation2 + $0x111] sm:$0xff]
      %v5121 = vld [vmem:[#allocation2 + $0x119] sm:$0xff]
      %v5122 = vpack.c.bf16 %v5087, %v5086
      %v5123 = vpack.c.bf16 %v5089, %v5088
      %v5124 = vpack.c.bf16 %v5091, %v5090
      %v5125 = vpack.c.bf16 %v5093, %v5092
      %v5126 = vpack.c.bf16 %v5095, %v5094
      %v5127 = vpack.c.bf16 %v5097, %v5096
      %v5128 = vpack.c.bf16 %v5099, %v5098
      %v5129 = vpack.c.bf16 %v5101, %v5100
      %v5130 = vpack.c.bf16 %v5103, %v5102
      %v5131 = vpack.c.bf16 %v5105, %v5104
      %v5132 = vpack.c.bf16 %v5107, %v5106
      %v5133 = vpack.c.bf16 %v5109, %v5108
      %v5134 = vpack.c.bf16 %v5111, %v5110
      %v5135 = vpack.c.bf16 %v5113, %v5112
      %v5136 = vpack.c.bf16 %v5115, %v5114
      %v5137 = vpack.c.bf16 %v5117, %v5116
      %v5138 = vpack.c.bf16 %v5119, %v5118
      %v5139 = vpack.c.bf16 %v5121, %v5120
      %5158 = vrot.lane.b32.xlu0 %v5122, 64
      %v5159 = vpop.permute.xlu0 %5158
      %5160 = vrot.lane.b32.xlu0 %v5123, 64
      %v5161 = vpop.permute.xlu0 %5160
      %5162 = vrot.lane.b32.xlu0 %v5124, 64
      %v5163 = vpop.permute.xlu0 %5162
      %5164 = vrot.lane.b32.xlu0 %v5125, 64
      %v5165 = vpop.permute.xlu0 %5164
      %5166 = vrot.lane.b32.xlu0 %v5126, 64
      %v5167 = vpop.permute.xlu0 %5166
      %5168 = vrot.lane.b32.xlu0 %v5127, 64
      %v5169 = vpop.permute.xlu0 %5168
      %5170 = vrot.lane.b32.xlu0 %v5128, 64
      %v5171 = vpop.permute.xlu0 %5170
      %5172 = vrot.lane.b32.xlu0 %v5129, 64
      %v5173 = vpop.permute.xlu0 %5172
      %5174 = vrot.lane.b32.xlu0 %v5130, 64
      %v5175 = vpop.permute.xlu0 %5174
      %5176 = vrot.lane.b32.xlu0 %v5131, 64
      %v5177 = vpop.permute.xlu0 %5176
      %5178 = vrot.lane.b32.xlu0 %v5132, 64
      %v5179 = vpop.permute.xlu0 %5178
      %5180 = vrot.lane.b32.xlu0 %v5133, 64
      %v5181 = vpop.permute.xlu0 %5180
      %5182 = vrot.lane.b32.xlu0 %v5134, 64
      %v5183 = vpop.permute.xlu0 %5182
      %5184 = vrot.lane.b32.xlu0 %v5135, 64
      %v5185 = vpop.permute.xlu0 %5184
      %5186 = vrot.lane.b32.xlu0 %v5136, 64
      %v5187 = vpop.permute.xlu0 %5186
      %5188 = vrot.lane.b32.xlu0 %v5137, 64
      %v5189 = vpop.permute.xlu0 %5188
      %5190 = vrot.lane.b32.xlu0 %v5138, 64
      %v5191 = vpop.permute.xlu0 %5190
      %5192 = vrot.lane.b32.xlu0 %v5139, 64
      %v5193 = vpop.permute.xlu0 %5192
      %5212 = vst.msk [vmem:[#allocation3] sm:$0xff] %vm461, %v5159
      %5213 = vst.msk [vmem:[#allocation3 + $0x28] sm:$0xff] %vm461, %v5161
      %5214 = vst.msk [vmem:[#allocation3 + $0x50] sm:$0xff] %vm461, %v5163
      %5215 = vst.msk [vmem:[#allocation3 + $0x78] sm:$0xff] %vm461, %v5165
      %5216 = vst.msk [vmem:[#allocation3 + $0xa0] sm:$0xff] %vm461, %v5167
      %5217 = vst.msk [vmem:[#allocation3 + $0xc8] sm:$0xff] %vm461, %v5169
      %5218 = vst.msk [vmem:[#allocation3 + $0xf0] sm:$0xff] %vm461, %v5171
      %5219 = vst.msk [vmem:[#allocation3 + $0x118] sm:$0xff] %vm461, %v5173
      %5220 = vst.msk [vmem:[#allocation3 + $0x140] sm:$0xff] %vm461, %v5175
      %5221 = vst.msk [vmem:[#allocation3 + $0x168] sm:$0xff] %vm461, %v5177
      %5222 = vst.msk [vmem:[#allocation3 + $0x190] sm:$0xff] %vm461, %v5179
      %5223 = vst.msk [vmem:[#allocation3 + $0x1b8] sm:$0xff] %vm461, %v5181
      %5224 = vst.msk [vmem:[#allocation3 + $0x1e0] sm:$0xff] %vm461, %v5183
      %5225 = vst.msk [vmem:[#allocation3 + $0x208] sm:$0xff] %vm461, %v5185
      %5226 = vst.msk [vmem:[#allocation3 + $0x230] sm:$0xff] %vm461, %v5187
      %5227 = vst.msk [vmem:[#allocation3 + $0x258] sm:$0xff] %vm461, %v5189
      %5228 = vst.msk [vmem:[#allocation3 + $0x280] sm:$0xff] %vm461, %v5191
      %5229 = vst.msk [vmem:[#allocation3 + $0x2a8] sm:$0xff] %vm461, %v5193
      %v5230 = vld [vmem:[#allocation2 + $0x2] sm:$0xff]
      %v5231 = vld [vmem:[#allocation2 + $0xa] sm:$0xff]
      %v5232 = vld [vmem:[#allocation2 + $0x12] sm:$0xff]
      %v5233 = vld [vmem:[#allocation2 + $0x1a] sm:$0xff]
      %v5234 = vld [vmem:[#allocation2 + $0x22] sm:$0xff]
      %v5235 = vld [vmem:[#allocation2 + $0x2a] sm:$0xff]
      %v5236 = vld [vmem:[#allocation2 + $0x32] sm:$0xff]
      %v5237 = vld [vmem:[#allocation2 + $0x3a] sm:$0xff]
      %v5238 = vld [vmem:[#allocation2 + $0x42] sm:$0xff]
      %v5239 = vld [vmem:[#allocation2 + $0x4a] sm:$0xff]
      %v5240 = vld [vmem:[#allocation2 + $0x52] sm:$0xff]
      %v5241 = vld [vmem:[#allocation2 + $0x5a] sm:$0xff]
      %v5242 = vld [vmem:[#allocation2 + $0x62] sm:$0xff]
      %v5243 = vld [vmem:[#allocation2 + $0x6a] sm:$0xff]
      %v5244 = vld [vmem:[#allocation2 + $0x72] sm:$0xff]
      %v5245 = vld [vmem:[#allocation2 + $0x7a] sm:$0xff]
      %v5246 = vld [vmem:[#allocation2 + $0x82] sm:$0xff]
      %v5247 = vld [vmem:[#allocation2 + $0x8a] sm:$0xff]
      %v5248 = vld [vmem:[#allocation2 + $0x92] sm:$0xff]
      %v5249 = vld [vmem:[#allocation2 + $0x9a] sm:$0xff]
      %v5250 = vld [vmem:[#allocation2 + $0xa2] sm:$0xff]
      %v5251 = vld [vmem:[#allocation2 + $0xaa] sm:$0xff]
      %v5252 = vld [vmem:[#allocation2 + $0xb2] sm:$0xff]
      %v5253 = vld [vmem:[#allocation2 + $0xba] sm:$0xff]
      %v5254 = vld [vmem:[#allocation2 + $0xc2] sm:$0xff]
      %v5255 = vld [vmem:[#allocation2 + $0xca] sm:$0xff]
      %v5256 = vld [vmem:[#allocation2 + $0xd2] sm:$0xff]
      %v5257 = vld [vmem:[#allocation2 + $0xda] sm:$0xff]
      %v5258 = vld [vmem:[#allocation2 + $0xe2] sm:$0xff]
      %v5259 = vld [vmem:[#allocation2 + $0xea] sm:$0xff]
      %v5260 = vld [vmem:[#allocation2 + $0xf2] sm:$0xff]
      %v5261 = vld [vmem:[#allocation2 + $0xfa] sm:$0xff]
      %v5262 = vld [vmem:[#allocation2 + $0x102] sm:$0xff]
      %v5263 = vld [vmem:[#allocation2 + $0x10a] sm:$0xff]
      %v5264 = vld [vmem:[#allocation2 + $0x112] sm:$0xff]
      %v5265 = vld [vmem:[#allocation2 + $0x11a] sm:$0xff]
      %v5266 = vpack.c.bf16 %v5231, %v5230
      %v5267 = vpack.c.bf16 %v5233, %v5232
      %v5268 = vpack.c.bf16 %v5235, %v5234
      %v5269 = vpack.c.bf16 %v5237, %v5236
      %v5270 = vpack.c.bf16 %v5239, %v5238
      %v5271 = vpack.c.bf16 %v5241, %v5240
      %v5272 = vpack.c.bf16 %v5243, %v5242
      %v5273 = vpack.c.bf16 %v5245, %v5244
      %v5274 = vpack.c.bf16 %v5247, %v5246
      %v5275 = vpack.c.bf16 %v5249, %v5248
      %v5276 = vpack.c.bf16 %v5251, %v5250
      %v5277 = vpack.c.bf16 %v5253, %v5252
      %v5278 = vpack.c.bf16 %v5255, %v5254
      %v5279 = vpack.c.bf16 %v5257, %v5256
      %v5280 = vpack.c.bf16 %v5259, %v5258
      %v5281 = vpack.c.bf16 %v5261, %v5260
      %v5282 = vpack.c.bf16 %v5263, %v5262
      %v5283 = vpack.c.bf16 %v5265, %v5264
      %5284 = vst.msk [vmem:[#allocation3 + $0x8] sm:$0xff] %vm253, %v5266
      %5285 = vst.msk [vmem:[#allocation3 + $0x30] sm:$0xff] %vm253, %v5267
      %5286 = vst.msk [vmem:[#allocation3 + $0x58] sm:$0xff] %vm253, %v5268
      %5287 = vst.msk [vmem:[#allocation3 + $0x80] sm:$0xff] %vm253, %v5269
      %5288 = vst.msk [vmem:[#allocation3 + $0xa8] sm:$0xff] %vm253, %v5270
      %5289 = vst.msk [vmem:[#allocation3 + $0xd0] sm:$0xff] %vm253, %v5271
      %5290 = vst.msk [vmem:[#allocation3 + $0xf8] sm:$0xff] %vm253, %v5272
      %5291 = vst.msk [vmem:[#allocation3 + $0x120] sm:$0xff] %vm253, %v5273
      %5292 = vst.msk [vmem:[#allocation3 + $0x148] sm:$0xff] %vm253, %v5274
      %5293 = vst.msk [vmem:[#allocation3 + $0x170] sm:$0xff] %vm253, %v5275
      %5294 = vst.msk [vmem:[#allocation3 + $0x198] sm:$0xff] %vm253, %v5276
      %5295 = vst.msk [vmem:[#allocation3 + $0x1c0] sm:$0xff] %vm253, %v5277
      %5296 = vst.msk [vmem:[#allocation3 + $0x1e8] sm:$0xff] %vm253, %v5278
      %5297 = vst.msk [vmem:[#allocation3 + $0x210] sm:$0xff] %vm253, %v5279
      %5298 = vst.msk [vmem:[#allocation3 + $0x238] sm:$0xff] %vm253, %v5280
      %5299 = vst.msk [vmem:[#allocation3 + $0x260] sm:$0xff] %vm253, %v5281
      %5300 = vst.msk [vmem:[#allocation3 + $0x288] sm:$0xff] %vm253, %v5282
      %5301 = vst.msk [vmem:[#allocation3 + $0x2b0] sm:$0xff] %vm253, %v5283
      %v5302 = vld [vmem:[#allocation2 + $0x12] sm:$0xff]
      %v5303 = vld [vmem:[#allocation2 + $0x1a] sm:$0xff]
      %v5304 = vld [vmem:[#allocation2 + $0x22] sm:$0xff]
      %v5305 = vld [vmem:[#allocation2 + $0x2a] sm:$0xff]
      %v5306 = vld [vmem:[#allocation2 + $0x32] sm:$0xff]
      %v5307 = vld [vmem:[#allocation2 + $0x3a] sm:$0xff]
      %v5308 = vld [vmem:[#allocation2 + $0x42] sm:$0xff]
      %v5309 = vld [vmem:[#allocation2 + $0x4a] sm:$0xff]
      %v5310 = vld [vmem:[#allocation2 + $0x52] sm:$0xff]
      %v5311 = vld [vmem:[#allocation2 + $0x5a] sm:$0xff]
      %v5312 = vld [vmem:[#allocation2 + $0x62] sm:$0xff]
      %v5313 = vld [vmem:[#allocation2 + $0x6a] sm:$0xff]
      %v5314 = vld [vmem:[#allocation2 + $0x72] sm:$0xff]
      %v5315 = vld [vmem:[#allocation2 + $0x7a] sm:$0xff]
      %v5316 = vld [vmem:[#allocation2 + $0x82] sm:$0xff]
      %v5317 = vld [vmem:[#allocation2 + $0x8a] sm:$0xff]
      %v5318 = vld [vmem:[#allocation2 + $0x92] sm:$0xff]
      %v5319 = vld [vmem:[#allocation2 + $0x9a] sm:$0xff]
      %v5320 = vld [vmem:[#allocation2 + $0xa2] sm:$0xff]
      %v5321 = vld [vmem:[#allocation2 + $0xaa] sm:$0xff]
      %v5322 = vld [vmem:[#allocation2 + $0xb2] sm:$0xff]
      %v5323 = vld [vmem:[#allocation2 + $0xba] sm:$0xff]
      %v5324 = vld [vmem:[#allocation2 + $0xc2] sm:$0xff]
      %v5325 = vld [vmem:[#allocation2 + $0xca] sm:$0xff]
      %v5326 = vld [vmem:[#allocation2 + $0xd2] sm:$0xff]
      %v5327 = vld [vmem:[#allocation2 + $0xda] sm:$0xff]
      %v5328 = vld [vmem:[#allocation2 + $0xe2] sm:$0xff]
      %v5329 = vld [vmem:[#allocation2 + $0xea] sm:$0xff]
      %v5330 = vld [vmem:[#allocation2 + $0xf2] sm:$0xff]
      %v5331 = vld [vmem:[#allocation2 + $0xfa] sm:$0xff]
      %v5332 = vld [vmem:[#allocation2 + $0x102] sm:$0xff]
      %v5333 = vld [vmem:[#allocation2 + $0x10a] sm:$0xff]
      %v5334 = vld [vmem:[#allocation2 + $0x112] sm:$0xff]
      %v5335 = vld [vmem:[#allocation2 + $0x11a] sm:$0xff]
      %v5336 = vld [vmem:[#allocation2 + $0x122] sm:$0xff]
      %v5337 = vld [vmem:[#allocation2 + $0x12a] sm:$0xff]
      %v5338 = vpack.c.bf16 %v5303, %v5302
      %v5339 = vpack.c.bf16 %v5305, %v5304
      %v5340 = vpack.c.bf16 %v5307, %v5306
      %v5341 = vpack.c.bf16 %v5309, %v5308
      %v5342 = vpack.c.bf16 %v5311, %v5310
      %v5343 = vpack.c.bf16 %v5313, %v5312
      %v5344 = vpack.c.bf16 %v5315, %v5314
      %v5345 = vpack.c.bf16 %v5317, %v5316
      %v5346 = vpack.c.bf16 %v5319, %v5318
      %v5347 = vpack.c.bf16 %v5321, %v5320
      %v5348 = vpack.c.bf16 %v5323, %v5322
      %v5349 = vpack.c.bf16 %v5325, %v5324
      %v5350 = vpack.c.bf16 %v5327, %v5326
      %v5351 = vpack.c.bf16 %v5329, %v5328
      %v5352 = vpack.c.bf16 %v5331, %v5330
      %v5353 = vpack.c.bf16 %v5333, %v5332
      %v5354 = vpack.c.bf16 %v5335, %v5334
      %v5355 = vpack.c.bf16 %v5337, %v5336
      %5374 = vrot.lane.b32.xlu0 %v5338, 64
      %v5375 = vpop.permute.xlu0 %5374
      %5376 = vrot.lane.b32.xlu0 %v5339, 64
      %v5377 = vpop.permute.xlu0 %5376
      %5378 = vrot.lane.b32.xlu0 %v5340, 64
      %v5379 = vpop.permute.xlu0 %5378
      %5380 = vrot.lane.b32.xlu0 %v5341, 64
      %v5381 = vpop.permute.xlu0 %5380
      %5382 = vrot.lane.b32.xlu0 %v5342, 64
      %v5383 = vpop.permute.xlu0 %5382
      %5384 = vrot.lane.b32.xlu0 %v5343, 64
      %v5385 = vpop.permute.xlu0 %5384
      %5386 = vrot.lane.b32.xlu0 %v5344, 64
      %v5387 = vpop.permute.xlu0 %5386
      %5388 = vrot.lane.b32.xlu0 %v5345, 64
      %v5389 = vpop.permute.xlu0 %5388
      %5390 = vrot.lane.b32.xlu0 %v5346, 64
      %v5391 = vpop.permute.xlu0 %5390
      %5392 = vrot.lane.b32.xlu0 %v5347, 64
      %v5393 = vpop.permute.xlu0 %5392
      %5394 = vrot.lane.b32.xlu0 %v5348, 64
      %v5395 = vpop.permute.xlu0 %5394
      %5396 = vrot.lane.b32.xlu0 %v5349, 64
      %v5397 = vpop.permute.xlu0 %5396
      %5398 = vrot.lane.b32.xlu0 %v5350, 64
      %v5399 = vpop.permute.xlu0 %5398
      %5400 = vrot.lane.b32.xlu0 %v5351, 64
      %v5401 = vpop.permute.xlu0 %5400
      %5402 = vrot.lane.b32.xlu0 %v5352, 64
      %v5403 = vpop.permute.xlu0 %5402
      %5404 = vrot.lane.b32.xlu0 %v5353, 64
      %v5405 = vpop.permute.xlu0 %5404
      %5406 = vrot.lane.b32.xlu0 %v5354, 64
      %v5407 = vpop.permute.xlu0 %5406
      %5408 = vrot.lane.b32.xlu0 %v5355, 64
      %v5409 = vpop.permute.xlu0 %5408
      %5428 = vst.msk [vmem:[#allocation3 + $0x8] sm:$0xff] %vm461, %v5375
      %5429 = vst.msk [vmem:[#allocation3 + $0x30] sm:$0xff] %vm461, %v5377
      %5430 = vst.msk [vmem:[#allocation3 + $0x58] sm:$0xff] %vm461, %v5379
      %5431 = vst.msk [vmem:[#allocation3 + $0x80] sm:$0xff] %vm461, %v5381
      %5432 = vst.msk [vmem:[#allocation3 + $0xa8] sm:$0xff] %vm461, %v5383
      %5433 = vst.msk [vmem:[#allocation3 + $0xd0] sm:$0xff] %vm461, %v5385
      %5434 = vst.msk [vmem:[#allocation3 + $0xf8] sm:$0xff] %vm461, %v5387
      %5435 = vst.msk [vmem:[#allocation3 + $0x120] sm:$0xff] %vm461, %v5389
      %5436 = vst.msk [vmem:[#allocation3 + $0x148] sm:$0xff] %vm461, %v5391
      %5437 = vst.msk [vmem:[#allocation3 + $0x170] sm:$0xff] %vm461, %v5393
      %5438 = vst.msk [vmem:[#allocation3 + $0x198] sm:$0xff] %vm461, %v5395
      %5439 = vst.msk [vmem:[#allocation3 + $0x1c0] sm:$0xff] %vm461, %v5397
      %5440 = vst.msk [vmem:[#allocation3 + $0x1e8] sm:$0xff] %vm461, %v5399
      %5441 = vst.msk [vmem:[#allocation3 + $0x210] sm:$0xff] %vm461, %v5401
      %5442 = vst.msk [vmem:[#allocation3 + $0x238] sm:$0xff] %vm461, %v5403
      %5443 = vst.msk [vmem:[#allocation3 + $0x260] sm:$0xff] %vm461, %v5405
      %5444 = vst.msk [vmem:[#allocation3 + $0x288] sm:$0xff] %vm461, %v5407
      %5445 = vst.msk [vmem:[#allocation3 + $0x2b0] sm:$0xff] %vm461, %v5409
      %v5446 = vld [vmem:[#allocation2 + $0x13] sm:$0xff]
      %v5447 = vld [vmem:[#allocation2 + $0x1b] sm:$0xff]
      %v5448 = vld [vmem:[#allocation2 + $0x23] sm:$0xff]
      %v5449 = vld [vmem:[#allocation2 + $0x2b] sm:$0xff]
      %v5450 = vld [vmem:[#allocation2 + $0x33] sm:$0xff]
      %v5451 = vld [vmem:[#allocation2 + $0x3b] sm:$0xff]
      %v5452 = vld [vmem:[#allocation2 + $0x43] sm:$0xff]
      %v5453 = vld [vmem:[#allocation2 + $0x4b] sm:$0xff]
      %v5454 = vld [vmem:[#allocation2 + $0x53] sm:$0xff]
      %v5455 = vld [vmem:[#allocation2 + $0x5b] sm:$0xff]
      %v5456 = vld [vmem:[#allocation2 + $0x63] sm:$0xff]
      %v5457 = vld [vmem:[#allocation2 + $0x6b] sm:$0xff]
      %v5458 = vld [vmem:[#allocation2 + $0x73] sm:$0xff]
      %v5459 = vld [vmem:[#allocation2 + $0x7b] sm:$0xff]
      %v5460 = vld [vmem:[#allocation2 + $0x83] sm:$0xff]
      %v5461 = vld [vmem:[#allocation2 + $0x8b] sm:$0xff]
      %v5462 = vld [vmem:[#allocation2 + $0x93] sm:$0xff]
      %v5463 = vld [vmem:[#allocation2 + $0x9b] sm:$0xff]
      %v5464 = vld [vmem:[#allocation2 + $0xa3] sm:$0xff]
      %v5465 = vld [vmem:[#allocation2 + $0xab] sm:$0xff]
      %v5466 = vld [vmem:[#allocation2 + $0xb3] sm:$0xff]
      %v5467 = vld [vmem:[#allocation2 + $0xbb] sm:$0xff]
      %v5468 = vld [vmem:[#allocation2 + $0xc3] sm:$0xff]
      %v5469 = vld [vmem:[#allocation2 + $0xcb] sm:$0xff]
      %v5470 = vld [vmem:[#allocation2 + $0xd3] sm:$0xff]
      %v5471 = vld [vmem:[#allocation2 + $0xdb] sm:$0xff]
      %v5472 = vld [vmem:[#allocation2 + $0xe3] sm:$0xff]
      %v5473 = vld [vmem:[#allocation2 + $0xeb] sm:$0xff]
      %v5474 = vld [vmem:[#allocation2 + $0xf3] sm:$0xff]
      %v5475 = vld [vmem:[#allocation2 + $0xfb] sm:$0xff]
      %v5476 = vld [vmem:[#allocation2 + $0x103] sm:$0xff]
      %v5477 = vld [vmem:[#allocation2 + $0x10b] sm:$0xff]
      %v5478 = vld [vmem:[#allocation2 + $0x113] sm:$0xff]
      %v5479 = vld [vmem:[#allocation2 + $0x11b] sm:$0xff]
      %v5480 = vld [vmem:[#allocation2 + $0x123] sm:$0xff]
      %v5481 = vld [vmem:[#allocation2 + $0x12b] sm:$0xff]
      %v5482 = vpack.c.bf16 %v5447, %v5446
      %v5483 = vpack.c.bf16 %v5449, %v5448
      %v5484 = vpack.c.bf16 %v5451, %v5450
      %v5485 = vpack.c.bf16 %v5453, %v5452
      %v5486 = vpack.c.bf16 %v5455, %v5454
      %v5487 = vpack.c.bf16 %v5457, %v5456
      %v5488 = vpack.c.bf16 %v5459, %v5458
      %v5489 = vpack.c.bf16 %v5461, %v5460
      %v5490 = vpack.c.bf16 %v5463, %v5462
      %v5491 = vpack.c.bf16 %v5465, %v5464
      %v5492 = vpack.c.bf16 %v5467, %v5466
      %v5493 = vpack.c.bf16 %v5469, %v5468
      %v5494 = vpack.c.bf16 %v5471, %v5470
      %v5495 = vpack.c.bf16 %v5473, %v5472
      %v5496 = vpack.c.bf16 %v5475, %v5474
      %v5497 = vpack.c.bf16 %v5477, %v5476
      %v5498 = vpack.c.bf16 %v5479, %v5478
      %v5499 = vpack.c.bf16 %v5481, %v5480
      %5500 = vst.msk [vmem:[#allocation3 + $0x10] sm:$0xff] %vm253, %v5482
      %5501 = vst.msk [vmem:[#allocation3 + $0x38] sm:$0xff] %vm253, %v5483
      %5502 = vst.msk [vmem:[#allocation3 + $0x60] sm:$0xff] %vm253, %v5484
      %5503 = vst.msk [vmem:[#allocation3 + $0x88] sm:$0xff] %vm253, %v5485
      %5504 = vst.msk [vmem:[#allocation3 + $0xb0] sm:$0xff] %vm253, %v5486
      %5505 = vst.msk [vmem:[#allocation3 + $0xd8] sm:$0xff] %vm253, %v5487
      %5506 = vst.msk [vmem:[#allocation3 + $0x100] sm:$0xff] %vm253, %v5488
      %5507 = vst.msk [vmem:[#allocation3 + $0x128] sm:$0xff] %vm253, %v5489
      %5508 = vst.msk [vmem:[#allocation3 + $0x150] sm:$0xff] %vm253, %v5490
      %5509 = vst.msk [vmem:[#allocation3 + $0x178] sm:$0xff] %vm253, %v5491
      %5510 = vst.msk [vmem:[#allocation3 + $0x1a0] sm:$0xff] %vm253, %v5492
      %5511 = vst.msk [vmem:[#allocation3 + $0x1c8] sm:$0xff] %vm253, %v5493
      %5512 = vst.msk [vmem:[#allocation3 + $0x1f0] sm:$0xff] %vm253, %v5494
      %5513 = vst.msk [vmem:[#allocation3 + $0x218] sm:$0xff] %vm253, %v5495
      %5514 = vst.msk [vmem:[#allocation3 + $0x240] sm:$0xff] %vm253, %v5496
      %5515 = vst.msk [vmem:[#allocation3 + $0x268] sm:$0xff] %vm253, %v5497
      %5516 = vst.msk [vmem:[#allocation3 + $0x290] sm:$0xff] %vm253, %v5498
      %5517 = vst.msk [vmem:[#allocation3 + $0x2b8] sm:$0xff] %vm253, %v5499
      %v5518 = vld [vmem:[#allocation2 + $0x14] sm:$0xff]
      %v5519 = vld [vmem:[#allocation2 + $0x1c] sm:$0xff]
      %v5520 = vld [vmem:[#allocation2 + $0x24] sm:$0xff]
      %v5521 = vld [vmem:[#allocation2 + $0x2c] sm:$0xff]
      %v5522 = vld [vmem:[#allocation2 + $0x34] sm:$0xff]
      %v5523 = vld [vmem:[#allocation2 + $0x3c] sm:$0xff]
      %v5524 = vld [vmem:[#allocation2 + $0x44] sm:$0xff]
      %v5525 = vld [vmem:[#allocation2 + $0x4c] sm:$0xff]
      %v5526 = vld [vmem:[#allocation2 + $0x54] sm:$0xff]
      %v5527 = vld [vmem:[#allocation2 + $0x5c] sm:$0xff]
      %v5528 = vld [vmem:[#allocation2 + $0x64] sm:$0xff]
      %v5529 = vld [vmem:[#allocation2 + $0x6c] sm:$0xff]
      %v5530 = vld [vmem:[#allocation2 + $0x74] sm:$0xff]
      %v5531 = vld [vmem:[#allocation2 + $0x7c] sm:$0xff]
      %v5532 = vld [vmem:[#allocation2 + $0x84] sm:$0xff]
      %v5533 = vld [vmem:[#allocation2 + $0x8c] sm:$0xff]
      %v5534 = vld [vmem:[#allocation2 + $0x94] sm:$0xff]
      %v5535 = vld [vmem:[#allocation2 + $0x9c] sm:$0xff]
      %v5536 = vld [vmem:[#allocation2 + $0xa4] sm:$0xff]
      %v5537 = vld [vmem:[#allocation2 + $0xac] sm:$0xff]
      %v5538 = vld [vmem:[#allocation2 + $0xb4] sm:$0xff]
      %v5539 = vld [vmem:[#allocation2 + $0xbc] sm:$0xff]
      %v5540 = vld [vmem:[#allocation2 + $0xc4] sm:$0xff]
      %v5541 = vld [vmem:[#allocation2 + $0xcc] sm:$0xff]
      %v5542 = vld [vmem:[#allocation2 + $0xd4] sm:$0xff]
      %v5543 = vld [vmem:[#allocation2 + $0xdc] sm:$0xff]
      %v5544 = vld [vmem:[#allocation2 + $0xe4] sm:$0xff]
      %v5545 = vld [vmem:[#allocation2 + $0xec] sm:$0xff]
      %v5546 = vld [vmem:[#allocation2 + $0xf4] sm:$0xff]
      %v5547 = vld [vmem:[#allocation2 + $0xfc] sm:$0xff]
      %v5548 = vld [vmem:[#allocation2 + $0x104] sm:$0xff]
      %v5549 = vld [vmem:[#allocation2 + $0x10c] sm:$0xff]
      %v5550 = vld [vmem:[#allocation2 + $0x114] sm:$0xff]
      %v5551 = vld [vmem:[#allocation2 + $0x11c] sm:$0xff]
      %v5552 = vld [vmem:[#allocation2 + $0x124] sm:$0xff]
      %v5553 = vld [vmem:[#allocation2 + $0x12c] sm:$0xff]
      %v5554 = vpack.c.bf16 %v5519, %v5518
      %v5555 = vpack.c.bf16 %v5521, %v5520
      %v5556 = vpack.c.bf16 %v5523, %v5522
      %v5557 = vpack.c.bf16 %v5525, %v5524
      %v5558 = vpack.c.bf16 %v5527, %v5526
      %v5559 = vpack.c.bf16 %v5529, %v5528
      %v5560 = vpack.c.bf16 %v5531, %v5530
      %v5561 = vpack.c.bf16 %v5533, %v5532
      %v5562 = vpack.c.bf16 %v5535, %v5534
      %v5563 = vpack.c.bf16 %v5537, %v5536
      %v5564 = vpack.c.bf16 %v5539, %v5538
      %v5565 = vpack.c.bf16 %v5541, %v5540
      %v5566 = vpack.c.bf16 %v5543, %v5542
      %v5567 = vpack.c.bf16 %v5545, %v5544
      %v5568 = vpack.c.bf16 %v5547, %v5546
      %v5569 = vpack.c.bf16 %v5549, %v5548
      %v5570 = vpack.c.bf16 %v5551, %v5550
      %v5571 = vpack.c.bf16 %v5553, %v5552
      %5590 = vrot.lane.b32.xlu0 %v5554, 64
      %v5591 = vpop.permute.xlu0 %5590
      %5592 = vrot.lane.b32.xlu0 %v5555, 64
      %v5593 = vpop.permute.xlu0 %5592
      %5594 = vrot.lane.b32.xlu0 %v5556, 64
      %v5595 = vpop.permute.xlu0 %5594
      %5596 = vrot.lane.b32.xlu0 %v5557, 64
      %v5597 = vpop.permute.xlu0 %5596
      %5598 = vrot.lane.b32.xlu0 %v5558, 64
      %v5599 = vpop.permute.xlu0 %5598
      %5600 = vrot.lane.b32.xlu0 %v5559, 64
      %v5601 = vpop.permute.xlu0 %5600
      %5602 = vrot.lane.b32.xlu0 %v5560, 64
      %v5603 = vpop.permute.xlu0 %5602
      %5604 = vrot.lane.b32.xlu0 %v5561, 64
      %v5605 = vpop.permute.xlu0 %5604
      %5606 = vrot.lane.b32.xlu0 %v5562, 64
      %v5607 = vpop.permute.xlu0 %5606
      %5608 = vrot.lane.b32.xlu0 %v5563, 64
      %v5609 = vpop.permute.xlu0 %5608
      %5610 = vrot.lane.b32.xlu0 %v5564, 64
      %v5611 = vpop.permute.xlu0 %5610
      %5612 = vrot.lane.b32.xlu0 %v5565, 64
      %v5613 = vpop.permute.xlu0 %5612
      %5614 = vrot.lane.b32.xlu0 %v5566, 64
      %v5615 = vpop.permute.xlu0 %5614
      %5616 = vrot.lane.b32.xlu0 %v5567, 64
      %v5617 = vpop.permute.xlu0 %5616
      %5618 = vrot.lane.b32.xlu0 %v5568, 64
      %v5619 = vpop.permute.xlu0 %5618
      %5620 = vrot.lane.b32.xlu0 %v5569, 64
      %v5621 = vpop.permute.xlu0 %5620
      %5622 = vrot.lane.b32.xlu0 %v5570, 64
      %v5623 = vpop.permute.xlu0 %5622
      %5624 = vrot.lane.b32.xlu0 %v5571, 64
      %v5625 = vpop.permute.xlu0 %5624
      %5644 = vst.msk [vmem:[#allocation3 + $0x10] sm:$0xff] %vm461, %v5591
      %5645 = vst.msk [vmem:[#allocation3 + $0x38] sm:$0xff] %vm461, %v5593
      %5646 = vst.msk [vmem:[#allocation3 + $0x60] sm:$0xff] %vm461, %v5595
      %5647 = vst.msk [vmem:[#allocation3 + $0x88] sm:$0xff] %vm461, %v5597
      %5648 = vst.msk [vmem:[#allocation3 + $0xb0] sm:$0xff] %vm461, %v5599
      %5649 = vst.msk [vmem:[#allocation3 + $0xd8] sm:$0xff] %vm461, %v5601
      %5650 = vst.msk [vmem:[#allocation3 + $0x100] sm:$0xff] %vm461, %v5603
      %5651 = vst.msk [vmem:[#allocation3 + $0x128] sm:$0xff] %vm461, %v5605
      %5652 = vst.msk [vmem:[#allocation3 + $0x150] sm:$0xff] %vm461, %v5607
      %5653 = vst.msk [vmem:[#allocation3 + $0x178] sm:$0xff] %vm461, %v5609
      %5654 = vst.msk [vmem:[#allocation3 + $0x1a0] sm:$0xff] %vm461, %v5611
      %5655 = vst.msk [vmem:[#allocation3 + $0x1c8] sm:$0xff] %vm461, %v5613
      %5656 = vst.msk [vmem:[#allocation3 + $0x1f0] sm:$0xff] %vm461, %v5615
      %5657 = vst.msk [vmem:[#allocation3 + $0x218] sm:$0xff] %vm461, %v5617
      %5658 = vst.msk [vmem:[#allocation3 + $0x240] sm:$0xff] %vm461, %v5619
      %5659 = vst.msk [vmem:[#allocation3 + $0x268] sm:$0xff] %vm461, %v5621
      %5660 = vst.msk [vmem:[#allocation3 + $0x290] sm:$0xff] %vm461, %v5623
      %5661 = vst.msk [vmem:[#allocation3 + $0x2b8] sm:$0xff] %vm461, %v5625
      %v5662 = vld [vmem:[#allocation2 + $0x24] sm:$0xff]
      %v5663 = vld [vmem:[#allocation2 + $0x2c] sm:$0xff]
      %v5664 = vld [vmem:[#allocation2 + $0x34] sm:$0xff]
      %v5665 = vld [vmem:[#allocation2 + $0x3c] sm:$0xff]
      %v5666 = vld [vmem:[#allocation2 + $0x44] sm:$0xff]
      %v5667 = vld [vmem:[#allocation2 + $0x4c] sm:$0xff]
      %v5668 = vld [vmem:[#allocation2 + $0x54] sm:$0xff]
      %v5669 = vld [vmem:[#allocation2 + $0x5c] sm:$0xff]
      %v5670 = vld [vmem:[#allocation2 + $0x64] sm:$0xff]
      %v5671 = vld [vmem:[#allocation2 + $0x6c] sm:$0xff]
      %v5672 = vld [vmem:[#allocation2 + $0x74] sm:$0xff]
      %v5673 = vld [vmem:[#allocation2 + $0x7c] sm:$0xff]
      %v5674 = vld [vmem:[#allocation2 + $0x84] sm:$0xff]
      %v5675 = vld [vmem:[#allocation2 + $0x8c] sm:$0xff]
      %v5676 = vld [vmem:[#allocation2 + $0x94] sm:$0xff]
      %v5677 = vld [vmem:[#allocation2 + $0x9c] sm:$0xff]
      %v5678 = vld [vmem:[#allocation2 + $0xa4] sm:$0xff]
      %v5679 = vld [vmem:[#allocation2 + $0xac] sm:$0xff]
      %v5680 = vld [vmem:[#allocation2 + $0xb4] sm:$0xff]
      %v5681 = vld [vmem:[#allocation2 + $0xbc] sm:$0xff]
      %v5682 = vld [vmem:[#allocation2 + $0xc4] sm:$0xff]
      %v5683 = vld [vmem:[#allocation2 + $0xcc] sm:$0xff]
      %v5684 = vld [vmem:[#allocation2 + $0xd4] sm:$0xff]
      %v5685 = vld [vmem:[#allocation2 + $0xdc] sm:$0xff]
      %v5686 = vld [vmem:[#allocation2 + $0xe4] sm:$0xff]
      %v5687 = vld [vmem:[#allocation2 + $0xec] sm:$0xff]
      %v5688 = vld [vmem:[#allocation2 + $0xf4] sm:$0xff]
      %v5689 = vld [vmem:[#allocation2 + $0xfc] sm:$0xff]
      %v5690 = vld [vmem:[#allocation2 + $0x104] sm:$0xff]
      %v5691 = vld [vmem:[#allocation2 + $0x10c] sm:$0xff]
      %v5692 = vld [vmem:[#allocation2 + $0x114] sm:$0xff]
      %v5693 = vld [vmem:[#allocation2 + $0x11c] sm:$0xff]
      %v5694 = vld [vmem:[#allocation2 + $0x124] sm:$0xff]
      %v5695 = vld [vmem:[#allocation2 + $0x12c] sm:$0xff]
      %v5696 = vld [vmem:[#allocation2 + $0x134] sm:$0xff]
      %v5697 = vld [vmem:[#allocation2 + $0x13c] sm:$0xff]
      %v5698 = vpack.c.bf16 %v5663, %v5662
      %v5699 = vpack.c.bf16 %v5665, %v5664
      %v5700 = vpack.c.bf16 %v5667, %v5666
      %v5701 = vpack.c.bf16 %v5669, %v5668
      %v5702 = vpack.c.bf16 %v5671, %v5670
      %v5703 = vpack.c.bf16 %v5673, %v5672
      %v5704 = vpack.c.bf16 %v5675, %v5674
      %v5705 = vpack.c.bf16 %v5677, %v5676
      %v5706 = vpack.c.bf16 %v5679, %v5678
      %v5707 = vpack.c.bf16 %v5681, %v5680
      %v5708 = vpack.c.bf16 %v5683, %v5682
      %v5709 = vpack.c.bf16 %v5685, %v5684
      %v5710 = vpack.c.bf16 %v5687, %v5686
      %v5711 = vpack.c.bf16 %v5689, %v5688
      %v5712 = vpack.c.bf16 %v5691, %v5690
      %v5713 = vpack.c.bf16 %v5693, %v5692
      %v5714 = vpack.c.bf16 %v5695, %v5694
      %v5715 = vpack.c.bf16 %v5697, %v5696
      %5716 = vst.msk [vmem:[#allocation3 + $0x18] sm:$0xff] %vm253, %v5698
      %5717 = vst.msk [vmem:[#allocation3 + $0x40] sm:$0xff] %vm253, %v5699
      %5718 = vst.msk [vmem:[#allocation3 + $0x68] sm:$0xff] %vm253, %v5700
      %5719 = vst.msk [vmem:[#allocation3 + $0x90] sm:$0xff] %vm253, %v5701
      %5720 = vst.msk [vmem:[#allocation3 + $0xb8] sm:$0xff] %vm253, %v5702
      %5721 = vst.msk [vmem:[#allocation3 + $0xe0] sm:$0xff] %vm253, %v5703
      %5722 = vst.msk [vmem:[#allocation3 + $0x108] sm:$0xff] %vm253, %v5704
      %5723 = vst.msk [vmem:[#allocation3 + $0x130] sm:$0xff] %vm253, %v5705
      %5724 = vst.msk [vmem:[#allocation3 + $0x158] sm:$0xff] %vm253, %v5706
      %5725 = vst.msk [vmem:[#allocation3 + $0x180] sm:$0xff] %vm253, %v5707
      %5726 = vst.msk [vmem:[#allocation3 + $0x1a8] sm:$0xff] %vm253, %v5708
      %5727 = vst.msk [vmem:[#allocation3 + $0x1d0] sm:$0xff] %vm253, %v5709
      %5728 = vst.msk [vmem:[#allocation3 + $0x1f8] sm:$0xff] %vm253, %v5710
      %5729 = vst.msk [vmem:[#allocation3 + $0x220] sm:$0xff] %vm253, %v5711
      %5730 = vst.msk [vmem:[#allocation3 + $0x248] sm:$0xff] %vm253, %v5712
      %5731 = vst.msk [vmem:[#allocation3 + $0x270] sm:$0xff] %vm253, %v5713
      %5732 = vst.msk [vmem:[#allocation3 + $0x298] sm:$0xff] %vm253, %v5714
      %5733 = vst.msk [vmem:[#allocation3 + $0x2c0] sm:$0xff] %vm253, %v5715
      %v5734 = vld [vmem:[#allocation2 + $0x25] sm:$0xff]
      %v5735 = vld [vmem:[#allocation2 + $0x2d] sm:$0xff]
      %v5736 = vld [vmem:[#allocation2 + $0x35] sm:$0xff]
      %v5737 = vld [vmem:[#allocation2 + $0x3d] sm:$0xff]
      %v5738 = vld [vmem:[#allocation2 + $0x45] sm:$0xff]
      %v5739 = vld [vmem:[#allocation2 + $0x4d] sm:$0xff]
      %v5740 = vld [vmem:[#allocation2 + $0x55] sm:$0xff]
      %v5741 = vld [vmem:[#allocation2 + $0x5d] sm:$0xff]
      %v5742 = vld [vmem:[#allocation2 + $0x65] sm:$0xff]
      %v5743 = vld [vmem:[#allocation2 + $0x6d] sm:$0xff]
      %v5744 = vld [vmem:[#allocation2 + $0x75] sm:$0xff]
      %v5745 = vld [vmem:[#allocation2 + $0x7d] sm:$0xff]
      %v5746 = vld [vmem:[#allocation2 + $0x85] sm:$0xff]
      %v5747 = vld [vmem:[#allocation2 + $0x8d] sm:$0xff]
      %v5748 = vld [vmem:[#allocation2 + $0x95] sm:$0xff]
      %v5749 = vld [vmem:[#allocation2 + $0x9d] sm:$0xff]
      %v5750 = vld [vmem:[#allocation2 + $0xa5] sm:$0xff]
      %v5751 = vld [vmem:[#allocation2 + $0xad] sm:$0xff]
      %v5752 = vld [vmem:[#allocation2 + $0xb5] sm:$0xff]
      %v5753 = vld [vmem:[#allocation2 + $0xbd] sm:$0xff]
      %v5754 = vld [vmem:[#allocation2 + $0xc5] sm:$0xff]
      %v5755 = vld [vmem:[#allocation2 + $0xcd] sm:$0xff]
      %v5756 = vld [vmem:[#allocation2 + $0xd5] sm:$0xff]
      %v5757 = vld [vmem:[#allocation2 + $0xdd] sm:$0xff]
      %v5758 = vld [vmem:[#allocation2 + $0xe5] sm:$0xff]
      %v5759 = vld [vmem:[#allocation2 + $0xed] sm:$0xff]
      %v5760 = vld [vmem:[#allocation2 + $0xf5] sm:$0xff]
      %v5761 = vld [vmem:[#allocation2 + $0xfd] sm:$0xff]
      %v5762 = vld [vmem:[#allocation2 + $0x105] sm:$0xff]
      %v5763 = vld [vmem:[#allocation2 + $0x10d] sm:$0xff]
      %v5764 = vld [vmem:[#allocation2 + $0x115] sm:$0xff]
      %v5765 = vld [vmem:[#allocation2 + $0x11d] sm:$0xff]
      %v5766 = vld [vmem:[#allocation2 + $0x125] sm:$0xff]
      %v5767 = vld [vmem:[#allocation2 + $0x12d] sm:$0xff]
      %v5768 = vld [vmem:[#allocation2 + $0x135] sm:$0xff]
      %v5769 = vld [vmem:[#allocation2 + $0x13d] sm:$0xff]
      %v5770 = vpack.c.bf16 %v5735, %v5734
      %v5771 = vpack.c.bf16 %v5737, %v5736
      %v5772 = vpack.c.bf16 %v5739, %v5738
      %v5773 = vpack.c.bf16 %v5741, %v5740
      %v5774 = vpack.c.bf16 %v5743, %v5742
      %v5775 = vpack.c.bf16 %v5745, %v5744
      %v5776 = vpack.c.bf16 %v5747, %v5746
      %v5777 = vpack.c.bf16 %v5749, %v5748
      %v5778 = vpack.c.bf16 %v5751, %v5750
      %v5779 = vpack.c.bf16 %v5753, %v5752
      %v5780 = vpack.c.bf16 %v5755, %v5754
      %v5781 = vpack.c.bf16 %v5757, %v5756
      %v5782 = vpack.c.bf16 %v5759, %v5758
      %v5783 = vpack.c.bf16 %v5761, %v5760
      %v5784 = vpack.c.bf16 %v5763, %v5762
      %v5785 = vpack.c.bf16 %v5765, %v5764
      %v5786 = vpack.c.bf16 %v5767, %v5766
      %v5787 = vpack.c.bf16 %v5769, %v5768
      %5806 = vrot.lane.b32.xlu0 %v5770, 64
      %v5807 = vpop.permute.xlu0 %5806
      %5808 = vrot.lane.b32.xlu0 %v5771, 64
      %v5809 = vpop.permute.xlu0 %5808
      %5810 = vrot.lane.b32.xlu0 %v5772, 64
      %v5811 = vpop.permute.xlu0 %5810
      %5812 = vrot.lane.b32.xlu0 %v5773, 64
      %v5813 = vpop.permute.xlu0 %5812
      %5814 = vrot.lane.b32.xlu0 %v5774, 64
      %v5815 = vpop.permute.xlu0 %5814
      %5816 = vrot.lane.b32.xlu0 %v5775, 64
      %v5817 = vpop.permute.xlu0 %5816
      %5818 = vrot.lane.b32.xlu0 %v5776, 64
      %v5819 = vpop.permute.xlu0 %5818
      %5820 = vrot.lane.b32.xlu0 %v5777, 64
      %v5821 = vpop.permute.xlu0 %5820
      %5822 = vrot.lane.b32.xlu0 %v5778, 64
      %v5823 = vpop.permute.xlu0 %5822
      %5824 = vrot.lane.b32.xlu0 %v5779, 64
      %v5825 = vpop.permute.xlu0 %5824
      %5826 = vrot.lane.b32.xlu0 %v5780, 64
      %v5827 = vpop.permute.xlu0 %5826
      %5828 = vrot.lane.b32.xlu0 %v5781, 64
      %v5829 = vpop.permute.xlu0 %5828
      %5830 = vrot.lane.b32.xlu0 %v5782, 64
      %v5831 = vpop.permute.xlu0 %5830
      %5832 = vrot.lane.b32.xlu0 %v5783, 64
      %v5833 = vpop.permute.xlu0 %5832
      %5834 = vrot.lane.b32.xlu0 %v5784, 64
      %v5835 = vpop.permute.xlu0 %5834
      %5836 = vrot.lane.b32.xlu0 %v5785, 64
      %v5837 = vpop.permute.xlu0 %5836
      %5838 = vrot.lane.b32.xlu0 %v5786, 64
      %v5839 = vpop.permute.xlu0 %5838
      %5840 = vrot.lane.b32.xlu0 %v5787, 64
      %v5841 = vpop.permute.xlu0 %5840
      %5860 = vst.msk [vmem:[#allocation3 + $0x18] sm:$0xff] %vm461, %v5807
      %5861 = vst.msk [vmem:[#allocation3 + $0x40] sm:$0xff] %vm461, %v5809
      %5862 = vst.msk [vmem:[#allocation3 + $0x68] sm:$0xff] %vm461, %v5811
      %5863 = vst.msk [vmem:[#allocation3 + $0x90] sm:$0xff] %vm461, %v5813
      %5864 = vst.msk [vmem:[#allocation3 + $0xb8] sm:$0xff] %vm461, %v5815
      %5865 = vst.msk [vmem:[#allocation3 + $0xe0] sm:$0xff] %vm461, %v5817
      %5866 = vst.msk [vmem:[#allocation3 + $0x108] sm:$0xff] %vm461, %v5819
      %5867 = vst.msk [vmem:[#allocation3 + $0x130] sm:$0xff] %vm461, %v5821
      %5868 = vst.msk [vmem:[#allocation3 + $0x158] sm:$0xff] %vm461, %v5823
      %5869 = vst.msk [vmem:[#allocation3 + $0x180] sm:$0xff] %vm461, %v5825
      %5870 = vst.msk [vmem:[#allocation3 + $0x1a8] sm:$0xff] %vm461, %v5827
      %5871 = vst.msk [vmem:[#allocation3 + $0x1d0] sm:$0xff] %vm461, %v5829
      %5872 = vst.msk [vmem:[#allocation3 + $0x1f8] sm:$0xff] %vm461, %v5831
      %5873 = vst.msk [vmem:[#allocation3 + $0x220] sm:$0xff] %vm461, %v5833
      %5874 = vst.msk [vmem:[#allocation3 + $0x248] sm:$0xff] %vm461, %v5835
      %5875 = vst.msk [vmem:[#allocation3 + $0x270] sm:$0xff] %vm461, %v5837
      %5876 = vst.msk [vmem:[#allocation3 + $0x298] sm:$0xff] %vm461, %v5839
      %5877 = vst.msk [vmem:[#allocation3 + $0x2c0] sm:$0xff] %vm461, %v5841
      %v5878 = vld [vmem:[#allocation2 + $0x26] sm:$0xff]
      %v5879 = vld [vmem:[#allocation2 + $0x2e] sm:$0xff]
      %v5880 = vld [vmem:[#allocation2 + $0x36] sm:$0xff]
      %v5881 = vld [vmem:[#allocation2 + $0x3e] sm:$0xff]
      %v5882 = vld [vmem:[#allocation2 + $0x46] sm:$0xff]
      %v5883 = vld [vmem:[#allocation2 + $0x4e] sm:$0xff]
      %v5884 = vld [vmem:[#allocation2 + $0x56] sm:$0xff]
      %v5885 = vld [vmem:[#allocation2 + $0x5e] sm:$0xff]
      %v5886 = vld [vmem:[#allocation2 + $0x66] sm:$0xff]
      %v5887 = vld [vmem:[#allocation2 + $0x6e] sm:$0xff]
      %v5888 = vld [vmem:[#allocation2 + $0x76] sm:$0xff]
      %v5889 = vld [vmem:[#allocation2 + $0x7e] sm:$0xff]
      %v5890 = vld [vmem:[#allocation2 + $0x86] sm:$0xff]
      %v5891 = vld [vmem:[#allocation2 + $0x8e] sm:$0xff]
      %v5892 = vld [vmem:[#allocation2 + $0x96] sm:$0xff]
      %v5893 = vld [vmem:[#allocation2 + $0x9e] sm:$0xff]
      %v5894 = vld [vmem:[#allocation2 + $0xa6] sm:$0xff]
      %v5895 = vld [vmem:[#allocation2 + $0xae] sm:$0xff]
      %v5896 = vld [vmem:[#allocation2 + $0xb6] sm:$0xff]
      %v5897 = vld [vmem:[#allocation2 + $0xbe] sm:$0xff]
      %v5898 = vld [vmem:[#allocation2 + $0xc6] sm:$0xff]
      %v5899 = vld [vmem:[#allocation2 + $0xce] sm:$0xff]
      %v5900 = vld [vmem:[#allocation2 + $0xd6] sm:$0xff]
      %v5901 = vld [vmem:[#allocation2 + $0xde] sm:$0xff]
      %v5902 = vld [vmem:[#allocation2 + $0xe6] sm:$0xff]
      %v5903 = vld [vmem:[#allocation2 + $0xee] sm:$0xff]
      %v5904 = vld [vmem:[#allocation2 + $0xf6] sm:$0xff]
      %v5905 = vld [vmem:[#allocation2 + $0xfe] sm:$0xff]
      %v5906 = vld [vmem:[#allocation2 + $0x106] sm:$0xff]
      %v5907 = vld [vmem:[#allocation2 + $0x10e] sm:$0xff]
      %v5908 = vld [vmem:[#allocation2 + $0x116] sm:$0xff]
      %v5909 = vld [vmem:[#allocation2 + $0x11e] sm:$0xff]
      %v5910 = vld [vmem:[#allocation2 + $0x126] sm:$0xff]
      %v5911 = vld [vmem:[#allocation2 + $0x12e] sm:$0xff]
      %v5912 = vld [vmem:[#allocation2 + $0x136] sm:$0xff]
      %v5913 = vld [vmem:[#allocation2 + $0x13e] sm:$0xff]
      %v5914 = vpack.c.bf16 %v5879, %v5878
      %v5915 = vpack.c.bf16 %v5881, %v5880
      %v5916 = vpack.c.bf16 %v5883, %v5882
      %v5917 = vpack.c.bf16 %v5885, %v5884
      %v5918 = vpack.c.bf16 %v5887, %v5886
      %v5919 = vpack.c.bf16 %v5889, %v5888
      %v5920 = vpack.c.bf16 %v5891, %v5890
      %v5921 = vpack.c.bf16 %v5893, %v5892
      %v5922 = vpack.c.bf16 %v5895, %v5894
      %v5923 = vpack.c.bf16 %v5897, %v5896
      %v5924 = vpack.c.bf16 %v5899, %v5898
      %v5925 = vpack.c.bf16 %v5901, %v5900
      %v5926 = vpack.c.bf16 %v5903, %v5902
      %v5927 = vpack.c.bf16 %v5905, %v5904
      %v5928 = vpack.c.bf16 %v5907, %v5906
      %v5929 = vpack.c.bf16 %v5909, %v5908
      %v5930 = vpack.c.bf16 %v5911, %v5910
      %v5931 = vpack.c.bf16 %v5913, %v5912
      %5932 = vst.msk [vmem:[#allocation3 + $0x20] sm:$0xff] %vm253, %v5914
      %5933 = vst.msk [vmem:[#allocation3 + $0x48] sm:$0xff] %vm253, %v5915
      %5934 = vst.msk [vmem:[#allocation3 + $0x70] sm:$0xff] %vm253, %v5916
      %5935 = vst.msk [vmem:[#allocation3 + $0x98] sm:$0xff] %vm253, %v5917
      %5936 = vst.msk [vmem:[#allocation3 + $0xc0] sm:$0xff] %vm253, %v5918
      %5937 = vst.msk [vmem:[#allocation3 + $0xe8] sm:$0xff] %vm253, %v5919
      %5938 = vst.msk [vmem:[#allocation3 + $0x110] sm:$0xff] %vm253, %v5920
      %5939 = vst.msk [vmem:[#allocation3 + $0x138] sm:$0xff] %vm253, %v5921
      %5940 = vst.msk [vmem:[#allocation3 + $0x160] sm:$0xff] %vm253, %v5922
      %5941 = vst.msk [vmem:[#allocation3 + $0x188] sm:$0xff] %vm253, %v5923
      %5942 = vst.msk [vmem:[#allocation3 + $0x1b0] sm:$0xff] %vm253, %v5924
      %5943 = vst.msk [vmem:[#allocation3 + $0x1d8] sm:$0xff] %vm253, %v5925
      %5944 = vst.msk [vmem:[#allocation3 + $0x200] sm:$0xff] %vm253, %v5926
      %5945 = vst.msk [vmem:[#allocation3 + $0x228] sm:$0xff] %vm253, %v5927
      %5946 = vst.msk [vmem:[#allocation3 + $0x250] sm:$0xff] %vm253, %v5928
      %5947 = vst.msk [vmem:[#allocation3 + $0x278] sm:$0xff] %vm253, %v5929
      %5948 = vst.msk [vmem:[#allocation3 + $0x2a0] sm:$0xff] %vm253, %v5930
      %5949 = vst.msk [vmem:[#allocation3 + $0x2c8] sm:$0xff] %vm253, %v5931
      %v5950 = vld [vmem:[#allocation3] sm:$0xff]
      %v5951 = vld [vmem:[#allocation3 + $0x8] sm:$0xff]
      %v5952 = vld [vmem:[#allocation3 + $0x10] sm:$0xff]
      %v5953 = vld [vmem:[#allocation3 + $0x18] sm:$0xff]
      %v5954 = vld [vmem:[#allocation3 + $0x20] sm:$0xff]
      %v5955 = vld [vmem:[#allocation3 + $0x28] sm:$0xff]
      %v5956 = vld [vmem:[#allocation3 + $0x30] sm:$0xff]
      %v5957 = vld [vmem:[#allocation3 + $0x38] sm:$0xff]
      %v5958 = vld [vmem:[#allocation3 + $0x40] sm:$0xff]
      %v5959 = vld [vmem:[#allocation3 + $0x48] sm:$0xff]
      %v5960 = vld [vmem:[#allocation3 + $0x50] sm:$0xff]
      %v5961 = vld [vmem:[#allocation3 + $0x58] sm:$0xff]
      %v5962 = vld [vmem:[#allocation3 + $0x60] sm:$0xff]
      %v5963 = vld [vmem:[#allocation3 + $0x68] sm:$0xff]
      %v5964 = vld [vmem:[#allocation3 + $0x70] sm:$0xff]
      %v5965 = vld [vmem:[#allocation3 + $0x78] sm:$0xff]
      %v5966 = vld [vmem:[#allocation3 + $0x80] sm:$0xff]
      %v5967 = vld [vmem:[#allocation3 + $0x88] sm:$0xff]
      %v5968 = vld [vmem:[#allocation3 + $0x90] sm:$0xff]
      %v5969 = vld [vmem:[#allocation3 + $0x98] sm:$0xff]
      %v5970 = vld [vmem:[#allocation3 + $0xa0] sm:$0xff]
      %v5971 = vld [vmem:[#allocation3 + $0xa8] sm:$0xff]
      %v5972 = vld [vmem:[#allocation3 + $0xb0] sm:$0xff]
      %v5973 = vld [vmem:[#allocation3 + $0xb8] sm:$0xff]
      %v5974 = vld [vmem:[#allocation3 + $0xc0] sm:$0xff]
      %v5975 = vld [vmem:[#allocation3 + $0xc8] sm:$0xff]
      %v5976 = vld [vmem:[#allocation3 + $0xd0] sm:$0xff]
      %v5977 = vld [vmem:[#allocation3 + $0xd8] sm:$0xff]
      %v5978 = vld [vmem:[#allocation3 + $0xe0] sm:$0xff]
      %v5979 = vld [vmem:[#allocation3 + $0xe8] sm:$0xff]
      %v5980 = vld [vmem:[#allocation3 + $0xf0] sm:$0xff]
      %v5981 = vld [vmem:[#allocation3 + $0xf8] sm:$0xff]
      %v5982 = vld [vmem:[#allocation3 + $0x100] sm:$0xff]
      %v5983 = vld [vmem:[#allocation3 + $0x108] sm:$0xff]
      %v5984 = vld [vmem:[#allocation3 + $0x110] sm:$0xff]
      %v5985 = vld [vmem:[#allocation3 + $0x118] sm:$0xff]
      %v5986 = vld [vmem:[#allocation3 + $0x120] sm:$0xff]
      %v5987 = vld [vmem:[#allocation3 + $0x128] sm:$0xff]
      %v5988 = vld [vmem:[#allocation3 + $0x130] sm:$0xff]
      %v5989 = vld [vmem:[#allocation3 + $0x138] sm:$0xff]
      %v5990 = vld [vmem:[#allocation3 + $0x140] sm:$0xff]
      %v5991 = vld [vmem:[#allocation3 + $0x148] sm:$0xff]
      %v5992 = vld [vmem:[#allocation3 + $0x150] sm:$0xff]
      %v5993 = vld [vmem:[#allocation3 + $0x158] sm:$0xff]
      %v5994 = vld [vmem:[#allocation3 + $0x160] sm:$0xff]
      %v5995 = vld [vmem:[#allocation3 + $0x168] sm:$0xff]
      %v5996 = vld [vmem:[#allocation3 + $0x170] sm:$0xff]
      %v5997 = vld [vmem:[#allocation3 + $0x178] sm:$0xff]
      %v5998 = vld [vmem:[#allocation3 + $0x180] sm:$0xff]
      %v5999 = vld [vmem:[#allocation3 + $0x188] sm:$0xff]
      %v6000 = vld [vmem:[#allocation3 + $0x190] sm:$0xff]
      %v6001 = vld [vmem:[#allocation3 + $0x198] sm:$0xff]
      %v6002 = vld [vmem:[#allocation3 + $0x1a0] sm:$0xff]
      %v6003 = vld [vmem:[#allocation3 + $0x1a8] sm:$0xff]
      %v6004 = vld [vmem:[#allocation3 + $0x1b0] sm:$0xff]
      %v6005 = vld [vmem:[#allocation3 + $0x1b8] sm:$0xff]
      %v6006 = vld [vmem:[#allocation3 + $0x1c0] sm:$0xff]
      %v6007 = vld [vmem:[#allocation3 + $0x1c8] sm:$0xff]
      %v6008 = vld [vmem:[#allocation3 + $0x1d0] sm:$0xff]
      %v6009 = vld [vmem:[#allocation3 + $0x1d8] sm:$0xff]
      %v6010 = vld [vmem:[#allocation3 + $0x1e0] sm:$0xff]
      %v6011 = vld [vmem:[#allocation3 + $0x1e8] sm:$0xff]
      %v6012 = vld [vmem:[#allocation3 + $0x1f0] sm:$0xff]
      %v6013 = vld [vmem:[#allocation3 + $0x1f8] sm:$0xff]
      %v6014 = vld [vmem:[#allocation3 + $0x200] sm:$0xff]
      %v6015 = vld [vmem:[#allocation3 + $0x208] sm:$0xff]
      %v6016 = vld [vmem:[#allocation3 + $0x210] sm:$0xff]
      %v6017 = vld [vmem:[#allocation3 + $0x218] sm:$0xff]
      %v6018 = vld [vmem:[#allocation3 + $0x220] sm:$0xff]
      %v6019 = vld [vmem:[#allocation3 + $0x228] sm:$0xff]
      %v6020 = vld [vmem:[#allocation3 + $0x230] sm:$0xff]
      %v6021 = vld [vmem:[#allocation3 + $0x238] sm:$0xff]
      %v6022 = vld [vmem:[#allocation3 + $0x240] sm:$0xff]
      %v6023 = vld [vmem:[#allocation3 + $0x248] sm:$0xff]
      %v6024 = vld [vmem:[#allocation3 + $0x250] sm:$0xff]
      %v6025 = vld [vmem:[#allocation3 + $0x258] sm:$0xff]
      %v6026 = vld [vmem:[#allocation3 + $0x260] sm:$0xff]
      %v6027 = vld [vmem:[#allocation3 + $0x268] sm:$0xff]
      %v6028 = vld [vmem:[#allocation3 + $0x270] sm:$0xff]
      %v6029 = vld [vmem:[#allocation3 + $0x278] sm:$0xff]
      %v6030 = vld [vmem:[#allocation3 + $0x280] sm:$0xff]
      %v6031 = vld [vmem:[#allocation3 + $0x288] sm:$0xff]
      %v6032 = vld [vmem:[#allocation3 + $0x290] sm:$0xff]
      %v6033 = vld [vmem:[#allocation3 + $0x298] sm:$0xff]
      %v6034 = vld [vmem:[#allocation3 + $0x2a0] sm:$0xff]
      %v6035 = vld [vmem:[#allocation3 + $0x2a8] sm:$0xff]
      %v6036 = vld [vmem:[#allocation3 + $0x2b0] sm:$0xff]
      %v6037 = vld [vmem:[#allocation3 + $0x2b8] sm:$0xff]
      %v6038 = vld [vmem:[#allocation3 + $0x2c0] sm:$0xff]
      %v6039 = vld [vmem:[#allocation3 + $0x2c8] sm:$0xff]
      %s6040 = scalar_lea.vmem %s2, 576
      %v6041 = vld [vmem:[%s6040] sm:$0xf]
      %v6042 = vld [vmem:[%s6040 + $0x4] sm:$0xf]
      %v6043 = vld [vmem:[%s6040 + $0x8] sm:$0xf]
      %v6044 = vld [vmem:[%s6040 + $0xc] sm:$0xf]
      %v6045 = vld [vmem:[%s6040 + $0x10] sm:$0xf]
      %v6046 = vld [vmem:[%s6040 + $0x14] sm:$0xf]
      %v6047 = vld [vmem:[%s6040 + $0x18] sm:$0xf]
      %v6048 = vld [vmem:[%s6040 + $0x1c] sm:$0xf]
      %v6049 = vld [vmem:[%s6040 + $0x20] sm:$0xf]
      %v6050 = vld [vmem:[%s6040 + $0x24] sm:$0xf]
      %v6051 = vld [vmem:[%s6040 + $0x28] sm:$0xf]
      %v6052 = vld [vmem:[%s6040 + $0x2c] sm:$0xf]
      %v6053 = vld [vmem:[%s6040 + $0x30] sm:$0xf]
      %v6054 = vld [vmem:[%s6040 + $0x34] sm:$0xf]
      %v6055 = vld [vmem:[%s6040 + $0x38] sm:$0xf]
      %v6056 = vld [vmem:[%s6040 + $0x3c] sm:$0xf]
      %v6057 = vld [vmem:[%s6040 + $0x40] sm:$0xf]
      %v6058 = vld [vmem:[%s6040 + $0x44] sm:$0xf]
      %v6059 = vld [vmem:[%s6040 + $0x48] sm:$0xf]
      %v6060 = vld [vmem:[%s6040 + $0x4c] sm:$0xf]
      %v6061 = vld [vmem:[%s6040 + $0x50] sm:$0xf]
      %v6062 = vld [vmem:[%s6040 + $0x54] sm:$0xf]
      %v6063 = vld [vmem:[%s6040 + $0x58] sm:$0xf]
      %v6064 = vld [vmem:[%s6040 + $0x5c] sm:$0xf]
      %v6065 = vld [vmem:[%s6040 + $0x60] sm:$0xf]
      %v6066 = vld [vmem:[%s6040 + $0x64] sm:$0xf]
      %v6067 = vld [vmem:[%s6040 + $0x68] sm:$0xf]
      %v6068 = vld [vmem:[%s6040 + $0x6c] sm:$0xf]
      %v6069 = vld [vmem:[%s6040 + $0x70] sm:$0xf]
      %v6070 = vld [vmem:[%s6040 + $0x74] sm:$0xf]
      %v6071 = vld [vmem:[%s6040 + $0x78] sm:$0xf]
      %v6072 = vld [vmem:[%s6040 + $0x7c] sm:$0xf]
      %v6073 = vld [vmem:[%s6040 + $0x80] sm:$0xf]
      %v6074 = vld [vmem:[%s6040 + $0x84] sm:$0xf]
      %v6075 = vld [vmem:[%s6040 + $0x88] sm:$0xf]
      %v6076 = vld [vmem:[%s6040 + $0x8c] sm:$0xf]
      %v6077 = vld [vmem:[%s6040 + $0x90] sm:$0xf]
      %v6078 = vld [vmem:[%s6040 + $0x94] sm:$0xf]
      %v6079 = vld [vmem:[%s6040 + $0x98] sm:$0xf]
      %v6080 = vld [vmem:[%s6040 + $0x9c] sm:$0xf]
      %v6081 = vld [vmem:[%s6040 + $0xa0] sm:$0xf]
      %v6082 = vld [vmem:[%s6040 + $0xa4] sm:$0xf]
      %v6083 = vld [vmem:[%s6040 + $0xa8] sm:$0xf]
      %v6084 = vld [vmem:[%s6040 + $0xac] sm:$0xf]
      %v6085 = vld [vmem:[%s6040 + $0xb0] sm:$0xf]
      %v6086 = vld [vmem:[%s6040 + $0xb4] sm:$0xf]
      %v6087 = vld [vmem:[%s6040 + $0xb8] sm:$0xf]
      %v6088 = vld [vmem:[%s6040 + $0xbc] sm:$0xf]
      %v6089 = vld [vmem:[%s6040 + $0xc0] sm:$0xf]
      %v6090 = vld [vmem:[%s6040 + $0xc4] sm:$0xf]
      %v6091 = vld [vmem:[%s6040 + $0xc8] sm:$0xf]
      %v6092 = vld [vmem:[%s6040 + $0xcc] sm:$0xf]
      %v6093 = vld [vmem:[%s6040 + $0xd0] sm:$0xf]
      %v6094 = vld [vmem:[%s6040 + $0xd4] sm:$0xf]
      %v6095 = vld [vmem:[%s6040 + $0xd8] sm:$0xf]
      %v6096 = vld [vmem:[%s6040 + $0xdc] sm:$0xf]
      %v6097 = vld [vmem:[%s6040 + $0xe0] sm:$0xf]
      %v6098 = vld [vmem:[%s6040 + $0xe4] sm:$0xf]
      %v6099 = vld [vmem:[%s6040 + $0xe8] sm:$0xf]
      %v6100 = vld [vmem:[%s6040 + $0xec] sm:$0xf]
      %v6101 = vld [vmem:[%s6040 + $0xf0] sm:$0xf]
      %v6102 = vld [vmem:[%s6040 + $0xf4] sm:$0xf]
      %v6103 = vld [vmem:[%s6040 + $0xf8] sm:$0xf]
      %v6104 = vld [vmem:[%s6040 + $0xfc] sm:$0xf]
      %v6105 = vld [vmem:[%s6040 + $0x100] sm:$0xf]
      %v6106 = vld [vmem:[%s6040 + $0x104] sm:$0xf]
      %v6107 = vld [vmem:[%s6040 + $0x108] sm:$0xf]
      %v6108 = vld [vmem:[%s6040 + $0x10c] sm:$0xf]
      %v6109 = vld [vmem:[%s6040 + $0x110] sm:$0xf]
      %v6110 = vld [vmem:[%s6040 + $0x114] sm:$0xf]
      %v6111 = vld [vmem:[%s6040 + $0x118] sm:$0xf]
      %v6112 = vld [vmem:[%s6040 + $0x11c] sm:$0xf]
      %s6113 = scalar_lea.vmem %s3, 2
      %v6114 = vld [vmem:[%s6113] sm:$0x1]
      %v6116 = vlaneseq
      %v6117 = vshrl.u32 %v6116, 7
      %v6118 = vsub.s32 0, %v6117
      %v6119 = vrot.slane %v6114, %v6118
      %v6193 = vunpack.c.l.b16 %v6041
      %v6194 = vunpack.c.l.b16 %v6042
      %v6195 = vunpack.c.l.b16 %v6043
      %v6196 = vunpack.c.l.b16 %v6044
      %v6197 = vunpack.c.l.b16 %v6045
      %v6198 = vunpack.c.l.b16 %v6046
      %v6199 = vunpack.c.l.b16 %v6047
      %v6200 = vunpack.c.l.b16 %v6048
      %v6201 = vunpack.c.l.b16 %v6049
      %v6202 = vunpack.c.l.b16 %v6050
      %v6203 = vunpack.c.l.b16 %v6051
      %v6204 = vunpack.c.l.b16 %v6052
      %v6205 = vunpack.c.l.b16 %v6053
      %v6206 = vunpack.c.l.b16 %v6054
      %v6207 = vunpack.c.l.b16 %v6055
      %v6208 = vunpack.c.l.b16 %v6056
      %v6209 = vunpack.c.l.b16 %v6057
      %v6210 = vunpack.c.l.b16 %v6058
      %v6211 = vunpack.c.l.b16 %v6059
      %v6212 = vunpack.c.l.b16 %v6060
      %v6213 = vunpack.c.l.b16 %v6061
      %v6214 = vunpack.c.l.b16 %v6062
      %v6215 = vunpack.c.l.b16 %v6063
      %v6216 = vunpack.c.l.b16 %v6064
      %v6217 = vunpack.c.l.b16 %v6065
      %v6218 = vunpack.c.l.b16 %v6066
      %v6219 = vunpack.c.l.b16 %v6067
      %v6220 = vunpack.c.l.b16 %v6068
      %v6221 = vunpack.c.l.b16 %v6069
      %v6222 = vunpack.c.l.b16 %v6070
      %v6223 = vunpack.c.l.b16 %v6071
      %v6224 = vunpack.c.l.b16 %v6072
      %v6225 = vunpack.c.l.b16 %v6073
      %v6226 = vunpack.c.l.b16 %v6074
      %v6227 = vunpack.c.l.b16 %v6075
      %v6228 = vunpack.c.l.b16 %v6076
      %v6229 = vunpack.c.l.b16 %v6077
      %v6230 = vunpack.c.l.b16 %v6078
      %v6231 = vunpack.c.l.b16 %v6079
      %v6232 = vunpack.c.l.b16 %v6080
      %v6233 = vunpack.c.l.b16 %v6081
      %v6234 = vunpack.c.l.b16 %v6082
      %v6235 = vunpack.c.l.b16 %v6083
      %v6236 = vunpack.c.l.b16 %v6084
      %v6237 = vunpack.c.l.b16 %v6085
      %v6238 = vunpack.c.l.b16 %v6086
      %v6239 = vunpack.c.l.b16 %v6087
      %v6240 = vunpack.c.l.b16 %v6088
      %v6241 = vunpack.c.l.b16 %v6089
      %v6242 = vunpack.c.l.b16 %v6090
      %v6243 = vunpack.c.l.b16 %v6091
      %v6244 = vunpack.c.l.b16 %v6092
      %v6245 = vunpack.c.l.b16 %v6093
      %v6246 = vunpack.c.l.b16 %v6094
      %v6247 = vunpack.c.l.b16 %v6095
      %v6248 = vunpack.c.l.b16 %v6096
      %v6249 = vunpack.c.l.b16 %v6097
      %v6250 = vunpack.c.l.b16 %v6098
      %v6251 = vunpack.c.l.b16 %v6099
      %v6252 = vunpack.c.l.b16 %v6100
      %v6253 = vunpack.c.l.b16 %v6101
      %v6254 = vunpack.c.l.b16 %v6102
      %v6255 = vunpack.c.l.b16 %v6103
      %v6256 = vunpack.c.l.b16 %v6104
      %v6257 = vunpack.c.l.b16 %v6105
      %v6258 = vunpack.c.l.b16 %v6106
      %v6259 = vunpack.c.l.b16 %v6107
      %v6260 = vunpack.c.l.b16 %v6108
      %v6261 = vunpack.c.l.b16 %v6109
      %v6262 = vunpack.c.l.b16 %v6110
      %v6263 = vunpack.c.l.b16 %v6111
      %v6264 = vunpack.c.l.b16 %v6112
      %v6265 = vpack.c.b16 %v6194, %v6193
      %v6266 = vpack.c.b16 %v6196, %v6195
      %v6267 = vpack.c.b16 %v6198, %v6197
      %v6268 = vpack.c.b16 %v6200, %v6199
      %v6269 = vpack.c.b16 %v6202, %v6201
      %v6270 = vpack.c.b16 %v6204, %v6203
      %v6271 = vpack.c.b16 %v6206, %v6205
      %v6272 = vpack.c.b16 %v6208, %v6207
      %v6273 = vpack.c.b16 %v6210, %v6209
      %v6274 = vpack.c.b16 %v6212, %v6211
      %v6275 = vpack.c.b16 %v6214, %v6213
      %v6276 = vpack.c.b16 %v6216, %v6215
      %v6277 = vpack.c.b16 %v6218, %v6217
      %v6278 = vpack.c.b16 %v6220, %v6219
      %v6279 = vpack.c.b16 %v6222, %v6221
      %v6280 = vpack.c.b16 %v6224, %v6223
      %v6281 = vpack.c.b16 %v6226, %v6225
      %v6282 = vpack.c.b16 %v6228, %v6227
      %v6283 = vpack.c.b16 %v6230, %v6229
      %v6284 = vpack.c.b16 %v6232, %v6231
      %v6285 = vpack.c.b16 %v6234, %v6233
      %v6286 = vpack.c.b16 %v6236, %v6235
      %v6287 = vpack.c.b16 %v6238, %v6237
      %v6288 = vpack.c.b16 %v6240, %v6239
      %v6289 = vpack.c.b16 %v6242, %v6241
      %v6290 = vpack.c.b16 %v6244, %v6243
      %v6291 = vpack.c.b16 %v6246, %v6245
      %v6292 = vpack.c.b16 %v6248, %v6247
      %v6293 = vpack.c.b16 %v6250, %v6249
      %v6294 = vpack.c.b16 %v6252, %v6251
      %v6295 = vpack.c.b16 %v6254, %v6253
      %v6296 = vpack.c.b16 %v6256, %v6255
      %v6297 = vpack.c.b16 %v6258, %v6257
      %v6298 = vpack.c.b16 %v6260, %v6259
      %v6299 = vpack.c.b16 %v6262, %v6261
      %v6300 = vpack.c.b16 %v6264, %v6263
      %v6338 = vsel %vm253, %v5954, 0
      %v6341 = vsel %vm253, %v5959, 0
      %v6344 = vsel %vm253, %v5964, 0
      %v6347 = vsel %vm253, %v5969, 0
      %v6350 = vsel %vm253, %v5974, 0
      %v6353 = vsel %vm253, %v5979, 0
      %v6356 = vsel %vm253, %v5984, 0
      %v6359 = vsel %vm253, %v5989, 0
      %v6362 = vsel %vm253, %v5994, 0
      %v6365 = vsel %vm253, %v5999, 0
      %v6368 = vsel %vm253, %v6004, 0
      %v6371 = vsel %vm253, %v6009, 0
      %v6374 = vsel %vm253, %v6014, 0
      %v6377 = vsel %vm253, %v6019, 0
      %v6380 = vsel %vm253, %v6024, 0
      %v6383 = vsel %vm253, %v6029, 0
      %v6386 = vsel %vm253, %v6034, 0
      %v6389 = vsel %vm253, %v6039, 0
      %6391 = vmatprep.subr.bf16.mxu0 0
      %6392 = vmatpush1.bf16.msra.mxu0 %v6265
      %6393 = vmatprep.subr.bf16.mxu0 0
      %6394 = vmatpush1.bf16.msra.mxu0 %v6266
      %6395 = vmatprep.subr.bf16.mxu0 0
      %6396 = vmatpush1.bf16.msra.mxu0 %v6267
      %6397 = vmatprep.subr.bf16.mxu0 0
      %6398 = vmatpush1.bf16.msra.mxu0 %v6268
      %6399 = vmatprep.subr.bf16.mxu0 0
      %6400 = vmatpush1.bf16.msra.mxu0 %v6269
      %6401 = vmatprep.subr.bf16.mxu0 0
      %6402 = vmatpush1.bf16.msra.mxu0 %v6270
      %6403 = vmatprep.subr.bf16.mxu0 0
      %6404 = vmatpush1.bf16.msra.mxu0 %v6271
      %6405 = vmatprep.subr.bf16.mxu0 0
      %6406 = vmatpush1.bf16.msra.mxu0 %v6272
      %6407 = vmatprep.subr.bf16.mxu0 0
      %6408 = vmatpush1.bf16.msra.mxu0 %v6273
      %6409 = vmatprep.subr.bf16.mxu0 0
      %6410 = vmatpush1.bf16.msra.mxu0 %v6274
      %6411 = vmatprep.subr.bf16.mxu0 0
      %6412 = vmatpush1.bf16.msra.mxu0 %v6275
      %6413 = vmatprep.subr.bf16.mxu0 0
      %6414 = vmatpush1.bf16.msra.mxu0 %v6276
      %6415 = vmatprep.subr.bf16.mxu0 0
      %6416 = vmatpush1.bf16.msra.mxu0 %v6277
      %6417 = vmatprep.subr.bf16.mxu0 0
      %6418 = vmatpush1.bf16.msra.mxu0 %v6278
      %6419 = vmatprep.subr.bf16.mxu0 0
      %6420 = vmatpush1.bf16.msra.mxu0 %v6279
      %6421 = vmatprep.subr.bf16.mxu0 0
      %6422 = vmatpush1.bf16.msra.mxu0 %v6280
      %6423 = vmatprep.mubr.bf16.mxu0 %v5951
      %6424 = vmatmul.mubr.bf16.gmra.mrb[0].mxu0 %v5950
      %v6425 = vpop.f32.mrb[0].mxu0
      %v6426 = vadd.f32 %v6119, %v6425
      %v6427 = vpop.f32.mrb[0].mxu0
      %v6428 = vpop.f32.mrb[0].mxu0
      %v6429 = vadd.f32 %v6119, %v6428
      %v6430 = vpop.f32.mrb[0].mxu0
      %6431 = vmatprep.mubr.bf16.mxu0 %v5956
      %6432 = vmatmul.mubr.bf16.gmra.mrb[0].mxu0 %v5955
      %v6433 = vpop.f32.mrb[0].mxu0
      %v6434 = vadd.f32 %v6119, %v6433
      %v6435 = vpop.f32.mrb[0].mxu0
      %v6436 = vpop.f32.mrb[0].mxu0
      %v6437 = vadd.f32 %v6119, %v6436
      %v6438 = vpop.f32.mrb[0].mxu0
      %6439 = vmatprep.mubr.bf16.mxu0 %v5961
      %6440 = vmatmul.mubr.bf16.gmra.mrb[0].mxu0 %v5960
      %v6441 = vpop.f32.mrb[0].mxu0
      %v6442 = vadd.f32 %v6119, %v6441
      %v6443 = vpop.f32.mrb[0].mxu0
      %v6444 = vpop.f32.mrb[0].mxu0
      %v6445 = vadd.f32 %v6119, %v6444
      %v6446 = vpop.f32.mrb[0].mxu0
      %6447 = vmatprep.mubr.bf16.mxu0 %v5966
      %6448 = vmatmul.mubr.bf16.gmra.mrb[0].mxu0 %v5965
      %v6449 = vpop.f32.mrb[0].mxu0
      %v6450 = vadd.f32 %v6119, %v6449
      %v6451 = vpop.f32.mrb[0].mxu0
      %v6452 = vpop.f32.mrb[0].mxu0
      %v6453 = vadd.f32 %v6119, %v6452
      %v6454 = vpop.f32.mrb[0].mxu0
      %6455 = vmatprep.mubr.bf16.mxu0 %v5971
      %6456 = vmatmul.mubr.bf16.gmra.mrb[0].mxu0 %v5970
      %v6457 = vpop.f32.mrb[0].mxu0
      %v6458 = vadd.f32 %v6119, %v6457
      %v6459 = vpop.f32.mrb[0].mxu0
      %v6460 = vpop.f32.mrb[0].mxu0
      %v6461 = vadd.f32 %v6119, %v6460
      %v6462 = vpop.f32.mrb[0].mxu0
      %6463 = vmatprep.mubr.bf16.mxu0 %v5976
      %6464 = vmatmul.mubr.bf16.gmra.mrb[0].mxu0 %v5975
      %v6465 = vpop.f32.mrb[0].mxu0
      %v6466 = vadd.f32 %v6119, %v6465
      %v6467 = vpop.f32.mrb[0].mxu0
      %v6468 = vpop.f32.mrb[0].mxu0
      %v6469 = vadd.f32 %v6119, %v6468
      %v6470 = vpop.f32.mrb[0].mxu0
      %6471 = vmatprep.mubr.bf16.mxu0 %v5981
      %6472 = vmatmul.mubr.bf16.gmra.mrb[0].mxu0 %v5980
      %v6473 = vpop.f32.mrb[0].mxu0
      %v6474 = vadd.f32 %v6119, %v6473
      %v6475 = vpop.f32.mrb[0].mxu0
      %v6476 = vpop.f32.mrb[0].mxu0
      %v6477 = vadd.f32 %v6119, %v6476
      %v6478 = vpop.f32.mrb[0].mxu0
      %6479 = vmatprep.mubr.bf16.mxu0 %v5986
      %6480 = vmatmul.mubr.bf16.gmra.mrb[0].mxu0 %v5985
      %v6481 = vpop.f32.mrb[0].mxu0
      %v6482 = vadd.f32 %v6119, %v6481
      %v6483 = vpop.f32.mrb[0].mxu0
      %v6484 = vpop.f32.mrb[0].mxu0
      %v6485 = vadd.f32 %v6119, %v6484
      %v6486 = vpop.f32.mrb[0].mxu0
      %6487 = vmatprep.mubr.bf16.mxu0 %v5991
      %6488 = vmatmul.mubr.bf16.gmra.mrb[0].mxu0 %v5990
      %v6489 = vpop.f32.mrb[0].mxu0
      %v6490 = vadd.f32 %v6119, %v6489
      %v6491 = vpop.f32.mrb[0].mxu0
      %v6492 = vpop.f32.mrb[0].mxu0
      %v6493 = vadd.f32 %v6119, %v6492
      %v6494 = vpop.f32.mrb[0].mxu0
      %6495 = vmatprep.mubr.bf16.mxu0 %v5996
      %6496 = vmatmul.mubr.bf16.gmra.mrb[0].mxu0 %v5995
      %v6497 = vpop.f32.mrb[0].mxu0
      %v6498 = vadd.f32 %v6119, %v6497
      %v6499 = vpop.f32.mrb[0].mxu0
      %v6500 = vpop.f32.mrb[0].mxu0
      %v6501 = vadd.f32 %v6119, %v6500
      %v6502 = vpop.f32.mrb[0].mxu0
      %6503 = vmatprep.mubr.bf16.mxu0 %v6001
      %6504 = vmatmul.mubr.bf16.gmra.mrb[0].mxu0 %v6000
      %v6505 = vpop.f32.mrb[0].mxu0
      %v6506 = vadd.f32 %v6119, %v6505
      %v6507 = vpop.f32.mrb[0].mxu0
      %v6508 = vpop.f32.mrb[0].mxu0
      %v6509 = vadd.f32 %v6119, %v6508
      %v6510 = vpop.f32.mrb[0].mxu0
      %6511 = vmatprep.mubr.bf16.mxu0 %v6006
      %6512 = vmatmul.mubr.bf16.gmra.mrb[0].mxu0 %v6005
      %v6513 = vpop.f32.mrb[0].mxu0
      %v6514 = vadd.f32 %v6119, %v6513
      %v6515 = vpop.f32.mrb[0].mxu0
      %v6516 = vpop.f32.mrb[0].mxu0
      %v6517 = vadd.f32 %v6119, %v6516
      %v6518 = vpop.f32.mrb[0].mxu0
      %6519 = vmatprep.mubr.bf16.mxu0 %v6011
      %6520 = vmatmul.mubr.bf16.gmra.mrb[0].mxu0 %v6010
      %v6521 = vpop.f32.mrb[0].mxu0
      %v6522 = vadd.f32 %v6119, %v6521
      %v6523 = vpop.f32.mrb[0].mxu0
      %v6524 = vpop.f32.mrb[0].mxu0
      %v6525 = vadd.f32 %v6119, %v6524
      %v6526 = vpop.f32.mrb[0].mxu0
      %6527 = vmatprep.mubr.bf16.mxu0 %v6016
      %6528 = vmatmul.mubr.bf16.gmra.mrb[0].mxu0 %v6015
      %v6529 = vpop.f32.mrb[0].mxu0
      %v6530 = vadd.f32 %v6119, %v6529
      %v6531 = vpop.f32.mrb[0].mxu0
      %v6532 = vpop.f32.mrb[0].mxu0
      %v6533 = vadd.f32 %v6119, %v6532
      %v6534 = vpop.f32.mrb[0].mxu0
      %6535 = vmatprep.mubr.bf16.mxu0 %v6021
      %6536 = vmatmul.mubr.bf16.gmra.mrb[0].mxu0 %v6020
      %v6537 = vpop.f32.mrb[0].mxu0
      %v6538 = vadd.f32 %v6119, %v6537
      %v6539 = vpop.f32.mrb[0].mxu0
      %v6540 = vpop.f32.mrb[0].mxu0
      %v6541 = vadd.f32 %v6119, %v6540
      %v6542 = vpop.f32.mrb[0].mxu0
      %6543 = vmatprep.mubr.bf16.mxu0 %v6026
      %6544 = vmatmul.mubr.bf16.gmra.mrb[0].mxu0 %v6025
      %v6545 = vpop.f32.mrb[0].mxu0
      %v6546 = vadd.f32 %v6119, %v6545
      %v6547 = vpop.f32.mrb[0].mxu0
      %v6548 = vpop.f32.mrb[0].mxu0
      %v6549 = vadd.f32 %v6119, %v6548
      %v6550 = vpop.f32.mrb[0].mxu0
      %6551 = vmatprep.mubr.bf16.mxu0 %v6031
      %6552 = vmatmul.mubr.bf16.gmra.mrb[0].mxu0 %v6030
      %v6553 = vpop.f32.mrb[0].mxu0
      %v6554 = vadd.f32 %v6119, %v6553
      %v6555 = vpop.f32.mrb[0].mxu0
      %v6556 = vpop.f32.mrb[0].mxu0
      %v6557 = vadd.f32 %v6119, %v6556
      %v6558 = vpop.f32.mrb[0].mxu0
      %6559 = vmatprep.mubr.bf16.mxu0 %v6036
      %6560 = vmatmul.mubr.bf16.gmra.mrb[0].mxu0 %v6035
      %v6561 = vpop.f32.mrb[0].mxu0
      %v6562 = vadd.f32 %v6119, %v6561
      %v6563 = vpop.f32.mrb[0].mxu0
      %v6564 = vpop.f32.mrb[0].mxu0
      %v6565 = vadd.f32 %v6119, %v6564
      %v6566 = vpop.f32.mrb[0].mxu0
      %6567 = vdwg.mxu0
      %6568 = vmatprep.subr.bf16.mxu0 0
      %6569 = vmatpush1.bf16.msra.mxu0 %v6281
      %6570 = vmatprep.subr.bf16.mxu0 0
      %6571 = vmatpush1.bf16.msra.mxu0 %v6282
      %6572 = vmatprep.subr.bf16.mxu0 0
      %6573 = vmatpush1.bf16.msra.mxu0 %v6283
      %6574 = vmatprep.subr.bf16.mxu0 0
      %6575 = vmatpush1.bf16.msra.mxu0 %v6284
      %6576 = vmatprep.subr.bf16.mxu0 0
      %6577 = vmatpush1.bf16.msra.mxu0 %v6285
      %6578 = vmatprep.subr.bf16.mxu0 0
      %6579 = vmatpush1.bf16.msra.mxu0 %v6286
      %6580 = vmatprep.subr.bf16.mxu0 0
      %6581 = vmatpush1.bf16.msra.mxu0 %v6287
      %6582 = vmatprep.subr.bf16.mxu0 0
      %6583 = vmatpush1.bf16.msra.mxu0 %v6288
      %6584 = vmatprep.subr.bf16.mxu0 0
      %6585 = vmatpush1.bf16.msra.mxu0 %v6289
      %6586 = vmatprep.subr.bf16.mxu0 0
      %6587 = vmatpush1.bf16.msra.mxu0 %v6290
      %6588 = vmatprep.subr.bf16.mxu0 0
      %6589 = vmatpush1.bf16.msra.mxu0 %v6291
      %6590 = vmatprep.subr.bf16.mxu0 0
      %6591 = vmatpush1.bf16.msra.mxu0 %v6292
      %6592 = vmatprep.subr.bf16.mxu0 0
      %6593 = vmatpush1.bf16.msra.mxu0 %v6293
      %6594 = vmatprep.subr.bf16.mxu0 0
      %6595 = vmatpush1.bf16.msra.mxu0 %v6294
      %6596 = vmatprep.subr.bf16.mxu0 0
      %6597 = vmatpush1.bf16.msra.mxu0 %v6295
      %6598 = vmatprep.subr.bf16.mxu0 0
      %6599 = vmatpush1.bf16.msra.mxu0 %v6296
      %6600 = vmatprep.mubr.bf16.mxu0 %v5953
      %6601 = vmatmul.mubr.bf16.gmra.mrb[0].mxu0 %v5952
      %v6602 = vpop.f32.mrb[0].mxu0
      %v6603 = vadd.f32 %v6426, %v6602
      %v6604 = vpop.f32.mrb[0].mxu0
      %v6605 = vpop.f32.mrb[0].mxu0
      %v6606 = vadd.f32 %v6429, %v6605
      %v6607 = vpop.f32.mrb[0].mxu0
      %6608 = vmatprep.mubr.bf16.mxu0 %v5958
      %6609 = vmatmul.mubr.bf16.gmra.mrb[0].mxu0 %v5957
      %v6610 = vpop.f32.mrb[0].mxu0
      %v6611 = vadd.f32 %v6434, %v6610
      %v6612 = vpop.f32.mrb[0].mxu0
      %v6613 = vpop.f32.mrb[0].mxu0
      %v6614 = vadd.f32 %v6437, %v6613
      %v6615 = vpop.f32.mrb[0].mxu0
      %6616 = vmatprep.mubr.bf16.mxu0 %v5963
      %6617 = vmatmul.mubr.bf16.gmra.mrb[0].mxu0 %v5962
      %v6618 = vpop.f32.mrb[0].mxu0
      %v6619 = vadd.f32 %v6442, %v6618
      %v6620 = vpop.f32.mrb[0].mxu0
      %v6621 = vpop.f32.mrb[0].mxu0
      %v6622 = vadd.f32 %v6445, %v6621
      %v6623 = vpop.f32.mrb[0].mxu0
      %6624 = vmatprep.mubr.bf16.mxu0 %v5968
      %6625 = vmatmul.mubr.bf16.gmra.mrb[0].mxu0 %v5967
      %v6626 = vpop.f32.mrb[0].mxu0
      %v6627 = vadd.f32 %v6450, %v6626
      %v6628 = vpop.f32.mrb[0].mxu0
      %v6629 = vpop.f32.mrb[0].mxu0
      %v6630 = vadd.f32 %v6453, %v6629
      %v6631 = vpop.f32.mrb[0].mxu0
      %6632 = vmatprep.mubr.bf16.mxu0 %v5973
      %6633 = vmatmul.mubr.bf16.gmra.mrb[0].mxu0 %v5972
      %v6634 = vpop.f32.mrb[0].mxu0
      %v6635 = vadd.f32 %v6458, %v6634
      %v6636 = vpop.f32.mrb[0].mxu0
      %v6637 = vpop.f32.mrb[0].mxu0
      %v6638 = vadd.f32 %v6461, %v6637
      %v6639 = vpop.f32.mrb[0].mxu0
      %6640 = vmatprep.mubr.bf16.mxu0 %v5978
      %6641 = vmatmul.mubr.bf16.gmra.mrb[0].mxu0 %v5977
      %v6642 = vpop.f32.mrb[0].mxu0
      %v6643 = vadd.f32 %v6466, %v6642
      %v6644 = vpop.f32.mrb[0].mxu0
      %v6645 = vpop.f32.mrb[0].mxu0
      %v6646 = vadd.f32 %v6469, %v6645
      %v6647 = vpop.f32.mrb[0].mxu0
      %6648 = vmatprep.mubr.bf16.mxu0 %v5983
      %6649 = vmatmul.mubr.bf16.gmra.mrb[0].mxu0 %v5982
      %v6650 = vpop.f32.mrb[0].mxu0
      %v6651 = vadd.f32 %v6474, %v6650
      %v6652 = vpop.f32.mrb[0].mxu0
      %v6653 = vpop.f32.mrb[0].mxu0
      %v6654 = vadd.f32 %v6477, %v6653
      %v6655 = vpop.f32.mrb[0].mxu0
      %6656 = vmatprep.mubr.bf16.mxu0 %v5988
      %6657 = vmatmul.mubr.bf16.gmra.mrb[0].mxu0 %v5987
      %v6658 = vpop.f32.mrb[0].mxu0
      %v6659 = vadd.f32 %v6482, %v6658
      %v6660 = vpop.f32.mrb[0].mxu0
      %v6661 = vpop.f32.mrb[0].mxu0
      %v6662 = vadd.f32 %v6485, %v6661
      %v6663 = vpop.f32.mrb[0].mxu0
      %6664 = vmatprep.mubr.bf16.mxu0 %v5993
      %6665 = vmatmul.mubr.bf16.gmra.mrb[0].mxu0 %v5992
      %v6666 = vpop.f32.mrb[0].mxu0
      %v6667 = vadd.f32 %v6490, %v6666
      %v6668 = vpop.f32.mrb[0].mxu0
      %v6669 = vpop.f32.mrb[0].mxu0
      %v6670 = vadd.f32 %v6493, %v6669
      %v6671 = vpop.f32.mrb[0].mxu0
      %6672 = vmatprep.mubr.bf16.mxu0 %v5998
      %6673 = vmatmul.mubr.bf16.gmra.mrb[0].mxu0 %v5997
      %v6674 = vpop.f32.mrb[0].mxu0
      %v6675 = vadd.f32 %v6498, %v6674
      %v6676 = vpop.f32.mrb[0].mxu0
      %v6677 = vpop.f32.mrb[0].mxu0
      %v6678 = vadd.f32 %v6501, %v6677
      %v6679 = vpop.f32.mrb[0].mxu0
      %6680 = vmatprep.mubr.bf16.mxu0 %v6003
      %6681 = vmatmul.mubr.bf16.gmra.mrb[0].mxu0 %v6002
      %v6682 = vpop.f32.mrb[0].mxu0
      %v6683 = vadd.f32 %v6506, %v6682
      %v6684 = vpop.f32.mrb[0].mxu0
      %v6685 = vpop.f32.mrb[0].mxu0
      %v6686 = vadd.f32 %v6509, %v6685
      %v6687 = vpop.f32.mrb[0].mxu0
      %6688 = vmatprep.mubr.bf16.mxu0 %v6008
      %6689 = vmatmul.mubr.bf16.gmra.mrb[0].mxu0 %v6007
      %v6690 = vpop.f32.mrb[0].mxu0
      %v6691 = vadd.f32 %v6514, %v6690
      %v6692 = vpop.f32.mrb[0].mxu0
      %v6693 = vpop.f32.mrb[0].mxu0
      %v6694 = vadd.f32 %v6517, %v6693
      %v6695 = vpop.f32.mrb[0].mxu0
      %6696 = vmatprep.mubr.bf16.mxu0 %v6013
      %6697 = vmatmul.mubr.bf16.gmra.mrb[0].mxu0 %v6012
      %v6698 = vpop.f32.mrb[0].mxu0
      %v6699 = vadd.f32 %v6522, %v6698
      %v6700 = vpop.f32.mrb[0].mxu0
      %v6701 = vpop.f32.mrb[0].mxu0
      %v6702 = vadd.f32 %v6525, %v6701
      %v6703 = vpop.f32.mrb[0].mxu0
      %6704 = vmatprep.mubr.bf16.mxu0 %v6018
      %6705 = vmatmul.mubr.bf16.gmra.mrb[0].mxu0 %v6017
      %v6706 = vpop.f32.mrb[0].mxu0
      %v6707 = vadd.f32 %v6530, %v6706
      %v6708 = vpop.f32.mrb[0].mxu0
      %v6709 = vpop.f32.mrb[0].mxu0
      %v6710 = vadd.f32 %v6533, %v6709
      %v6711 = vpop.f32.mrb[0].mxu0
      %6712 = vmatprep.mubr.bf16.mxu0 %v6023
      %6713 = vmatmul.mubr.bf16.gmra.mrb[0].mxu0 %v6022
      %v6714 = vpop.f32.mrb[0].mxu0
      %v6715 = vadd.f32 %v6538, %v6714
      %v6716 = vpop.f32.mrb[0].mxu0
      %v6717 = vpop.f32.mrb[0].mxu0
      %v6718 = vadd.f32 %v6541, %v6717
      %v6719 = vpop.f32.mrb[0].mxu0
      %6720 = vmatprep.mubr.bf16.mxu0 %v6028
      %6721 = vmatmul.mubr.bf16.gmra.mrb[0].mxu0 %v6027
      %v6722 = vpop.f32.mrb[0].mxu0
      %v6723 = vadd.f32 %v6546, %v6722
      %v6724 = vpop.f32.mrb[0].mxu0
      %v6725 = vpop.f32.mrb[0].mxu0
      %v6726 = vadd.f32 %v6549, %v6725
      %v6727 = vpop.f32.mrb[0].mxu0
      %6728 = vmatprep.mubr.bf16.mxu0 %v6033
      %6729 = vmatmul.mubr.bf16.gmra.mrb[0].mxu0 %v6032
      %v6730 = vpop.f32.mrb[0].mxu0
      %v6731 = vadd.f32 %v6554, %v6730
      %v6732 = vpop.f32.mrb[0].mxu0
      %v6733 = vpop.f32.mrb[0].mxu0
      %v6734 = vadd.f32 %v6557, %v6733
      %v6735 = vpop.f32.mrb[0].mxu0
      %6736 = vmatprep.mubr.bf16.mxu0 %v6038
      %6737 = vmatmul.mubr.bf16.gmra.mrb[0].mxu0 %v6037
      %v6738 = vpop.f32.mrb[0].mxu0
      %v6739 = vadd.f32 %v6562, %v6738
      %v6740 = vpop.f32.mrb[0].mxu0
      %v6741 = vpop.f32.mrb[0].mxu0
      %v6742 = vadd.f32 %v6565, %v6741
      %v6743 = vpop.f32.mrb[0].mxu0
      %6744 = vdwg.mxu0
      %6745 = vmatprep.subr.bf16.mxu0 0
      %6746 = vmatpush1.bf16.msra.mxu0 %v6297
      %6747 = vmatprep.subr.bf16.mxu0 0
      %6748 = vmatpush1.bf16.msra.mxu0 %v6298
      %6749 = vmatprep.subr.bf16.mxu0 0
      %6750 = vmatpush1.bf16.msra.mxu0 %v6299
      %6751 = vmatprep.subr.bf16.mxu0 0
      %6752 = vmatpush1.bf16.msra.mxu0 %v6300
      %6753 = vmatprep.subr.bf16.mxu0 0
      %6754 = vmatpush1.bf16.msra.mxu0 0
      %6755 = vmatprep.subr.bf16.mxu0 0
      %6756 = vmatpush1.bf16.msra.mxu0 0
      %6757 = vmatprep.subr.bf16.mxu0 0
      %6758 = vmatpush1.bf16.msra.mxu0 0
      %6759 = vmatprep.subr.bf16.mxu0 0
      %6760 = vmatpush1.bf16.msra.mxu0 0
      %6761 = vmatprep.subr.bf16.mxu0 0
      %6762 = vmatpush1.bf16.msra.mxu0 0
      %6763 = vmatprep.subr.bf16.mxu0 0
      %6764 = vmatpush1.bf16.msra.mxu0 0
      %6765 = vmatprep.subr.bf16.mxu0 0
      %6766 = vmatpush1.bf16.msra.mxu0 0
      %6767 = vmatprep.subr.bf16.mxu0 0
      %6768 = vmatpush1.bf16.msra.mxu0 0
      %6769 = vmatprep.subr.bf16.mxu0 0
      %6770 = vmatpush1.bf16.msra.mxu0 0
      %6771 = vmatprep.subr.bf16.mxu0 0
      %6772 = vmatpush1.bf16.msra.mxu0 0
      %6773 = vmatprep.subr.bf16.mxu0 0
      %6774 = vmatpush1.bf16.msra.mxu0 0
      %6775 = vmatprep.subr.bf16.mxu0 0
      %6776 = vmatpush1.bf16.msra.mxu0 0
      %6777 = vmatprep.mubr.bf16.mxu0 0
      %6778 = vmatmul.mubr.bf16.gmra.mrb[0].mxu0 %v6338
      %v6779 = vpop.f32.mrb[0].mxu0
      %v6780 = vadd.f32 %v6603, %v6779
      %v6781 = vpop.f32.mrb[0].mxu0
      %v6782 = vpop.f32.mrb[0].mxu0
      %v6783 = vadd.f32 %v6606, %v6782
      %v6784 = vpop.f32.mrb[0].mxu0
      %6785 = vmatprep.mubr.bf16.mxu0 0
      %6786 = vmatmul.mubr.bf16.gmra.mrb[0].mxu0 %v6341
      %v6787 = vpop.f32.mrb[0].mxu0
      %v6788 = vadd.f32 %v6611, %v6787
      %v6789 = vpop.f32.mrb[0].mxu0
      %v6790 = vpop.f32.mrb[0].mxu0
      %v6791 = vadd.f32 %v6614, %v6790
      %v6792 = vpop.f32.mrb[0].mxu0
      %6793 = vmatprep.mubr.bf16.mxu0 0
      %6794 = vmatmul.mubr.bf16.gmra.mrb[0].mxu0 %v6344
      %v6795 = vpop.f32.mrb[0].mxu0
      %v6796 = vadd.f32 %v6619, %v6795
      %v6797 = vpop.f32.mrb[0].mxu0
      %v6798 = vpop.f32.mrb[0].mxu0
      %v6799 = vadd.f32 %v6622, %v6798
      %v6800 = vpop.f32.mrb[0].mxu0
      %6801 = vmatprep.mubr.bf16.mxu0 0
      %6802 = vmatmul.mubr.bf16.gmra.mrb[0].mxu0 %v6347
      %v6803 = vpop.f32.mrb[0].mxu0
      %v6804 = vadd.f32 %v6627, %v6803
      %v6805 = vpop.f32.mrb[0].mxu0
      %v6806 = vpop.f32.mrb[0].mxu0
      %v6807 = vadd.f32 %v6630, %v6806
      %v6808 = vpop.f32.mrb[0].mxu0
      %6809 = vmatprep.mubr.bf16.mxu0 0
      %6810 = vmatmul.mubr.bf16.gmra.mrb[0].mxu0 %v6350
      %v6811 = vpop.f32.mrb[0].mxu0
      %v6812 = vadd.f32 %v6635, %v6811
      %v6813 = vpop.f32.mrb[0].mxu0
      %v6814 = vpop.f32.mrb[0].mxu0
      %v6815 = vadd.f32 %v6638, %v6814
      %v6816 = vpop.f32.mrb[0].mxu0
      %6817 = vmatprep.mubr.bf16.mxu0 0
      %6818 = vmatmul.mubr.bf16.gmra.mrb[0].mxu0 %v6353
      %v6819 = vpop.f32.mrb[0].mxu0
      %v6820 = vadd.f32 %v6643, %v6819
      %v6821 = vpop.f32.mrb[0].mxu0
      %v6822 = vpop.f32.mrb[0].mxu0
      %v6823 = vadd.f32 %v6646, %v6822
      %v6824 = vpop.f32.mrb[0].mxu0
      %6825 = vmatprep.mubr.bf16.mxu0 0
      %6826 = vmatmul.mubr.bf16.gmra.mrb[0].mxu0 %v6356
      %v6827 = vpop.f32.mrb[0].mxu0
      %v6828 = vadd.f32 %v6651, %v6827
      %v6829 = vpop.f32.mrb[0].mxu0
      %v6830 = vpop.f32.mrb[0].mxu0
      %v6831 = vadd.f32 %v6654, %v6830
      %v6832 = vpop.f32.mrb[0].mxu0
      %6833 = vmatprep.mubr.bf16.mxu0 0
      %6834 = vmatmul.mubr.bf16.gmra.mrb[0].mxu0 %v6359
      %v6835 = vpop.f32.mrb[0].mxu0
      %v6836 = vadd.f32 %v6659, %v6835
      %v6837 = vpop.f32.mrb[0].mxu0
      %v6838 = vpop.f32.mrb[0].mxu0
      %v6839 = vadd.f32 %v6662, %v6838
      %v6840 = vpop.f32.mrb[0].mxu0
      %6841 = vmatprep.mubr.bf16.mxu0 0
      %6842 = vmatmul.mubr.bf16.gmra.mrb[0].mxu0 %v6362
      %v6843 = vpop.f32.mrb[0].mxu0
      %v6844 = vadd.f32 %v6667, %v6843
      %v6845 = vpop.f32.mrb[0].mxu0
      %v6846 = vpop.f32.mrb[0].mxu0
      %v6847 = vadd.f32 %v6670, %v6846
      %v6848 = vpop.f32.mrb[0].mxu0
      %6849 = vmatprep.mubr.bf16.mxu0 0
      %6850 = vmatmul.mubr.bf16.gmra.mrb[0].mxu0 %v6365
      %v6851 = vpop.f32.mrb[0].mxu0
      %v6852 = vadd.f32 %v6675, %v6851
      %v6853 = vpop.f32.mrb[0].mxu0
      %v6854 = vpop.f32.mrb[0].mxu0
      %v6855 = vadd.f32 %v6678, %v6854
      %v6856 = vpop.f32.mrb[0].mxu0
      %6857 = vmatprep.mubr.bf16.mxu0 0
      %6858 = vmatmul.mubr.bf16.gmra.mrb[0].mxu0 %v6368
      %v6859 = vpop.f32.mrb[0].mxu0
      %v6860 = vadd.f32 %v6683, %v6859
      %v6861 = vpop.f32.mrb[0].mxu0
      %v6862 = vpop.f32.mrb[0].mxu0
      %v6863 = vadd.f32 %v6686, %v6862
      %v6864 = vpop.f32.mrb[0].mxu0
      %6865 = vmatprep.mubr.bf16.mxu0 0
      %6866 = vmatmul.mubr.bf16.gmra.mrb[0].mxu0 %v6371
      %v6867 = vpop.f32.mrb[0].mxu0
      %v6868 = vadd.f32 %v6691, %v6867
      %v6869 = vpop.f32.mrb[0].mxu0
      %v6870 = vpop.f32.mrb[0].mxu0
      %v6871 = vadd.f32 %v6694, %v6870
      %v6872 = vpop.f32.mrb[0].mxu0
      %6873 = vmatprep.mubr.bf16.mxu0 0
      %6874 = vmatmul.mubr.bf16.gmra.mrb[0].mxu0 %v6374
      %v6875 = vpop.f32.mrb[0].mxu0
      %v6876 = vadd.f32 %v6699, %v6875
      %v6877 = vpop.f32.mrb[0].mxu0
      %v6878 = vpop.f32.mrb[0].mxu0
      %v6879 = vadd.f32 %v6702, %v6878
      %v6880 = vpop.f32.mrb[0].mxu0
      %6881 = vmatprep.mubr.bf16.mxu0 0
      %6882 = vmatmul.mubr.bf16.gmra.mrb[0].mxu0 %v6377
      %v6883 = vpop.f32.mrb[0].mxu0
      %v6884 = vadd.f32 %v6707, %v6883
      %v6885 = vpop.f32.mrb[0].mxu0
      %v6886 = vpop.f32.mrb[0].mxu0
      %v6887 = vadd.f32 %v6710, %v6886
      %v6888 = vpop.f32.mrb[0].mxu0
      %6889 = vmatprep.mubr.bf16.mxu0 0
      %6890 = vmatmul.mubr.bf16.gmra.mrb[0].mxu0 %v6380
      %v6891 = vpop.f32.mrb[0].mxu0
      %v6892 = vadd.f32 %v6715, %v6891
      %v6893 = vpop.f32.mrb[0].mxu0
      %v6894 = vpop.f32.mrb[0].mxu0
      %v6895 = vadd.f32 %v6718, %v6894
      %v6896 = vpop.f32.mrb[0].mxu0
      %6897 = vmatprep.mubr.bf16.mxu0 0
      %6898 = vmatmul.mubr.bf16.gmra.mrb[0].mxu0 %v6383
      %v6899 = vpop.f32.mrb[0].mxu0
      %v6900 = vadd.f32 %v6723, %v6899
      %v6901 = vpop.f32.mrb[0].mxu0
      %v6902 = vpop.f32.mrb[0].mxu0
      %v6903 = vadd.f32 %v6726, %v6902
      %v6904 = vpop.f32.mrb[0].mxu0
      %6905 = vmatprep.mubr.bf16.mxu0 0
      %6906 = vmatmul.mubr.bf16.gmra.mrb[0].mxu0 %v6386
      %v6907 = vpop.f32.mrb[0].mxu0
      %v6908 = vadd.f32 %v6731, %v6907
      %v6909 = vpop.f32.mrb[0].mxu0
      %v6910 = vpop.f32.mrb[0].mxu0
      %v6911 = vadd.f32 %v6734, %v6910
      %v6912 = vpop.f32.mrb[0].mxu0
      %6913 = vmatprep.mubr.bf16.mxu0 0
      %6914 = vmatmul.mubr.bf16.gmra.mrb[0].mxu0 %v6389
      %v6915 = vpop.f32.mrb[0].mxu0
      %v6916 = vadd.f32 %v6739, %v6915
      %v6917 = vpop.f32.mrb[0].mxu0
      %v6918 = vpop.f32.mrb[0].mxu0
      %v6919 = vadd.f32 %v6742, %v6918
      %v6920 = vpop.f32.mrb[0].mxu0
      %6921 = vdwg.mxu0
      %vm6922 = vcmp.gt.f32.partialorder %v6780, 0.0
      %vm6923 = vcmp.gt.f32.partialorder %v6783, 0.0
      %vm6924 = vcmp.gt.f32.partialorder %v6788, 0.0
      %vm6925 = vcmp.gt.f32.partialorder %v6791, 0.0
      %vm6926 = vcmp.gt.f32.partialorder %v6796, 0.0
      %vm6927 = vcmp.gt.f32.partialorder %v6799, 0.0
      %vm6928 = vcmp.gt.f32.partialorder %v6804, 0.0
      %vm6929 = vcmp.gt.f32.partialorder %v6807, 0.0
      %vm6930 = vcmp.gt.f32.partialorder %v6812, 0.0
      %vm6931 = vcmp.gt.f32.partialorder %v6815, 0.0
      %vm6932 = vcmp.gt.f32.partialorder %v6820, 0.0
      %vm6933 = vcmp.gt.f32.partialorder %v6823, 0.0
      %vm6934 = vcmp.gt.f32.partialorder %v6828, 0.0
      %vm6935 = vcmp.gt.f32.partialorder %v6831, 0.0
      %vm6936 = vcmp.gt.f32.partialorder %v6836, 0.0
      %vm6937 = vcmp.gt.f32.partialorder %v6839, 0.0
      %vm6938 = vcmp.gt.f32.partialorder %v6844, 0.0
      %vm6939 = vcmp.gt.f32.partialorder %v6847, 0.0
      %vm6940 = vcmp.gt.f32.partialorder %v6852, 0.0
      %vm6941 = vcmp.gt.f32.partialorder %v6855, 0.0
      %vm6942 = vcmp.gt.f32.partialorder %v6860, 0.0
      %vm6943 = vcmp.gt.f32.partialorder %v6863, 0.0
      %vm6944 = vcmp.gt.f32.partialorder %v6868, 0.0
      %vm6945 = vcmp.gt.f32.partialorder %v6871, 0.0
      %vm6946 = vcmp.gt.f32.partialorder %v6876, 0.0
      %vm6947 = vcmp.gt.f32.partialorder %v6879, 0.0
      %vm6948 = vcmp.gt.f32.partialorder %v6884, 0.0
      %vm6949 = vcmp.gt.f32.partialorder %v6887, 0.0
      %vm6950 = vcmp.gt.f32.partialorder %v6892, 0.0
      %vm6951 = vcmp.gt.f32.partialorder %v6895, 0.0
      %vm6952 = vcmp.gt.f32.partialorder %v6900, 0.0
      %vm6953 = vcmp.gt.f32.partialorder %v6903, 0.0
      %vm6954 = vcmp.gt.f32.partialorder %v6908, 0.0
      %vm6955 = vcmp.gt.f32.partialorder %v6911, 0.0
      %vm6956 = vcmp.gt.f32.partialorder %v6916, 0.0
      %vm6957 = vcmp.gt.f32.partialorder %v6919, 0.0
      %v6958 = vmul.f32 %v6780, 0.01
      %v6959 = vmul.f32 %v6783, 0.01
      %v6960 = vmul.f32 %v6788, 0.01
      %v6961 = vmul.f32 %v6791, 0.01
      %v6962 = vmul.f32 %v6796, 0.01
      %v6963 = vmul.f32 %v6799, 0.01
      %v6964 = vmul.f32 %v6804, 0.01
      %v6965 = vmul.f32 %v6807, 0.01
      %v6966 = vmul.f32 %v6812, 0.01
      %v6967 = vmul.f32 %v6815, 0.01
      %v6968 = vmul.f32 %v6820, 0.01
      %v6969 = vmul.f32 %v6823, 0.01
      %v6970 = vmul.f32 %v6828, 0.01
      %v6971 = vmul.f32 %v6831, 0.01
      %v6972 = vmul.f32 %v6836, 0.01
      %v6973 = vmul.f32 %v6839, 0.01
      %v6974 = vmul.f32 %v6844, 0.01
      %v6975 = vmul.f32 %v6847, 0.01
      %v6976 = vmul.f32 %v6852, 0.01
      %v6977 = vmul.f32 %v6855, 0.01
      %v6978 = vmul.f32 %v6860, 0.01
      %v6979 = vmul.f32 %v6863, 0.01
      %v6980 = vmul.f32 %v6868, 0.01
      %v6981 = vmul.f32 %v6871, 0.01
      %v6982 = vmul.f32 %v6876, 0.01
      %v6983 = vmul.f32 %v6879, 0.01
      %v6984 = vmul.f32 %v6884, 0.01
      %v6985 = vmul.f32 %v6887, 0.01
      %v6986 = vmul.f32 %v6892, 0.01
      %v6987 = vmul.f32 %v6895, 0.01
      %v6988 = vmul.f32 %v6900, 0.01
      %v6989 = vmul.f32 %v6903, 0.01
      %v6990 = vmul.f32 %v6908, 0.01
      %v6991 = vmul.f32 %v6911, 0.01
      %v6992 = vmul.f32 %v6916, 0.01
      %v6993 = vmul.f32 %v6919, 0.01
      %v6994 = vsel %vm6922, %v6780, %v6958
      %v6995 = vsel %vm6923, %v6783, %v6959
      %v6996 = vsel %vm6924, %v6788, %v6960
      %v6997 = vsel %vm6925, %v6791, %v6961
      %v6998 = vsel %vm6926, %v6796, %v6962
      %v6999 = vsel %vm6927, %v6799, %v6963
      %v7000 = vsel %vm6928, %v6804, %v6964
      %v7001 = vsel %vm6929, %v6807, %v6965
      %v7002 = vsel %vm6930, %v6812, %v6966
      %v7003 = vsel %vm6931, %v6815, %v6967
      %v7004 = vsel %vm6932, %v6820, %v6968
      %v7005 = vsel %vm6933, %v6823, %v6969
      %v7006 = vsel %vm6934, %v6828, %v6970
      %v7007 = vsel %vm6935, %v6831, %v6971
      %v7008 = vsel %vm6936, %v6836, %v6972
      %v7009 = vsel %vm6937, %v6839, %v6973
      %v7010 = vsel %vm6938, %v6844, %v6974
      %v7011 = vsel %vm6939, %v6847, %v6975
      %v7012 = vsel %vm6940, %v6852, %v6976
      %v7013 = vsel %vm6941, %v6855, %v6977
      %v7014 = vsel %vm6942, %v6860, %v6978
      %v7015 = vsel %vm6943, %v6863, %v6979
      %v7016 = vsel %vm6944, %v6868, %v6980
      %v7017 = vsel %vm6945, %v6871, %v6981
      %v7018 = vsel %vm6946, %v6876, %v6982
      %v7019 = vsel %vm6947, %v6879, %v6983
      %v7020 = vsel %vm6948, %v6884, %v6984
      %v7021 = vsel %vm6949, %v6887, %v6985
      %v7022 = vsel %vm6950, %v6892, %v6986
      %v7023 = vsel %vm6951, %v6895, %v6987
      %v7024 = vsel %vm6952, %v6900, %v6988
      %v7025 = vsel %vm6953, %v6903, %v6989
      %v7026 = vsel %vm6954, %v6908, %v6990
      %v7027 = vsel %vm6955, %v6911, %v6991
      %v7028 = vsel %vm6956, %v6916, %v6992
      %v7029 = vsel %vm6957, %v6919, %v6993
      %v7030 = vld [vmem:[%s1] sm:$0xff]
      %v7031 = vld [vmem:[%s1 + $0x8] sm:$0xff]
      %v7032 = vld [vmem:[%s1 + $0x10] sm:$0xff]
      %v7033 = vld [vmem:[%s1 + $0x18] sm:$0xff]
      %v7034 = vld [vmem:[%s1 + $0x20] sm:$0xff]
      %v7035 = vld [vmem:[%s1 + $0x28] sm:$0xff]
      %v7036 = vld [vmem:[%s1 + $0x30] sm:$0xff]
      %v7037 = vld [vmem:[%s1 + $0x38] sm:$0xff]
      %v7038 = vld [vmem:[%s1 + $0x40] sm:$0xff]
      %v7039 = vld [vmem:[%s1 + $0x48] sm:$0xff]
      %v7040 = vld [vmem:[%s1 + $0x50] sm:$0xff]
      %v7041 = vld [vmem:[%s1 + $0x58] sm:$0xff]
      %v7042 = vld [vmem:[%s1 + $0x60] sm:$0xff]
      %v7043 = vld [vmem:[%s1 + $0x68] sm:$0xff]
      %v7044 = vld [vmem:[%s1 + $0x70] sm:$0xff]
      %v7045 = vld [vmem:[%s1 + $0x78] sm:$0xff]
      %v7046 = vld [vmem:[%s1 + $0x80] sm:$0xff]
      %v7047 = vld [vmem:[%s1 + $0x88] sm:$0xff]
      %v7048 = vld [vmem:[%s1 + $0x90] sm:$0xff]
      %v7049 = vld [vmem:[%s1 + $0x98] sm:$0xff]
      %v7050 = vld [vmem:[%s1 + $0xa0] sm:$0xff]
      %v7051 = vld [vmem:[%s1 + $0xa8] sm:$0xff]
      %v7052 = vld [vmem:[%s1 + $0xb0] sm:$0xff]
      %v7053 = vld [vmem:[%s1 + $0xb8] sm:$0xff]
      %v7054 = vld [vmem:[%s1 + $0xc0] sm:$0xff]
      %v7055 = vld [vmem:[%s1 + $0xc8] sm:$0xff]
      %v7056 = vld [vmem:[%s1 + $0xd0] sm:$0xff]
      %v7057 = vld [vmem:[%s1 + $0xd8] sm:$0xff]
      %v7058 = vld [vmem:[%s1 + $0xe0] sm:$0xff]
      %v7059 = vld [vmem:[%s1 + $0xe8] sm:$0xff]
      %v7060 = vld [vmem:[%s1 + $0xf0] sm:$0xff]
      %v7061 = vld [vmem:[%s1 + $0xf8] sm:$0xff]
      %v7062 = vld [vmem:[%s1 + $0x100] sm:$0xff]
      %v7063 = vld [vmem:[%s1 + $0x108] sm:$0xff]
      %v7064 = vld [vmem:[%s1 + $0x110] sm:$0xff]
      %v7065 = vld [vmem:[%s1 + $0x118] sm:$0xff]
      %7067 = vset.pattern.permute.xlu0 0
      %7068 = vperm.xlu0 %7067, %v7030
      %v7069 = vpop.permute.xlu0 %7068
      %7072 = vset.pattern.permute.xlu0 0
      %7073 = vperm.xlu0 %7072, %v7031
      %v7074 = vpop.permute.xlu0 %7073
      %7077 = vset.pattern.permute.xlu0 0
      %7078 = vperm.xlu0 %7077, %v7032
      %v7079 = vpop.permute.xlu0 %7078
      %7082 = vset.pattern.permute.xlu0 0
      %7083 = vperm.xlu0 %7082, %v7033
      %v7084 = vpop.permute.xlu0 %7083
      %7087 = vset.pattern.permute.xlu0 0
      %7088 = vperm.xlu0 %7087, %v7034
      %v7089 = vpop.permute.xlu0 %7088
      %7092 = vset.pattern.permute.xlu0 0
      %7093 = vperm.xlu0 %7092, %v7035
      %v7094 = vpop.permute.xlu0 %7093
      %7097 = vset.pattern.permute.xlu0 0
      %7098 = vperm.xlu0 %7097, %v7036
      %v7099 = vpop.permute.xlu0 %7098
      %7102 = vset.pattern.permute.xlu0 0
      %7103 = vperm.xlu0 %7102, %v7037
      %v7104 = vpop.permute.xlu0 %7103
      %7107 = vset.pattern.permute.xlu0 0
      %7108 = vperm.xlu0 %7107, %v7038
      %v7109 = vpop.permute.xlu0 %7108
      %7112 = vset.pattern.permute.xlu0 0
      %7113 = vperm.xlu0 %7112, %v7039
      %v7114 = vpop.permute.xlu0 %7113
      %7117 = vset.pattern.permute.xlu0 0
      %7118 = vperm.xlu0 %7117, %v7040
      %v7119 = vpop.permute.xlu0 %7118
      %7122 = vset.pattern.permute.xlu0 0
      %7123 = vperm.xlu0 %7122, %v7041
      %v7124 = vpop.permute.xlu0 %7123
      %7127 = vset.pattern.permute.xlu0 0
      %7128 = vperm.xlu0 %7127, %v7042
      %v7129 = vpop.permute.xlu0 %7128
      %7132 = vset.pattern.permute.xlu0 0
      %7133 = vperm.xlu0 %7132, %v7043
      %v7134 = vpop.permute.xlu0 %7133
      %7137 = vset.pattern.permute.xlu0 0
      %7138 = vperm.xlu0 %7137, %v7044
      %v7139 = vpop.permute.xlu0 %7138
      %7142 = vset.pattern.permute.xlu0 0
      %7143 = vperm.xlu0 %7142, %v7045
      %v7144 = vpop.permute.xlu0 %7143
      %7147 = vset.pattern.permute.xlu0 0
      %7148 = vperm.xlu0 %7147, %v7046
      %v7149 = vpop.permute.xlu0 %7148
      %7152 = vset.pattern.permute.xlu0 0
      %7153 = vperm.xlu0 %7152, %v7047
      %v7154 = vpop.permute.xlu0 %7153
      %7157 = vset.pattern.permute.xlu0 0
      %7158 = vperm.xlu0 %7157, %v7048
      %v7159 = vpop.permute.xlu0 %7158
      %7162 = vset.pattern.permute.xlu0 0
      %7163 = vperm.xlu0 %7162, %v7049
      %v7164 = vpop.permute.xlu0 %7163
      %7167 = vset.pattern.permute.xlu0 0
      %7168 = vperm.xlu0 %7167, %v7050
      %v7169 = vpop.permute.xlu0 %7168
      %7172 = vset.pattern.permute.xlu0 0
      %7173 = vperm.xlu0 %7172, %v7051
      %v7174 = vpop.permute.xlu0 %7173
      %7177 = vset.pattern.permute.xlu0 0
      %7178 = vperm.xlu0 %7177, %v7052
      %v7179 = vpop.permute.xlu0 %7178
      %7182 = vset.pattern.permute.xlu0 0
      %7183 = vperm.xlu0 %7182, %v7053
      %v7184 = vpop.permute.xlu0 %7183
      %7187 = vset.pattern.permute.xlu0 0
      %7188 = vperm.xlu0 %7187, %v7054
      %v7189 = vpop.permute.xlu0 %7188
      %7192 = vset.pattern.permute.xlu0 0
      %7193 = vperm.xlu0 %7192, %v7055
      %v7194 = vpop.permute.xlu0 %7193
      %7197 = vset.pattern.permute.xlu0 0
      %7198 = vperm.xlu0 %7197, %v7056
      %v7199 = vpop.permute.xlu0 %7198
      %7202 = vset.pattern.permute.xlu0 0
      %7203 = vperm.xlu0 %7202, %v7057
      %v7204 = vpop.permute.xlu0 %7203
      %7207 = vset.pattern.permute.xlu0 0
      %7208 = vperm.xlu0 %7207, %v7058
      %v7209 = vpop.permute.xlu0 %7208
      %7212 = vset.pattern.permute.xlu0 0
      %7213 = vperm.xlu0 %7212, %v7059
      %v7214 = vpop.permute.xlu0 %7213
      %7217 = vset.pattern.permute.xlu0 0
      %7218 = vperm.xlu0 %7217, %v7060
      %v7219 = vpop.permute.xlu0 %7218
      %7222 = vset.pattern.permute.xlu0 0
      %7223 = vperm.xlu0 %7222, %v7061
      %v7224 = vpop.permute.xlu0 %7223
      %7227 = vset.pattern.permute.xlu0 0
      %7228 = vperm.xlu0 %7227, %v7062
      %v7229 = vpop.permute.xlu0 %7228
      %7232 = vset.pattern.permute.xlu0 0
      %7233 = vperm.xlu0 %7232, %v7063
      %v7234 = vpop.permute.xlu0 %7233
      %7237 = vset.pattern.permute.xlu0 0
      %7238 = vperm.xlu0 %7237, %v7064
      %v7239 = vpop.permute.xlu0 %7238
      %7242 = vset.pattern.permute.xlu0 0
      %7243 = vperm.xlu0 %7242, %v7065
      %v7244 = vpop.permute.xlu0 %7243
      %v7246 = vmul.f32 %v6994, %v7069
      %v7247 = vmul.f32 %v6995, %v7074
      %v7248 = vmul.f32 %v6996, %v7079
      %v7249 = vmul.f32 %v6997, %v7084
      %v7250 = vmul.f32 %v6998, %v7089
      %v7251 = vmul.f32 %v6999, %v7094
      %v7252 = vmul.f32 %v7000, %v7099
      %v7253 = vmul.f32 %v7001, %v7104
      %v7254 = vmul.f32 %v7002, %v7109
      %v7255 = vmul.f32 %v7003, %v7114
      %v7256 = vmul.f32 %v7004, %v7119
      %v7257 = vmul.f32 %v7005, %v7124
      %v7258 = vmul.f32 %v7006, %v7129
      %v7259 = vmul.f32 %v7007, %v7134
      %v7260 = vmul.f32 %v7008, %v7139
      %v7261 = vmul.f32 %v7009, %v7144
      %v7262 = vmul.f32 %v7010, %v7149
      %v7263 = vmul.f32 %v7011, %v7154
      %v7264 = vmul.f32 %v7012, %v7159
      %v7265 = vmul.f32 %v7013, %v7164
      %v7266 = vmul.f32 %v7014, %v7169
      %v7267 = vmul.f32 %v7015, %v7174
      %v7268 = vmul.f32 %v7016, %v7179
      %v7269 = vmul.f32 %v7017, %v7184
      %v7270 = vmul.f32 %v7018, %v7189
      %v7271 = vmul.f32 %v7019, %v7194
      %v7272 = vmul.f32 %v7020, %v7199
      %v7273 = vmul.f32 %v7021, %v7204
      %v7274 = vmul.f32 %v7022, %v7209
      %v7275 = vmul.f32 %v7023, %v7214
      %v7276 = vmul.f32 %v7024, %v7219
      %v7277 = vmul.f32 %v7025, %v7224
      %v7278 = vmul.f32 %v7026, %v7229
      %v7279 = vmul.f32 %v7027, %v7234
      %v7280 = vmul.f32 %v7028, %v7239
      %v7281 = vmul.f32 %v7029, %v7244
      %v7282 = vpack.c.bf16 %v7247, %v7246
      %v7283 = vpack.c.bf16 %v7249, %v7248
      %v7284 = vpack.c.bf16 %v7251, %v7250
      %v7285 = vpack.c.bf16 %v7253, %v7252
      %v7286 = vpack.c.bf16 %v7255, %v7254
      %v7287 = vpack.c.bf16 %v7257, %v7256
      %v7288 = vpack.c.bf16 %v7259, %v7258
      %v7289 = vpack.c.bf16 %v7261, %v7260
      %v7290 = vpack.c.bf16 %v7263, %v7262
      %v7291 = vpack.c.bf16 %v7265, %v7264
      %v7292 = vpack.c.bf16 %v7267, %v7266
      %v7293 = vpack.c.bf16 %v7269, %v7268
      %v7294 = vpack.c.bf16 %v7271, %v7270
      %v7295 = vpack.c.bf16 %v7273, %v7272
      %v7296 = vpack.c.bf16 %v7275, %v7274
      %v7297 = vpack.c.bf16 %v7277, %v7276
      %v7298 = vpack.c.bf16 %v7279, %v7278
      %v7299 = vpack.c.bf16 %v7281, %v7280
      %7300 = vst.msk [vmem:[#allocation4 + $0x8] sm:$0xff] %vm253, %v7282
      %7301 = vst.msk [vmem:[#allocation4 + $0x18] sm:$0xff] %vm253, %v7283
      %7302 = vst.msk [vmem:[#allocation4 + $0x28] sm:$0xff] %vm253, %v7284
      %7303 = vst.msk [vmem:[#allocation4 + $0x38] sm:$0xff] %vm253, %v7285
      %7304 = vst.msk [vmem:[#allocation4 + $0x48] sm:$0xff] %vm253, %v7286
      %7305 = vst.msk [vmem:[#allocation4 + $0x58] sm:$0xff] %vm253, %v7287
      %7306 = vst.msk [vmem:[#allocation4 + $0x68] sm:$0xff] %vm253, %v7288
      %7307 = vst.msk [vmem:[#allocation4 + $0x78] sm:$0xff] %vm253, %v7289
      %7308 = vst.msk [vmem:[#allocation4 + $0x88] sm:$0xff] %vm253, %v7290
      %7309 = vst.msk [vmem:[#allocation4 + $0x98] sm:$0xff] %vm253, %v7291
      %7310 = vst.msk [vmem:[#allocation4 + $0xa8] sm:$0xff] %vm253, %v7292
      %7311 = vst.msk [vmem:[#allocation4 + $0xb8] sm:$0xff] %vm253, %v7293
      %7312 = vst.msk [vmem:[#allocation4 + $0xc8] sm:$0xff] %vm253, %v7294
      %7313 = vst.msk [vmem:[#allocation4 + $0xd8] sm:$0xff] %vm253, %v7295
      %7314 = vst.msk [vmem:[#allocation4 + $0xe8] sm:$0xff] %vm253, %v7296
      %7315 = vst.msk [vmem:[#allocation4 + $0xf8] sm:$0xff] %vm253, %v7297
      %7316 = vst.msk [vmem:[#allocation4 + $0x108] sm:$0xff] %vm253, %v7298
      %7317 = vst.msk [vmem:[#allocation4 + $0x118] sm:$0xff] %vm253, %v7299
      %7318 = vst.msk [vmem:[#allocation2 + $0x13] sm:$0xff] %vm253, %v7246
      %7319 = vst.msk [vmem:[#allocation2 + $0x1b] sm:$0xff] %vm253, %v7247
      %7320 = vst.msk [vmem:[#allocation2 + $0x23] sm:$0xff] %vm253, %v7248
      %7321 = vst.msk [vmem:[#allocation2 + $0x2b] sm:$0xff] %vm253, %v7249
      %7322 = vst.msk [vmem:[#allocation2 + $0x33] sm:$0xff] %vm253, %v7250
      %7323 = vst.msk [vmem:[#allocation2 + $0x3b] sm:$0xff] %vm253, %v7251
      %7324 = vst.msk [vmem:[#allocation2 + $0x43] sm:$0xff] %vm253, %v7252
      %7325 = vst.msk [vmem:[#allocation2 + $0x4b] sm:$0xff] %vm253, %v7253
      %7326 = vst.msk [vmem:[#allocation2 + $0x53] sm:$0xff] %vm253, %v7254
      %7327 = vst.msk [vmem:[#allocation2 + $0x5b] sm:$0xff] %vm253, %v7255
      %7328 = vst.msk [vmem:[#allocation2 + $0x63] sm:$0xff] %vm253, %v7256
      %7329 = vst.msk [vmem:[#allocation2 + $0x6b] sm:$0xff] %vm253, %v7257
      %7330 = vst.msk [vmem:[#allocation2 + $0x73] sm:$0xff] %vm253, %v7258
      %7331 = vst.msk [vmem:[#allocation2 + $0x7b] sm:$0xff] %vm253, %v7259
      %7332 = vst.msk [vmem:[#allocation2 + $0x83] sm:$0xff] %vm253, %v7260
      %7333 = vst.msk [vmem:[#allocation2 + $0x8b] sm:$0xff] %vm253, %v7261
      %7334 = vst.msk [vmem:[#allocation2 + $0x93] sm:$0xff] %vm253, %v7262
      %7335 = vst.msk [vmem:[#allocation2 + $0x9b] sm:$0xff] %vm253, %v7263
      %7336 = vst.msk [vmem:[#allocation2 + $0xa3] sm:$0xff] %vm253, %v7264
      %7337 = vst.msk [vmem:[#allocation2 + $0xab] sm:$0xff] %vm253, %v7265
      %7338 = vst.msk [vmem:[#allocation2 + $0xb3] sm:$0xff] %vm253, %v7266
      %7339 = vst.msk [vmem:[#allocation2 + $0xbb] sm:$0xff] %vm253, %v7267
      %7340 = vst.msk [vmem:[#allocation2 + $0xc3] sm:$0xff] %vm253, %v7268
      %7341 = vst.msk [vmem:[#allocation2 + $0xcb] sm:$0xff] %vm253, %v7269
      %7342 = vst.msk [vmem:[#allocation2 + $0xd3] sm:$0xff] %vm253, %v7270
      %7343 = vst.msk [vmem:[#allocation2 + $0xdb] sm:$0xff] %vm253, %v7271
      %7344 = vst.msk [vmem:[#allocation2 + $0xe3] sm:$0xff] %vm253, %v7272
      %7345 = vst.msk [vmem:[#allocation2 + $0xeb] sm:$0xff] %vm253, %v7273
      %7346 = vst.msk [vmem:[#allocation2 + $0xf3] sm:$0xff] %vm253, %v7274
      %7347 = vst.msk [vmem:[#allocation2 + $0xfb] sm:$0xff] %vm253, %v7275
      %7348 = vst.msk [vmem:[#allocation2 + $0x103] sm:$0xff] %vm253, %v7276
      %7349 = vst.msk [vmem:[#allocation2 + $0x10b] sm:$0xff] %vm253, %v7277
      %7350 = vst.msk [vmem:[#allocation2 + $0x113] sm:$0xff] %vm253, %v7278
      %7351 = vst.msk [vmem:[#allocation2 + $0x11b] sm:$0xff] %vm253, %v7279
      %7352 = vst.msk [vmem:[#allocation2 + $0x123] sm:$0xff] %vm253, %v7280
      %7353 = vst.msk [vmem:[#allocation2 + $0x12b] sm:$0xff] %vm253, %v7281
      %v7354 = vld [vmem:[#allocation2] sm:$0xff]
      %v7355 = vld [vmem:[#allocation2 + $0x8] sm:$0xff]
      %v7356 = vld [vmem:[#allocation2 + $0x10] sm:$0xff]
      %v7357 = vld [vmem:[#allocation2 + $0x18] sm:$0xff]
      %v7358 = vld [vmem:[#allocation2 + $0x20] sm:$0xff]
      %v7359 = vld [vmem:[#allocation2 + $0x28] sm:$0xff]
      %v7360 = vld [vmem:[#allocation2 + $0x30] sm:$0xff]
      %v7361 = vld [vmem:[#allocation2 + $0x38] sm:$0xff]
      %v7362 = vld [vmem:[#allocation2 + $0x40] sm:$0xff]
      %v7363 = vld [vmem:[#allocation2 + $0x48] sm:$0xff]
      %v7364 = vld [vmem:[#allocation2 + $0x50] sm:$0xff]
      %v7365 = vld [vmem:[#allocation2 + $0x58] sm:$0xff]
      %v7366 = vld [vmem:[#allocation2 + $0x60] sm:$0xff]
      %v7367 = vld [vmem:[#allocation2 + $0x68] sm:$0xff]
      %v7368 = vld [vmem:[#allocation2 + $0x70] sm:$0xff]
      %v7369 = vld [vmem:[#allocation2 + $0x78] sm:$0xff]
      %v7370 = vld [vmem:[#allocation2 + $0x80] sm:$0xff]
      %v7371 = vld [vmem:[#allocation2 + $0x88] sm:$0xff]
      %v7372 = vld [vmem:[#allocation2 + $0x90] sm:$0xff]
      %v7373 = vld [vmem:[#allocation2 + $0x98] sm:$0xff]
      %v7374 = vld [vmem:[#allocation2 + $0xa0] sm:$0xff]
      %v7375 = vld [vmem:[#allocation2 + $0xa8] sm:$0xff]
      %v7376 = vld [vmem:[#allocation2 + $0xb0] sm:$0xff]
      %v7377 = vld [vmem:[#allocation2 + $0xb8] sm:$0xff]
      %v7378 = vld [vmem:[#allocation2 + $0xc0] sm:$0xff]
      %v7379 = vld [vmem:[#allocation2 + $0xc8] sm:$0xff]
      %v7380 = vld [vmem:[#allocation2 + $0xd0] sm:$0xff]
      %v7381 = vld [vmem:[#allocation2 + $0xd8] sm:$0xff]
      %v7382 = vld [vmem:[#allocation2 + $0xe0] sm:$0xff]
      %v7383 = vld [vmem:[#allocation2 + $0xe8] sm:$0xff]
      %v7384 = vld [vmem:[#allocation2 + $0xf0] sm:$0xff]
      %v7385 = vld [vmem:[#allocation2 + $0xf8] sm:$0xff]
      %v7386 = vld [vmem:[#allocation2 + $0x100] sm:$0xff]
      %v7387 = vld [vmem:[#allocation2 + $0x108] sm:$0xff]
      %v7388 = vld [vmem:[#allocation2 + $0x110] sm:$0xff]
      %v7389 = vld [vmem:[#allocation2 + $0x118] sm:$0xff]
      %v7390 = vpack.c.bf16 %v7355, %v7354
      %v7391 = vpack.c.bf16 %v7357, %v7356
      %v7392 = vpack.c.bf16 %v7359, %v7358
      %v7393 = vpack.c.bf16 %v7361, %v7360
      %v7394 = vpack.c.bf16 %v7363, %v7362
      %v7395 = vpack.c.bf16 %v7365, %v7364
      %v7396 = vpack.c.bf16 %v7367, %v7366
      %v7397 = vpack.c.bf16 %v7369, %v7368
      %v7398 = vpack.c.bf16 %v7371, %v7370
      %v7399 = vpack.c.bf16 %v7373, %v7372
      %v7400 = vpack.c.bf16 %v7375, %v7374
      %v7401 = vpack.c.bf16 %v7377, %v7376
      %v7402 = vpack.c.bf16 %v7379, %v7378
      %v7403 = vpack.c.bf16 %v7381, %v7380
      %v7404 = vpack.c.bf16 %v7383, %v7382
      %v7405 = vpack.c.bf16 %v7385, %v7384
      %v7406 = vpack.c.bf16 %v7387, %v7386
      %v7407 = vpack.c.bf16 %v7389, %v7388
      %7408 = vst.msk [vmem:[#allocation3] sm:$0xff] %vm253, %v7390
      %7409 = vst.msk [vmem:[#allocation3 + $0x28] sm:$0xff] %vm253, %v7391
      %7410 = vst.msk [vmem:[#allocation3 + $0x50] sm:$0xff] %vm253, %v7392
      %7411 = vst.msk [vmem:[#allocation3 + $0x78] sm:$0xff] %vm253, %v7393
      %7412 = vst.msk [vmem:[#allocation3 + $0xa0] sm:$0xff] %vm253, %v7394
      %7413 = vst.msk [vmem:[#allocation3 + $0xc8] sm:$0xff] %vm253, %v7395
      %7414 = vst.msk [vmem:[#allocation3 + $0xf0] sm:$0xff] %vm253, %v7396
      %7415 = vst.msk [vmem:[#allocation3 + $0x118] sm:$0xff] %vm253, %v7397
      %7416 = vst.msk [vmem:[#allocation3 + $0x140] sm:$0xff] %vm253, %v7398
      %7417 = vst.msk [vmem:[#allocation3 + $0x168] sm:$0xff] %vm253, %v7399
      %7418 = vst.msk [vmem:[#allocation3 + $0x190] sm:$0xff] %vm253, %v7400
      %7419 = vst.msk [vmem:[#allocation3 + $0x1b8] sm:$0xff] %vm253, %v7401
      %7420 = vst.msk [vmem:[#allocation3 + $0x1e0] sm:$0xff] %vm253, %v7402
      %7421 = vst.msk [vmem:[#allocation3 + $0x208] sm:$0xff] %vm253, %v7403
      %7422 = vst.msk [vmem:[#allocation3 + $0x230] sm:$0xff] %vm253, %v7404
      %7423 = vst.msk [vmem:[#allocation3 + $0x258] sm:$0xff] %vm253, %v7405
      %7424 = vst.msk [vmem:[#allocation3 + $0x280] sm:$0xff] %vm253, %v7406
      %7425 = vst.msk [vmem:[#allocation3 + $0x2a8] sm:$0xff] %vm253, %v7407
      %v7426 = vld [vmem:[#allocation2 + $0x1] sm:$0xff]
      %v7427 = vld [vmem:[#allocation2 + $0x9] sm:$0xff]
      %v7428 = vld [vmem:[#allocation2 + $0x11] sm:$0xff]
      %v7429 = vld [vmem:[#allocation2 + $0x19] sm:$0xff]
      %v7430 = vld [vmem:[#allocation2 + $0x21] sm:$0xff]
      %v7431 = vld [vmem:[#allocation2 + $0x29] sm:$0xff]
      %v7432 = vld [vmem:[#allocation2 + $0x31] sm:$0xff]
      %v7433 = vld [vmem:[#allocation2 + $0x39] sm:$0xff]
      %v7434 = vld [vmem:[#allocation2 + $0x41] sm:$0xff]
      %v7435 = vld [vmem:[#allocation2 + $0x49] sm:$0xff]
      %v7436 = vld [vmem:[#allocation2 + $0x51] sm:$0xff]
      %v7437 = vld [vmem:[#allocation2 + $0x59] sm:$0xff]
      %v7438 = vld [vmem:[#allocation2 + $0x61] sm:$0xff]
      %v7439 = vld [vmem:[#allocation2 + $0x69] sm:$0xff]
      %v7440 = vld [vmem:[#allocation2 + $0x71] sm:$0xff]
      %v7441 = vld [vmem:[#allocation2 + $0x79] sm:$0xff]
      %v7442 = vld [vmem:[#allocation2 + $0x81] sm:$0xff]
      %v7443 = vld [vmem:[#allocation2 + $0x89] sm:$0xff]
      %v7444 = vld [vmem:[#allocation2 + $0x91] sm:$0xff]
      %v7445 = vld [vmem:[#allocation2 + $0x99] sm:$0xff]
      %v7446 = vld [vmem:[#allocation2 + $0xa1] sm:$0xff]
      %v7447 = vld [vmem:[#allocation2 + $0xa9] sm:$0xff]
      %v7448 = vld [vmem:[#allocation2 + $0xb1] sm:$0xff]
      %v7449 = vld [vmem:[#allocation2 + $0xb9] sm:$0xff]
      %v7450 = vld [vmem:[#allocation2 + $0xc1] sm:$0xff]
      %v7451 = vld [vmem:[#allocation2 + $0xc9] sm:$0xff]
      %v7452 = vld [vmem:[#allocation2 + $0xd1] sm:$0xff]
      %v7453 = vld [vmem:[#allocation2 + $0xd9] sm:$0xff]
      %v7454 = vld [vmem:[#allocation2 + $0xe1] sm:$0xff]
      %v7455 = vld [vmem:[#allocation2 + $0xe9] sm:$0xff]
      %v7456 = vld [vmem:[#allocation2 + $0xf1] sm:$0xff]
      %v7457 = vld [vmem:[#allocation2 + $0xf9] sm:$0xff]
      %v7458 = vld [vmem:[#allocation2 + $0x101] sm:$0xff]
      %v7459 = vld [vmem:[#allocation2 + $0x109] sm:$0xff]
      %v7460 = vld [vmem:[#allocation2 + $0x111] sm:$0xff]
      %v7461 = vld [vmem:[#allocation2 + $0x119] sm:$0xff]
      %v7462 = vpack.c.bf16 %v7427, %v7426
      %v7463 = vpack.c.bf16 %v7429, %v7428
      %v7464 = vpack.c.bf16 %v7431, %v7430
      %v7465 = vpack.c.bf16 %v7433, %v7432
      %v7466 = vpack.c.bf16 %v7435, %v7434
      %v7467 = vpack.c.bf16 %v7437, %v7436
      %v7468 = vpack.c.bf16 %v7439, %v7438
      %v7469 = vpack.c.bf16 %v7441, %v7440
      %v7470 = vpack.c.bf16 %v7443, %v7442
      %v7471 = vpack.c.bf16 %v7445, %v7444
      %v7472 = vpack.c.bf16 %v7447, %v7446
      %v7473 = vpack.c.bf16 %v7449, %v7448
      %v7474 = vpack.c.bf16 %v7451, %v7450
      %v7475 = vpack.c.bf16 %v7453, %v7452
      %v7476 = vpack.c.bf16 %v7455, %v7454
      %v7477 = vpack.c.bf16 %v7457, %v7456
      %v7478 = vpack.c.bf16 %v7459, %v7458
      %v7479 = vpack.c.bf16 %v7461, %v7460
      %7498 = vrot.lane.b32.xlu0 %v7462, 64
      %v7499 = vpop.permute.xlu0 %7498
      %7500 = vrot.lane.b32.xlu0 %v7463, 64
      %v7501 = vpop.permute.xlu0 %7500
      %7502 = vrot.lane.b32.xlu0 %v7464, 64
      %v7503 = vpop.permute.xlu0 %7502
      %7504 = vrot.lane.b32.xlu0 %v7465, 64
      %v7505 = vpop.permute.xlu0 %7504
      %7506 = vrot.lane.b32.xlu0 %v7466, 64
      %v7507 = vpop.permute.xlu0 %7506
      %7508 = vrot.lane.b32.xlu0 %v7467, 64
      %v7509 = vpop.permute.xlu0 %7508
      %7510 = vrot.lane.b32.xlu0 %v7468, 64
      %v7511 = vpop.permute.xlu0 %7510
      %7512 = vrot.lane.b32.xlu0 %v7469, 64
      %v7513 = vpop.permute.xlu0 %7512
      %7514 = vrot.lane.b32.xlu0 %v7470, 64
      %v7515 = vpop.permute.xlu0 %7514
      %7516 = vrot.lane.b32.xlu0 %v7471, 64
      %v7517 = vpop.permute.xlu0 %7516
      %7518 = vrot.lane.b32.xlu0 %v7472, 64
      %v7519 = vpop.permute.xlu0 %7518
      %7520 = vrot.lane.b32.xlu0 %v7473, 64
      %v7521 = vpop.permute.xlu0 %7520
      %7522 = vrot.lane.b32.xlu0 %v7474, 64
      %v7523 = vpop.permute.xlu0 %7522
      %7524 = vrot.lane.b32.xlu0 %v7475, 64
      %v7525 = vpop.permute.xlu0 %7524
      %7526 = vrot.lane.b32.xlu0 %v7476, 64
      %v7527 = vpop.permute.xlu0 %7526
      %7528 = vrot.lane.b32.xlu0 %v7477, 64
      %v7529 = vpop.permute.xlu0 %7528
      %7530 = vrot.lane.b32.xlu0 %v7478, 64
      %v7531 = vpop.permute.xlu0 %7530
      %7532 = vrot.lane.b32.xlu0 %v7479, 64
      %v7533 = vpop.permute.xlu0 %7532
      %7552 = vst.msk [vmem:[#allocation3] sm:$0xff] %vm461, %v7499
      %7553 = vst.msk [vmem:[#allocation3 + $0x28] sm:$0xff] %vm461, %v7501
      %7554 = vst.msk [vmem:[#allocation3 + $0x50] sm:$0xff] %vm461, %v7503
      %7555 = vst.msk [vmem:[#allocation3 + $0x78] sm:$0xff] %vm461, %v7505
      %7556 = vst.msk [vmem:[#allocation3 + $0xa0] sm:$0xff] %vm461, %v7507
      %7557 = vst.msk [vmem:[#allocation3 + $0xc8] sm:$0xff] %vm461, %v7509
      %7558 = vst.msk [vmem:[#allocation3 + $0xf0] sm:$0xff] %vm461, %v7511
      %7559 = vst.msk [vmem:[#allocation3 + $0x118] sm:$0xff] %vm461, %v7513
      %7560 = vst.msk [vmem:[#allocation3 + $0x140] sm:$0xff] %vm461, %v7515
      %7561 = vst.msk [vmem:[#allocation3 + $0x168] sm:$0xff] %vm461, %v7517
      %7562 = vst.msk [vmem:[#allocation3 + $0x190] sm:$0xff] %vm461, %v7519
      %7563 = vst.msk [vmem:[#allocation3 + $0x1b8] sm:$0xff] %vm461, %v7521
      %7564 = vst.msk [vmem:[#allocation3 + $0x1e0] sm:$0xff] %vm461, %v7523
      %7565 = vst.msk [vmem:[#allocation3 + $0x208] sm:$0xff] %vm461, %v7525
      %7566 = vst.msk [vmem:[#allocation3 + $0x230] sm:$0xff] %vm461, %v7527
      %7567 = vst.msk [vmem:[#allocation3 + $0x258] sm:$0xff] %vm461, %v7529
      %7568 = vst.msk [vmem:[#allocation3 + $0x280] sm:$0xff] %vm461, %v7531
      %7569 = vst.msk [vmem:[#allocation3 + $0x2a8] sm:$0xff] %vm461, %v7533
      %v7570 = vld [vmem:[#allocation2 + $0x2] sm:$0xff]
      %v7571 = vld [vmem:[#allocation2 + $0xa] sm:$0xff]
      %v7572 = vld [vmem:[#allocation2 + $0x12] sm:$0xff]
      %v7573 = vld [vmem:[#allocation2 + $0x1a] sm:$0xff]
      %v7574 = vld [vmem:[#allocation2 + $0x22] sm:$0xff]
      %v7575 = vld [vmem:[#allocation2 + $0x2a] sm:$0xff]
      %v7576 = vld [vmem:[#allocation2 + $0x32] sm:$0xff]
      %v7577 = vld [vmem:[#allocation2 + $0x3a] sm:$0xff]
      %v7578 = vld [vmem:[#allocation2 + $0x42] sm:$0xff]
      %v7579 = vld [vmem:[#allocation2 + $0x4a] sm:$0xff]
      %v7580 = vld [vmem:[#allocation2 + $0x52] sm:$0xff]
      %v7581 = vld [vmem:[#allocation2 + $0x5a] sm:$0xff]
      %v7582 = vld [vmem:[#allocation2 + $0x62] sm:$0xff]
      %v7583 = vld [vmem:[#allocation2 + $0x6a] sm:$0xff]
      %v7584 = vld [vmem:[#allocation2 + $0x72] sm:$0xff]
      %v7585 = vld [vmem:[#allocation2 + $0x7a] sm:$0xff]
      %v7586 = vld [vmem:[#allocation2 + $0x82] sm:$0xff]
      %v7587 = vld [vmem:[#allocation2 + $0x8a] sm:$0xff]
      %v7588 = vld [vmem:[#allocation2 + $0x92] sm:$0xff]
      %v7589 = vld [vmem:[#allocation2 + $0x9a] sm:$0xff]
      %v7590 = vld [vmem:[#allocation2 + $0xa2] sm:$0xff]
      %v7591 = vld [vmem:[#allocation2 + $0xaa] sm:$0xff]
      %v7592 = vld [vmem:[#allocation2 + $0xb2] sm:$0xff]
      %v7593 = vld [vmem:[#allocation2 + $0xba] sm:$0xff]
      %v7594 = vld [vmem:[#allocation2 + $0xc2] sm:$0xff]
      %v7595 = vld [vmem:[#allocation2 + $0xca] sm:$0xff]
      %v7596 = vld [vmem:[#allocation2 + $0xd2] sm:$0xff]
      %v7597 = vld [vmem:[#allocation2 + $0xda] sm:$0xff]
      %v7598 = vld [vmem:[#allocation2 + $0xe2] sm:$0xff]
      %v7599 = vld [vmem:[#allocation2 + $0xea] sm:$0xff]
      %v7600 = vld [vmem:[#allocation2 + $0xf2] sm:$0xff]
      %v7601 = vld [vmem:[#allocation2 + $0xfa] sm:$0xff]
      %v7602 = vld [vmem:[#allocation2 + $0x102] sm:$0xff]
      %v7603 = vld [vmem:[#allocation2 + $0x10a] sm:$0xff]
      %v7604 = vld [vmem:[#allocation2 + $0x112] sm:$0xff]
      %v7605 = vld [vmem:[#allocation2 + $0x11a] sm:$0xff]
      %v7606 = vpack.c.bf16 %v7571, %v7570
      %v7607 = vpack.c.bf16 %v7573, %v7572
      %v7608 = vpack.c.bf16 %v7575, %v7574
      %v7609 = vpack.c.bf16 %v7577, %v7576
      %v7610 = vpack.c.bf16 %v7579, %v7578
      %v7611 = vpack.c.bf16 %v7581, %v7580
      %v7612 = vpack.c.bf16 %v7583, %v7582
      %v7613 = vpack.c.bf16 %v7585, %v7584
      %v7614 = vpack.c.bf16 %v7587, %v7586
      %v7615 = vpack.c.bf16 %v7589, %v7588
      %v7616 = vpack.c.bf16 %v7591, %v7590
      %v7617 = vpack.c.bf16 %v7593, %v7592
      %v7618 = vpack.c.bf16 %v7595, %v7594
      %v7619 = vpack.c.bf16 %v7597, %v7596
      %v7620 = vpack.c.bf16 %v7599, %v7598
      %v7621 = vpack.c.bf16 %v7601, %v7600
      %v7622 = vpack.c.bf16 %v7603, %v7602
      %v7623 = vpack.c.bf16 %v7605, %v7604
      %7624 = vst.msk [vmem:[#allocation3 + $0x8] sm:$0xff] %vm253, %v7606
      %7625 = vst.msk [vmem:[#allocation3 + $0x30] sm:$0xff] %vm253, %v7607
      %7626 = vst.msk [vmem:[#allocation3 + $0x58] sm:$0xff] %vm253, %v7608
      %7627 = vst.msk [vmem:[#allocation3 + $0x80] sm:$0xff] %vm253, %v7609
      %7628 = vst.msk [vmem:[#allocation3 + $0xa8] sm:$0xff] %vm253, %v7610
      %7629 = vst.msk [vmem:[#allocation3 + $0xd0] sm:$0xff] %vm253, %v7611
      %7630 = vst.msk [vmem:[#allocation3 + $0xf8] sm:$0xff] %vm253, %v7612
      %7631 = vst.msk [vmem:[#allocation3 + $0x120] sm:$0xff] %vm253, %v7613
      %7632 = vst.msk [vmem:[#allocation3 + $0x148] sm:$0xff] %vm253, %v7614
      %7633 = vst.msk [vmem:[#allocation3 + $0x170] sm:$0xff] %vm253, %v7615
      %7634 = vst.msk [vmem:[#allocation3 + $0x198] sm:$0xff] %vm253, %v7616
      %7635 = vst.msk [vmem:[#allocation3 + $0x1c0] sm:$0xff] %vm253, %v7617
      %7636 = vst.msk [vmem:[#allocation3 + $0x1e8] sm:$0xff] %vm253, %v7618
      %7637 = vst.msk [vmem:[#allocation3 + $0x210] sm:$0xff] %vm253, %v7619
      %7638 = vst.msk [vmem:[#allocation3 + $0x238] sm:$0xff] %vm253, %v7620
      %7639 = vst.msk [vmem:[#allocation3 + $0x260] sm:$0xff] %vm253, %v7621
      %7640 = vst.msk [vmem:[#allocation3 + $0x288] sm:$0xff] %vm253, %v7622
      %7641 = vst.msk [vmem:[#allocation3 + $0x2b0] sm:$0xff] %vm253, %v7623
      %v7642 = vld [vmem:[#allocation2 + $0x12] sm:$0xff]
      %v7643 = vld [vmem:[#allocation2 + $0x1a] sm:$0xff]
      %v7644 = vld [vmem:[#allocation2 + $0x22] sm:$0xff]
      %v7645 = vld [vmem:[#allocation2 + $0x2a] sm:$0xff]
      %v7646 = vld [vmem:[#allocation2 + $0x32] sm:$0xff]
      %v7647 = vld [vmem:[#allocation2 + $0x3a] sm:$0xff]
      %v7648 = vld [vmem:[#allocation2 + $0x42] sm:$0xff]
      %v7649 = vld [vmem:[#allocation2 + $0x4a] sm:$0xff]
      %v7650 = vld [vmem:[#allocation2 + $0x52] sm:$0xff]
      %v7651 = vld [vmem:[#allocation2 + $0x5a] sm:$0xff]
      %v7652 = vld [vmem:[#allocation2 + $0x62] sm:$0xff]
      %v7653 = vld [vmem:[#allocation2 + $0x6a] sm:$0xff]
      %v7654 = vld [vmem:[#allocation2 + $0x72] sm:$0xff]
      %v7655 = vld [vmem:[#allocation2 + $0x7a] sm:$0xff]
      %v7656 = vld [vmem:[#allocation2 + $0x82] sm:$0xff]
      %v7657 = vld [vmem:[#allocation2 + $0x8a] sm:$0xff]
      %v7658 = vld [vmem:[#allocation2 + $0x92] sm:$0xff]
      %v7659 = vld [vmem:[#allocation2 + $0x9a] sm:$0xff]
      %v7660 = vld [vmem:[#allocation2 + $0xa2] sm:$0xff]
      %v7661 = vld [vmem:[#allocation2 + $0xaa] sm:$0xff]
      %v7662 = vld [vmem:[#allocation2 + $0xb2] sm:$0xff]
      %v7663 = vld [vmem:[#allocation2 + $0xba] sm:$0xff]
      %v7664 = vld [vmem:[#allocation2 + $0xc2] sm:$0xff]
      %v7665 = vld [vmem:[#allocation2 + $0xca] sm:$0xff]
      %v7666 = vld [vmem:[#allocation2 + $0xd2] sm:$0xff]
      %v7667 = vld [vmem:[#allocation2 + $0xda] sm:$0xff]
      %v7668 = vld [vmem:[#allocation2 + $0xe2] sm:$0xff]
      %v7669 = vld [vmem:[#allocation2 + $0xea] sm:$0xff]
      %v7670 = vld [vmem:[#allocation2 + $0xf2] sm:$0xff]
      %v7671 = vld [vmem:[#allocation2 + $0xfa] sm:$0xff]
      %v7672 = vld [vmem:[#allocation2 + $0x102] sm:$0xff]
      %v7673 = vld [vmem:[#allocation2 + $0x10a] sm:$0xff]
      %v7674 = vld [vmem:[#allocation2 + $0x112] sm:$0xff]
      %v7675 = vld [vmem:[#allocation2 + $0x11a] sm:$0xff]
      %v7676 = vld [vmem:[#allocation2 + $0x122] sm:$0xff]
      %v7677 = vld [vmem:[#allocation2 + $0x12a] sm:$0xff]
      %v7678 = vpack.c.bf16 %v7643, %v7642
      %v7679 = vpack.c.bf16 %v7645, %v7644
      %v7680 = vpack.c.bf16 %v7647, %v7646
      %v7681 = vpack.c.bf16 %v7649, %v7648
      %v7682 = vpack.c.bf16 %v7651, %v7650
      %v7683 = vpack.c.bf16 %v7653, %v7652
      %v7684 = vpack.c.bf16 %v7655, %v7654
      %v7685 = vpack.c.bf16 %v7657, %v7656
      %v7686 = vpack.c.bf16 %v7659, %v7658
      %v7687 = vpack.c.bf16 %v7661, %v7660
      %v7688 = vpack.c.bf16 %v7663, %v7662
      %v7689 = vpack.c.bf16 %v7665, %v7664
      %v7690 = vpack.c.bf16 %v7667, %v7666
      %v7691 = vpack.c.bf16 %v7669, %v7668
      %v7692 = vpack.c.bf16 %v7671, %v7670
      %v7693 = vpack.c.bf16 %v7673, %v7672
      %v7694 = vpack.c.bf16 %v7675, %v7674
      %v7695 = vpack.c.bf16 %v7677, %v7676
      %7714 = vrot.lane.b32.xlu0 %v7678, 64
      %v7715 = vpop.permute.xlu0 %7714
      %7716 = vrot.lane.b32.xlu0 %v7679, 64
      %v7717 = vpop.permute.xlu0 %7716
      %7718 = vrot.lane.b32.xlu0 %v7680, 64
      %v7719 = vpop.permute.xlu0 %7718
      %7720 = vrot.lane.b32.xlu0 %v7681, 64
      %v7721 = vpop.permute.xlu0 %7720
      %7722 = vrot.lane.b32.xlu0 %v7682, 64
      %v7723 = vpop.permute.xlu0 %7722
      %7724 = vrot.lane.b32.xlu0 %v7683, 64
      %v7725 = vpop.permute.xlu0 %7724
      %7726 = vrot.lane.b32.xlu0 %v7684, 64
      %v7727 = vpop.permute.xlu0 %7726
      %7728 = vrot.lane.b32.xlu0 %v7685, 64
      %v7729 = vpop.permute.xlu0 %7728
      %7730 = vrot.lane.b32.xlu0 %v7686, 64
      %v7731 = vpop.permute.xlu0 %7730
      %7732 = vrot.lane.b32.xlu0 %v7687, 64
      %v7733 = vpop.permute.xlu0 %7732
      %7734 = vrot.lane.b32.xlu0 %v7688, 64
      %v7735 = vpop.permute.xlu0 %7734
      %7736 = vrot.lane.b32.xlu0 %v7689, 64
      %v7737 = vpop.permute.xlu0 %7736
      %7738 = vrot.lane.b32.xlu0 %v7690, 64
      %v7739 = vpop.permute.xlu0 %7738
      %7740 = vrot.lane.b32.xlu0 %v7691, 64
      %v7741 = vpop.permute.xlu0 %7740
      %7742 = vrot.lane.b32.xlu0 %v7692, 64
      %v7743 = vpop.permute.xlu0 %7742
      %7744 = vrot.lane.b32.xlu0 %v7693, 64
      %v7745 = vpop.permute.xlu0 %7744
      %7746 = vrot.lane.b32.xlu0 %v7694, 64
      %v7747 = vpop.permute.xlu0 %7746
      %7748 = vrot.lane.b32.xlu0 %v7695, 64
      %v7749 = vpop.permute.xlu0 %7748
      %7768 = vst.msk [vmem:[#allocation3 + $0x8] sm:$0xff] %vm461, %v7715
      %7769 = vst.msk [vmem:[#allocation3 + $0x30] sm:$0xff] %vm461, %v7717
      %7770 = vst.msk [vmem:[#allocation3 + $0x58] sm:$0xff] %vm461, %v7719
      %7771 = vst.msk [vmem:[#allocation3 + $0x80] sm:$0xff] %vm461, %v7721
      %7772 = vst.msk [vmem:[#allocation3 + $0xa8] sm:$0xff] %vm461, %v7723
      %7773 = vst.msk [vmem:[#allocation3 + $0xd0] sm:$0xff] %vm461, %v7725
      %7774 = vst.msk [vmem:[#allocation3 + $0xf8] sm:$0xff] %vm461, %v7727
      %7775 = vst.msk [vmem:[#allocation3 + $0x120] sm:$0xff] %vm461, %v7729
      %7776 = vst.msk [vmem:[#allocation3 + $0x148] sm:$0xff] %vm461, %v7731
      %7777 = vst.msk [vmem:[#allocation3 + $0x170] sm:$0xff] %vm461, %v7733
      %7778 = vst.msk [vmem:[#allocation3 + $0x198] sm:$0xff] %vm461, %v7735
      %7779 = vst.msk [vmem:[#allocation3 + $0x1c0] sm:$0xff] %vm461, %v7737
      %7780 = vst.msk [vmem:[#allocation3 + $0x1e8] sm:$0xff] %vm461, %v7739
      %7781 = vst.msk [vmem:[#allocation3 + $0x210] sm:$0xff] %vm461, %v7741
      %7782 = vst.msk [vmem:[#allocation3 + $0x238] sm:$0xff] %vm461, %v7743
      %7783 = vst.msk [vmem:[#allocation3 + $0x260] sm:$0xff] %vm461, %v7745
      %7784 = vst.msk [vmem:[#allocation3 + $0x288] sm:$0xff] %vm461, %v7747
      %7785 = vst.msk [vmem:[#allocation3 + $0x2b0] sm:$0xff] %vm461, %v7749
      %v7786 = vld [vmem:[#allocation2 + $0x13] sm:$0xff]
      %v7787 = vld [vmem:[#allocation2 + $0x1b] sm:$0xff]
      %v7788 = vld [vmem:[#allocation2 + $0x23] sm:$0xff]
      %v7789 = vld [vmem:[#allocation2 + $0x2b] sm:$0xff]
      %v7790 = vld [vmem:[#allocation2 + $0x33] sm:$0xff]
      %v7791 = vld [vmem:[#allocation2 + $0x3b] sm:$0xff]
      %v7792 = vld [vmem:[#allocation2 + $0x43] sm:$0xff]
      %v7793 = vld [vmem:[#allocation2 + $0x4b] sm:$0xff]
      %v7794 = vld [vmem:[#allocation2 + $0x53] sm:$0xff]
      %v7795 = vld [vmem:[#allocation2 + $0x5b] sm:$0xff]
      %v7796 = vld [vmem:[#allocation2 + $0x63] sm:$0xff]
      %v7797 = vld [vmem:[#allocation2 + $0x6b] sm:$0xff]
      %v7798 = vld [vmem:[#allocation2 + $0x73] sm:$0xff]
      %v7799 = vld [vmem:[#allocation2 + $0x7b] sm:$0xff]
      %v7800 = vld [vmem:[#allocation2 + $0x83] sm:$0xff]
      %v7801 = vld [vmem:[#allocation2 + $0x8b] sm:$0xff]
      %v7802 = vld [vmem:[#allocation2 + $0x93] sm:$0xff]
      %v7803 = vld [vmem:[#allocation2 + $0x9b] sm:$0xff]
      %v7804 = vld [vmem:[#allocation2 + $0xa3] sm:$0xff]
      %v7805 = vld [vmem:[#allocation2 + $0xab] sm:$0xff]
      %v7806 = vld [vmem:[#allocation2 + $0xb3] sm:$0xff]
      %v7807 = vld [vmem:[#allocation2 + $0xbb] sm:$0xff]
      %v7808 = vld [vmem:[#allocation2 + $0xc3] sm:$0xff]
      %v7809 = vld [vmem:[#allocation2 + $0xcb] sm:$0xff]
      %v7810 = vld [vmem:[#allocation2 + $0xd3] sm:$0xff]
      %v7811 = vld [vmem:[#allocation2 + $0xdb] sm:$0xff]
      %v7812 = vld [vmem:[#allocation2 + $0xe3] sm:$0xff]
      %v7813 = vld [vmem:[#allocation2 + $0xeb] sm:$0xff]
      %v7814 = vld [vmem:[#allocation2 + $0xf3] sm:$0xff]
      %v7815 = vld [vmem:[#allocation2 + $0xfb] sm:$0xff]
      %v7816 = vld [vmem:[#allocation2 + $0x103] sm:$0xff]
      %v7817 = vld [vmem:[#allocation2 + $0x10b] sm:$0xff]
      %v7818 = vld [vmem:[#allocation2 + $0x113] sm:$0xff]
      %v7819 = vld [vmem:[#allocation2 + $0x11b] sm:$0xff]
      %v7820 = vld [vmem:[#allocation2 + $0x123] sm:$0xff]
      %v7821 = vld [vmem:[#allocation2 + $0x12b] sm:$0xff]
      %v7822 = vpack.c.bf16 %v7787, %v7786
      %v7823 = vpack.c.bf16 %v7789, %v7788
      %v7824 = vpack.c.bf16 %v7791, %v7790
      %v7825 = vpack.c.bf16 %v7793, %v7792
      %v7826 = vpack.c.bf16 %v7795, %v7794
      %v7827 = vpack.c.bf16 %v7797, %v7796
      %v7828 = vpack.c.bf16 %v7799, %v7798
      %v7829 = vpack.c.bf16 %v7801, %v7800
      %v7830 = vpack.c.bf16 %v7803, %v7802
      %v7831 = vpack.c.bf16 %v7805, %v7804
      %v7832 = vpack.c.bf16 %v7807, %v7806
      %v7833 = vpack.c.bf16 %v7809, %v7808
      %v7834 = vpack.c.bf16 %v7811, %v7810
      %v7835 = vpack.c.bf16 %v7813, %v7812
      %v7836 = vpack.c.bf16 %v7815, %v7814
      %v7837 = vpack.c.bf16 %v7817, %v7816
      %v7838 = vpack.c.bf16 %v7819, %v7818
      %v7839 = vpack.c.bf16 %v7821, %v7820
      %7840 = vst.msk [vmem:[#allocation3 + $0x10] sm:$0xff] %vm253, %v7822
      %7841 = vst.msk [vmem:[#allocation3 + $0x38] sm:$0xff] %vm253, %v7823
      %7842 = vst.msk [vmem:[#allocation3 + $0x60] sm:$0xff] %vm253, %v7824
      %7843 = vst.msk [vmem:[#allocation3 + $0x88] sm:$0xff] %vm253, %v7825
      %7844 = vst.msk [vmem:[#allocation3 + $0xb0] sm:$0xff] %vm253, %v7826
      %7845 = vst.msk [vmem:[#allocation3 + $0xd8] sm:$0xff] %vm253, %v7827
      %7846 = vst.msk [vmem:[#allocation3 + $0x100] sm:$0xff] %vm253, %v7828
      %7847 = vst.msk [vmem:[#allocation3 + $0x128] sm:$0xff] %vm253, %v7829
      %7848 = vst.msk [vmem:[#allocation3 + $0x150] sm:$0xff] %vm253, %v7830
      %7849 = vst.msk [vmem:[#allocation3 + $0x178] sm:$0xff] %vm253, %v7831
      %7850 = vst.msk [vmem:[#allocation3 + $0x1a0] sm:$0xff] %vm253, %v7832
      %7851 = vst.msk [vmem:[#allocation3 + $0x1c8] sm:$0xff] %vm253, %v7833
      %7852 = vst.msk [vmem:[#allocation3 + $0x1f0] sm:$0xff] %vm253, %v7834
      %7853 = vst.msk [vmem:[#allocation3 + $0x218] sm:$0xff] %vm253, %v7835
      %7854 = vst.msk [vmem:[#allocation3 + $0x240] sm:$0xff] %vm253, %v7836
      %7855 = vst.msk [vmem:[#allocation3 + $0x268] sm:$0xff] %vm253, %v7837
      %7856 = vst.msk [vmem:[#allocation3 + $0x290] sm:$0xff] %vm253, %v7838
      %7857 = vst.msk [vmem:[#allocation3 + $0x2b8] sm:$0xff] %vm253, %v7839
      %v7858 = vld [vmem:[#allocation2 + $0x14] sm:$0xff]
      %v7859 = vld [vmem:[#allocation2 + $0x1c] sm:$0xff]
      %v7860 = vld [vmem:[#allocation2 + $0x24] sm:$0xff]
      %v7861 = vld [vmem:[#allocation2 + $0x2c] sm:$0xff]
      %v7862 = vld [vmem:[#allocation2 + $0x34] sm:$0xff]
      %v7863 = vld [vmem:[#allocation2 + $0x3c] sm:$0xff]
      %v7864 = vld [vmem:[#allocation2 + $0x44] sm:$0xff]
      %v7865 = vld [vmem:[#allocation2 + $0x4c] sm:$0xff]
      %v7866 = vld [vmem:[#allocation2 + $0x54] sm:$0xff]
      %v7867 = vld [vmem:[#allocation2 + $0x5c] sm:$0xff]
      %v7868 = vld [vmem:[#allocation2 + $0x64] sm:$0xff]
      %v7869 = vld [vmem:[#allocation2 + $0x6c] sm:$0xff]
      %v7870 = vld [vmem:[#allocation2 + $0x74] sm:$0xff]
      %v7871 = vld [vmem:[#allocation2 + $0x7c] sm:$0xff]
      %v7872 = vld [vmem:[#allocation2 + $0x84] sm:$0xff]
      %v7873 = vld [vmem:[#allocation2 + $0x8c] sm:$0xff]
      %v7874 = vld [vmem:[#allocation2 + $0x94] sm:$0xff]
      %v7875 = vld [vmem:[#allocation2 + $0x9c] sm:$0xff]
      %v7876 = vld [vmem:[#allocation2 + $0xa4] sm:$0xff]
      %v7877 = vld [vmem:[#allocation2 + $0xac] sm:$0xff]
      %v7878 = vld [vmem:[#allocation2 + $0xb4] sm:$0xff]
      %v7879 = vld [vmem:[#allocation2 + $0xbc] sm:$0xff]
      %v7880 = vld [vmem:[#allocation2 + $0xc4] sm:$0xff]
      %v7881 = vld [vmem:[#allocation2 + $0xcc] sm:$0xff]
      %v7882 = vld [vmem:[#allocation2 + $0xd4] sm:$0xff]
      %v7883 = vld [vmem:[#allocation2 + $0xdc] sm:$0xff]
      %v7884 = vld [vmem:[#allocation2 + $0xe4] sm:$0xff]
      %v7885 = vld [vmem:[#allocation2 + $0xec] sm:$0xff]
      %v7886 = vld [vmem:[#allocation2 + $0xf4] sm:$0xff]
      %v7887 = vld [vmem:[#allocation2 + $0xfc] sm:$0xff]
      %v7888 = vld [vmem:[#allocation2 + $0x104] sm:$0xff]
      %v7889 = vld [vmem:[#allocation2 + $0x10c] sm:$0xff]
      %v7890 = vld [vmem:[#allocation2 + $0x114] sm:$0xff]
      %v7891 = vld [vmem:[#allocation2 + $0x11c] sm:$0xff]
      %v7892 = vld [vmem:[#allocation2 + $0x124] sm:$0xff]
      %v7893 = vld [vmem:[#allocation2 + $0x12c] sm:$0xff]
      %v7894 = vpack.c.bf16 %v7859, %v7858
      %v7895 = vpack.c.bf16 %v7861, %v7860
      %v7896 = vpack.c.bf16 %v7863, %v7862
      %v7897 = vpack.c.bf16 %v7865, %v7864
      %v7898 = vpack.c.bf16 %v7867, %v7866
      %v7899 = vpack.c.bf16 %v7869, %v7868
      %v7900 = vpack.c.bf16 %v7871, %v7870
      %v7901 = vpack.c.bf16 %v7873, %v7872
      %v7902 = vpack.c.bf16 %v7875, %v7874
      %v7903 = vpack.c.bf16 %v7877, %v7876
      %v7904 = vpack.c.bf16 %v7879, %v7878
      %v7905 = vpack.c.bf16 %v7881, %v7880
      %v7906 = vpack.c.bf16 %v7883, %v7882
      %v7907 = vpack.c.bf16 %v7885, %v7884
      %v7908 = vpack.c.bf16 %v7887, %v7886
      %v7909 = vpack.c.bf16 %v7889, %v7888
      %v7910 = vpack.c.bf16 %v7891, %v7890
      %v7911 = vpack.c.bf16 %v7893, %v7892
      %7930 = vrot.lane.b32.xlu0 %v7894, 64
      %v7931 = vpop.permute.xlu0 %7930
      %7932 = vrot.lane.b32.xlu0 %v7895, 64
      %v7933 = vpop.permute.xlu0 %7932
      %7934 = vrot.lane.b32.xlu0 %v7896, 64
      %v7935 = vpop.permute.xlu0 %7934
      %7936 = vrot.lane.b32.xlu0 %v7897, 64
      %v7937 = vpop.permute.xlu0 %7936
      %7938 = vrot.lane.b32.xlu0 %v7898, 64
      %v7939 = vpop.permute.xlu0 %7938
      %7940 = vrot.lane.b32.xlu0 %v7899, 64
      %v7941 = vpop.permute.xlu0 %7940
      %7942 = vrot.lane.b32.xlu0 %v7900, 64
      %v7943 = vpop.permute.xlu0 %7942
      %7944 = vrot.lane.b32.xlu0 %v7901, 64
      %v7945 = vpop.permute.xlu0 %7944
      %7946 = vrot.lane.b32.xlu0 %v7902, 64
      %v7947 = vpop.permute.xlu0 %7946
      %7948 = vrot.lane.b32.xlu0 %v7903, 64
      %v7949 = vpop.permute.xlu0 %7948
      %7950 = vrot.lane.b32.xlu0 %v7904, 64
      %v7951 = vpop.permute.xlu0 %7950
      %7952 = vrot.lane.b32.xlu0 %v7905, 64
      %v7953 = vpop.permute.xlu0 %7952
      %7954 = vrot.lane.b32.xlu0 %v7906, 64
      %v7955 = vpop.permute.xlu0 %7954
      %7956 = vrot.lane.b32.xlu0 %v7907, 64
      %v7957 = vpop.permute.xlu0 %7956
      %7958 = vrot.lane.b32.xlu0 %v7908, 64
      %v7959 = vpop.permute.xlu0 %7958
      %7960 = vrot.lane.b32.xlu0 %v7909, 64
      %v7961 = vpop.permute.xlu0 %7960
      %7962 = vrot.lane.b32.xlu0 %v7910, 64
      %v7963 = vpop.permute.xlu0 %7962
      %7964 = vrot.lane.b32.xlu0 %v7911, 64
      %v7965 = vpop.permute.xlu0 %7964
      %7984 = vst.msk [vmem:[#allocation3 + $0x10] sm:$0xff] %vm461, %v7931
      %7985 = vst.msk [vmem:[#allocation3 + $0x38] sm:$0xff] %vm461, %v7933
      %7986 = vst.msk [vmem:[#allocation3 + $0x60] sm:$0xff] %vm461, %v7935
      %7987 = vst.msk [vmem:[#allocation3 + $0x88] sm:$0xff] %vm461, %v7937
      %7988 = vst.msk [vmem:[#allocation3 + $0xb0] sm:$0xff] %vm461, %v7939
      %7989 = vst.msk [vmem:[#allocation3 + $0xd8] sm:$0xff] %vm461, %v7941
      %7990 = vst.msk [vmem:[#allocation3 + $0x100] sm:$0xff] %vm461, %v7943
      %7991 = vst.msk [vmem:[#allocation3 + $0x128] sm:$0xff] %vm461, %v7945
      %7992 = vst.msk [vmem:[#allocation3 + $0x150] sm:$0xff] %vm461, %v7947
      %7993 = vst.msk [vmem:[#allocation3 + $0x178] sm:$0xff] %vm461, %v7949
      %7994 = vst.msk [vmem:[#allocation3 + $0x1a0] sm:$0xff] %vm461, %v7951
      %7995 = vst.msk [vmem:[#allocation3 + $0x1c8] sm:$0xff] %vm461, %v7953
      %7996 = vst.msk [vmem:[#allocation3 + $0x1f0] sm:$0xff] %vm461, %v7955
      %7997 = vst.msk [vmem:[#allocation3 + $0x218] sm:$0xff] %vm461, %v7957
      %7998 = vst.msk [vmem:[#allocation3 + $0x240] sm:$0xff] %vm461, %v7959
      %7999 = vst.msk [vmem:[#allocation3 + $0x268] sm:$0xff] %vm461, %v7961
      %8000 = vst.msk [vmem:[#allocation3 + $0x290] sm:$0xff] %vm461, %v7963
      %8001 = vst.msk [vmem:[#allocation3 + $0x2b8] sm:$0xff] %vm461, %v7965
      %v8002 = vld [vmem:[#allocation2 + $0x24] sm:$0xff]
      %v8003 = vld [vmem:[#allocation2 + $0x2c] sm:$0xff]
      %v8004 = vld [vmem:[#allocation2 + $0x34] sm:$0xff]
      %v8005 = vld [vmem:[#allocation2 + $0x3c] sm:$0xff]
      %v8006 = vld [vmem:[#allocation2 + $0x44] sm:$0xff]
      %v8007 = vld [vmem:[#allocation2 + $0x4c] sm:$0xff]
      %v8008 = vld [vmem:[#allocation2 + $0x54] sm:$0xff]
      %v8009 = vld [vmem:[#allocation2 + $0x5c] sm:$0xff]
      %v8010 = vld [vmem:[#allocation2 + $0x64] sm:$0xff]
      %v8011 = vld [vmem:[#allocation2 + $0x6c] sm:$0xff]
      %v8012 = vld [vmem:[#allocation2 + $0x74] sm:$0xff]
      %v8013 = vld [vmem:[#allocation2 + $0x7c] sm:$0xff]
      %v8014 = vld [vmem:[#allocation2 + $0x84] sm:$0xff]
      %v8015 = vld [vmem:[#allocation2 + $0x8c] sm:$0xff]
      %v8016 = vld [vmem:[#allocation2 + $0x94] sm:$0xff]
      %v8017 = vld [vmem:[#allocation2 + $0x9c] sm:$0xff]
      %v8018 = vld [vmem:[#allocation2 + $0xa4] sm:$0xff]
      %v8019 = vld [vmem:[#allocation2 + $0xac] sm:$0xff]
      %v8020 = vld [vmem:[#allocation2 + $0xb4] sm:$0xff]
      %v8021 = vld [vmem:[#allocation2 + $0xbc] sm:$0xff]
      %v8022 = vld [vmem:[#allocation2 + $0xc4] sm:$0xff]
      %v8023 = vld [vmem:[#allocation2 + $0xcc] sm:$0xff]
      %v8024 = vld [vmem:[#allocation2 + $0xd4] sm:$0xff]
      %v8025 = vld [vmem:[#allocation2 + $0xdc] sm:$0xff]
      %v8026 = vld [vmem:[#allocation2 + $0xe4] sm:$0xff]
      %v8027 = vld [vmem:[#allocation2 + $0xec] sm:$0xff]
      %v8028 = vld [vmem:[#allocation2 + $0xf4] sm:$0xff]
      %v8029 = vld [vmem:[#allocation2 + $0xfc] sm:$0xff]
      %v8030 = vld [vmem:[#allocation2 + $0x104] sm:$0xff]
      %v8031 = vld [vmem:[#allocation2 + $0x10c] sm:$0xff]
      %v8032 = vld [vmem:[#allocation2 + $0x114] sm:$0xff]
      %v8033 = vld [vmem:[#allocation2 + $0x11c] sm:$0xff]
      %v8034 = vld [vmem:[#allocation2 + $0x124] sm:$0xff]
      %v8035 = vld [vmem:[#allocation2 + $0x12c] sm:$0xff]
      %v8036 = vld [vmem:[#allocation2 + $0x134] sm:$0xff]
      %v8037 = vld [vmem:[#allocation2 + $0x13c] sm:$0xff]
      %v8038 = vpack.c.bf16 %v8003, %v8002
      %v8039 = vpack.c.bf16 %v8005, %v8004
      %v8040 = vpack.c.bf16 %v8007, %v8006
      %v8041 = vpack.c.bf16 %v8009, %v8008
      %v8042 = vpack.c.bf16 %v8011, %v8010
      %v8043 = vpack.c.bf16 %v8013, %v8012
      %v8044 = vpack.c.bf16 %v8015, %v8014
      %v8045 = vpack.c.bf16 %v8017, %v8016
      %v8046 = vpack.c.bf16 %v8019, %v8018
      %v8047 = vpack.c.bf16 %v8021, %v8020
      %v8048 = vpack.c.bf16 %v8023, %v8022
      %v8049 = vpack.c.bf16 %v8025, %v8024
      %v8050 = vpack.c.bf16 %v8027, %v8026
      %v8051 = vpack.c.bf16 %v8029, %v8028
      %v8052 = vpack.c.bf16 %v8031, %v8030
      %v8053 = vpack.c.bf16 %v8033, %v8032
      %v8054 = vpack.c.bf16 %v8035, %v8034
      %v8055 = vpack.c.bf16 %v8037, %v8036
      %8056 = vst.msk [vmem:[#allocation3 + $0x18] sm:$0xff] %vm253, %v8038
      %8057 = vst.msk [vmem:[#allocation3 + $0x40] sm:$0xff] %vm253, %v8039
      %8058 = vst.msk [vmem:[#allocation3 + $0x68] sm:$0xff] %vm253, %v8040
      %8059 = vst.msk [vmem:[#allocation3 + $0x90] sm:$0xff] %vm253, %v8041
      %8060 = vst.msk [vmem:[#allocation3 + $0xb8] sm:$0xff] %vm253, %v8042
      %8061 = vst.msk [vmem:[#allocation3 + $0xe0] sm:$0xff] %vm253, %v8043
      %8062 = vst.msk [vmem:[#allocation3 + $0x108] sm:$0xff] %vm253, %v8044
      %8063 = vst.msk [vmem:[#allocation3 + $0x130] sm:$0xff] %vm253, %v8045
      %8064 = vst.msk [vmem:[#allocation3 + $0x158] sm:$0xff] %vm253, %v8046
      %8065 = vst.msk [vmem:[#allocation3 + $0x180] sm:$0xff] %vm253, %v8047
      %8066 = vst.msk [vmem:[#allocation3 + $0x1a8] sm:$0xff] %vm253, %v8048
      %8067 = vst.msk [vmem:[#allocation3 + $0x1d0] sm:$0xff] %vm253, %v8049
      %8068 = vst.msk [vmem:[#allocation3 + $0x1f8] sm:$0xff] %vm253, %v8050
      %8069 = vst.msk [vmem:[#allocation3 + $0x220] sm:$0xff] %vm253, %v8051
      %8070 = vst.msk [vmem:[#allocation3 + $0x248] sm:$0xff] %vm253, %v8052
      %8071 = vst.msk [vmem:[#allocation3 + $0x270] sm:$0xff] %vm253, %v8053
      %8072 = vst.msk [vmem:[#allocation3 + $0x298] sm:$0xff] %vm253, %v8054
      %8073 = vst.msk [vmem:[#allocation3 + $0x2c0] sm:$0xff] %vm253, %v8055
      %v8074 = vld [vmem:[#allocation2 + $0x25] sm:$0xff]
      %v8075 = vld [vmem:[#allocation2 + $0x2d] sm:$0xff]
      %v8076 = vld [vmem:[#allocation2 + $0x35] sm:$0xff]
      %v8077 = vld [vmem:[#allocation2 + $0x3d] sm:$0xff]
      %v8078 = vld [vmem:[#allocation2 + $0x45] sm:$0xff]
      %v8079 = vld [vmem:[#allocation2 + $0x4d] sm:$0xff]
      %v8080 = vld [vmem:[#allocation2 + $0x55] sm:$0xff]
      %v8081 = vld [vmem:[#allocation2 + $0x5d] sm:$0xff]
      %v8082 = vld [vmem:[#allocation2 + $0x65] sm:$0xff]
      %v8083 = vld [vmem:[#allocation2 + $0x6d] sm:$0xff]
      %v8084 = vld [vmem:[#allocation2 + $0x75] sm:$0xff]
      %v8085 = vld [vmem:[#allocation2 + $0x7d] sm:$0xff]
      %v8086 = vld [vmem:[#allocation2 + $0x85] sm:$0xff]
      %v8087 = vld [vmem:[#allocation2 + $0x8d] sm:$0xff]
      %v8088 = vld [vmem:[#allocation2 + $0x95] sm:$0xff]
      %v8089 = vld [vmem:[#allocation2 + $0x9d] sm:$0xff]
      %v8090 = vld [vmem:[#allocation2 + $0xa5] sm:$0xff]
      %v8091 = vld [vmem:[#allocation2 + $0xad] sm:$0xff]
      %v8092 = vld [vmem:[#allocation2 + $0xb5] sm:$0xff]
      %v8093 = vld [vmem:[#allocation2 + $0xbd] sm:$0xff]
      %v8094 = vld [vmem:[#allocation2 + $0xc5] sm:$0xff]
      %v8095 = vld [vmem:[#allocation2 + $0xcd] sm:$0xff]
      %v8096 = vld [vmem:[#allocation2 + $0xd5] sm:$0xff]
      %v8097 = vld [vmem:[#allocation2 + $0xdd] sm:$0xff]
      %v8098 = vld [vmem:[#allocation2 + $0xe5] sm:$0xff]
      %v8099 = vld [vmem:[#allocation2 + $0xed] sm:$0xff]
      %v8100 = vld [vmem:[#allocation2 + $0xf5] sm:$0xff]
      %v8101 = vld [vmem:[#allocation2 + $0xfd] sm:$0xff]
      %v8102 = vld [vmem:[#allocation2 + $0x105] sm:$0xff]
      %v8103 = vld [vmem:[#allocation2 + $0x10d] sm:$0xff]
      %v8104 = vld [vmem:[#allocation2 + $0x115] sm:$0xff]
      %v8105 = vld [vmem:[#allocation2 + $0x11d] sm:$0xff]
      %v8106 = vld [vmem:[#allocation2 + $0x125] sm:$0xff]
      %v8107 = vld [vmem:[#allocation2 + $0x12d] sm:$0xff]
      %v8108 = vld [vmem:[#allocation2 + $0x135] sm:$0xff]
      %v8109 = vld [vmem:[#allocation2 + $0x13d] sm:$0xff]
      %v8110 = vpack.c.bf16 %v8075, %v8074
      %v8111 = vpack.c.bf16 %v8077, %v8076
      %v8112 = vpack.c.bf16 %v8079, %v8078
      %v8113 = vpack.c.bf16 %v8081, %v8080
      %v8114 = vpack.c.bf16 %v8083, %v8082
      %v8115 = vpack.c.bf16 %v8085, %v8084
      %v8116 = vpack.c.bf16 %v8087, %v8086
      %v8117 = vpack.c.bf16 %v8089, %v8088
      %v8118 = vpack.c.bf16 %v8091, %v8090
      %v8119 = vpack.c.bf16 %v8093, %v8092
      %v8120 = vpack.c.bf16 %v8095, %v8094
      %v8121 = vpack.c.bf16 %v8097, %v8096
      %v8122 = vpack.c.bf16 %v8099, %v8098
      %v8123 = vpack.c.bf16 %v8101, %v8100
      %v8124 = vpack.c.bf16 %v8103, %v8102
      %v8125 = vpack.c.bf16 %v8105, %v8104
      %v8126 = vpack.c.bf16 %v8107, %v8106
      %v8127 = vpack.c.bf16 %v8109, %v8108
      %8146 = vrot.lane.b32.xlu0 %v8110, 64
      %v8147 = vpop.permute.xlu0 %8146
      %8148 = vrot.lane.b32.xlu0 %v8111, 64
      %v8149 = vpop.permute.xlu0 %8148
      %8150 = vrot.lane.b32.xlu0 %v8112, 64
      %v8151 = vpop.permute.xlu0 %8150
      %8152 = vrot.lane.b32.xlu0 %v8113, 64
      %v8153 = vpop.permute.xlu0 %8152
      %8154 = vrot.lane.b32.xlu0 %v8114, 64
      %v8155 = vpop.permute.xlu0 %8154
      %8156 = vrot.lane.b32.xlu0 %v8115, 64
      %v8157 = vpop.permute.xlu0 %8156
      %8158 = vrot.lane.b32.xlu0 %v8116, 64
      %v8159 = vpop.permute.xlu0 %8158
      %8160 = vrot.lane.b32.xlu0 %v8117, 64
      %v8161 = vpop.permute.xlu0 %8160
      %8162 = vrot.lane.b32.xlu0 %v8118, 64
      %v8163 = vpop.permute.xlu0 %8162
      %8164 = vrot.lane.b32.xlu0 %v8119, 64
      %v8165 = vpop.permute.xlu0 %8164
      %8166 = vrot.lane.b32.xlu0 %v8120, 64
      %v8167 = vpop.permute.xlu0 %8166
      %8168 = vrot.lane.b32.xlu0 %v8121, 64
      %v8169 = vpop.permute.xlu0 %8168
      %8170 = vrot.lane.b32.xlu0 %v8122, 64
      %v8171 = vpop.permute.xlu0 %8170
      %8172 = vrot.lane.b32.xlu0 %v8123, 64
      %v8173 = vpop.permute.xlu0 %8172
      %8174 = vrot.lane.b32.xlu0 %v8124, 64
      %v8175 = vpop.permute.xlu0 %8174
      %8176 = vrot.lane.b32.xlu0 %v8125, 64
      %v8177 = vpop.permute.xlu0 %8176
      %8178 = vrot.lane.b32.xlu0 %v8126, 64
      %v8179 = vpop.permute.xlu0 %8178
      %8180 = vrot.lane.b32.xlu0 %v8127, 64
      %v8181 = vpop.permute.xlu0 %8180
      %8200 = vst.msk [vmem:[#allocation3 + $0x18] sm:$0xff] %vm461, %v8147
      %8201 = vst.msk [vmem:[#allocation3 + $0x40] sm:$0xff] %vm461, %v8149
      %8202 = vst.msk [vmem:[#allocation3 + $0x68] sm:$0xff] %vm461, %v8151
      %8203 = vst.msk [vmem:[#allocation3 + $0x90] sm:$0xff] %vm461, %v8153
      %8204 = vst.msk [vmem:[#allocation3 + $0xb8] sm:$0xff] %vm461, %v8155
      %8205 = vst.msk [vmem:[#allocation3 + $0xe0] sm:$0xff] %vm461, %v8157
      %8206 = vst.msk [vmem:[#allocation3 + $0x108] sm:$0xff] %vm461, %v8159
      %8207 = vst.msk [vmem:[#allocation3 + $0x130] sm:$0xff] %vm461, %v8161
      %8208 = vst.msk [vmem:[#allocation3 + $0x158] sm:$0xff] %vm461, %v8163
      %8209 = vst.msk [vmem:[#allocation3 + $0x180] sm:$0xff] %vm461, %v8165
      %8210 = vst.msk [vmem:[#allocation3 + $0x1a8] sm:$0xff] %vm461, %v8167
      %8211 = vst.msk [vmem:[#allocation3 + $0x1d0] sm:$0xff] %vm461, %v8169
      %8212 = vst.msk [vmem:[#allocation3 + $0x1f8] sm:$0xff] %vm461, %v8171
      %8213 = vst.msk [vmem:[#allocation3 + $0x220] sm:$0xff] %vm461, %v8173
      %8214 = vst.msk [vmem:[#allocation3 + $0x248] sm:$0xff] %vm461, %v8175
      %8215 = vst.msk [vmem:[#allocation3 + $0x270] sm:$0xff] %vm461, %v8177
      %8216 = vst.msk [vmem:[#allocation3 + $0x298] sm:$0xff] %vm461, %v8179
      %8217 = vst.msk [vmem:[#allocation3 + $0x2c0] sm:$0xff] %vm461, %v8181
      %v8218 = vld [vmem:[#allocation2 + $0x26] sm:$0xff]
      %v8219 = vld [vmem:[#allocation2 + $0x2e] sm:$0xff]
      %v8220 = vld [vmem:[#allocation2 + $0x36] sm:$0xff]
      %v8221 = vld [vmem:[#allocation2 + $0x3e] sm:$0xff]
      %v8222 = vld [vmem:[#allocation2 + $0x46] sm:$0xff]
      %v8223 = vld [vmem:[#allocation2 + $0x4e] sm:$0xff]
      %v8224 = vld [vmem:[#allocation2 + $0x56] sm:$0xff]
      %v8225 = vld [vmem:[#allocation2 + $0x5e] sm:$0xff]
      %v8226 = vld [vmem:[#allocation2 + $0x66] sm:$0xff]
      %v8227 = vld [vmem:[#allocation2 + $0x6e] sm:$0xff]
      %v8228 = vld [vmem:[#allocation2 + $0x76] sm:$0xff]
      %v8229 = vld [vmem:[#allocation2 + $0x7e] sm:$0xff]
      %v8230 = vld [vmem:[#allocation2 + $0x86] sm:$0xff]
      %v8231 = vld [vmem:[#allocation2 + $0x8e] sm:$0xff]
      %v8232 = vld [vmem:[#allocation2 + $0x96] sm:$0xff]
      %v8233 = vld [vmem:[#allocation2 + $0x9e] sm:$0xff]
      %v8234 = vld [vmem:[#allocation2 + $0xa6] sm:$0xff]
      %v8235 = vld [vmem:[#allocation2 + $0xae] sm:$0xff]
      %v8236 = vld [vmem:[#allocation2 + $0xb6] sm:$0xff]
      %v8237 = vld [vmem:[#allocation2 + $0xbe] sm:$0xff]
      %v8238 = vld [vmem:[#allocation2 + $0xc6] sm:$0xff]
      %v8239 = vld [vmem:[#allocation2 + $0xce] sm:$0xff]
      %v8240 = vld [vmem:[#allocation2 + $0xd6] sm:$0xff]
      %v8241 = vld [vmem:[#allocation2 + $0xde] sm:$0xff]
      %v8242 = vld [vmem:[#allocation2 + $0xe6] sm:$0xff]
      %v8243 = vld [vmem:[#allocation2 + $0xee] sm:$0xff]
      %v8244 = vld [vmem:[#allocation2 + $0xf6] sm:$0xff]
      %v8245 = vld [vmem:[#allocation2 + $0xfe] sm:$0xff]
      %v8246 = vld [vmem:[#allocation2 + $0x106] sm:$0xff]
      %v8247 = vld [vmem:[#allocation2 + $0x10e] sm:$0xff]
      %v8248 = vld [vmem:[#allocation2 + $0x116] sm:$0xff]
      %v8249 = vld [vmem:[#allocation2 + $0x11e] sm:$0xff]
      %v8250 = vld [vmem:[#allocation2 + $0x126] sm:$0xff]
      %v8251 = vld [vmem:[#allocation2 + $0x12e] sm:$0xff]
      %v8252 = vld [vmem:[#allocation2 + $0x136] sm:$0xff]
      %v8253 = vld [vmem:[#allocation2 + $0x13e] sm:$0xff]
      %v8254 = vpack.c.bf16 %v8219, %v8218
      %v8255 = vpack.c.bf16 %v8221, %v8220
      %v8256 = vpack.c.bf16 %v8223, %v8222
      %v8257 = vpack.c.bf16 %v8225, %v8224
      %v8258 = vpack.c.bf16 %v8227, %v8226
      %v8259 = vpack.c.bf16 %v8229, %v8228
      %v8260 = vpack.c.bf16 %v8231, %v8230
      %v8261 = vpack.c.bf16 %v8233, %v8232
      %v8262 = vpack.c.bf16 %v8235, %v8234
      %v8263 = vpack.c.bf16 %v8237, %v8236
      %v8264 = vpack.c.bf16 %v8239, %v8238
      %v8265 = vpack.c.bf16 %v8241, %v8240
      %v8266 = vpack.c.bf16 %v8243, %v8242
      %v8267 = vpack.c.bf16 %v8245, %v8244
      %v8268 = vpack.c.bf16 %v8247, %v8246
      %v8269 = vpack.c.bf16 %v8249, %v8248
      %v8270 = vpack.c.bf16 %v8251, %v8250
      %v8271 = vpack.c.bf16 %v8253, %v8252
      %8272 = vst.msk [vmem:[#allocation3 + $0x20] sm:$0xff] %vm253, %v8254
      %8273 = vst.msk [vmem:[#allocation3 + $0x48] sm:$0xff] %vm253, %v8255
      %8274 = vst.msk [vmem:[#allocation3 + $0x70] sm:$0xff] %vm253, %v8256
      %8275 = vst.msk [vmem:[#allocation3 + $0x98] sm:$0xff] %vm253, %v8257
      %8276 = vst.msk [vmem:[#allocation3 + $0xc0] sm:$0xff] %vm253, %v8258
      %8277 = vst.msk [vmem:[#allocation3 + $0xe8] sm:$0xff] %vm253, %v8259
      %8278 = vst.msk [vmem:[#allocation3 + $0x110] sm:$0xff] %vm253, %v8260
      %8279 = vst.msk [vmem:[#allocation3 + $0x138] sm:$0xff] %vm253, %v8261
      %8280 = vst.msk [vmem:[#allocation3 + $0x160] sm:$0xff] %vm253, %v8262
      %8281 = vst.msk [vmem:[#allocation3 + $0x188] sm:$0xff] %vm253, %v8263
      %8282 = vst.msk [vmem:[#allocation3 + $0x1b0] sm:$0xff] %vm253, %v8264
      %8283 = vst.msk [vmem:[#allocation3 + $0x1d8] sm:$0xff] %vm253, %v8265
      %8284 = vst.msk [vmem:[#allocation3 + $0x200] sm:$0xff] %vm253, %v8266
      %8285 = vst.msk [vmem:[#allocation3 + $0x228] sm:$0xff] %vm253, %v8267
      %8286 = vst.msk [vmem:[#allocation3 + $0x250] sm:$0xff] %vm253, %v8268
      %8287 = vst.msk [vmem:[#allocation3 + $0x278] sm:$0xff] %vm253, %v8269
      %8288 = vst.msk [vmem:[#allocation3 + $0x2a0] sm:$0xff] %vm253, %v8270
      %8289 = vst.msk [vmem:[#allocation3 + $0x2c8] sm:$0xff] %vm253, %v8271
      %v8290 = vld [vmem:[#allocation3] sm:$0xff]
      %v8291 = vld [vmem:[#allocation3 + $0x8] sm:$0xff]
      %v8292 = vld [vmem:[#allocation3 + $0x10] sm:$0xff]
      %v8293 = vld [vmem:[#allocation3 + $0x18] sm:$0xff]
      %v8294 = vld [vmem:[#allocation3 + $0x20] sm:$0xff]
      %v8295 = vld [vmem:[#allocation3 + $0x28] sm:$0xff]
      %v8296 = vld [vmem:[#allocation3 + $0x30] sm:$0xff]
      %v8297 = vld [vmem:[#allocation3 + $0x38] sm:$0xff]
      %v8298 = vld [vmem:[#allocation3 + $0x40] sm:$0xff]
      %v8299 = vld [vmem:[#allocation3 + $0x48] sm:$0xff]
      %v8300 = vld [vmem:[#allocation3 + $0x50] sm:$0xff]
      %v8301 = vld [vmem:[#allocation3 + $0x58] sm:$0xff]
      %v8302 = vld [vmem:[#allocation3 + $0x60] sm:$0xff]
      %v8303 = vld [vmem:[#allocation3 + $0x68] sm:$0xff]
      %v8304 = vld [vmem:[#allocation3 + $0x70] sm:$0xff]
      %v8305 = vld [vmem:[#allocation3 + $0x78] sm:$0xff]
      %v8306 = vld [vmem:[#allocation3 + $0x80] sm:$0xff]
      %v8307 = vld [vmem:[#allocation3 + $0x88] sm:$0xff]
      %v8308 = vld [vmem:[#allocation3 + $0x90] sm:$0xff]
      %v8309 = vld [vmem:[#allocation3 + $0x98] sm:$0xff]
      %v8310 = vld [vmem:[#allocation3 + $0xa0] sm:$0xff]
      %v8311 = vld [vmem:[#allocation3 + $0xa8] sm:$0xff]
      %v8312 = vld [vmem:[#allocation3 + $0xb0] sm:$0xff]
      %v8313 = vld [vmem:[#allocation3 + $0xb8] sm:$0xff]
      %v8314 = vld [vmem:[#allocation3 + $0xc0] sm:$0xff]
      %v8315 = vld [vmem:[#allocation3 + $0xc8] sm:$0xff]
      %v8316 = vld [vmem:[#allocation3 + $0xd0] sm:$0xff]
      %v8317 = vld [vmem:[#allocation3 + $0xd8] sm:$0xff]
      %v8318 = vld [vmem:[#allocation3 + $0xe0] sm:$0xff]
      %v8319 = vld [vmem:[#allocation3 + $0xe8] sm:$0xff]
      %v8320 = vld [vmem:[#allocation3 + $0xf0] sm:$0xff]
      %v8321 = vld [vmem:[#allocation3 + $0xf8] sm:$0xff]
      %v8322 = vld [vmem:[#allocation3 + $0x100] sm:$0xff]
      %v8323 = vld [vmem:[#allocation3 + $0x108] sm:$0xff]
      %v8324 = vld [vmem:[#allocation3 + $0x110] sm:$0xff]
      %v8325 = vld [vmem:[#allocation3 + $0x118] sm:$0xff]
      %v8326 = vld [vmem:[#allocation3 + $0x120] sm:$0xff]
      %v8327 = vld [vmem:[#allocation3 + $0x128] sm:$0xff]
      %v8328 = vld [vmem:[#allocation3 + $0x130] sm:$0xff]
      %v8329 = vld [vmem:[#allocation3 + $0x138] sm:$0xff]
      %v8330 = vld [vmem:[#allocation3 + $0x140] sm:$0xff]
      %v8331 = vld [vmem:[#allocation3 + $0x148] sm:$0xff]
      %v8332 = vld [vmem:[#allocation3 + $0x150] sm:$0xff]
      %v8333 = vld [vmem:[#allocation3 + $0x158] sm:$0xff]
      %v8334 = vld [vmem:[#allocation3 + $0x160] sm:$0xff]
      %v8335 = vld [vmem:[#allocation3 + $0x168] sm:$0xff]
      %v8336 = vld [vmem:[#allocation3 + $0x170] sm:$0xff]
      %v8337 = vld [vmem:[#allocation3 + $0x178] sm:$0xff]
      %v8338 = vld [vmem:[#allocation3 + $0x180] sm:$0xff]
      %v8339 = vld [vmem:[#allocation3 + $0x188] sm:$0xff]
      %v8340 = vld [vmem:[#allocation3 + $0x190] sm:$0xff]
      %v8341 = vld [vmem:[#allocation3 + $0x198] sm:$0xff]
      %v8342 = vld [vmem:[#allocation3 + $0x1a0] sm:$0xff]
      %v8343 = vld [vmem:[#allocation3 + $0x1a8] sm:$0xff]
      %v8344 = vld [vmem:[#allocation3 + $0x1b0] sm:$0xff]
      %v8345 = vld [vmem:[#allocation3 + $0x1b8] sm:$0xff]
      %v8346 = vld [vmem:[#allocation3 + $0x1c0] sm:$0xff]
      %v8347 = vld [vmem:[#allocation3 + $0x1c8] sm:$0xff]
      %v8348 = vld [vmem:[#allocation3 + $0x1d0] sm:$0xff]
      %v8349 = vld [vmem:[#allocation3 + $0x1d8] sm:$0xff]
      %v8350 = vld [vmem:[#allocation3 + $0x1e0] sm:$0xff]
      %v8351 = vld [vmem:[#allocation3 + $0x1e8] sm:$0xff]
      %v8352 = vld [vmem:[#allocation3 + $0x1f0] sm:$0xff]
      %v8353 = vld [vmem:[#allocation3 + $0x1f8] sm:$0xff]
      %v8354 = vld [vmem:[#allocation3 + $0x200] sm:$0xff]
      %v8355 = vld [vmem:[#allocation3 + $0x208] sm:$0xff]
      %v8356 = vld [vmem:[#allocation3 + $0x210] sm:$0xff]
      %v8357 = vld [vmem:[#allocation3 + $0x218] sm:$0xff]
      %v8358 = vld [vmem:[#allocation3 + $0x220] sm:$0xff]
      %v8359 = vld [vmem:[#allocation3 + $0x228] sm:$0xff]
      %v8360 = vld [vmem:[#allocation3 + $0x230] sm:$0xff]
      %v8361 = vld [vmem:[#allocation3 + $0x238] sm:$0xff]
      %v8362 = vld [vmem:[#allocation3 + $0x240] sm:$0xff]
      %v8363 = vld [vmem:[#allocation3 + $0x248] sm:$0xff]
      %v8364 = vld [vmem:[#allocation3 + $0x250] sm:$0xff]
      %v8365 = vld [vmem:[#allocation3 + $0x258] sm:$0xff]
      %v8366 = vld [vmem:[#allocation3 + $0x260] sm:$0xff]
      %v8367 = vld [vmem:[#allocation3 + $0x268] sm:$0xff]
      %v8368 = vld [vmem:[#allocation3 + $0x270] sm:$0xff]
      %v8369 = vld [vmem:[#allocation3 + $0x278] sm:$0xff]
      %v8370 = vld [vmem:[#allocation3 + $0x280] sm:$0xff]
      %v8371 = vld [vmem:[#allocation3 + $0x288] sm:$0xff]
      %v8372 = vld [vmem:[#allocation3 + $0x290] sm:$0xff]
      %v8373 = vld [vmem:[#allocation3 + $0x298] sm:$0xff]
      %v8374 = vld [vmem:[#allocation3 + $0x2a0] sm:$0xff]
      %v8375 = vld [vmem:[#allocation3 + $0x2a8] sm:$0xff]
      %v8376 = vld [vmem:[#allocation3 + $0x2b0] sm:$0xff]
      %v8377 = vld [vmem:[#allocation3 + $0x2b8] sm:$0xff]
      %v8378 = vld [vmem:[#allocation3 + $0x2c0] sm:$0xff]
      %v8379 = vld [vmem:[#allocation3 + $0x2c8] sm:$0xff]
      %s8380 = scalar_lea.vmem %s2, 864
      %v8381 = vld [vmem:[%s8380] sm:$0xf]
      %v8382 = vld [vmem:[%s8380 + $0x4] sm:$0xf]
      %v8383 = vld [vmem:[%s8380 + $0x8] sm:$0xf]
      %v8384 = vld [vmem:[%s8380 + $0xc] sm:$0xf]
      %v8385 = vld [vmem:[%s8380 + $0x10] sm:$0xf]
      %v8386 = vld [vmem:[%s8380 + $0x14] sm:$0xf]
      %v8387 = vld [vmem:[%s8380 + $0x18] sm:$0xf]
      %v8388 = vld [vmem:[%s8380 + $0x1c] sm:$0xf]
      %v8389 = vld [vmem:[%s8380 + $0x20] sm:$0xf]
      %v8390 = vld [vmem:[%s8380 + $0x24] sm:$0xf]
      %v8391 = vld [vmem:[%s8380 + $0x28] sm:$0xf]
      %v8392 = vld [vmem:[%s8380 + $0x2c] sm:$0xf]
      %v8393 = vld [vmem:[%s8380 + $0x30] sm:$0xf]
      %v8394 = vld [vmem:[%s8380 + $0x34] sm:$0xf]
      %v8395 = vld [vmem:[%s8380 + $0x38] sm:$0xf]
      %v8396 = vld [vmem:[%s8380 + $0x3c] sm:$0xf]
      %v8397 = vld [vmem:[%s8380 + $0x40] sm:$0xf]
      %v8398 = vld [vmem:[%s8380 + $0x44] sm:$0xf]
      %v8399 = vld [vmem:[%s8380 + $0x48] sm:$0xf]
      %v8400 = vld [vmem:[%s8380 + $0x4c] sm:$0xf]
      %v8401 = vld [vmem:[%s8380 + $0x50] sm:$0xf]
      %v8402 = vld [vmem:[%s8380 + $0x54] sm:$0xf]
      %v8403 = vld [vmem:[%s8380 + $0x58] sm:$0xf]
      %v8404 = vld [vmem:[%s8380 + $0x5c] sm:$0xf]
      %v8405 = vld [vmem:[%s8380 + $0x60] sm:$0xf]
      %v8406 = vld [vmem:[%s8380 + $0x64] sm:$0xf]
      %v8407 = vld [vmem:[%s8380 + $0x68] sm:$0xf]
      %v8408 = vld [vmem:[%s8380 + $0x6c] sm:$0xf]
      %v8409 = vld [vmem:[%s8380 + $0x70] sm:$0xf]
      %v8410 = vld [vmem:[%s8380 + $0x74] sm:$0xf]
      %v8411 = vld [vmem:[%s8380 + $0x78] sm:$0xf]
      %v8412 = vld [vmem:[%s8380 + $0x7c] sm:$0xf]
      %v8413 = vld [vmem:[%s8380 + $0x80] sm:$0xf]
      %v8414 = vld [vmem:[%s8380 + $0x84] sm:$0xf]
      %v8415 = vld [vmem:[%s8380 + $0x88] sm:$0xf]
      %v8416 = vld [vmem:[%s8380 + $0x8c] sm:$0xf]
      %v8417 = vld [vmem:[%s8380 + $0x90] sm:$0xf]
      %v8418 = vld [vmem:[%s8380 + $0x94] sm:$0xf]
      %v8419 = vld [vmem:[%s8380 + $0x98] sm:$0xf]
      %v8420 = vld [vmem:[%s8380 + $0x9c] sm:$0xf]
      %v8421 = vld [vmem:[%s8380 + $0xa0] sm:$0xf]
      %v8422 = vld [vmem:[%s8380 + $0xa4] sm:$0xf]
      %v8423 = vld [vmem:[%s8380 + $0xa8] sm:$0xf]
      %v8424 = vld [vmem:[%s8380 + $0xac] sm:$0xf]
      %v8425 = vld [vmem:[%s8380 + $0xb0] sm:$0xf]
      %v8426 = vld [vmem:[%s8380 + $0xb4] sm:$0xf]
      %v8427 = vld [vmem:[%s8380 + $0xb8] sm:$0xf]
      %v8428 = vld [vmem:[%s8380 + $0xbc] sm:$0xf]
      %v8429 = vld [vmem:[%s8380 + $0xc0] sm:$0xf]
      %v8430 = vld [vmem:[%s8380 + $0xc4] sm:$0xf]
      %v8431 = vld [vmem:[%s8380 + $0xc8] sm:$0xf]
      %v8432 = vld [vmem:[%s8380 + $0xcc] sm:$0xf]
      %v8433 = vld [vmem:[%s8380 + $0xd0] sm:$0xf]
      %v8434 = vld [vmem:[%s8380 + $0xd4] sm:$0xf]
      %v8435 = vld [vmem:[%s8380 + $0xd8] sm:$0xf]
      %v8436 = vld [vmem:[%s8380 + $0xdc] sm:$0xf]
      %v8437 = vld [vmem:[%s8380 + $0xe0] sm:$0xf]
      %v8438 = vld [vmem:[%s8380 + $0xe4] sm:$0xf]
      %v8439 = vld [vmem:[%s8380 + $0xe8] sm:$0xf]
      %v8440 = vld [vmem:[%s8380 + $0xec] sm:$0xf]
      %v8441 = vld [vmem:[%s8380 + $0xf0] sm:$0xf]
      %v8442 = vld [vmem:[%s8380 + $0xf4] sm:$0xf]
      %v8443 = vld [vmem:[%s8380 + $0xf8] sm:$0xf]
      %v8444 = vld [vmem:[%s8380 + $0xfc] sm:$0xf]
      %v8445 = vld [vmem:[%s8380 + $0x100] sm:$0xf]
      %v8446 = vld [vmem:[%s8380 + $0x104] sm:$0xf]
      %v8447 = vld [vmem:[%s8380 + $0x108] sm:$0xf]
      %v8448 = vld [vmem:[%s8380 + $0x10c] sm:$0xf]
      %v8449 = vld [vmem:[%s8380 + $0x110] sm:$0xf]
      %v8450 = vld [vmem:[%s8380 + $0x114] sm:$0xf]
      %v8451 = vld [vmem:[%s8380 + $0x118] sm:$0xf]
      %v8452 = vld [vmem:[%s8380 + $0x11c] sm:$0xf]
      %s8453 = scalar_lea.vmem %s3, 3
      %v8454 = vld [vmem:[%s8453] sm:$0x1]
      %v8456 = vlaneseq
      %v8457 = vshrl.u32 %v8456, 7
      %v8458 = vsub.s32 0, %v8457
      %v8459 = vrot.slane %v8454, %v8458
      %v8533 = vunpack.c.l.b16 %v8381
      %v8534 = vunpack.c.l.b16 %v8382
      %v8535 = vunpack.c.l.b16 %v8383
      %v8536 = vunpack.c.l.b16 %v8384
      %v8537 = vunpack.c.l.b16 %v8385
      %v8538 = vunpack.c.l.b16 %v8386
      %v8539 = vunpack.c.l.b16 %v8387
      %v8540 = vunpack.c.l.b16 %v8388
      %v8541 = vunpack.c.l.b16 %v8389
      %v8542 = vunpack.c.l.b16 %v8390
      %v8543 = vunpack.c.l.b16 %v8391
      %v8544 = vunpack.c.l.b16 %v8392
      %v8545 = vunpack.c.l.b16 %v8393
      %v8546 = vunpack.c.l.b16 %v8394
      %v8547 = vunpack.c.l.b16 %v8395
      %v8548 = vunpack.c.l.b16 %v8396
      %v8549 = vunpack.c.l.b16 %v8397
      %v8550 = vunpack.c.l.b16 %v8398
      %v8551 = vunpack.c.l.b16 %v8399
      %v8552 = vunpack.c.l.b16 %v8400
      %v8553 = vunpack.c.l.b16 %v8401
      %v8554 = vunpack.c.l.b16 %v8402
      %v8555 = vunpack.c.l.b16 %v8403
      %v8556 = vunpack.c.l.b16 %v8404
      %v8557 = vunpack.c.l.b16 %v8405
      %v8558 = vunpack.c.l.b16 %v8406
      %v8559 = vunpack.c.l.b16 %v8407
      %v8560 = vunpack.c.l.b16 %v8408
      %v8561 = vunpack.c.l.b16 %v8409
      %v8562 = vunpack.c.l.b16 %v8410
      %v8563 = vunpack.c.l.b16 %v8411
      %v8564 = vunpack.c.l.b16 %v8412
      %v8565 = vunpack.c.l.b16 %v8413
      %v8566 = vunpack.c.l.b16 %v8414
      %v8567 = vunpack.c.l.b16 %v8415
      %v8568 = vunpack.c.l.b16 %v8416
      %v8569 = vunpack.c.l.b16 %v8417
      %v8570 = vunpack.c.l.b16 %v8418
      %v8571 = vunpack.c.l.b16 %v8419
      %v8572 = vunpack.c.l.b16 %v8420
      %v8573 = vunpack.c.l.b16 %v8421
      %v8574 = vunpack.c.l.b16 %v8422
      %v8575 = vunpack.c.l.b16 %v8423
      %v8576 = vunpack.c.l.b16 %v8424
      %v8577 = vunpack.c.l.b16 %v8425
      %v8578 = vunpack.c.l.b16 %v8426
      %v8579 = vunpack.c.l.b16 %v8427
      %v8580 = vunpack.c.l.b16 %v8428
      %v8581 = vunpack.c.l.b16 %v8429
      %v8582 = vunpack.c.l.b16 %v8430
      %v8583 = vunpack.c.l.b16 %v8431
      %v8584 = vunpack.c.l.b16 %v8432
      %v8585 = vunpack.c.l.b16 %v8433
      %v8586 = vunpack.c.l.b16 %v8434
      %v8587 = vunpack.c.l.b16 %v8435
      %v8588 = vunpack.c.l.b16 %v8436
      %v8589 = vunpack.c.l.b16 %v8437
      %v8590 = vunpack.c.l.b16 %v8438
      %v8591 = vunpack.c.l.b16 %v8439
      %v8592 = vunpack.c.l.b16 %v8440
      %v8593 = vunpack.c.l.b16 %v8441
      %v8594 = vunpack.c.l.b16 %v8442
      %v8595 = vunpack.c.l.b16 %v8443
      %v8596 = vunpack.c.l.b16 %v8444
      %v8597 = vunpack.c.l.b16 %v8445
      %v8598 = vunpack.c.l.b16 %v8446
      %v8599 = vunpack.c.l.b16 %v8447
      %v8600 = vunpack.c.l.b16 %v8448
      %v8601 = vunpack.c.l.b16 %v8449
      %v8602 = vunpack.c.l.b16 %v8450
      %v8603 = vunpack.c.l.b16 %v8451
      %v8604 = vunpack.c.l.b16 %v8452
      %v8605 = vpack.c.b16 %v8534, %v8533
      %v8606 = vpack.c.b16 %v8536, %v8535
      %v8607 = vpack.c.b16 %v8538, %v8537
      %v8608 = vpack.c.b16 %v8540, %v8539
      %v8609 = vpack.c.b16 %v8542, %v8541
      %v8610 = vpack.c.b16 %v8544, %v8543
      %v8611 = vpack.c.b16 %v8546, %v8545
      %v8612 = vpack.c.b16 %v8548, %v8547
      %v8613 = vpack.c.b16 %v8550, %v8549
      %v8614 = vpack.c.b16 %v8552, %v8551
      %v8615 = vpack.c.b16 %v8554, %v8553
      %v8616 = vpack.c.b16 %v8556, %v8555
      %v8617 = vpack.c.b16 %v8558, %v8557
      %v8618 = vpack.c.b16 %v8560, %v8559
      %v8619 = vpack.c.b16 %v8562, %v8561
      %v8620 = vpack.c.b16 %v8564, %v8563
      %v8621 = vpack.c.b16 %v8566, %v8565
      %v8622 = vpack.c.b16 %v8568, %v8567
      %v8623 = vpack.c.b16 %v8570, %v8569
      %v8624 = vpack.c.b16 %v8572, %v8571
      %v8625 = vpack.c.b16 %v8574, %v8573
      %v8626 = vpack.c.b16 %v8576, %v8575
      %v8627 = vpack.c.b16 %v8578, %v8577
      %v8628 = vpack.c.b16 %v8580, %v8579
      %v8629 = vpack.c.b16 %v8582, %v8581
      %v8630 = vpack.c.b16 %v8584, %v8583
      %v8631 = vpack.c.b16 %v8586, %v8585
      %v8632 = vpack.c.b16 %v8588, %v8587
      %v8633 = vpack.c.b16 %v8590, %v8589
      %v8634 = vpack.c.b16 %v8592, %v8591
      %v8635 = vpack.c.b16 %v8594, %v8593
      %v8636 = vpack.c.b16 %v8596, %v8595
      %v8637 = vpack.c.b16 %v8598, %v8597
      %v8638 = vpack.c.b16 %v8600, %v8599
      %v8639 = vpack.c.b16 %v8602, %v8601
      %v8640 = vpack.c.b16 %v8604, %v8603
      %v8678 = vsel %vm253, %v8294, 0
      %v8681 = vsel %vm253, %v8299, 0
      %v8684 = vsel %vm253, %v8304, 0
      %v8687 = vsel %vm253, %v8309, 0
      %v8690 = vsel %vm253, %v8314, 0
      %v8693 = vsel %vm253, %v8319, 0
      %v8696 = vsel %vm253, %v8324, 0
      %v8699 = vsel %vm253, %v8329, 0
      %v8702 = vsel %vm253, %v8334, 0
      %v8705 = vsel %vm253, %v8339, 0
      %v8708 = vsel %vm253, %v8344, 0
      %v8711 = vsel %vm253, %v8349, 0
      %v8714 = vsel %vm253, %v8354, 0
      %v8717 = vsel %vm253, %v8359, 0
      %v8720 = vsel %vm253, %v8364, 0
      %v8723 = vsel %vm253, %v8369, 0
      %v8726 = vsel %vm253, %v8374, 0
      %v8729 = vsel %vm253, %v8379, 0
      %8731 = vmatprep.subr.bf16.mxu0 0
      %8732 = vmatpush1.bf16.msra.mxu0 %v8605
      %8733 = vmatprep.subr.bf16.mxu0 0
      %8734 = vmatpush1.bf16.msra.mxu0 %v8606
      %8735 = vmatprep.subr.bf16.mxu0 0
      %8736 = vmatpush1.bf16.msra.mxu0 %v8607
      %8737 = vmatprep.subr.bf16.mxu0 0
      %8738 = vmatpush1.bf16.msra.mxu0 %v8608
      %8739 = vmatprep.subr.bf16.mxu0 0
      %8740 = vmatpush1.bf16.msra.mxu0 %v8609
      %8741 = vmatprep.subr.bf16.mxu0 0
      %8742 = vmatpush1.bf16.msra.mxu0 %v8610
      %8743 = vmatprep.subr.bf16.mxu0 0
      %8744 = vmatpush1.bf16.msra.mxu0 %v8611
      %8745 = vmatprep.subr.bf16.mxu0 0
      %8746 = vmatpush1.bf16.msra.mxu0 %v8612
      %8747 = vmatprep.subr.bf16.mxu0 0
      %8748 = vmatpush1.bf16.msra.mxu0 %v8613
      %8749 = vmatprep.subr.bf16.mxu0 0
      %8750 = vmatpush1.bf16.msra.mxu0 %v8614
      %8751 = vmatprep.subr.bf16.mxu0 0
      %8752 = vmatpush1.bf16.msra.mxu0 %v8615
      %8753 = vmatprep.subr.bf16.mxu0 0
      %8754 = vmatpush1.bf16.msra.mxu0 %v8616
      %8755 = vmatprep.subr.bf16.mxu0 0
      %8756 = vmatpush1.bf16.msra.mxu0 %v8617
      %8757 = vmatprep.subr.bf16.mxu0 0
      %8758 = vmatpush1.bf16.msra.mxu0 %v8618
      %8759 = vmatprep.subr.bf16.mxu0 0
      %8760 = vmatpush1.bf16.msra.mxu0 %v8619
      %8761 = vmatprep.subr.bf16.mxu0 0
      %8762 = vmatpush1.bf16.msra.mxu0 %v8620
      %8763 = vmatprep.mubr.bf16.mxu0 %v8291
      %8764 = vmatmul.mubr.bf16.gmra.mrb[0].mxu0 %v8290
      %v8765 = vpop.f32.mrb[0].mxu0
      %v8766 = vadd.f32 %v8459, %v8765
      %v8767 = vpop.f32.mrb[0].mxu0
      %v8768 = vpop.f32.mrb[0].mxu0
      %v8769 = vadd.f32 %v8459, %v8768
      %v8770 = vpop.f32.mrb[0].mxu0
      %8771 = vmatprep.mubr.bf16.mxu0 %v8296
      %8772 = vmatmul.mubr.bf16.gmra.mrb[0].mxu0 %v8295
      %v8773 = vpop.f32.mrb[0].mxu0
      %v8774 = vadd.f32 %v8459, %v8773
      %v8775 = vpop.f32.mrb[0].mxu0
      %v8776 = vpop.f32.mrb[0].mxu0
      %v8777 = vadd.f32 %v8459, %v8776
      %v8778 = vpop.f32.mrb[0].mxu0
      %8779 = vmatprep.mubr.bf16.mxu0 %v8301
      %8780 = vmatmul.mubr.bf16.gmra.mrb[0].mxu0 %v8300
      %v8781 = vpop.f32.mrb[0].mxu0
      %v8782 = vadd.f32 %v8459, %v8781
      %v8783 = vpop.f32.mrb[0].mxu0
      %v8784 = vpop.f32.mrb[0].mxu0
      %v8785 = vadd.f32 %v8459, %v8784
      %v8786 = vpop.f32.mrb[0].mxu0
      %8787 = vmatprep.mubr.bf16.mxu0 %v8306
      %8788 = vmatmul.mubr.bf16.gmra.mrb[0].mxu0 %v8305
      %v8789 = vpop.f32.mrb[0].mxu0
      %v8790 = vadd.f32 %v8459, %v8789
      %v8791 = vpop.f32.mrb[0].mxu0
      %v8792 = vpop.f32.mrb[0].mxu0
      %v8793 = vadd.f32 %v8459, %v8792
      %v8794 = vpop.f32.mrb[0].mxu0
      %8795 = vmatprep.mubr.bf16.mxu0 %v8311
      %8796 = vmatmul.mubr.bf16.gmra.mrb[0].mxu0 %v8310
      %v8797 = vpop.f32.mrb[0].mxu0
      %v8798 = vadd.f32 %v8459, %v8797
      %v8799 = vpop.f32.mrb[0].mxu0
      %v8800 = vpop.f32.mrb[0].mxu0
      %v8801 = vadd.f32 %v8459, %v8800
      %v8802 = vpop.f32.mrb[0].mxu0
      %8803 = vmatprep.mubr.bf16.mxu0 %v8316
      %8804 = vmatmul.mubr.bf16.gmra.mrb[0].mxu0 %v8315
      %v8805 = vpop.f32.mrb[0].mxu0
      %v8806 = vadd.f32 %v8459, %v8805
      %v8807 = vpop.f32.mrb[0].mxu0
      %v8808 = vpop.f32.mrb[0].mxu0
      %v8809 = vadd.f32 %v8459, %v8808
      %v8810 = vpop.f32.mrb[0].mxu0
      %8811 = vmatprep.mubr.bf16.mxu0 %v8321
      %8812 = vmatmul.mubr.bf16.gmra.mrb[0].mxu0 %v8320
      %v8813 = vpop.f32.mrb[0].mxu0
      %v8814 = vadd.f32 %v8459, %v8813
      %v8815 = vpop.f32.mrb[0].mxu0
      %v8816 = vpop.f32.mrb[0].mxu0
      %v8817 = vadd.f32 %v8459, %v8816
      %v8818 = vpop.f32.mrb[0].mxu0
      %8819 = vmatprep.mubr.bf16.mxu0 %v8326
      %8820 = vmatmul.mubr.bf16.gmra.mrb[0].mxu0 %v8325
      %v8821 = vpop.f32.mrb[0].mxu0
      %v8822 = vadd.f32 %v8459, %v8821
      %v8823 = vpop.f32.mrb[0].mxu0
      %v8824 = vpop.f32.mrb[0].mxu0
      %v8825 = vadd.f32 %v8459, %v8824
      %v8826 = vpop.f32.mrb[0].mxu0
      %8827 = vmatprep.mubr.bf16.mxu0 %v8331
      %8828 = vmatmul.mubr.bf16.gmra.mrb[0].mxu0 %v8330
      %v8829 = vpop.f32.mrb[0].mxu0
      %v8830 = vadd.f32 %v8459, %v8829
      %v8831 = vpop.f32.mrb[0].mxu0
      %v8832 = vpop.f32.mrb[0].mxu0
      %v8833 = vadd.f32 %v8459, %v8832
      %v8834 = vpop.f32.mrb[0].mxu0
      %8835 = vmatprep.mubr.bf16.mxu0 %v8336
      %8836 = vmatmul.mubr.bf16.gmra.mrb[0].mxu0 %v8335
      %v8837 = vpop.f32.mrb[0].mxu0
      %v8838 = vadd.f32 %v8459, %v8837
      %v8839 = vpop.f32.mrb[0].mxu0
      %v8840 = vpop.f32.mrb[0].mxu0
      %v8841 = vadd.f32 %v8459, %v8840
      %v8842 = vpop.f32.mrb[0].mxu0
      %8843 = vmatprep.mubr.bf16.mxu0 %v8341
      %8844 = vmatmul.mubr.bf16.gmra.mrb[0].mxu0 %v8340
      %v8845 = vpop.f32.mrb[0].mxu0
      %v8846 = vadd.f32 %v8459, %v8845
      %v8847 = vpop.f32.mrb[0].mxu0
      %v8848 = vpop.f32.mrb[0].mxu0
      %v8849 = vadd.f32 %v8459, %v8848
      %v8850 = vpop.f32.mrb[0].mxu0
      %8851 = vmatprep.mubr.bf16.mxu0 %v8346
      %8852 = vmatmul.mubr.bf16.gmra.mrb[0].mxu0 %v8345
      %v8853 = vpop.f32.mrb[0].mxu0
      %v8854 = vadd.f32 %v8459, %v8853
      %v8855 = vpop.f32.mrb[0].mxu0
      %v8856 = vpop.f32.mrb[0].mxu0
      %v8857 = vadd.f32 %v8459, %v8856
      %v8858 = vpop.f32.mrb[0].mxu0
      %8859 = vmatprep.mubr.bf16.mxu0 %v8351
      %8860 = vmatmul.mubr.bf16.gmra.mrb[0].mxu0 %v8350
      %v8861 = vpop.f32.mrb[0].mxu0
      %v8862 = vadd.f32 %v8459, %v8861
      %v8863 = vpop.f32.mrb[0].mxu0
      %v8864 = vpop.f32.mrb[0].mxu0
      %v8865 = vadd.f32 %v8459, %v8864
      %v8866 = vpop.f32.mrb[0].mxu0
      %8867 = vmatprep.mubr.bf16.mxu0 %v8356
      %8868 = vmatmul.mubr.bf16.gmra.mrb[0].mxu0 %v8355
      %v8869 = vpop.f32.mrb[0].mxu0
      %v8870 = vadd.f32 %v8459, %v8869
      %v8871 = vpop.f32.mrb[0].mxu0
      %v8872 = vpop.f32.mrb[0].mxu0
      %v8873 = vadd.f32 %v8459, %v8872
      %v8874 = vpop.f32.mrb[0].mxu0
      %8875 = vmatprep.mubr.bf16.mxu0 %v8361
      %8876 = vmatmul.mubr.bf16.gmra.mrb[0].mxu0 %v8360
      %v8877 = vpop.f32.mrb[0].mxu0
      %v8878 = vadd.f32 %v8459, %v8877
      %v8879 = vpop.f32.mrb[0].mxu0
      %v8880 = vpop.f32.mrb[0].mxu0
      %v8881 = vadd.f32 %v8459, %v8880
      %v8882 = vpop.f32.mrb[0].mxu0
      %8883 = vmatprep.mubr.bf16.mxu0 %v8366
      %8884 = vmatmul.mubr.bf16.gmra.mrb[0].mxu0 %v8365
      %v8885 = vpop.f32.mrb[0].mxu0
      %v8886 = vadd.f32 %v8459, %v8885
      %v8887 = vpop.f32.mrb[0].mxu0
      %v8888 = vpop.f32.mrb[0].mxu0
      %v8889 = vadd.f32 %v8459, %v8888
      %v8890 = vpop.f32.mrb[0].mxu0
      %8891 = vmatprep.mubr.bf16.mxu0 %v8371
      %8892 = vmatmul.mubr.bf16.gmra.mrb[0].mxu0 %v8370
      %v8893 = vpop.f32.mrb[0].mxu0
      %v8894 = vadd.f32 %v8459, %v8893
      %v8895 = vpop.f32.mrb[0].mxu0
      %v8896 = vpop.f32.mrb[0].mxu0
      %v8897 = vadd.f32 %v8459, %v8896
      %v8898 = vpop.f32.mrb[0].mxu0
      %8899 = vmatprep.mubr.bf16.mxu0 %v8376
      %8900 = vmatmul.mubr.bf16.gmra.mrb[0].mxu0 %v8375
      %v8901 = vpop.f32.mrb[0].mxu0
      %v8902 = vadd.f32 %v8459, %v8901
      %v8903 = vpop.f32.mrb[0].mxu0
      %v8904 = vpop.f32.mrb[0].mxu0
      %v8905 = vadd.f32 %v8459, %v8904
      %v8906 = vpop.f32.mrb[0].mxu0
      %8907 = vdwg.mxu0
      %8908 = vmatprep.subr.bf16.mxu0 0
      %8909 = vmatpush1.bf16.msra.mxu0 %v8621
      %8910 = vmatprep.subr.bf16.mxu0 0
      %8911 = vmatpush1.bf16.msra.mxu0 %v8622
      %8912 = vmatprep.subr.bf16.mxu0 0
      %8913 = vmatpush1.bf16.msra.mxu0 %v8623
      %8914 = vmatprep.subr.bf16.mxu0 0
      %8915 = vmatpush1.bf16.msra.mxu0 %v8624
      %8916 = vmatprep.subr.bf16.mxu0 0
      %8917 = vmatpush1.bf16.msra.mxu0 %v8625
      %8918 = vmatprep.subr.bf16.mxu0 0
      %8919 = vmatpush1.bf16.msra.mxu0 %v8626
      %8920 = vmatprep.subr.bf16.mxu0 0
      %8921 = vmatpush1.bf16.msra.mxu0 %v8627
      %8922 = vmatprep.subr.bf16.mxu0 0
      %8923 = vmatpush1.bf16.msra.mxu0 %v8628
      %8924 = vmatprep.subr.bf16.mxu0 0
      %8925 = vmatpush1.bf16.msra.mxu0 %v8629
      %8926 = vmatprep.subr.bf16.mxu0 0
      %8927 = vmatpush1.bf16.msra.mxu0 %v8630
      %8928 = vmatprep.subr.bf16.mxu0 0
      %8929 = vmatpush1.bf16.msra.mxu0 %v8631
      %8930 = vmatprep.subr.bf16.mxu0 0
      %8931 = vmatpush1.bf16.msra.mxu0 %v8632
      %8932 = vmatprep.subr.bf16.mxu0 0
      %8933 = vmatpush1.bf16.msra.mxu0 %v8633
      %8934 = vmatprep.subr.bf16.mxu0 0
      %8935 = vmatpush1.bf16.msra.mxu0 %v8634
      %8936 = vmatprep.subr.bf16.mxu0 0
      %8937 = vmatpush1.bf16.msra.mxu0 %v8635
      %8938 = vmatprep.subr.bf16.mxu0 0
      %8939 = vmatpush1.bf16.msra.mxu0 %v8636
      %8940 = vmatprep.mubr.bf16.mxu0 %v8293
      %8941 = vmatmul.mubr.bf16.gmra.mrb[0].mxu0 %v8292
      %v8942 = vpop.f32.mrb[0].mxu0
      %v8943 = vadd.f32 %v8766, %v8942
      %v8944 = vpop.f32.mrb[0].mxu0
      %v8945 = vpop.f32.mrb[0].mxu0
      %v8946 = vadd.f32 %v8769, %v8945
      %v8947 = vpop.f32.mrb[0].mxu0
      %8948 = vmatprep.mubr.bf16.mxu0 %v8298
      %8949 = vmatmul.mubr.bf16.gmra.mrb[0].mxu0 %v8297
      %v8950 = vpop.f32.mrb[0].mxu0
      %v8951 = vadd.f32 %v8774, %v8950
      %v8952 = vpop.f32.mrb[0].mxu0
      %v8953 = vpop.f32.mrb[0].mxu0
      %v8954 = vadd.f32 %v8777, %v8953
      %v8955 = vpop.f32.mrb[0].mxu0
      %8956 = vmatprep.mubr.bf16.mxu0 %v8303
      %8957 = vmatmul.mubr.bf16.gmra.mrb[0].mxu0 %v8302
      %v8958 = vpop.f32.mrb[0].mxu0
      %v8959 = vadd.f32 %v8782, %v8958
      %v8960 = vpop.f32.mrb[0].mxu0
      %v8961 = vpop.f32.mrb[0].mxu0
      %v8962 = vadd.f32 %v8785, %v8961
      %v8963 = vpop.f32.mrb[0].mxu0
      %8964 = vmatprep.mubr.bf16.mxu0 %v8308
      %8965 = vmatmul.mubr.bf16.gmra.mrb[0].mxu0 %v8307
      %v8966 = vpop.f32.mrb[0].mxu0
      %v8967 = vadd.f32 %v8790, %v8966
      %v8968 = vpop.f32.mrb[0].mxu0
      %v8969 = vpop.f32.mrb[0].mxu0
      %v8970 = vadd.f32 %v8793, %v8969
      %v8971 = vpop.f32.mrb[0].mxu0
      %8972 = vmatprep.mubr.bf16.mxu0 %v8313
      %8973 = vmatmul.mubr.bf16.gmra.mrb[0].mxu0 %v8312
      %v8974 = vpop.f32.mrb[0].mxu0
      %v8975 = vadd.f32 %v8798, %v8974
      %v8976 = vpop.f32.mrb[0].mxu0
      %v8977 = vpop.f32.mrb[0].mxu0
      %v8978 = vadd.f32 %v8801, %v8977
      %v8979 = vpop.f32.mrb[0].mxu0
      %8980 = vmatprep.mubr.bf16.mxu0 %v8318
      %8981 = vmatmul.mubr.bf16.gmra.mrb[0].mxu0 %v8317
      %v8982 = vpop.f32.mrb[0].mxu0
      %v8983 = vadd.f32 %v8806, %v8982
      %v8984 = vpop.f32.mrb[0].mxu0
      %v8985 = vpop.f32.mrb[0].mxu0
      %v8986 = vadd.f32 %v8809, %v8985
      %v8987 = vpop.f32.mrb[0].mxu0
      %8988 = vmatprep.mubr.bf16.mxu0 %v8323
      %8989 = vmatmul.mubr.bf16.gmra.mrb[0].mxu0 %v8322
      %v8990 = vpop.f32.mrb[0].mxu0
      %v8991 = vadd.f32 %v8814, %v8990
      %v8992 = vpop.f32.mrb[0].mxu0
      %v8993 = vpop.f32.mrb[0].mxu0
      %v8994 = vadd.f32 %v8817, %v8993
      %v8995 = vpop.f32.mrb[0].mxu0
      %8996 = vmatprep.mubr.bf16.mxu0 %v8328
      %8997 = vmatmul.mubr.bf16.gmra.mrb[0].mxu0 %v8327
      %v8998 = vpop.f32.mrb[0].mxu0
      %v8999 = vadd.f32 %v8822, %v8998
      %v9000 = vpop.f32.mrb[0].mxu0
      %v9001 = vpop.f32.mrb[0].mxu0
      %v9002 = vadd.f32 %v8825, %v9001
      %v9003 = vpop.f32.mrb[0].mxu0
      %9004 = vmatprep.mubr.bf16.mxu0 %v8333
      %9005 = vmatmul.mubr.bf16.gmra.mrb[0].mxu0 %v8332
      %v9006 = vpop.f32.mrb[0].mxu0
      %v9007 = vadd.f32 %v8830, %v9006
      %v9008 = vpop.f32.mrb[0].mxu0
      %v9009 = vpop.f32.mrb[0].mxu0
      %v9010 = vadd.f32 %v8833, %v9009
      %v9011 = vpop.f32.mrb[0].mxu0
      %9012 = vmatprep.mubr.bf16.mxu0 %v8338
      %9013 = vmatmul.mubr.bf16.gmra.mrb[0].mxu0 %v8337
      %v9014 = vpop.f32.mrb[0].mxu0
      %v9015 = vadd.f32 %v8838, %v9014
      %v9016 = vpop.f32.mrb[0].mxu0
      %v9017 = vpop.f32.mrb[0].mxu0
      %v9018 = vadd.f32 %v8841, %v9017
      %v9019 = vpop.f32.mrb[0].mxu0
      %9020 = vmatprep.mubr.bf16.mxu0 %v8343
      %9021 = vmatmul.mubr.bf16.gmra.mrb[0].mxu0 %v8342
      %v9022 = vpop.f32.mrb[0].mxu0
      %v9023 = vadd.f32 %v8846, %v9022
      %v9024 = vpop.f32.mrb[0].mxu0
      %v9025 = vpop.f32.mrb[0].mxu0
      %v9026 = vadd.f32 %v8849, %v9025
      %v9027 = vpop.f32.mrb[0].mxu0
      %9028 = vmatprep.mubr.bf16.mxu0 %v8348
      %9029 = vmatmul.mubr.bf16.gmra.mrb[0].mxu0 %v8347
      %v9030 = vpop.f32.mrb[0].mxu0
      %v9031 = vadd.f32 %v8854, %v9030
      %v9032 = vpop.f32.mrb[0].mxu0
      %v9033 = vpop.f32.mrb[0].mxu0
      %v9034 = vadd.f32 %v8857, %v9033
      %v9035 = vpop.f32.mrb[0].mxu0
      %9036 = vmatprep.mubr.bf16.mxu0 %v8353
      %9037 = vmatmul.mubr.bf16.gmra.mrb[0].mxu0 %v8352
      %v9038 = vpop.f32.mrb[0].mxu0
      %v9039 = vadd.f32 %v8862, %v9038
      %v9040 = vpop.f32.mrb[0].mxu0
      %v9041 = vpop.f32.mrb[0].mxu0
      %v9042 = vadd.f32 %v8865, %v9041
      %v9043 = vpop.f32.mrb[0].mxu0
      %9044 = vmatprep.mubr.bf16.mxu0 %v8358
      %9045 = vmatmul.mubr.bf16.gmra.mrb[0].mxu0 %v8357
      %v9046 = vpop.f32.mrb[0].mxu0
      %v9047 = vadd.f32 %v8870, %v9046
      %v9048 = vpop.f32.mrb[0].mxu0
      %v9049 = vpop.f32.mrb[0].mxu0
      %v9050 = vadd.f32 %v8873, %v9049
      %v9051 = vpop.f32.mrb[0].mxu0
      %9052 = vmatprep.mubr.bf16.mxu0 %v8363
      %9053 = vmatmul.mubr.bf16.gmra.mrb[0].mxu0 %v8362
      %v9054 = vpop.f32.mrb[0].mxu0
      %v9055 = vadd.f32 %v8878, %v9054
      %v9056 = vpop.f32.mrb[0].mxu0
      %v9057 = vpop.f32.mrb[0].mxu0
      %v9058 = vadd.f32 %v8881, %v9057
      %v9059 = vpop.f32.mrb[0].mxu0
      %9060 = vmatprep.mubr.bf16.mxu0 %v8368
      %9061 = vmatmul.mubr.bf16.gmra.mrb[0].mxu0 %v8367
      %v9062 = vpop.f32.mrb[0].mxu0
      %v9063 = vadd.f32 %v8886, %v9062
      %v9064 = vpop.f32.mrb[0].mxu0
      %v9065 = vpop.f32.mrb[0].mxu0
      %v9066 = vadd.f32 %v8889, %v9065
      %v9067 = vpop.f32.mrb[0].mxu0
      %9068 = vmatprep.mubr.bf16.mxu0 %v8373
      %9069 = vmatmul.mubr.bf16.gmra.mrb[0].mxu0 %v8372
      %v9070 = vpop.f32.mrb[0].mxu0
      %v9071 = vadd.f32 %v8894, %v9070
      %v9072 = vpop.f32.mrb[0].mxu0
      %v9073 = vpop.f32.mrb[0].mxu0
      %v9074 = vadd.f32 %v8897, %v9073
      %v9075 = vpop.f32.mrb[0].mxu0
      %9076 = vmatprep.mubr.bf16.mxu0 %v8378
      %9077 = vmatmul.mubr.bf16.gmra.mrb[0].mxu0 %v8377
      %v9078 = vpop.f32.mrb[0].mxu0
      %v9079 = vadd.f32 %v8902, %v9078
      %v9080 = vpop.f32.mrb[0].mxu0
      %v9081 = vpop.f32.mrb[0].mxu0
      %v9082 = vadd.f32 %v8905, %v9081
      %v9083 = vpop.f32.mrb[0].mxu0
      %9084 = vdwg.mxu0
      %9085 = vmatprep.subr.bf16.mxu0 0
      %9086 = vmatpush1.bf16.msra.mxu0 %v8637
      %9087 = vmatprep.subr.bf16.mxu0 0
      %9088 = vmatpush1.bf16.msra.mxu0 %v8638
      %9089 = vmatprep.subr.bf16.mxu0 0
      %9090 = vmatpush1.bf16.msra.mxu0 %v8639
      %9091 = vmatprep.subr.bf16.mxu0 0
      %9092 = vmatpush1.bf16.msra.mxu0 %v8640
      %9093 = vmatprep.subr.bf16.mxu0 0
      %9094 = vmatpush1.bf16.msra.mxu0 0
      %9095 = vmatprep.subr.bf16.mxu0 0
      %9096 = vmatpush1.bf16.msra.mxu0 0
      %9097 = vmatprep.subr.bf16.mxu0 0
      %9098 = vmatpush1.bf16.msra.mxu0 0
      %9099 = vmatprep.subr.bf16.mxu0 0
      %9100 = vmatpush1.bf16.msra.mxu0 0
      %9101 = vmatprep.subr.bf16.mxu0 0
      %9102 = vmatpush1.bf16.msra.mxu0 0
      %9103 = vmatprep.subr.bf16.mxu0 0
      %9104 = vmatpush1.bf16.msra.mxu0 0
      %9105 = vmatprep.subr.bf16.mxu0 0
      %9106 = vmatpush1.bf16.msra.mxu0 0
      %9107 = vmatprep.subr.bf16.mxu0 0
      %9108 = vmatpush1.bf16.msra.mxu0 0
      %9109 = vmatprep.subr.bf16.mxu0 0
      %9110 = vmatpush1.bf16.msra.mxu0 0
      %9111 = vmatprep.subr.bf16.mxu0 0
      %9112 = vmatpush1.bf16.msra.mxu0 0
      %9113 = vmatprep.subr.bf16.mxu0 0
      %9114 = vmatpush1.bf16.msra.mxu0 0
      %9115 = vmatprep.subr.bf16.mxu0 0
      %9116 = vmatpush1.bf16.msra.mxu0 0
      %9117 = vmatprep.mubr.bf16.mxu0 0
      %9118 = vmatmul.mubr.bf16.gmra.mrb[0].mxu0 %v8678
      %v9119 = vpop.f32.mrb[0].mxu0
      %v9120 = vadd.f32 %v8943, %v9119
      %v9121 = vpop.f32.mrb[0].mxu0
      %v9122 = vpop.f32.mrb[0].mxu0
      %v9123 = vadd.f32 %v8946, %v9122
      %v9124 = vpop.f32.mrb[0].mxu0
      %9125 = vmatprep.mubr.bf16.mxu0 0
      %9126 = vmatmul.mubr.bf16.gmra.mrb[0].mxu0 %v8681
      %v9127 = vpop.f32.mrb[0].mxu0
      %v9128 = vadd.f32 %v8951, %v9127
      %v9129 = vpop.f32.mrb[0].mxu0
      %v9130 = vpop.f32.mrb[0].mxu0
      %v9131 = vadd.f32 %v8954, %v9130
      %v9132 = vpop.f32.mrb[0].mxu0
      %9133 = vmatprep.mubr.bf16.mxu0 0
      %9134 = vmatmul.mubr.bf16.gmra.mrb[0].mxu0 %v8684
      %v9135 = vpop.f32.mrb[0].mxu0
      %v9136 = vadd.f32 %v8959, %v9135
      %v9137 = vpop.f32.mrb[0].mxu0
      %v9138 = vpop.f32.mrb[0].mxu0
      %v9139 = vadd.f32 %v8962, %v9138
      %v9140 = vpop.f32.mrb[0].mxu0
      %9141 = vmatprep.mubr.bf16.mxu0 0
      %9142 = vmatmul.mubr.bf16.gmra.mrb[0].mxu0 %v8687
      %v9143 = vpop.f32.mrb[0].mxu0
      %v9144 = vadd.f32 %v8967, %v9143
      %v9145 = vpop.f32.mrb[0].mxu0
      %v9146 = vpop.f32.mrb[0].mxu0
      %v9147 = vadd.f32 %v8970, %v9146
      %v9148 = vpop.f32.mrb[0].mxu0
      %9149 = vmatprep.mubr.bf16.mxu0 0
      %9150 = vmatmul.mubr.bf16.gmra.mrb[0].mxu0 %v8690
      %v9151 = vpop.f32.mrb[0].mxu0
      %v9152 = vadd.f32 %v8975, %v9151
      %v9153 = vpop.f32.mrb[0].mxu0
      %v9154 = vpop.f32.mrb[0].mxu0
      %v9155 = vadd.f32 %v8978, %v9154
      %v9156 = vpop.f32.mrb[0].mxu0
      %9157 = vmatprep.mubr.bf16.mxu0 0
      %9158 = vmatmul.mubr.bf16.gmra.mrb[0].mxu0 %v8693
      %v9159 = vpop.f32.mrb[0].mxu0
      %v9160 = vadd.f32 %v8983, %v9159
      %v9161 = vpop.f32.mrb[0].mxu0
      %v9162 = vpop.f32.mrb[0].mxu0
      %v9163 = vadd.f32 %v8986, %v9162
      %v9164 = vpop.f32.mrb[0].mxu0
      %9165 = vmatprep.mubr.bf16.mxu0 0
      %9166 = vmatmul.mubr.bf16.gmra.mrb[0].mxu0 %v8696
      %v9167 = vpop.f32.mrb[0].mxu0
      %v9168 = vadd.f32 %v8991, %v9167
      %v9169 = vpop.f32.mrb[0].mxu0
      %v9170 = vpop.f32.mrb[0].mxu0
      %v9171 = vadd.f32 %v8994, %v9170
      %v9172 = vpop.f32.mrb[0].mxu0
      %9173 = vmatprep.mubr.bf16.mxu0 0
      %9174 = vmatmul.mubr.bf16.gmra.mrb[0].mxu0 %v8699
      %v9175 = vpop.f32.mrb[0].mxu0
      %v9176 = vadd.f32 %v8999, %v9175
      %v9177 = vpop.f32.mrb[0].mxu0
      %v9178 = vpop.f32.mrb[0].mxu0
      %v9179 = vadd.f32 %v9002, %v9178
      %v9180 = vpop.f32.mrb[0].mxu0
      %9181 = vmatprep.mubr.bf16.mxu0 0
      %9182 = vmatmul.mubr.bf16.gmra.mrb[0].mxu0 %v8702
      %v9183 = vpop.f32.mrb[0].mxu0
      %v9184 = vadd.f32 %v9007, %v9183
      %v9185 = vpop.f32.mrb[0].mxu0
      %v9186 = vpop.f32.mrb[0].mxu0
      %v9187 = vadd.f32 %v9010, %v9186
      %v9188 = vpop.f32.mrb[0].mxu0
      %9189 = vmatprep.mubr.bf16.mxu0 0
      %9190 = vmatmul.mubr.bf16.gmra.mrb[0].mxu0 %v8705
      %v9191 = vpop.f32.mrb[0].mxu0
      %v9192 = vadd.f32 %v9015, %v9191
      %v9193 = vpop.f32.mrb[0].mxu0
      %v9194 = vpop.f32.mrb[0].mxu0
      %v9195 = vadd.f32 %v9018, %v9194
      %v9196 = vpop.f32.mrb[0].mxu0
      %9197 = vmatprep.mubr.bf16.mxu0 0
      %9198 = vmatmul.mubr.bf16.gmra.mrb[0].mxu0 %v8708
      %v9199 = vpop.f32.mrb[0].mxu0
      %v9200 = vadd.f32 %v9023, %v9199
      %v9201 = vpop.f32.mrb[0].mxu0
      %v9202 = vpop.f32.mrb[0].mxu0
      %v9203 = vadd.f32 %v9026, %v9202
      %v9204 = vpop.f32.mrb[0].mxu0
      %9205 = vmatprep.mubr.bf16.mxu0 0
      %9206 = vmatmul.mubr.bf16.gmra.mrb[0].mxu0 %v8711
      %v9207 = vpop.f32.mrb[0].mxu0
      %v9208 = vadd.f32 %v9031, %v9207
      %v9209 = vpop.f32.mrb[0].mxu0
      %v9210 = vpop.f32.mrb[0].mxu0
      %v9211 = vadd.f32 %v9034, %v9210
      %v9212 = vpop.f32.mrb[0].mxu0
      %9213 = vmatprep.mubr.bf16.mxu0 0
      %9214 = vmatmul.mubr.bf16.gmra.mrb[0].mxu0 %v8714
      %v9215 = vpop.f32.mrb[0].mxu0
      %v9216 = vadd.f32 %v9039, %v9215
      %v9217 = vpop.f32.mrb[0].mxu0
      %v9218 = vpop.f32.mrb[0].mxu0
      %v9219 = vadd.f32 %v9042, %v9218
      %v9220 = vpop.f32.mrb[0].mxu0
      %9221 = vmatprep.mubr.bf16.mxu0 0
      %9222 = vmatmul.mubr.bf16.gmra.mrb[0].mxu0 %v8717
      %v9223 = vpop.f32.mrb[0].mxu0
      %v9224 = vadd.f32 %v9047, %v9223
      %v9225 = vpop.f32.mrb[0].mxu0
      %v9226 = vpop.f32.mrb[0].mxu0
      %v9227 = vadd.f32 %v9050, %v9226
      %v9228 = vpop.f32.mrb[0].mxu0
      %9229 = vmatprep.mubr.bf16.mxu0 0
      %9230 = vmatmul.mubr.bf16.gmra.mrb[0].mxu0 %v8720
      %v9231 = vpop.f32.mrb[0].mxu0
      %v9232 = vadd.f32 %v9055, %v9231
      %v9233 = vpop.f32.mrb[0].mxu0
      %v9234 = vpop.f32.mrb[0].mxu0
      %v9235 = vadd.f32 %v9058, %v9234
      %v9236 = vpop.f32.mrb[0].mxu0
      %9237 = vmatprep.mubr.bf16.mxu0 0
      %9238 = vmatmul.mubr.bf16.gmra.mrb[0].mxu0 %v8723
      %v9239 = vpop.f32.mrb[0].mxu0
      %v9240 = vadd.f32 %v9063, %v9239
      %v9241 = vpop.f32.mrb[0].mxu0
      %v9242 = vpop.f32.mrb[0].mxu0
      %v9243 = vadd.f32 %v9066, %v9242
      %v9244 = vpop.f32.mrb[0].mxu0
      %9245 = vmatprep.mubr.bf16.mxu0 0
      %9246 = vmatmul.mubr.bf16.gmra.mrb[0].mxu0 %v8726
      %v9247 = vpop.f32.mrb[0].mxu0
      %v9248 = vadd.f32 %v9071, %v9247
      %v9249 = vpop.f32.mrb[0].mxu0
      %v9250 = vpop.f32.mrb[0].mxu0
      %v9251 = vadd.f32 %v9074, %v9250
      %v9252 = vpop.f32.mrb[0].mxu0
      %9253 = vmatprep.mubr.bf16.mxu0 0
      %9254 = vmatmul.mubr.bf16.gmra.mrb[0].mxu0 %v8729
      %v9255 = vpop.f32.mrb[0].mxu0
      %v9256 = vadd.f32 %v9079, %v9255
      %v9257 = vpop.f32.mrb[0].mxu0
      %v9258 = vpop.f32.mrb[0].mxu0
      %v9259 = vadd.f32 %v9082, %v9258
      %v9260 = vpop.f32.mrb[0].mxu0
      %9261 = vdwg.mxu0
      %vm9262 = vcmp.gt.f32.partialorder %v9120, 0.0
      %vm9263 = vcmp.gt.f32.partialorder %v9123, 0.0
      %vm9264 = vcmp.gt.f32.partialorder %v9128, 0.0
      %vm9265 = vcmp.gt.f32.partialorder %v9131, 0.0
      %vm9266 = vcmp.gt.f32.partialorder %v9136, 0.0
      %vm9267 = vcmp.gt.f32.partialorder %v9139, 0.0
      %vm9268 = vcmp.gt.f32.partialorder %v9144, 0.0
      %vm9269 = vcmp.gt.f32.partialorder %v9147, 0.0
      %vm9270 = vcmp.gt.f32.partialorder %v9152, 0.0
      %vm9271 = vcmp.gt.f32.partialorder %v9155, 0.0
      %vm9272 = vcmp.gt.f32.partialorder %v9160, 0.0
      %vm9273 = vcmp.gt.f32.partialorder %v9163, 0.0
      %vm9274 = vcmp.gt.f32.partialorder %v9168, 0.0
      %vm9275 = vcmp.gt.f32.partialorder %v9171, 0.0
      %vm9276 = vcmp.gt.f32.partialorder %v9176, 0.0
      %vm9277 = vcmp.gt.f32.partialorder %v9179, 0.0
      %vm9278 = vcmp.gt.f32.partialorder %v9184, 0.0
      %vm9279 = vcmp.gt.f32.partialorder %v9187, 0.0
      %vm9280 = vcmp.gt.f32.partialorder %v9192, 0.0
      %vm9281 = vcmp.gt.f32.partialorder %v9195, 0.0
      %vm9282 = vcmp.gt.f32.partialorder %v9200, 0.0
      %vm9283 = vcmp.gt.f32.partialorder %v9203, 0.0
      %vm9284 = vcmp.gt.f32.partialorder %v9208, 0.0
      %vm9285 = vcmp.gt.f32.partialorder %v9211, 0.0
      %vm9286 = vcmp.gt.f32.partialorder %v9216, 0.0
      %vm9287 = vcmp.gt.f32.partialorder %v9219, 0.0
      %vm9288 = vcmp.gt.f32.partialorder %v9224, 0.0
      %vm9289 = vcmp.gt.f32.partialorder %v9227, 0.0
      %vm9290 = vcmp.gt.f32.partialorder %v9232, 0.0
      %vm9291 = vcmp.gt.f32.partialorder %v9235, 0.0
      %vm9292 = vcmp.gt.f32.partialorder %v9240, 0.0
      %vm9293 = vcmp.gt.f32.partialorder %v9243, 0.0
      %vm9294 = vcmp.gt.f32.partialorder %v9248, 0.0
      %vm9295 = vcmp.gt.f32.partialorder %v9251, 0.0
      %vm9296 = vcmp.gt.f32.partialorder %v9256, 0.0
      %vm9297 = vcmp.gt.f32.partialorder %v9259, 0.0
      %v9298 = vmul.f32 %v9120, 0.01
      %v9299 = vmul.f32 %v9123, 0.01
      %v9300 = vmul.f32 %v9128, 0.01
      %v9301 = vmul.f32 %v9131, 0.01
      %v9302 = vmul.f32 %v9136, 0.01
      %v9303 = vmul.f32 %v9139, 0.01
      %v9304 = vmul.f32 %v9144, 0.01
      %v9305 = vmul.f32 %v9147, 0.01
      %v9306 = vmul.f32 %v9152, 0.01
      %v9307 = vmul.f32 %v9155, 0.01
      %v9308 = vmul.f32 %v9160, 0.01
      %v9309 = vmul.f32 %v9163, 0.01
      %v9310 = vmul.f32 %v9168, 0.01
      %v9311 = vmul.f32 %v9171, 0.01
      %v9312 = vmul.f32 %v9176, 0.01
      %v9313 = vmul.f32 %v9179, 0.01
      %v9314 = vmul.f32 %v9184, 0.01
      %v9315 = vmul.f32 %v9187, 0.01
      %v9316 = vmul.f32 %v9192, 0.01
      %v9317 = vmul.f32 %v9195, 0.01
      %v9318 = vmul.f32 %v9200, 0.01
      %v9319 = vmul.f32 %v9203, 0.01
      %v9320 = vmul.f32 %v9208, 0.01
      %v9321 = vmul.f32 %v9211, 0.01
      %v9322 = vmul.f32 %v9216, 0.01
      %v9323 = vmul.f32 %v9219, 0.01
      %v9324 = vmul.f32 %v9224, 0.01
      %v9325 = vmul.f32 %v9227, 0.01
      %v9326 = vmul.f32 %v9232, 0.01
      %v9327 = vmul.f32 %v9235, 0.01
      %v9328 = vmul.f32 %v9240, 0.01
      %v9329 = vmul.f32 %v9243, 0.01
      %v9330 = vmul.f32 %v9248, 0.01
      %v9331 = vmul.f32 %v9251, 0.01
      %v9332 = vmul.f32 %v9256, 0.01
      %v9333 = vmul.f32 %v9259, 0.01
      %v9334 = vsel %vm9262, %v9120, %v9298
      %v9335 = vsel %vm9263, %v9123, %v9299
      %v9336 = vsel %vm9264, %v9128, %v9300
      %v9337 = vsel %vm9265, %v9131, %v9301
      %v9338 = vsel %vm9266, %v9136, %v9302
      %v9339 = vsel %vm9267, %v9139, %v9303
      %v9340 = vsel %vm9268, %v9144, %v9304
      %v9341 = vsel %vm9269, %v9147, %v9305
      %v9342 = vsel %vm9270, %v9152, %v9306
      %v9343 = vsel %vm9271, %v9155, %v9307
      %v9344 = vsel %vm9272, %v9160, %v9308
      %v9345 = vsel %vm9273, %v9163, %v9309
      %v9346 = vsel %vm9274, %v9168, %v9310
      %v9347 = vsel %vm9275, %v9171, %v9311
      %v9348 = vsel %vm9276, %v9176, %v9312
      %v9349 = vsel %vm9277, %v9179, %v9313
      %v9350 = vsel %vm9278, %v9184, %v9314
      %v9351 = vsel %vm9279, %v9187, %v9315
      %v9352 = vsel %vm9280, %v9192, %v9316
      %v9353 = vsel %vm9281, %v9195, %v9317
      %v9354 = vsel %vm9282, %v9200, %v9318
      %v9355 = vsel %vm9283, %v9203, %v9319
      %v9356 = vsel %vm9284, %v9208, %v9320
      %v9357 = vsel %vm9285, %v9211, %v9321
      %v9358 = vsel %vm9286, %v9216, %v9322
      %v9359 = vsel %vm9287, %v9219, %v9323
      %v9360 = vsel %vm9288, %v9224, %v9324
      %v9361 = vsel %vm9289, %v9227, %v9325
      %v9362 = vsel %vm9290, %v9232, %v9326
      %v9363 = vsel %vm9291, %v9235, %v9327
      %v9364 = vsel %vm9292, %v9240, %v9328
      %v9365 = vsel %vm9293, %v9243, %v9329
      %v9366 = vsel %vm9294, %v9248, %v9330
      %v9367 = vsel %vm9295, %v9251, %v9331
      %v9368 = vsel %vm9296, %v9256, %v9332
      %v9369 = vsel %vm9297, %v9259, %v9333
      %v9370 = vpack.c.bf16 %v9335, %v9334
      %v9371 = vpack.c.bf16 %v9337, %v9336
      %v9372 = vpack.c.bf16 %v9339, %v9338
      %v9373 = vpack.c.bf16 %v9341, %v9340
      %v9374 = vpack.c.bf16 %v9343, %v9342
      %v9375 = vpack.c.bf16 %v9345, %v9344
      %v9376 = vpack.c.bf16 %v9347, %v9346
      %v9377 = vpack.c.bf16 %v9349, %v9348
      %v9378 = vpack.c.bf16 %v9351, %v9350
      %v9379 = vpack.c.bf16 %v9353, %v9352
      %v9380 = vpack.c.bf16 %v9355, %v9354
      %v9381 = vpack.c.bf16 %v9357, %v9356
      %v9382 = vpack.c.bf16 %v9359, %v9358
      %v9383 = vpack.c.bf16 %v9361, %v9360
      %v9384 = vpack.c.bf16 %v9363, %v9362
      %v9385 = vpack.c.bf16 %v9365, %v9364
      %v9386 = vpack.c.bf16 %v9367, %v9366
      %v9387 = vpack.c.bf16 %v9369, %v9368
      %9406 = vrot.lane.b32.xlu0 %v9370, 64
      %v9407 = vpop.permute.xlu0 %9406
      %9408 = vrot.lane.b32.xlu0 %v9371, 64
      %v9409 = vpop.permute.xlu0 %9408
      %9410 = vrot.lane.b32.xlu0 %v9372, 64
      %v9411 = vpop.permute.xlu0 %9410
      %9412 = vrot.lane.b32.xlu0 %v9373, 64
      %v9413 = vpop.permute.xlu0 %9412
      %9414 = vrot.lane.b32.xlu0 %v9374, 64
      %v9415 = vpop.permute.xlu0 %9414
      %9416 = vrot.lane.b32.xlu0 %v9375, 64
      %v9417 = vpop.permute.xlu0 %9416
      %9418 = vrot.lane.b32.xlu0 %v9376, 64
      %v9419 = vpop.permute.xlu0 %9418
      %9420 = vrot.lane.b32.xlu0 %v9377, 64
      %v9421 = vpop.permute.xlu0 %9420
      %9422 = vrot.lane.b32.xlu0 %v9378, 64
      %v9423 = vpop.permute.xlu0 %9422
      %9424 = vrot.lane.b32.xlu0 %v9379, 64
      %v9425 = vpop.permute.xlu0 %9424
      %9426 = vrot.lane.b32.xlu0 %v9380, 64
      %v9427 = vpop.permute.xlu0 %9426
      %9428 = vrot.lane.b32.xlu0 %v9381, 64
      %v9429 = vpop.permute.xlu0 %9428
      %9430 = vrot.lane.b32.xlu0 %v9382, 64
      %v9431 = vpop.permute.xlu0 %9430
      %9432 = vrot.lane.b32.xlu0 %v9383, 64
      %v9433 = vpop.permute.xlu0 %9432
      %9434 = vrot.lane.b32.xlu0 %v9384, 64
      %v9435 = vpop.permute.xlu0 %9434
      %9436 = vrot.lane.b32.xlu0 %v9385, 64
      %v9437 = vpop.permute.xlu0 %9436
      %9438 = vrot.lane.b32.xlu0 %v9386, 64
      %v9439 = vpop.permute.xlu0 %9438
      %9440 = vrot.lane.b32.xlu0 %v9387, 64
      %v9441 = vpop.permute.xlu0 %9440
      %9460 = vst.msk [vmem:[#allocation4 + $0x8] sm:$0xff] %vm461, %v9407
      %9461 = vst.msk [vmem:[#allocation4 + $0x18] sm:$0xff] %vm461, %v9409
      %9462 = vst.msk [vmem:[#allocation4 + $0x28] sm:$0xff] %vm461, %v9411
      %9463 = vst.msk [vmem:[#allocation4 + $0x38] sm:$0xff] %vm461, %v9413
      %9464 = vst.msk [vmem:[#allocation4 + $0x48] sm:$0xff] %vm461, %v9415
      %9465 = vst.msk [vmem:[#allocation4 + $0x58] sm:$0xff] %vm461, %v9417
      %9466 = vst.msk [vmem:[#allocation4 + $0x68] sm:$0xff] %vm461, %v9419
      %9467 = vst.msk [vmem:[#allocation4 + $0x78] sm:$0xff] %vm461, %v9421
      %9468 = vst.msk [vmem:[#allocation4 + $0x88] sm:$0xff] %vm461, %v9423
      %9469 = vst.msk [vmem:[#allocation4 + $0x98] sm:$0xff] %vm461, %v9425
      %9470 = vst.msk [vmem:[#allocation4 + $0xa8] sm:$0xff] %vm461, %v9427
      %9471 = vst.msk [vmem:[#allocation4 + $0xb8] sm:$0xff] %vm461, %v9429
      %9472 = vst.msk [vmem:[#allocation4 + $0xc8] sm:$0xff] %vm461, %v9431
      %9473 = vst.msk [vmem:[#allocation4 + $0xd8] sm:$0xff] %vm461, %v9433
      %9474 = vst.msk [vmem:[#allocation4 + $0xe8] sm:$0xff] %vm461, %v9435
      %9475 = vst.msk [vmem:[#allocation4 + $0xf8] sm:$0xff] %vm461, %v9437
      %9476 = vst.msk [vmem:[#allocation4 + $0x108] sm:$0xff] %vm461, %v9439
      %9477 = vst.msk [vmem:[#allocation4 + $0x118] sm:$0xff] %vm461, %v9441
      %v9478 = vld [vmem:[#allocation4] sm:$0xff]
      %v9479 = vld [vmem:[#allocation4 + $0x8] sm:$0xff]
      %v9480 = vld [vmem:[#allocation4 + $0x10] sm:$0xff]
      %v9481 = vld [vmem:[#allocation4 + $0x18] sm:$0xff]
      %v9482 = vld [vmem:[#allocation4 + $0x20] sm:$0xff]
      %v9483 = vld [vmem:[#allocation4 + $0x28] sm:$0xff]
      %v9484 = vld [vmem:[#allocation4 + $0x30] sm:$0xff]
      %v9485 = vld [vmem:[#allocation4 + $0x38] sm:$0xff]
      %v9486 = vld [vmem:[#allocation4 + $0x40] sm:$0xff]
      %v9487 = vld [vmem:[#allocation4 + $0x48] sm:$0xff]
      %v9488 = vld [vmem:[#allocation4 + $0x50] sm:$0xff]
      %v9489 = vld [vmem:[#allocation4 + $0x58] sm:$0xff]
      %v9490 = vld [vmem:[#allocation4 + $0x60] sm:$0xff]
      %v9491 = vld [vmem:[#allocation4 + $0x68] sm:$0xff]
      %v9492 = vld [vmem:[#allocation4 + $0x70] sm:$0xff]
      %v9493 = vld [vmem:[#allocation4 + $0x78] sm:$0xff]
      %v9494 = vld [vmem:[#allocation4 + $0x80] sm:$0xff]
      %v9495 = vld [vmem:[#allocation4 + $0x88] sm:$0xff]
      %v9496 = vld [vmem:[#allocation4 + $0x90] sm:$0xff]
      %v9497 = vld [vmem:[#allocation4 + $0x98] sm:$0xff]
      %v9498 = vld [vmem:[#allocation4 + $0xa0] sm:$0xff]
      %v9499 = vld [vmem:[#allocation4 + $0xa8] sm:$0xff]
      %v9500 = vld [vmem:[#allocation4 + $0xb0] sm:$0xff]
      %v9501 = vld [vmem:[#allocation4 + $0xb8] sm:$0xff]
      %v9502 = vld [vmem:[#allocation4 + $0xc0] sm:$0xff]
      %v9503 = vld [vmem:[#allocation4 + $0xc8] sm:$0xff]
      %v9504 = vld [vmem:[#allocation4 + $0xd0] sm:$0xff]
      %v9505 = vld [vmem:[#allocation4 + $0xd8] sm:$0xff]
      %v9506 = vld [vmem:[#allocation4 + $0xe0] sm:$0xff]
      %v9507 = vld [vmem:[#allocation4 + $0xe8] sm:$0xff]
      %v9508 = vld [vmem:[#allocation4 + $0xf0] sm:$0xff]
      %v9509 = vld [vmem:[#allocation4 + $0xf8] sm:$0xff]
      %v9510 = vld [vmem:[#allocation4 + $0x100] sm:$0xff]
      %v9511 = vld [vmem:[#allocation4 + $0x108] sm:$0xff]
      %v9512 = vld [vmem:[#allocation4 + $0x110] sm:$0xff]
      %v9513 = vld [vmem:[#allocation4 + $0x118] sm:$0xff]
      %v9514 = vld [vmem:[%s4] sm:$0xf]
      %v9515 = vld [vmem:[%s4 + $0x4] sm:$0xf]
      %v9516 = vld [vmem:[%s4 + $0x8] sm:$0xf]
      %v9517 = vld [vmem:[%s4 + $0xc] sm:$0xf]
      %v9518 = vld [vmem:[%s4 + $0x10] sm:$0xf]
      %v9519 = vld [vmem:[%s4 + $0x14] sm:$0xf]
      %v9520 = vld [vmem:[%s4 + $0x18] sm:$0xf]
      %v9521 = vld [vmem:[%s4 + $0x1c] sm:$0xf]
      %v9522 = vld [vmem:[%s4 + $0x20] sm:$0xf]
      %v9523 = vld [vmem:[%s4 + $0x24] sm:$0xf]
      %v9524 = vld [vmem:[%s4 + $0x28] sm:$0xf]
      %v9525 = vld [vmem:[%s4 + $0x2c] sm:$0xf]
      %v9526 = vld [vmem:[%s4 + $0x30] sm:$0xf]
      %v9527 = vld [vmem:[%s4 + $0x34] sm:$0xf]
      %v9528 = vld [vmem:[%s4 + $0x38] sm:$0xf]
      %v9529 = vld [vmem:[%s4 + $0x3c] sm:$0xf]
      %v9530 = vld [vmem:[%s4 + $0x40] sm:$0xf]
      %v9531 = vld [vmem:[%s4 + $0x44] sm:$0xf]
      %v9532 = vld [vmem:[%s4 + $0x48] sm:$0xf]
      %v9533 = vld [vmem:[%s4 + $0x4c] sm:$0xf]
      %v9534 = vld [vmem:[%s4 + $0x50] sm:$0xf]
      %v9535 = vld [vmem:[%s4 + $0x54] sm:$0xf]
      %v9536 = vld [vmem:[%s4 + $0x58] sm:$0xf]
      %v9537 = vld [vmem:[%s4 + $0x5c] sm:$0xf]
      %v9538 = vld [vmem:[%s4 + $0x60] sm:$0xf]
      %v9539 = vld [vmem:[%s4 + $0x64] sm:$0xf]
      %v9540 = vld [vmem:[%s4 + $0x68] sm:$0xf]
      %v9541 = vld [vmem:[%s4 + $0x6c] sm:$0xf]
      %v9542 = vld [vmem:[%s4 + $0x70] sm:$0xf]
      %v9543 = vld [vmem:[%s4 + $0x74] sm:$0xf]
      %v9544 = vld [vmem:[%s4 + $0x78] sm:$0xf]
      %v9545 = vld [vmem:[%s4 + $0x7c] sm:$0xf]
      %v9546 = vld [vmem:[%s5] sm:$0x1]
      %v9548 = vlaneseq
      %v9549 = vshrl.u32 %v9548, 7
      %v9550 = vsub.s32 0, %v9549
      %v9551 = vrot.slane %v9546, %v9550
      %v9585 = vunpack.c.l.b16 %v9514
      %v9586 = vunpack.c.l.b16 %v9515
      %v9587 = vunpack.c.l.b16 %v9516
      %v9588 = vunpack.c.l.b16 %v9517
      %v9589 = vunpack.c.l.b16 %v9518
      %v9590 = vunpack.c.l.b16 %v9519
      %v9591 = vunpack.c.l.b16 %v9520
      %v9592 = vunpack.c.l.b16 %v9521
      %v9593 = vunpack.c.l.b16 %v9522
      %v9594 = vunpack.c.l.b16 %v9523
      %v9595 = vunpack.c.l.b16 %v9524
      %v9596 = vunpack.c.l.b16 %v9525
      %v9597 = vunpack.c.l.b16 %v9526
      %v9598 = vunpack.c.l.b16 %v9527
      %v9599 = vunpack.c.l.b16 %v9528
      %v9600 = vunpack.c.l.b16 %v9529
      %v9601 = vunpack.c.l.b16 %v9530
      %v9602 = vunpack.c.l.b16 %v9531
      %v9603 = vunpack.c.l.b16 %v9532
      %v9604 = vunpack.c.l.b16 %v9533
      %v9605 = vunpack.c.l.b16 %v9534
      %v9606 = vunpack.c.l.b16 %v9535
      %v9607 = vunpack.c.l.b16 %v9536
      %v9608 = vunpack.c.l.b16 %v9537
      %v9609 = vunpack.c.l.b16 %v9538
      %v9610 = vunpack.c.l.b16 %v9539
      %v9611 = vunpack.c.l.b16 %v9540
      %v9612 = vunpack.c.l.b16 %v9541
      %v9613 = vunpack.c.l.b16 %v9542
      %v9614 = vunpack.c.l.b16 %v9543
      %v9615 = vunpack.c.l.b16 %v9544
      %v9616 = vunpack.c.l.b16 %v9545
      %v9617 = vpack.c.b16 %v9586, %v9585
      %v9618 = vpack.c.b16 %v9588, %v9587
      %v9619 = vpack.c.b16 %v9590, %v9589
      %v9620 = vpack.c.b16 %v9592, %v9591
      %v9621 = vpack.c.b16 %v9594, %v9593
      %v9622 = vpack.c.b16 %v9596, %v9595
      %v9623 = vpack.c.b16 %v9598, %v9597
      %v9624 = vpack.c.b16 %v9600, %v9599
      %v9625 = vpack.c.b16 %v9602, %v9601
      %v9626 = vpack.c.b16 %v9604, %v9603
      %v9627 = vpack.c.b16 %v9606, %v9605
      %v9628 = vpack.c.b16 %v9608, %v9607
      %v9629 = vpack.c.b16 %v9610, %v9609
      %v9630 = vpack.c.b16 %v9612, %v9611
      %v9631 = vpack.c.b16 %v9614, %v9613
      %v9632 = vpack.c.b16 %v9616, %v9615
      %9649 = vmatprep.subr.bf16.mxu0 0
      %9650 = vmatpush1.bf16.msra.mxu0 %v9617
      %9651 = vmatprep.subr.bf16.mxu0 0
      %9652 = vmatpush1.bf16.msra.mxu0 %v9618
      %9653 = vmatprep.subr.bf16.mxu0 0
      %9654 = vmatpush1.bf16.msra.mxu0 %v9619
      %9655 = vmatprep.subr.bf16.mxu0 0
      %9656 = vmatpush1.bf16.msra.mxu0 %v9620
      %9657 = vmatprep.subr.bf16.mxu0 0
      %9658 = vmatpush1.bf16.msra.mxu0 %v9621
      %9659 = vmatprep.subr.bf16.mxu0 0
      %9660 = vmatpush1.bf16.msra.mxu0 %v9622
      %9661 = vmatprep.subr.bf16.mxu0 0
      %9662 = vmatpush1.bf16.msra.mxu0 %v9623
      %9663 = vmatprep.subr.bf16.mxu0 0
      %9664 = vmatpush1.bf16.msra.mxu0 %v9624
      %9665 = vmatprep.subr.bf16.mxu0 0
      %9666 = vmatpush1.bf16.msra.mxu0 %v9625
      %9667 = vmatprep.subr.bf16.mxu0 0
      %9668 = vmatpush1.bf16.msra.mxu0 %v9626
      %9669 = vmatprep.subr.bf16.mxu0 0
      %9670 = vmatpush1.bf16.msra.mxu0 %v9627
      %9671 = vmatprep.subr.bf16.mxu0 0
      %9672 = vmatpush1.bf16.msra.mxu0 %v9628
      %9673 = vmatprep.subr.bf16.mxu0 0
      %9674 = vmatpush1.bf16.msra.mxu0 %v9629
      %9675 = vmatprep.subr.bf16.mxu0 0
      %9676 = vmatpush1.bf16.msra.mxu0 %v9630
      %9677 = vmatprep.subr.bf16.mxu0 0
      %9678 = vmatpush1.bf16.msra.mxu0 %v9631
      %9679 = vmatprep.subr.bf16.mxu0 0
      %9680 = vmatpush1.bf16.msra.mxu0 %v9632
      %9681 = vmatprep.mubr.bf16.mxu0 %v9479
      %9682 = vmatmul.mubr.bf16.gmra.mrb[0].mxu0 %v9478
      %v9683 = vpop.f32.mrb[0].mxu0
      %v9684 = vadd.f32 %v9551, %v9683
      %v9685 = vpop.f32.mrb[0].mxu0
      %v9686 = vpop.f32.mrb[0].mxu0
      %v9687 = vadd.f32 %v9551, %v9686
      %v9688 = vpop.f32.mrb[0].mxu0
      %9689 = vmatprep.mubr.bf16.mxu0 %v9481
      %9690 = vmatmul.mubr.bf16.gmra.mrb[0].mxu0 %v9480
      %v9691 = vpop.f32.mrb[0].mxu0
      %v9692 = vadd.f32 %v9551, %v9691
      %v9693 = vpop.f32.mrb[0].mxu0
      %v9694 = vpop.f32.mrb[0].mxu0
      %v9695 = vadd.f32 %v9551, %v9694
      %v9696 = vpop.f32.mrb[0].mxu0
      %9697 = vmatprep.mubr.bf16.mxu0 %v9483
      %9698 = vmatmul.mubr.bf16.gmra.mrb[0].mxu0 %v9482
      %v9699 = vpop.f32.mrb[0].mxu0
      %v9700 = vadd.f32 %v9551, %v9699
      %v9701 = vpop.f32.mrb[0].mxu0
      %v9702 = vpop.f32.mrb[0].mxu0
      %v9703 = vadd.f32 %v9551, %v9702
      %v9704 = vpop.f32.mrb[0].mxu0
      %9705 = vmatprep.mubr.bf16.mxu0 %v9485
      %9706 = vmatmul.mubr.bf16.gmra.mrb[0].mxu0 %v9484
      %v9707 = vpop.f32.mrb[0].mxu0
      %v9708 = vadd.f32 %v9551, %v9707
      %v9709 = vpop.f32.mrb[0].mxu0
      %v9710 = vpop.f32.mrb[0].mxu0
      %v9711 = vadd.f32 %v9551, %v9710
      %v9712 = vpop.f32.mrb[0].mxu0
      %9713 = vmatprep.mubr.bf16.mxu0 %v9487
      %9714 = vmatmul.mubr.bf16.gmra.mrb[0].mxu0 %v9486
      %v9715 = vpop.f32.mrb[0].mxu0
      %v9716 = vadd.f32 %v9551, %v9715
      %v9717 = vpop.f32.mrb[0].mxu0
      %v9718 = vpop.f32.mrb[0].mxu0
      %v9719 = vadd.f32 %v9551, %v9718
      %v9720 = vpop.f32.mrb[0].mxu0
      %9721 = vmatprep.mubr.bf16.mxu0 %v9489
      %9722 = vmatmul.mubr.bf16.gmra.mrb[0].mxu0 %v9488
      %v9723 = vpop.f32.mrb[0].mxu0
      %v9724 = vadd.f32 %v9551, %v9723
      %v9725 = vpop.f32.mrb[0].mxu0
      %v9726 = vpop.f32.mrb[0].mxu0
      %v9727 = vadd.f32 %v9551, %v9726
      %v9728 = vpop.f32.mrb[0].mxu0
      %9729 = vmatprep.mubr.bf16.mxu0 %v9491
      %9730 = vmatmul.mubr.bf16.gmra.mrb[0].mxu0 %v9490
      %v9731 = vpop.f32.mrb[0].mxu0
      %v9732 = vadd.f32 %v9551, %v9731
      %v9733 = vpop.f32.mrb[0].mxu0
      %v9734 = vpop.f32.mrb[0].mxu0
      %v9735 = vadd.f32 %v9551, %v9734
      %v9736 = vpop.f32.mrb[0].mxu0
      %9737 = vmatprep.mubr.bf16.mxu0 %v9493
      %9738 = vmatmul.mubr.bf16.gmra.mrb[0].mxu0 %v9492
      %v9739 = vpop.f32.mrb[0].mxu0
      %v9740 = vadd.f32 %v9551, %v9739
      %v9741 = vpop.f32.mrb[0].mxu0
      %v9742 = vpop.f32.mrb[0].mxu0
      %v9743 = vadd.f32 %v9551, %v9742
      %v9744 = vpop.f32.mrb[0].mxu0
      %9745 = vmatprep.mubr.bf16.mxu0 %v9495
      %9746 = vmatmul.mubr.bf16.gmra.mrb[0].mxu0 %v9494
      %v9747 = vpop.f32.mrb[0].mxu0
      %v9748 = vadd.f32 %v9551, %v9747
      %v9749 = vpop.f32.mrb[0].mxu0
      %v9750 = vpop.f32.mrb[0].mxu0
      %v9751 = vadd.f32 %v9551, %v9750
      %v9752 = vpop.f32.mrb[0].mxu0
      %9753 = vmatprep.mubr.bf16.mxu0 %v9497
      %9754 = vmatmul.mubr.bf16.gmra.mrb[0].mxu0 %v9496
      %v9755 = vpop.f32.mrb[0].mxu0
      %v9756 = vadd.f32 %v9551, %v9755
      %v9757 = vpop.f32.mrb[0].mxu0
      %v9758 = vpop.f32.mrb[0].mxu0
      %v9759 = vadd.f32 %v9551, %v9758
      %v9760 = vpop.f32.mrb[0].mxu0
      %9761 = vmatprep.mubr.bf16.mxu0 %v9499
      %9762 = vmatmul.mubr.bf16.gmra.mrb[0].mxu0 %v9498
      %v9763 = vpop.f32.mrb[0].mxu0
      %v9764 = vadd.f32 %v9551, %v9763
      %v9765 = vpop.f32.mrb[0].mxu0
      %v9766 = vpop.f32.mrb[0].mxu0
      %v9767 = vadd.f32 %v9551, %v9766
      %v9768 = vpop.f32.mrb[0].mxu0
      %9769 = vmatprep.mubr.bf16.mxu0 %v9501
      %9770 = vmatmul.mubr.bf16.gmra.mrb[0].mxu0 %v9500
      %v9771 = vpop.f32.mrb[0].mxu0
      %v9772 = vadd.f32 %v9551, %v9771
      %v9773 = vpop.f32.mrb[0].mxu0
      %v9774 = vpop.f32.mrb[0].mxu0
      %v9775 = vadd.f32 %v9551, %v9774
      %v9776 = vpop.f32.mrb[0].mxu0
      %9777 = vmatprep.mubr.bf16.mxu0 %v9503
      %9778 = vmatmul.mubr.bf16.gmra.mrb[0].mxu0 %v9502
      %v9779 = vpop.f32.mrb[0].mxu0
      %v9780 = vadd.f32 %v9551, %v9779
      %v9781 = vpop.f32.mrb[0].mxu0
      %v9782 = vpop.f32.mrb[0].mxu0
      %v9783 = vadd.f32 %v9551, %v9782
      %v9784 = vpop.f32.mrb[0].mxu0
      %9785 = vmatprep.mubr.bf16.mxu0 %v9505
      %9786 = vmatmul.mubr.bf16.gmra.mrb[0].mxu0 %v9504
      %v9787 = vpop.f32.mrb[0].mxu0
      %v9788 = vadd.f32 %v9551, %v9787
      %v9789 = vpop.f32.mrb[0].mxu0
      %v9790 = vpop.f32.mrb[0].mxu0
      %v9791 = vadd.f32 %v9551, %v9790
      %v9792 = vpop.f32.mrb[0].mxu0
      %9793 = vmatprep.mubr.bf16.mxu0 %v9507
      %9794 = vmatmul.mubr.bf16.gmra.mrb[0].mxu0 %v9506
      %v9795 = vpop.f32.mrb[0].mxu0
      %v9796 = vadd.f32 %v9551, %v9795
      %v9797 = vpop.f32.mrb[0].mxu0
      %v9798 = vpop.f32.mrb[0].mxu0
      %v9799 = vadd.f32 %v9551, %v9798
      %v9800 = vpop.f32.mrb[0].mxu0
      %9801 = vmatprep.mubr.bf16.mxu0 %v9509
      %9802 = vmatmul.mubr.bf16.gmra.mrb[0].mxu0 %v9508
      %v9803 = vpop.f32.mrb[0].mxu0
      %v9804 = vadd.f32 %v9551, %v9803
      %v9805 = vpop.f32.mrb[0].mxu0
      %v9806 = vpop.f32.mrb[0].mxu0
      %v9807 = vadd.f32 %v9551, %v9806
      %v9808 = vpop.f32.mrb[0].mxu0
      %9809 = vmatprep.mubr.bf16.mxu0 %v9511
      %9810 = vmatmul.mubr.bf16.gmra.mrb[0].mxu0 %v9510
      %v9811 = vpop.f32.mrb[0].mxu0
      %v9812 = vadd.f32 %v9551, %v9811
      %v9813 = vpop.f32.mrb[0].mxu0
      %v9814 = vpop.f32.mrb[0].mxu0
      %v9815 = vadd.f32 %v9551, %v9814
      %v9816 = vpop.f32.mrb[0].mxu0
      %9817 = vmatprep.mubr.bf16.mxu0 %v9513
      %9818 = vmatmul.mubr.bf16.gmra.mrb[0].mxu0 %v9512
      %v9819 = vpop.f32.mrb[0].mxu0
      %v9820 = vadd.f32 %v9551, %v9819
      %v9821 = vpop.f32.mrb[0].mxu0
      %v9822 = vpop.f32.mrb[0].mxu0
      %v9823 = vadd.f32 %v9551, %v9822
      %v9824 = vpop.f32.mrb[0].mxu0
      %9825 = vdwg.mxu0
      %9826 = vst.msk [vmem:[%s251] sm:$0xff] %vm253, %v9684
      %9827 = vst.msk [vmem:[%s251 + $0x8] sm:$0xff] %vm253, %v9687
      %9828 = vst.msk [vmem:[%s251 + $0x10] sm:$0xff] %vm253, %v9692
      %9829 = vst.msk [vmem:[%s251 + $0x18] sm:$0xff] %vm253, %v9695
      %9830 = vst.msk [vmem:[%s251 + $0x20] sm:$0xff] %vm253, %v9700
      %9831 = vst.msk [vmem:[%s251 + $0x28] sm:$0xff] %vm253, %v9703
      %9832 = vst.msk [vmem:[%s251 + $0x30] sm:$0xff] %vm253, %v9708
      %9833 = vst.msk [vmem:[%s251 + $0x38] sm:$0xff] %vm253, %v9711
      %9834 = vst.msk [vmem:[%s251 + $0x40] sm:$0xff] %vm253, %v9716
      %9835 = vst.msk [vmem:[%s251 + $0x48] sm:$0xff] %vm253, %v9719
      %9836 = vst.msk [vmem:[%s251 + $0x50] sm:$0xff] %vm253, %v9724
      %9837 = vst.msk [vmem:[%s251 + $0x58] sm:$0xff] %vm253, %v9727
      %9838 = vst.msk [vmem:[%s251 + $0x60] sm:$0xff] %vm253, %v9732
      %9839 = vst.msk [vmem:[%s251 + $0x68] sm:$0xff] %vm253, %v9735
      %9840 = vst.msk [vmem:[%s251 + $0x70] sm:$0xff] %vm253, %v9740
      %9841 = vst.msk [vmem:[%s251 + $0x78] sm:$0xff] %vm253, %v9743
      %9842 = vst.msk [vmem:[%s251 + $0x80] sm:$0xff] %vm253, %v9748
      %9843 = vst.msk [vmem:[%s251 + $0x88] sm:$0xff] %vm253, %v9751
      %9844 = vst.msk [vmem:[%s251 + $0x90] sm:$0xff] %vm253, %v9756
      %9845 = vst.msk [vmem:[%s251 + $0x98] sm:$0xff] %vm253, %v9759
      %9846 = vst.msk [vmem:[%s251 + $0xa0] sm:$0xff] %vm253, %v9764
      %9847 = vst.msk [vmem:[%s251 + $0xa8] sm:$0xff] %vm253, %v9767
      %9848 = vst.msk [vmem:[%s251 + $0xb0] sm:$0xff] %vm253, %v9772
      %9849 = vst.msk [vmem:[%s251 + $0xb8] sm:$0xff] %vm253, %v9775
      %9850 = vst.msk [vmem:[%s251 + $0xc0] sm:$0xff] %vm253, %v9780
      %9851 = vst.msk [vmem:[%s251 + $0xc8] sm:$0xff] %vm253, %v9783
      %9852 = vst.msk [vmem:[%s251 + $0xd0] sm:$0xff] %vm253, %v9788
      %9853 = vst.msk [vmem:[%s251 + $0xd8] sm:$0xff] %vm253, %v9791
      %9854 = vst.msk [vmem:[%s251 + $0xe0] sm:$0xff] %vm253, %v9796
      %9855 = vst.msk [vmem:[%s251 + $0xe8] sm:$0xff] %vm253, %v9799
      %9856 = vst.msk [vmem:[%s251 + $0xf0] sm:$0xff] %vm253, %v9804
      %9857 = vst.msk [vmem:[%s251 + $0xf8] sm:$0xff] %vm253, %v9807
      %9858 = vst.msk [vmem:[%s251 + $0x100] sm:$0xff] %vm253, %v9812
      %9859 = vst.msk [vmem:[%s251 + $0x108] sm:$0xff] %vm253, %v9815
      %9860 = vst.msk [vmem:[%s251 + $0x110] sm:$0xff] %vm253, %v9820
      %9861 = vst.msk [vmem:[%s251 + $0x118] sm:$0xff] %vm253, %v9823
      %p9862 = scmp.lt.s32.totalorder %s17, 1
      %s9863 = scalar_select %p9862, %s17, 1
      %s9864 = smul.addr %s9863, 36
      %s9865 = smul.addr %s9864, 8
      %s9866 = scalar_lea.vmem %s6, %s9865
      // Predicated region
      $region45: #{imdb_forward.1} parent=43 // pred_check
        %p9867 = pneg %p166
      $region46: #{imdb_forward.1} parent=43 // pred_check_branch
        %9869 = sbr.rel (%p9867) target = $region48
      $region47: #{imdb_forward.1} parent=43 // pred_region
        _
      $region48: #{imdb_forward.1} parent=43 // pred_fallthru
        _
    $region44: #{imdb_forward.1} parent=5 // pred_fallthru
      _
    %p9870 = scmp.le.s32.totalorder 2, %s12
    // Predicated region
    $region49: #{imdb_forward.1} parent=5 // pred_check
      %p9871 = pneg %p9870
    $region50: #{imdb_forward.1} parent=5 // pred_check_branch
      %9873 = sbr.rel (%p9871) target = $region52
    $region51: #{imdb_forward.1} parent=5 // pred_region
      %s9874 = ssub.s32 %s12, 2
      // Predicated region
      $region53: #{imdb_forward.1} parent=51 // pred_check
        %p9875 = pneg %p172
      $region54: #{imdb_forward.1} parent=51 // pred_check_branch
        %9877 = sbr.rel (%p9875) target = $region56
      $region55: #{imdb_forward.1} parent=51 // pred_region
        %p9878 = scmp.lt.s32.totalorder %s18, 1
        %s9879 = scalar_select %p9878, %s18, 1
        %s9880 = smul.addr %s9879, 36
        %s9881 = smul.addr %s9880, 8
        %s9882 = scalar_lea.vmem %s6, %s9881
      $region56: #{imdb_forward.1} parent=51 // pred_fallthru
        _
    $region52: #{imdb_forward.1} parent=5 // pred_fallthru
      _
  $region6: #{imdb_forward.1} parent=0 // loop_footer
    %s16 = sadd.s32 1, %s12
  $region7: #{imdb_forward.1} parent=0 // loop_footer_branch
    %11 = sbr.rel target = $region3
  $region8: #{imdb_forward.1} parent=0 // loop_exit
    _

</llo_original>
